<compile_context>
chip_gen: v6e
topology: v6e:2x2x1
jax: 0.10.0
libtpu: 0.0.40
codegen_flags: <defaults>
</compile_context>

<pallas_src>
import functools

import jax
import jax.numpy as jnp
from jax.experimental import pallas as pl
from jax.experimental.pallas import tpu as pltpu

EPS = 1e-5  # nn.InstanceNorm2d default eps, affine=False (no gamma/beta)


def _instance_norm(y):
    """Per-sample, per-channel normalization over spatial dims (one-pass stats).

    y: (NB, H, W, C) float32.
    """
    m = jnp.mean(y, axis=(1, 2), keepdims=True)
    ex2 = jnp.mean(y * y, axis=(1, 2), keepdims=True)
    r = jax.lax.rsqrt(ex2 - m * m + EPS)          # biased variance, EUP rsqrt
    return y * r - m * r                           # fused normalize


def _conv3x3(pad_ref, w_ref, NB, H, W, C):
    """3x3 'same' conv as a single im2col MXU matmul.

    pad_ref: (NB, H+2, W+2, C) bf16 VMEM scratch (halo already zero)
    w_ref:   (9*C, C) bf16 weights, rows ordered (dy, dx, cin)
    returns: (NB, H, W, C) float32
    """
    taps = [pad_ref[:, dy:dy + H, dx:dx + W, :]
            for dy in range(3) for dx in range(3)]
    patches = jnp.concatenate(taps, axis=-1)               # (NB, H, W, 9C) bf16
    patches = patches.reshape(NB * H * W, 9 * C)           # M x K, M = NB*H*W
    y = jnp.dot(patches, w_ref[...], preferred_element_type=jnp.float32)
    return y.reshape(NB, H, W, C)


def resblock_kernel(x_ref, w1_ref, w2_ref, o_ref, pad_ref, *, H, W, C, NB):
    dt = pad_ref.dtype
    # Zero only the four 1-wide halo strips; interior is overwritten below.
    pad_ref[:, 0:1, :, :] = jnp.zeros((NB, 1, W + 2, C), dt)
    pad_ref[:, H + 1:H + 2, :, :] = jnp.zeros((NB, 1, W + 2, C), dt)
    pad_ref[:, :, 0:1, :] = jnp.zeros((NB, H + 2, 1, C), dt)
    pad_ref[:, :, W + 1:W + 2, :] = jnp.zeros((NB, H + 2, 1, C), dt)

    # ---- conv1 + InstanceNorm + ReLU (conv bias is exactly cancelled by IN) ----
    pad_ref[:, 1:H + 1, 1:W + 1, :] = x_ref[...].astype(dt)
    h = _instance_norm(_conv3x3(pad_ref, w1_ref, NB, H, W, C))
    h = jnp.maximum(h, 0.0)

    # ---- conv2 + InstanceNorm (reuse the same padded scratch) ----
    pad_ref[:, 1:H + 1, 1:W + 1, :] = h.astype(dt)
    h2 = _instance_norm(_conv3x3(pad_ref, w2_ref, NB, H, W, C))

    # ---- residual add (f32) straight from the input block ----
    o_ref[...] = (h2 + x_ref[...]).astype(o_ref.dtype)


def _pick_batch_block(N, H, W, target_m=128):
    """Largest divisor of N such that NB*H*W reaches ~target_m MXU rows."""
    nb = min(N, max(1, -(-target_m // (H * W))))
    while N % nb:
        nb -= 1
    return nb


def resblock256(x_nchw, w1_hwio, w2_hwio, *, batch_block=None):
    """Forward pass of ResBlock256.  Conv biases are omitted on purpose: a
    per-channel constant added right before InstanceNorm(affine=False) is
    mathematically cancelled by the mean subtraction (and the module inits
    them to zero anyway)."""
    N, C, H, W = x_nchw.shape
    x = jnp.transpose(x_nchw, (0, 2, 3, 1))                    # NHWC
    NB = _pick_batch_block(N, H, W) if batch_block is None else batch_block
    assert N % NB == 0
    G = N // NB

    # HWIO (3,3,Cin,Cout) -> (9*Cin, Cout), rows ordered (dy, dx, cin); bf16
    # MXU operands (f32 accumulation happens inside the kernel).
    w1r = w1_hwio.reshape(9 * C, C).astype(jnp.bfloat16)
    w2r = w2_hwio.reshape(9 * C, C).astype(jnp.bfloat16)

    kernel = functools.partial(resblock_kernel, H=H, W=W, C=C, NB=NB)
    out = pl.pallas_call(
        kernel,
        out_shape=jax.ShapeDtypeStruct((N, H, W, C), x.dtype),
        grid_spec=pltpu.PrefetchScalarGridSpec(
            num_scalar_prefetch=0,
            grid=(G,),
            in_specs=[
                pl.BlockSpec((NB, H, W, C), lambda g: (g, 0, 0, 0)),
                pl.BlockSpec((9 * C, C), lambda g: (0, 0)),
                pl.BlockSpec((9 * C, C), lambda g: (0, 0)),
            ],
            out_specs=pl.BlockSpec((NB, H, W, C), lambda g: (g, 0, 0, 0)),
            scratch_shapes=[
                pltpu.VMEM((NB, H + 2, W + 2, C), jnp.bfloat16),
            ],
        ),
        compiler_params=pltpu.CompilerParams(
            dimension_semantics=("parallel",)),   # v7x: shards batch over 2 TCs
    )(x, w1r, w2r)
    return jnp.transpose(out, (0, 3, 1, 2))                    # back to NCHW


# ----------------------------- references --------------------------------- #

def _conv_ref(x, w, b, op_dtype):
    y = jax.lax.conv_general_dilated(
        x.astype(op_dtype), w.astype(op_dtype),
        window_strides=(1, 1), padding='SAME',
        dimension_numbers=('NHWC', 'HWIO', 'NHWC'),
        preferred_element_type=jnp.float32)
    return y + b


def _inorm_ref(x):
    m = jnp.mean(x, axis=(1, 2), keepdims=True)
    v = jnp.mean((x - m) ** 2, axis=(1, 2), keepdims=True)
    return (x - m) * jax.lax.rsqrt(v + EPS)


def ref_forward(x_nchw, w1, b1, w2, b2, op_dtype=jnp.float32):
    """Pure-JAX reference.  op_dtype=bf16 mirrors the kernel's MXU precision."""
    x = jnp.transpose(x_nchw, (0, 2, 3, 1))
    h = jnp.maximum(_inorm_ref(_conv_ref(x, w1, b1, op_dtype)), 0.0)
    h = _inorm_ref(_conv_ref(h, w2, b2, op_dtype))
    return jnp.transpose(h + x, (0, 3, 1, 2))


if __name__ == "__main__":
    key = jax.random.PRNGKey(0)
    k1, k2, kx = jax.random.split(key, 3)

    N, C, H, W = 2, 256, 8, 8   # module hard-codes 256 channels; small spatial
    # Conv2d weights ~ N(0, 0.02), biases = 0 (per module._init_weights)
    w1 = 0.02 * jax.random.normal(k1, (3, 3, C, C), jnp.float32)
    w2 = 0.02 * jax.random.normal(k2, (3, 3, C, C), jnp.float32)
    b1 = jnp.zeros((C,), jnp.float32)
    b2 = jnp.zeros((C,), jnp.float32)

    x = jax.random.normal(kx, (N, C, H, W), jnp.float32)

    out = jax.block_until_ready(resblock256(x, w1, w2))
    assert out.shape == x.shape and out.dtype == x.dtype

    # Tight check against a reference with matching bf16 MXU precision.
    ref_bf16 = ref_forward(x, w1, b1, w2, b2, op_dtype=jnp.bfloat16)
    err_matched = float(jnp.max(jnp.abs(out - ref_bf16)))
    assert err_matched < 5e-3, f"matched-precision max abs error {err_matched}"

    # Sanity check against the full-f32 module semantics (bf16 MXU rounding
    # of two 2304-term convolutions accounts for the remaining difference).
    ref_f32 = ref_forward(x, w1, b1, w2, b2, op_dtype=jnp.float32)
    err_f32 = float(jnp.max(jnp.abs(out - ref_f32)))
    assert err_f32 < 1e-1, f"f32-reference max abs error {err_f32}"

    print("KERNEL_OK")
</pallas_src>

<mosaic_0001>
module attributes {stable_mosaic.version = 11 : i64} {
  func.func @resblock_kernel(%arg0: i32, %arg1: memref<2x8x8x256xf32, #tpu.memory_space<vmem>>, %arg2: memref<2304x256xbf16, #tpu.memory_space<vmem>>, %arg3: memref<2304x256xbf16, #tpu.memory_space<vmem>>, %arg4: memref<2x8x8x256xf32, #tpu.memory_space<vmem>>, %arg5: memref<2x10x10x256xbf16, #tpu.memory_space<vmem>>) attributes {dimension_semantics = [#tpu.dimension_semantics<parallel>], iteration_bounds = array<i64: 1>, scalar_prefetch = 0 : i64, scratch_operands = 1 : i64, tpu.core_type = #tpu.core_type<tc>, window_params = [{transform_indices = @transform_0, window_bounds = array<i64: 2, 8, 8, 256>}, {pipeline_mode = #tpu.pipeline_mode<synchronous>, transform_indices = @transform_1, window_bounds = array<i64: 2304, 256>}, {pipeline_mode = #tpu.pipeline_mode<synchronous>, transform_indices = @transform_2, window_bounds = array<i64: 2304, 256>}, {transform_indices = @transform_3, window_bounds = array<i64: 2, 8, 8, 256>}]} {
    %cst = arith.constant 0.000000e+00 : bf16
    %0 = vector.broadcast %cst : bf16 to vector<2x1x10x256xbf16>
    %c0 = arith.constant 0 : index
    %c0_0 = arith.constant 0 : index
    %c0_1 = arith.constant 0 : index
    %c0_2 = arith.constant 0 : index
    %1 = vector.load %arg5[%c0, %c0_0, %c0_1, %c0_2] : memref<2x10x10x256xbf16, #tpu.memory_space<vmem>>, vector<2x1x10x256xbf16>
    tpu.vector_store %arg5[%c0, %c0_0, %c0_1, %c0_2], %0 {strides = array<i32>} : memref<2x10x10x256xbf16, #tpu.memory_space<vmem>>, vector<2x1x10x256xbf16>,
    %cst_3 = arith.constant 0.000000e+00 : bf16
    %2 = vector.broadcast %cst_3 : bf16 to vector<2x1x10x256xbf16>
    %c0_4 = arith.constant 0 : index
    %c9 = arith.constant 9 : index
    %c0_5 = arith.constant 0 : index
    %c0_6 = arith.constant 0 : index
    %3 = vector.load %arg5[%c0_4, %c9, %c0_5, %c0_6] : memref<2x10x10x256xbf16, #tpu.memory_space<vmem>>, vector<2x1x10x256xbf16>
    tpu.vector_store %arg5[%c0_4, %c9, %c0_5, %c0_6], %2 {strides = array<i32>} : memref<2x10x10x256xbf16, #tpu.memory_space<vmem>>, vector<2x1x10x256xbf16>,
    %cst_7 = arith.constant 0.000000e+00 : bf16
    %4 = vector.broadcast %cst_7 : bf16 to vector<2x10x1x256xbf16>
    %c0_8 = arith.constant 0 : index
    %c0_9 = arith.constant 0 : index
    %c0_10 = arith.constant 0 : index
    %c0_11 = arith.constant 0 : index
    %5 = vector.load %arg5[%c0_8, %c0_9, %c0_10, %c0_11] : memref<2x10x10x256xbf16, #tpu.memory_space<vmem>>, vector<2x10x1x256xbf16>
    tpu.vector_store %arg5[%c0_8, %c0_9, %c0_10, %c0_11], %4 {strides = array<i32>} : memref<2x10x10x256xbf16, #tpu.memory_space<vmem>>, vector<2x10x1x256xbf16>,
    %cst_12 = arith.constant 0.000000e+00 : bf16
    %6 = vector.broadcast %cst_12 : bf16 to vector<2x10x1x256xbf16>
    %c0_13 = arith.constant 0 : index
    %c0_14 = arith.constant 0 : index
    %c9_15 = arith.constant 9 : index
    %c0_16 = arith.constant 0 : index
    %7 = vector.load %arg5[%c0_13, %c0_14, %c9_15, %c0_16] : memref<2x10x10x256xbf16, #tpu.memory_space<vmem>>, vector<2x10x1x256xbf16>
    tpu.vector_store %arg5[%c0_13, %c0_14, %c9_15, %c0_16], %6 {strides = array<i32>} : memref<2x10x10x256xbf16, #tpu.memory_space<vmem>>, vector<2x10x1x256xbf16>,
    %c0_17 = arith.constant 0 : index
    %c0_18 = arith.constant 0 : index
    %c0_19 = arith.constant 0 : index
    %c0_20 = arith.constant 0 : index
    %8 = vector.load %arg1[%c0_17, %c0_18, %c0_19, %c0_20] : memref<2x8x8x256xf32, #tpu.memory_space<vmem>>, vector<2x8x8x256xf32>
    %9 = arith.truncf %8 : vector<2x8x8x256xf32> to vector<2x8x8x256xbf16>
    %c0_21 = arith.constant 0 : index
    %c1 = arith.constant 1 : index
    %c1_22 = arith.constant 1 : index
    %c0_23 = arith.constant 0 : index
    %10 = vector.load %arg5[%c0_21, %c1, %c1_22, %c0_23] : memref<2x10x10x256xbf16, #tpu.memory_space<vmem>>, vector<2x8x8x256xbf16>
    tpu.vector_store %arg5[%c0_21, %c1, %c1_22, %c0_23], %9 {strides = array<i32>} : memref<2x10x10x256xbf16, #tpu.memory_space<vmem>>, vector<2x8x8x256xbf16>,
    %c0_24 = arith.constant 0 : index
    %c0_25 = arith.constant 0 : index
    %c0_26 = arith.constant 0 : index
    %c0_27 = arith.constant 0 : index
    %11 = vector.load %arg5[%c0_24, %c0_25, %c0_26, %c0_27] : memref<2x10x10x256xbf16, #tpu.memory_space<vmem>>, vector<2x8x8x256xbf16>
    %c0_28 = arith.constant 0 : index
    %c0_29 = arith.constant 0 : index
    %c1_30 = arith.constant 1 : index
    %c0_31 = arith.constant 0 : index
    %12 = vector.load %arg5[%c0_28, %c0_29, %c1_30, %c0_31] : memref<2x10x10x256xbf16, #tpu.memory_space<vmem>>, vector<2x8x8x256xbf16>
    %c0_32 = arith.constant 0 : index
    %c0_33 = arith.constant 0 : index
    %c2 = arith.constant 2 : index
    %c0_34 = arith.constant 0 : index
    %13 = vector.load %arg5[%c0_32, %c0_33, %c2, %c0_34] : memref<2x10x10x256xbf16, #tpu.memory_space<vmem>>, vector<2x8x8x256xbf16>
    %c0_35 = arith.constant 0 : index
    %c1_36 = arith.constant 1 : index
    %c0_37 = arith.constant 0 : index
    %c0_38 = arith.constant 0 : index
    %14 = vector.load %arg5[%c0_35, %c1_36, %c0_37, %c0_38] : memref<2x10x10x256xbf16, #tpu.memory_space<vmem>>, vector<2x8x8x256xbf16>
    %c0_39 = arith.constant 0 : index
    %c1_40 = arith.constant 1 : index
    %c1_41 = arith.constant 1 : index
    %c0_42 = arith.constant 0 : index
    %15 = vector.load %arg5[%c0_39, %c1_40, %c1_41, %c0_42] : memref<2x10x10x256xbf16, #tpu.memory_space<vmem>>, vector<2x8x8x256xbf16>
    %c0_43 = arith.constant 0 : index
    %c1_44 = arith.constant 1 : index
    %c2_45 = arith.constant 2 : index
    %c0_46 = arith.constant 0 : index
    %16 = vector.load %arg5[%c0_43, %c1_44, %c2_45, %c0_46] : memref<2x10x10x256xbf16, #tpu.memory_space<vmem>>, vector<2x8x8x256xbf16>
    %c0_47 = arith.constant 0 : index
    %c2_48 = arith.constant 2 : index
    %c0_49 = arith.constant 0 : index
    %c0_50 = arith.constant 0 : index
    %17 = vector.load %arg5[%c0_47, %c2_48, %c0_49, %c0_50] : memref<2x10x10x256xbf16, #tpu.memory_space<vmem>>, vector<2x8x8x256xbf16>
    %c0_51 = arith.constant 0 : index
    %c2_52 = arith.constant 2 : index
    %c1_53 = arith.constant 1 : index
    %c0_54 = arith.constant 0 : index
    %18 = vector.load %arg5[%c0_51, %c2_52, %c1_53, %c0_54] : memref<2x10x10x256xbf16, #tpu.memory_space<vmem>>, vector<2x8x8x256xbf16>
    %c0_55 = arith.constant 0 : index
    %c2_56 = arith.constant 2 : index
    %c2_57 = arith.constant 2 : index
    %c0_58 = arith.constant 0 : index
    %19 = vector.load %arg5[%c0_55, %c2_56, %c2_57, %c0_58] : memref<2x10x10x256xbf16, #tpu.memory_space<vmem>>, vector<2x8x8x256xbf16>
    %20 = tpu.concatenate %11, %12, %13, %14, %15, %16, %17, %18, %19 in 3 : vector<2x8x8x256xbf16>, vector<2x8x8x256xbf16>, vector<2x8x8x256xbf16>, vector<2x8x8x256xbf16>, vector<2x8x8x256xbf16>, vector<2x8x8x256xbf16>, vector<2x8x8x256xbf16>, vector<2x8x8x256xbf16>, vector<2x8x8x256xbf16> -> vector<2x8x8x2304xbf16>
    %21 = vector.shape_cast %20 : vector<2x8x8x2304xbf16> to vector<128x2304xbf16>
    %c0_59 = arith.constant 0 : index
    %c0_60 = arith.constant 0 : index
    %22 = vector.load %arg2[%c0_59, %c0_60] : memref<2304x256xbf16, #tpu.memory_space<vmem>>, vector<2304x256xbf16>
    %cst_61 = arith.constant dense<0.000000e+00> : vector<128x256xf32>
    %23 = tpu.matmul %21, %22, %cst_61 {dimension_numbers = #tpu.dot_dimension_numbers<[1], [0], [0], [1], [0, 0, 1, 1], [], []>} : vector<128x2304xbf16>, vector<2304x256xbf16>, vector<128x256xf32> -> vector<128x256xf32>
    %24 = vector.shape_cast %23 : vector<128x256xf32> to vector<2x8x8x256xf32>
    %cst_62 = arith.constant dense<0.000000e+00> : vector<2x256xf32>
    %25 = vector.multi_reduction <add>, %24, %cst_62 [1, 2] : vector<2x8x8x256xf32> to vector<2x256xf32>
    %26 = vector.shape_cast %25 : vector<2x256xf32> to vector<2x1x1x256xf32>
    %cst_63 = arith.constant 6.400000e+01 : f32
    %27 = vector.broadcast %cst_63 : f32 to vector<2x1x1x256xf32>
    %28 = arith.divf %26, %27 : vector<2x1x1x256xf32>
    %29 = arith.mulf %24, %24 : vector<2x8x8x256xf32>
    %cst_64 = arith.constant dense<0.000000e+00> : vector<2x256xf32>
    %30 = vector.multi_reduction <add>, %29, %cst_64 [1, 2] : vector<2x8x8x256xf32> to vector<2x256xf32>
    %31 = vector.shape_cast %30 : vector<2x256xf32> to vector<2x1x1x256xf32>
    %cst_65 = arith.constant 6.400000e+01 : f32
    %32 = vector.broadcast %cst_65 : f32 to vector<2x1x1x256xf32>
    %33 = arith.divf %31, %32 : vector<2x1x1x256xf32>
    %34 = arith.mulf %28, %28 : vector<2x1x1x256xf32>
    %35 = arith.subf %33, %34 : vector<2x1x1x256xf32>
    %cst_66 = arith.constant 9.99999974E-6 : f32
    %36 = vector.broadcast %cst_66 : f32 to vector<2x1x1x256xf32>
    %37 = arith.addf %35, %36 : vector<2x1x1x256xf32>
    %38 = math.rsqrt %37 : vector<2x1x1x256xf32>
    %39 = vector.broadcast %38 : vector<2x1x1x256xf32> to vector<2x8x8x256xf32>
    %40 = arith.mulf %24, %39 : vector<2x8x8x256xf32>
    %41 = arith.mulf %28, %38 : vector<2x1x1x256xf32>
    %42 = vector.broadcast %41 : vector<2x1x1x256xf32> to vector<2x8x8x256xf32>
    %43 = arith.subf %40, %42 : vector<2x8x8x256xf32>
    %cst_67 = arith.constant 0.000000e+00 : f32
    %44 = vector.broadcast %cst_67 : f32 to vector<2x8x8x256xf32>
    %45 = arith.maximumf %43, %44 : vector<2x8x8x256xf32>
    %46 = arith.truncf %45 : vector<2x8x8x256xf32> to vector<2x8x8x256xbf16>
    %c0_68 = arith.constant 0 : index
    %c1_69 = arith.constant 1 : index
    %c1_70 = arith.constant 1 : index
    %c0_71 = arith.constant 0 : index
    %47 = vector.load %arg5[%c0_68, %c1_69, %c1_70, %c0_71] : memref<2x10x10x256xbf16, #tpu.memory_space<vmem>>, vector<2x8x8x256xbf16>
    tpu.vector_store %arg5[%c0_68, %c1_69, %c1_70, %c0_71], %46 {strides = array<i32>} : memref<2x10x10x256xbf16, #tpu.memory_space<vmem>>, vector<2x8x8x256xbf16>,
    %c0_72 = arith.constant 0 : index
    %c0_73 = arith.constant 0 : index
    %c0_74 = arith.constant 0 : index
    %c0_75 = arith.constant 0 : index
    %48 = vector.load %arg5[%c0_72, %c0_73, %c0_74, %c0_75] : memref<2x10x10x256xbf16, #tpu.memory_space<vmem>>, vector<2x8x8x256xbf16>
    %c0_76 = arith.constant 0 : index
    %c0_77 = arith.constant 0 : index
    %c1_78 = arith.constant 1 : index
    %c0_79 = arith.constant 0 : index
    %49 = vector.load %arg5[%c0_76, %c0_77, %c1_78, %c0_79] : memref<2x10x10x256xbf16, #tpu.memory_space<vmem>>, vector<2x8x8x256xbf16>
    %c0_80 = arith.constant 0 : index
    %c0_81 = arith.constant 0 : index
    %c2_82 = arith.constant 2 : index
    %c0_83 = arith.constant 0 : index
    %50 = vector.load %arg5[%c0_80, %c0_81, %c2_82, %c0_83] : memref<2x10x10x256xbf16, #tpu.memory_space<vmem>>, vector<2x8x8x256xbf16>
    %c0_84 = arith.constant 0 : index
    %c1_85 = arith.constant 1 : index
    %c0_86 = arith.constant 0 : index
    %c0_87 = arith.constant 0 : index
    %51 = vector.load %arg5[%c0_84, %c1_85, %c0_86, %c0_87] : memref<2x10x10x256xbf16, #tpu.memory_space<vmem>>, vector<2x8x8x256xbf16>
    %c0_88 = arith.constant 0 : index
    %c1_89 = arith.constant 1 : index
    %c1_90 = arith.constant 1 : index
    %c0_91 = arith.constant 0 : index
    %52 = vector.load %arg5[%c0_88, %c1_89, %c1_90, %c0_91] : memref<2x10x10x256xbf16, #tpu.memory_space<vmem>>, vector<2x8x8x256xbf16>
    %c0_92 = arith.constant 0 : index
    %c1_93 = arith.constant 1 : index
    %c2_94 = arith.constant 2 : index
    %c0_95 = arith.constant 0 : index
    %53 = vector.load %arg5[%c0_92, %c1_93, %c2_94, %c0_95] : memref<2x10x10x256xbf16, #tpu.memory_space<vmem>>, vector<2x8x8x256xbf16>
    %c0_96 = arith.constant 0 : index
    %c2_97 = arith.constant 2 : index
    %c0_98 = arith.constant 0 : index
    %c0_99 = arith.constant 0 : index
    %54 = vector.load %arg5[%c0_96, %c2_97, %c0_98, %c0_99] : memref<2x10x10x256xbf16, #tpu.memory_space<vmem>>, vector<2x8x8x256xbf16>
    %c0_100 = arith.constant 0 : index
    %c2_101 = arith.constant 2 : index
    %c1_102 = arith.constant 1 : index
    %c0_103 = arith.constant 0 : index
    %55 = vector.load %arg5[%c0_100, %c2_101, %c1_102, %c0_103] : memref<2x10x10x256xbf16, #tpu.memory_space<vmem>>, vector<2x8x8x256xbf16>
    %c0_104 = arith.constant 0 : index
    %c2_105 = arith.constant 2 : index
    %c2_106 = arith.constant 2 : index
    %c0_107 = arith.constant 0 : index
    %56 = vector.load %arg5[%c0_104, %c2_105, %c2_106, %c0_107] : memref<2x10x10x256xbf16, #tpu.memory_space<vmem>>, vector<2x8x8x256xbf16>
    %57 = tpu.concatenate %48, %49, %50, %51, %52, %53, %54, %55, %56 in 3 : vector<2x8x8x256xbf16>, vector<2x8x8x256xbf16>, vector<2x8x8x256xbf16>, vector<2x8x8x256xbf16>, vector<2x8x8x256xbf16>, vector<2x8x8x256xbf16>, vector<2x8x8x256xbf16>, vector<2x8x8x256xbf16>, vector<2x8x8x256xbf16> -> vector<2x8x8x2304xbf16>
    %58 = vector.shape_cast %57 : vector<2x8x8x2304xbf16> to vector<128x2304xbf16>
    %c0_108 = arith.constant 0 : index
    %c0_109 = arith.constant 0 : index
    %59 = vector.load %arg3[%c0_108, %c0_109] : memref<2304x256xbf16, #tpu.memory_space<vmem>>, vector<2304x256xbf16>
    %cst_110 = arith.constant dense<0.000000e+00> : vector<128x256xf32>
    %60 = tpu.matmul %58, %59, %cst_110 {dimension_numbers = #tpu.dot_dimension_numbers<[1], [0], [0], [1], [0, 0, 1, 1], [], []>} : vector<128x2304xbf16>, vector<2304x256xbf16>, vector<128x256xf32> -> vector<128x256xf32>
    %61 = vector.shape_cast %60 : vector<128x256xf32> to vector<2x8x8x256xf32>
    %cst_111 = arith.constant dense<0.000000e+00> : vector<2x256xf32>
    %62 = vector.multi_reduction <add>, %61, %cst_111 [1, 2] : vector<2x8x8x256xf32> to vector<2x256xf32>
    %63 = vector.shape_cast %62 : vector<2x256xf32> to vector<2x1x1x256xf32>
    %cst_112 = arith.constant 6.400000e+01 : f32
    %64 = vector.broadcast %cst_112 : f32 to vector<2x1x1x256xf32>
    %65 = arith.divf %63, %64 : vector<2x1x1x256xf32>
    %66 = arith.mulf %61, %61 : vector<2x8x8x256xf32>
    %cst_113 = arith.constant dense<0.000000e+00> : vector<2x256xf32>
    %67 = vector.multi_reduction <add>, %66, %cst_113 [1, 2] : vector<2x8x8x256xf32> to vector<2x256xf32>
    %68 = vector.shape_cast %67 : vector<2x256xf32> to vector<2x1x1x256xf32>
    %cst_114 = arith.constant 6.400000e+01 : f32
    %69 = vector.broadcast %cst_114 : f32 to vector<2x1x1x256xf32>
    %70 = arith.divf %68, %69 : vector<2x1x1x256xf32>
    %71 = arith.mulf %65, %65 : vector<2x1x1x256xf32>
    %72 = arith.subf %70, %71 : vector<2x1x1x256xf32>
    %cst_115 = arith.constant 9.99999974E-6 : f32
    %73 = vector.broadcast %cst_115 : f32 to vector<2x1x1x256xf32>
    %74 = arith.addf %72, %73 : vector<2x1x1x256xf32>
    %75 = math.rsqrt %74 : vector<2x1x1x256xf32>
    %76 = vector.broadcast %75 : vector<2x1x1x256xf32> to vector<2x8x8x256xf32>
    %77 = arith.mulf %61, %76 : vector<2x8x8x256xf32>
    %78 = arith.mulf %65, %75 : vector<2x1x1x256xf32>
    %79 = vector.broadcast %78 : vector<2x1x1x256xf32> to vector<2x8x8x256xf32>
    %80 = arith.subf %77, %79 : vector<2x8x8x256xf32>
    %c0_116 = arith.constant 0 : index
    %c0_117 = arith.constant 0 : index
    %c0_118 = arith.constant 0 : index
    %c0_119 = arith.constant 0 : index
    %81 = vector.load %arg1[%c0_116, %c0_117, %c0_118, %c0_119] : memref<2x8x8x256xf32, #tpu.memory_space<vmem>>, vector<2x8x8x256xf32>
    %82 = arith.addf %80, %81 : vector<2x8x8x256xf32>
    %c0_120 = arith.constant 0 : index
    %c0_121 = arith.constant 0 : index
    %c0_122 = arith.constant 0 : index
    %c0_123 = arith.constant 0 : index
    %83 = vector.load %arg4[%c0_120, %c0_121, %c0_122, %c0_123] : memref<2x8x8x256xf32, #tpu.memory_space<vmem>>, vector<2x8x8x256xf32>
    tpu.vector_store %arg4[%c0_120, %c0_121, %c0_122, %c0_123], %82 {strides = array<i32>} : memref<2x8x8x256xf32, #tpu.memory_space<vmem>>, vector<2x8x8x256xf32>,
    return
  }
  func.func @transform_0(%arg0: i32) -> (i32, i32, i32, i32) {
    %c0_i32 = arith.constant 0 : i32
    %c0_i32_0 = arith.constant 0 : i32
    %c0_i32_1 = arith.constant 0 : i32
    %c0_i32_2 = arith.constant 0 : i32
    return %arg0, %c0_i32, %c0_i32_0, %c0_i32_1 : i32, i32, i32, i32
  }
  func.func @transform_1(%arg0: i32) -> (i32, i32) {
    %c0_i32 = arith.constant 0 : i32
    %c0_i32_0 = arith.constant 0 : i32
    %c0_i32_1 = arith.constant 0 : i32
    return %c0_i32, %c0_i32_0 : i32, i32
  }
  func.func @transform_2(%arg0: i32) -> (i32, i32) {
    %c0_i32 = arith.constant 0 : i32
    %c0_i32_0 = arith.constant 0 : i32
    %c0_i32_1 = arith.constant 0 : i32
    return %c0_i32, %c0_i32_0 : i32, i32
  }
  func.func @transform_3(%arg0: i32) -> (i32, i32, i32, i32) {
    %c0_i32 = arith.constant 0 : i32
    %c0_i32_0 = arith.constant 0 : i32
    %c0_i32_1 = arith.constant 0 : i32
    %c0_i32_2 = arith.constant 0 : i32
    return %arg0, %c0_i32, %c0_i32_0, %c0_i32_1 : i32, i32, i32, i32
  }
}

</mosaic_0001>

<llo_original>
// kernel: tpu_custom_call.1
$region0: #{tpu_custom_call.1}
  #allocation0 [shape = 'u32[]', space=smem, size = 0x4, offset = 0x4, fixed_abs, tag = 'smem constant byte address 0x4 - core index']
  #allocation1 [shape = 'u32[144,128]{1,0:T(1,128)}', space=vmem, size = 0x12000, scoped, tag = 'internal scratch']
  #allocation2 [shape = 'bf16[2,10,10,256]{3,2,1,0:T(8,128)(2,1)}', space=vmem, size = 0x28000, scoped, tag = 'scratch operand']
  %s0 = inlined_call_operand.hbm [shape: f32[2,8,8,256], index: 0, kind: input, shape index: {}]
  %s1 = inlined_call_operand.hbm [shape: bf16[2304,256], index: 1, kind: input, shape index: {}]
  %s2 = inlined_call_operand.hbm [shape: bf16[2304,256], index: 2, kind: input, shape index: {}]
  %s3 = inlined_call_operand.hbm [shape: f32[2,8,8,256], index: 3, kind: output, shape index: {}]
  %s4 = sld [smem:[#allocation0]]
  $region34: #{tpu_custom_call.1} parent=0
    _
  %s6 = ssub.s32 1, %s4
  %s7 = scalar_select 0, %s6, %s4
  $region1: #{tpu_custom_call.1} parent=0
    #allocation3 [shape = 'u8[131072]{0}', space=vmem, size = 0x20000, scoped, tag = 'input window, operand 0, single buffered']
    #allocation4 [shape = 's32[1]{0}', space=sflag, size = 0x4, scoped, tag = 'scoped memory for tpu_custom_call.1']
    #allocation5 [shape = 's32[1]{0}', space=sflag, size = 0x4, scoped, tag = 'scoped memory for tpu_custom_call.1']
    #allocation6 [shape = 'u8[1179648]{0}', space=vmem, size = 0x120000, scoped, tag = 'input window, operand 1, single buffered']
    #allocation7 [shape = 's32[1]{0}', space=sflag, size = 0x4, scoped, tag = 'scoped memory for tpu_custom_call.1']
    #allocation8 [shape = 'u8[1179648]{0}', space=vmem, size = 0x120000, scoped, tag = 'input window, operand 2, single buffered']
    #allocation9 [shape = 'u8[131072]{0}', space=vmem, size = 0x20000, scoped, tag = 'output window, operand 0, single buffered']
    %8 = vsyncpa [#allocation4], 0
    %9 = vsyncpa [#allocation7], 0
    %10 = vsyncpa [#allocation5], 0
    // Predicated region
    $region2: #{tpu_custom_call.1} parent=1 // pred_check
      _
    $region3: #{tpu_custom_call.1} parent=1 // pred_check_branch
      %12 = sbr.rel (0) target = $region5
    $region4: #{tpu_custom_call.1} parent=1 // pred_region
      %s14 = ssub.s32 4096, 4096
      %15 = vsyncadd [#allocation4], %s14
      %s16 = sshll.u32 [#allocation3], 4
      %s17 = int_to_ptr.vmem [resolvable:$true] %s16
      %22 = dma.hbm_to_vmem [thread:$0]  %s0, 4096, %s17, [#allocation4], 256, 256, 16
    $region5: #{tpu_custom_call.1} parent=1 // pred_fallthru
      _
    // Predicated region
    $region6: #{tpu_custom_call.1} parent=1 // pred_check
      _
    $region7: #{tpu_custom_call.1} parent=1 // pred_check_branch
      %24 = sbr.rel (0) target = $region9
    $region8: #{tpu_custom_call.1} parent=1 // pred_region
      %s26 = ssub.s32 36864, 36864
      %27 = vsyncadd [#allocation7], %s26
      %s28 = sshll.u32 [#allocation6], 4
      %s29 = int_to_ptr.vmem [resolvable:$true] %s28
      %34 = dma.hbm_to_vmem [thread:$0]  %s1, 36864, %s29, [#allocation7], 128, 128, 8
    $region9: #{tpu_custom_call.1} parent=1 // pred_fallthru
      _
    // Predicated region
    $region10: #{tpu_custom_call.1} parent=1 // pred_check
      _
    $region11: #{tpu_custom_call.1} parent=1 // pred_check_branch
      %36 = sbr.rel (0) target = $region13
    $region12: #{tpu_custom_call.1} parent=1 // pred_region
      %s38 = ssub.s32 36864, 36864
      %39 = vsyncadd [#allocation7], %s38
      %s40 = sshll.u32 [#allocation8], 4
      %s41 = int_to_ptr.vmem [resolvable:$true] %s40
      %46 = dma.hbm_to_vmem [thread:$0]  %s2, 36864, %s41, [#allocation7], 128, 128, 8
    $region13: #{tpu_custom_call.1} parent=1 // pred_fallthru
      _
    // Predicated region
    $region14: #{tpu_custom_call.1} parent=1 // pred_check
      _
    $region15: #{tpu_custom_call.1} parent=1 // pred_check_branch
      %48 = sbr.rel (0) target = $region17
    $region16: #{tpu_custom_call.1} parent=1 // pred_region
      %49 = dma.done [#allocation4], 4096
    $region17: #{tpu_custom_call.1} parent=1 // pred_fallthru
      _
    // Predicated region
    $region18: #{tpu_custom_call.1} parent=1 // pred_check
      _
    $region19: #{tpu_custom_call.1} parent=1 // pred_check_branch
      %51 = sbr.rel (0) target = $region21
    $region20: #{tpu_custom_call.1} parent=1 // pred_region
      %52 = dma.done [#allocation7], 36864
    $region21: #{tpu_custom_call.1} parent=1 // pred_fallthru
      _
    // Predicated region
    $region22: #{tpu_custom_call.1} parent=1 // pred_check
      _
    $region23: #{tpu_custom_call.1} parent=1 // pred_check_branch
      %54 = sbr.rel (0) target = $region25
    $region24: #{tpu_custom_call.1} parent=1 // pred_region
      %55 = dma.done [#allocation7], 36864
    $region25: #{tpu_custom_call.1} parent=1 // pred_fallthru
      _
    %57 = vst [vmem:[#allocation2] sm:$0xff] 0
    %58 = vst [vmem:[#allocation2 + $0x8] sm:$0x11] 0
    %59 = vst [vmem:[#allocation2 + $0xa0] sm:$0xff] 0
    %60 = vst [vmem:[#allocation2 + $0xa8] sm:$0x11] 0
    %s61 = scalar_lea.vmem [#allocation2], 144
    %62 = vst [vmem:[%s61] sm:$0xff] 0
    %63 = vst [vmem:[%s61 + $0x8] sm:$0x11] 0
    %64 = vst [vmem:[%s61 + $0xa0] sm:$0xff] 0
    %65 = vst [vmem:[%s61 + $0xa8] sm:$0x11] 0
    %vm66 = vcmask 1040384
    %vm67 = vsmask.f32 256
    %vm68 = vmand %vm66, %vm67
    %vm69 = vcmask 1044484
    %vm70 = vsmask.f32 4352
    %vm71 = vmand %vm69, %vm70
    %vm72 = vmor %vm71, %vm68
    %v73 = vld [vmem:[#allocation2] sm:$0x11]
    %v74 = vsel %vm72, 0, %v73
    %75 = vst [vmem:[#allocation2] sm:$0x11] %v74
    %v76 = vld [vmem:[#allocation2 + $0x10] sm:$0x11]
    %v77 = vsel %vm72, 0, %v76
    %78 = vst [vmem:[#allocation2 + $0x10] sm:$0x11] %v77
    %v79 = vld [vmem:[#allocation2 + $0x20] sm:$0x11]
    %v80 = vsel %vm72, 0, %v79
    %81 = vst [vmem:[#allocation2 + $0x20] sm:$0x11] %v80
    %v82 = vld [vmem:[#allocation2 + $0x30] sm:$0x11]
    %v83 = vsel %vm72, 0, %v82
    %84 = vst [vmem:[#allocation2 + $0x30] sm:$0x11] %v83
    %v85 = vld [vmem:[#allocation2 + $0x40] sm:$0x11]
    %v86 = vsel %vm72, 0, %v85
    %87 = vst [vmem:[#allocation2 + $0x40] sm:$0x11] %v86
    %v88 = vld [vmem:[#allocation2 + $0x50] sm:$0x11]
    %v89 = vsel %vm72, 0, %v88
    %90 = vst [vmem:[#allocation2 + $0x50] sm:$0x11] %v89
    %v91 = vld [vmem:[#allocation2 + $0x60] sm:$0x11]
    %v92 = vsel %vm72, 0, %v91
    %93 = vst [vmem:[#allocation2 + $0x60] sm:$0x11] %v92
    %v94 = vld [vmem:[#allocation2 + $0x70] sm:$0x11]
    %v95 = vsel %vm72, 0, %v94
    %96 = vst [vmem:[#allocation2 + $0x70] sm:$0x11] %v95
    %v97 = vld [vmem:[#allocation2 + $0x80] sm:$0x11]
    %v98 = vsel %vm72, 0, %v97
    %99 = vst [vmem:[#allocation2 + $0x80] sm:$0x11] %v98
    %v100 = vld [vmem:[#allocation2 + $0x90] sm:$0x11]
    %v101 = vsel %vm72, 0, %v100
    %102 = vst [vmem:[#allocation2 + $0x90] sm:$0x11] %v101
    %v103 = vld [vmem:[#allocation2 + $0xa0] sm:$0x11]
    %v104 = vsel %vm72, 0, %v103
    %105 = vst [vmem:[#allocation2 + $0xa0] sm:$0x11] %v104
    %v106 = vld [vmem:[#allocation2 + $0xb0] sm:$0x11]
    %v107 = vsel %vm72, 0, %v106
    %108 = vst [vmem:[#allocation2 + $0xb0] sm:$0x11] %v107
    %v109 = vld [vmem:[#allocation2 + $0xc0] sm:$0x11]
    %v110 = vsel %vm72, 0, %v109
    %111 = vst [vmem:[#allocation2 + $0xc0] sm:$0x11] %v110
    %v112 = vld [vmem:[#allocation2 + $0xd0] sm:$0x11]
    %v113 = vsel %vm72, 0, %v112
    %114 = vst [vmem:[#allocation2 + $0xd0] sm:$0x11] %v113
    %v115 = vld [vmem:[#allocation2 + $0xe0] sm:$0x11]
    %v116 = vsel %vm72, 0, %v115
    %117 = vst [vmem:[#allocation2 + $0xe0] sm:$0x11] %v116
    %v118 = vld [vmem:[#allocation2 + $0xf0] sm:$0x11]
    %v119 = vsel %vm72, 0, %v118
    %120 = vst [vmem:[#allocation2 + $0xf0] sm:$0x11] %v119
    %v121 = vld [vmem:[#allocation2 + $0x100] sm:$0x11]
    %v122 = vsel %vm72, 0, %v121
    %123 = vst [vmem:[#allocation2 + $0x100] sm:$0x11] %v122
    %v124 = vld [vmem:[#allocation2 + $0x110] sm:$0x11]
    %v125 = vsel %vm72, 0, %v124
    %126 = vst [vmem:[#allocation2 + $0x110] sm:$0x11] %v125
    %v127 = vld [vmem:[#allocation2 + $0x120] sm:$0x11]
    %v128 = vsel %vm72, 0, %v127
    %129 = vst [vmem:[#allocation2 + $0x120] sm:$0x11] %v128
    %v130 = vld [vmem:[#allocation2 + $0x130] sm:$0x11]
    %v131 = vsel %vm72, 0, %v130
    %132 = vst [vmem:[#allocation2 + $0x130] sm:$0x11] %v131
    %vm133 = vsmask.f32 7938
    %vm134 = vmand %vm66, %vm133
    %vm135 = vsmask.f32 7954
    %vm136 = vmand %vm69, %vm135
    %vm137 = vmor %vm136, %vm134
    %v138 = vld [vmem:[#allocation2 + $0x8] sm:$0x11]
    %v139 = vsel %vm137, 0, %v138
    %140 = vst [vmem:[#allocation2 + $0x8] sm:$0x11] %v139
    %v141 = vld [vmem:[#allocation2 + $0x18] sm:$0x11]
    %v142 = vsel %vm137, 0, %v141
    %143 = vst [vmem:[#allocation2 + $0x18] sm:$0x11] %v142
    %v144 = vld [vmem:[#allocation2 + $0x28] sm:$0x11]
    %v145 = vsel %vm137, 0, %v144
    %146 = vst [vmem:[#allocation2 + $0x28] sm:$0x11] %v145
    %v147 = vld [vmem:[#allocation2 + $0x38] sm:$0x11]
    %v148 = vsel %vm137, 0, %v147
    %149 = vst [vmem:[#allocation2 + $0x38] sm:$0x11] %v148
    %v150 = vld [vmem:[#allocation2 + $0x48] sm:$0x11]
    %v151 = vsel %vm137, 0, %v150
    %152 = vst [vmem:[#allocation2 + $0x48] sm:$0x11] %v151
    %v153 = vld [vmem:[#allocation2 + $0x58] sm:$0x11]
    %v154 = vsel %vm137, 0, %v153
    %155 = vst [vmem:[#allocation2 + $0x58] sm:$0x11] %v154
    %v156 = vld [vmem:[#allocation2 + $0x68] sm:$0x11]
    %v157 = vsel %vm137, 0, %v156
    %158 = vst [vmem:[#allocation2 + $0x68] sm:$0x11] %v157
    %v159 = vld [vmem:[#allocation2 + $0x78] sm:$0x11]
    %v160 = vsel %vm137, 0, %v159
    %161 = vst [vmem:[#allocation2 + $0x78] sm:$0x11] %v160
    %v162 = vld [vmem:[#allocation2 + $0x88] sm:$0x11]
    %v163 = vsel %vm137, 0, %v162
    %164 = vst [vmem:[#allocation2 + $0x88] sm:$0x11] %v163
    %v165 = vld [vmem:[#allocation2 + $0x98] sm:$0x11]
    %v166 = vsel %vm137, 0, %v165
    %167 = vst [vmem:[#allocation2 + $0x98] sm:$0x11] %v166
    %v168 = vld [vmem:[#allocation2 + $0xa8] sm:$0x11]
    %v169 = vsel %vm137, 0, %v168
    %170 = vst [vmem:[#allocation2 + $0xa8] sm:$0x11] %v169
    %v171 = vld [vmem:[#allocation2 + $0xb8] sm:$0x11]
    %v172 = vsel %vm137, 0, %v171
    %173 = vst [vmem:[#allocation2 + $0xb8] sm:$0x11] %v172
    %v174 = vld [vmem:[#allocation2 + $0xc8] sm:$0x11]
    %v175 = vsel %vm137, 0, %v174
    %176 = vst [vmem:[#allocation2 + $0xc8] sm:$0x11] %v175
    %v177 = vld [vmem:[#allocation2 + $0xd8] sm:$0x11]
    %v178 = vsel %vm137, 0, %v177
    %179 = vst [vmem:[#allocation2 + $0xd8] sm:$0x11] %v178
    %v180 = vld [vmem:[#allocation2 + $0xe8] sm:$0x11]
    %v181 = vsel %vm137, 0, %v180
    %182 = vst [vmem:[#allocation2 + $0xe8] sm:$0x11] %v181
    %v183 = vld [vmem:[#allocation2 + $0xf8] sm:$0x11]
    %v184 = vsel %vm137, 0, %v183
    %185 = vst [vmem:[#allocation2 + $0xf8] sm:$0x11] %v184
    %v186 = vld [vmem:[#allocation2 + $0x108] sm:$0x11]
    %v187 = vsel %vm137, 0, %v186
    %188 = vst [vmem:[#allocation2 + $0x108] sm:$0x11] %v187
    %v189 = vld [vmem:[#allocation2 + $0x118] sm:$0x11]
    %v190 = vsel %vm137, 0, %v189
    %191 = vst [vmem:[#allocation2 + $0x118] sm:$0x11] %v190
    %v192 = vld [vmem:[#allocation2 + $0x128] sm:$0x11]
    %v193 = vsel %vm137, 0, %v192
    %194 = vst [vmem:[#allocation2 + $0x128] sm:$0x11] %v193
    %v195 = vld [vmem:[#allocation2 + $0x138] sm:$0x11]
    %v196 = vsel %vm137, 0, %v195
    %197 = vst [vmem:[#allocation2 + $0x138] sm:$0x11] %v196
    %v198 = vld [vmem:[#allocation3] sm:$0xff]
    %v199 = vld [vmem:[#allocation3 + $0x8] sm:$0xff]
    %v200 = vld [vmem:[#allocation3 + $0x10] sm:$0xff]
    %v201 = vld [vmem:[#allocation3 + $0x18] sm:$0xff]
    %v202 = vld [vmem:[#allocation3 + $0x20] sm:$0xff]
    %v203 = vld [vmem:[#allocation3 + $0x28] sm:$0xff]
    %v204 = vld [vmem:[#allocation3 + $0x30] sm:$0xff]
    %v205 = vld [vmem:[#allocation3 + $0x38] sm:$0xff]
    %v206 = vld [vmem:[#allocation3 + $0x40] sm:$0xff]
    %v207 = vld [vmem:[#allocation3 + $0x48] sm:$0xff]
    %v208 = vld [vmem:[#allocation3 + $0x50] sm:$0xff]
    %v209 = vld [vmem:[#allocation3 + $0x58] sm:$0xff]
    %v210 = vld [vmem:[#allocation3 + $0x60] sm:$0xff]
    %v211 = vld [vmem:[#allocation3 + $0x68] sm:$0xff]
    %v212 = vld [vmem:[#allocation3 + $0x70] sm:$0xff]
    %v213 = vld [vmem:[#allocation3 + $0x78] sm:$0xff]
    %v214 = vld [vmem:[#allocation3 + $0x80] sm:$0xff]
    %v215 = vld [vmem:[#allocation3 + $0x88] sm:$0xff]
    %v216 = vld [vmem:[#allocation3 + $0x90] sm:$0xff]
    %v217 = vld [vmem:[#allocation3 + $0x98] sm:$0xff]
    %v218 = vld [vmem:[#allocation3 + $0xa0] sm:$0xff]
    %v219 = vld [vmem:[#allocation3 + $0xa8] sm:$0xff]
    %v220 = vld [vmem:[#allocation3 + $0xb0] sm:$0xff]
    %v221 = vld [vmem:[#allocation3 + $0xb8] sm:$0xff]
    %v222 = vld [vmem:[#allocation3 + $0xc0] sm:$0xff]
    %v223 = vld [vmem:[#allocation3 + $0xc8] sm:$0xff]
    %v224 = vld [vmem:[#allocation3 + $0xd0] sm:$0xff]
    %v225 = vld [vmem:[#allocation3 + $0xd8] sm:$0xff]
    %v226 = vld [vmem:[#allocation3 + $0xe0] sm:$0xff]
    %v227 = vld [vmem:[#allocation3 + $0xe8] sm:$0xff]
    %v228 = vld [vmem:[#allocation3 + $0xf0] sm:$0xff]
    %v229 = vld [vmem:[#allocation3 + $0xf8] sm:$0xff]
    %v230 = vpack.c.bf16 %v198, %v198
    %v231 = vpack.c.bf16 %v199, %v199
    %v232 = vpack.c.bf16 %v200, %v200
    %v233 = vpack.c.bf16 %v201, %v201
    %v234 = vpack.c.bf16 %v202, %v202
    %v235 = vpack.c.bf16 %v203, %v203
    %v236 = vpack.c.bf16 %v204, %v204
    %v237 = vpack.c.bf16 %v205, %v205
    %v238 = vpack.c.bf16 %v206, %v206
    %v239 = vpack.c.bf16 %v207, %v207
    %v240 = vpack.c.bf16 %v208, %v208
    %v241 = vpack.c.bf16 %v209, %v209
    %v242 = vpack.c.bf16 %v210, %v210
    %v243 = vpack.c.bf16 %v211, %v211
    %v244 = vpack.c.bf16 %v212, %v212
    %v245 = vpack.c.bf16 %v213, %v213
    %v246 = vpack.c.bf16 %v214, %v214
    %v247 = vpack.c.bf16 %v215, %v215
    %v248 = vpack.c.bf16 %v216, %v216
    %v249 = vpack.c.bf16 %v217, %v217
    %v250 = vpack.c.bf16 %v218, %v218
    %v251 = vpack.c.bf16 %v219, %v219
    %v252 = vpack.c.bf16 %v220, %v220
    %v253 = vpack.c.bf16 %v221, %v221
    %v254 = vpack.c.bf16 %v222, %v222
    %v255 = vpack.c.bf16 %v223, %v223
    %v256 = vpack.c.bf16 %v224, %v224
    %v257 = vpack.c.bf16 %v225, %v225
    %v258 = vpack.c.bf16 %v226, %v226
    %v259 = vpack.c.bf16 %v227, %v227
    %v260 = vpack.c.bf16 %v228, %v228
    %v261 = vpack.c.bf16 %v229, %v229
    %v294 = vunpack.c.l.b16 %v230
    %v295 = vunpack.c.l.b16 %v231
    %v296 = vunpack.c.l.b16 %v232
    %v297 = vunpack.c.l.b16 %v233
    %v298 = vunpack.c.l.b16 %v234
    %v299 = vunpack.c.l.b16 %v235
    %v300 = vunpack.c.l.b16 %v236
    %v301 = vunpack.c.l.b16 %v237
    %v302 = vunpack.c.l.b16 %v238
    %v303 = vunpack.c.l.b16 %v239
    %v304 = vunpack.c.l.b16 %v240
    %v305 = vunpack.c.l.b16 %v241
    %v306 = vunpack.c.l.b16 %v242
    %v307 = vunpack.c.l.b16 %v243
    %v308 = vunpack.c.l.b16 %v244
    %v309 = vunpack.c.l.b16 %v245
    %v310 = vunpack.c.l.b16 %v246
    %v311 = vunpack.c.l.b16 %v247
    %v312 = vunpack.c.l.b16 %v248
    %v313 = vunpack.c.l.b16 %v249
    %v314 = vunpack.c.l.b16 %v250
    %v315 = vunpack.c.l.b16 %v251
    %v316 = vunpack.c.l.b16 %v252
    %v317 = vunpack.c.l.b16 %v253
    %v318 = vunpack.c.l.b16 %v254
    %v319 = vunpack.c.l.b16 %v255
    %v320 = vunpack.c.l.b16 %v256
    %v321 = vunpack.c.l.b16 %v257
    %v322 = vunpack.c.l.b16 %v258
    %v323 = vunpack.c.l.b16 %v259
    %v324 = vunpack.c.l.b16 %v260
    %v325 = vunpack.c.l.b16 %v261
    %v326 = vpack.c.b16 %v295, %v294
    %v327 = vpack.c.b16 %v297, %v296
    %v328 = vpack.c.b16 %v299, %v298
    %v329 = vpack.c.b16 %v301, %v300
    %v330 = vpack.c.b16 %v303, %v302
    %v331 = vpack.c.b16 %v305, %v304
    %v332 = vpack.c.b16 %v307, %v306
    %v333 = vpack.c.b16 %v309, %v308
    %v334 = vpack.c.b16 %v311, %v310
    %v335 = vpack.c.b16 %v313, %v312
    %v336 = vpack.c.b16 %v315, %v314
    %v337 = vpack.c.b16 %v317, %v316
    %v338 = vpack.c.b16 %v319, %v318
    %v339 = vpack.c.b16 %v321, %v320
    %v340 = vpack.c.b16 %v323, %v322
    %v341 = vpack.c.b16 %v325, %v324
    %v343 = vshrl.u32 %v326, 16
    %v345 = vrot.slane %v343, 7
    %v346 = vshll.u32 %v326, 16
    %v348 = vor.u32 %v345, %v346
    %v349 = vrot.slane %v345, 4
    %v351 = vshrl.u32 %v327, 16
    %v353 = vrot.slane %v351, 7
    %v354 = vshll.u32 %v327, 16
    %v356 = vor.u32 %v353, %v354
    %v357 = vrot.slane %v353, 4
    %v359 = vshrl.u32 %v328, 16
    %v361 = vrot.slane %v359, 7
    %v362 = vshll.u32 %v328, 16
    %v364 = vor.u32 %v361, %v362
    %v365 = vrot.slane %v361, 4
    %v367 = vshrl.u32 %v329, 16
    %v369 = vrot.slane %v367, 7
    %v370 = vshll.u32 %v329, 16
    %v372 = vor.u32 %v369, %v370
    %v373 = vrot.slane %v369, 4
    %v375 = vshrl.u32 %v330, 16
    %v377 = vrot.slane %v375, 7
    %v378 = vshll.u32 %v330, 16
    %v380 = vor.u32 %v377, %v378
    %v381 = vrot.slane %v377, 4
    %v383 = vshrl.u32 %v331, 16
    %v385 = vrot.slane %v383, 7
    %v386 = vshll.u32 %v331, 16
    %v388 = vor.u32 %v385, %v386
    %v389 = vrot.slane %v385, 4
    %v391 = vshrl.u32 %v332, 16
    %v393 = vrot.slane %v391, 7
    %v394 = vshll.u32 %v332, 16
    %v396 = vor.u32 %v393, %v394
    %v397 = vrot.slane %v393, 4
    %v399 = vshrl.u32 %v333, 16
    %v401 = vrot.slane %v399, 7
    %v402 = vshll.u32 %v333, 16
    %v404 = vor.u32 %v401, %v402
    %v405 = vrot.slane %v401, 4
    %v407 = vshrl.u32 %v334, 16
    %v409 = vrot.slane %v407, 7
    %v410 = vshll.u32 %v334, 16
    %v412 = vor.u32 %v409, %v410
    %v413 = vrot.slane %v409, 4
    %v415 = vshrl.u32 %v335, 16
    %v417 = vrot.slane %v415, 7
    %v418 = vshll.u32 %v335, 16
    %v420 = vor.u32 %v417, %v418
    %v421 = vrot.slane %v417, 4
    %v423 = vshrl.u32 %v336, 16
    %v425 = vrot.slane %v423, 7
    %v426 = vshll.u32 %v336, 16
    %v428 = vor.u32 %v425, %v426
    %v429 = vrot.slane %v425, 4
    %v431 = vshrl.u32 %v337, 16
    %v433 = vrot.slane %v431, 7
    %v434 = vshll.u32 %v337, 16
    %v436 = vor.u32 %v433, %v434
    %v437 = vrot.slane %v433, 4
    %v439 = vshrl.u32 %v338, 16
    %v441 = vrot.slane %v439, 7
    %v442 = vshll.u32 %v338, 16
    %v444 = vor.u32 %v441, %v442
    %v445 = vrot.slane %v441, 4
    %v447 = vshrl.u32 %v339, 16
    %v449 = vrot.slane %v447, 7
    %v450 = vshll.u32 %v339, 16
    %v452 = vor.u32 %v449, %v450
    %v453 = vrot.slane %v449, 4
    %v455 = vshrl.u32 %v340, 16
    %v457 = vrot.slane %v455, 7
    %v458 = vshll.u32 %v340, 16
    %v460 = vor.u32 %v457, %v458
    %v461 = vrot.slane %v457, 4
    %v463 = vshrl.u32 %v341, 16
    %v465 = vrot.slane %v463, 7
    %v466 = vshll.u32 %v341, 16
    %v468 = vor.u32 %v465, %v466
    %v469 = vrot.slane %v465, 4
    %s502 = scalar_lea.vmem [#allocation2], 16
    %vm503 = vcmask 1043456
    %vm504 = vmand %vm503, %vm133
    %vm505 = vcmask 1047556
    %vm506 = vmand %vm505, %vm135
    %vm507 = vmor %vm506, %vm504
    %v508 = vld [vmem:[%s502] sm:$0xff]
    %v509 = vsel %vm507, %v348, %v508
    %510 = vst [vmem:[%s502] sm:$0xff] %v509
    %v511 = vld [vmem:[%s502 + $0x8] sm:$0x11]
    %v512 = vsel %vm72, %v349, %v511
    %513 = vst [vmem:[%s502 + $0x8] sm:$0x11] %v512
    %v514 = vld [vmem:[%s502 + $0x10] sm:$0xff]
    %v515 = vsel %vm507, %v356, %v514
    %516 = vst [vmem:[%s502 + $0x10] sm:$0xff] %v515
    %v517 = vld [vmem:[%s502 + $0x18] sm:$0x11]
    %v518 = vsel %vm72, %v357, %v517
    %519 = vst [vmem:[%s502 + $0x18] sm:$0x11] %v518
    %v520 = vld [vmem:[%s502 + $0x20] sm:$0xff]
    %v521 = vsel %vm507, %v364, %v520
    %522 = vst [vmem:[%s502 + $0x20] sm:$0xff] %v521
    %v523 = vld [vmem:[%s502 + $0x28] sm:$0x11]
    %v524 = vsel %vm72, %v365, %v523
    %525 = vst [vmem:[%s502 + $0x28] sm:$0x11] %v524
    %v526 = vld [vmem:[%s502 + $0x30] sm:$0xff]
    %v527 = vsel %vm507, %v372, %v526
    %528 = vst [vmem:[%s502 + $0x30] sm:$0xff] %v527
    %v529 = vld [vmem:[%s502 + $0x38] sm:$0x11]
    %v530 = vsel %vm72, %v373, %v529
    %531 = vst [vmem:[%s502 + $0x38] sm:$0x11] %v530
    %v532 = vld [vmem:[%s502 + $0x40] sm:$0xff]
    %v533 = vsel %vm507, %v380, %v532
    %534 = vst [vmem:[%s502 + $0x40] sm:$0xff] %v533
    %v535 = vld [vmem:[%s502 + $0x48] sm:$0x11]
    %v536 = vsel %vm72, %v381, %v535
    %537 = vst [vmem:[%s502 + $0x48] sm:$0x11] %v536
    %v538 = vld [vmem:[%s502 + $0x50] sm:$0xff]
    %v539 = vsel %vm507, %v388, %v538
    %540 = vst [vmem:[%s502 + $0x50] sm:$0xff] %v539
    %v541 = vld [vmem:[%s502 + $0x58] sm:$0x11]
    %v542 = vsel %vm72, %v389, %v541
    %543 = vst [vmem:[%s502 + $0x58] sm:$0x11] %v542
    %v544 = vld [vmem:[%s502 + $0x60] sm:$0xff]
    %v545 = vsel %vm507, %v396, %v544
    %546 = vst [vmem:[%s502 + $0x60] sm:$0xff] %v545
    %v547 = vld [vmem:[%s502 + $0x68] sm:$0x11]
    %v548 = vsel %vm72, %v397, %v547
    %549 = vst [vmem:[%s502 + $0x68] sm:$0x11] %v548
    %v550 = vld [vmem:[%s502 + $0x70] sm:$0xff]
    %v551 = vsel %vm507, %v404, %v550
    %552 = vst [vmem:[%s502 + $0x70] sm:$0xff] %v551
    %v553 = vld [vmem:[%s502 + $0x78] sm:$0x11]
    %v554 = vsel %vm72, %v405, %v553
    %555 = vst [vmem:[%s502 + $0x78] sm:$0x11] %v554
    %v556 = vld [vmem:[%s502 + $0xa0] sm:$0xff]
    %v557 = vsel %vm507, %v412, %v556
    %558 = vst [vmem:[%s502 + $0xa0] sm:$0xff] %v557
    %v559 = vld [vmem:[%s502 + $0xa8] sm:$0x11]
    %v560 = vsel %vm72, %v413, %v559
    %561 = vst [vmem:[%s502 + $0xa8] sm:$0x11] %v560
    %v562 = vld [vmem:[%s502 + $0xb0] sm:$0xff]
    %v563 = vsel %vm507, %v420, %v562
    %564 = vst [vmem:[%s502 + $0xb0] sm:$0xff] %v563
    %v565 = vld [vmem:[%s502 + $0xb8] sm:$0x11]
    %v566 = vsel %vm72, %v421, %v565
    %567 = vst [vmem:[%s502 + $0xb8] sm:$0x11] %v566
    %v568 = vld [vmem:[%s502 + $0xc0] sm:$0xff]
    %v569 = vsel %vm507, %v428, %v568
    %570 = vst [vmem:[%s502 + $0xc0] sm:$0xff] %v569
    %v571 = vld [vmem:[%s502 + $0xc8] sm:$0x11]
    %v572 = vsel %vm72, %v429, %v571
    %573 = vst [vmem:[%s502 + $0xc8] sm:$0x11] %v572
    %v574 = vld [vmem:[%s502 + $0xd0] sm:$0xff]
    %v575 = vsel %vm507, %v436, %v574
    %576 = vst [vmem:[%s502 + $0xd0] sm:$0xff] %v575
    %v577 = vld [vmem:[%s502 + $0xd8] sm:$0x11]
    %v578 = vsel %vm72, %v437, %v577
    %579 = vst [vmem:[%s502 + $0xd8] sm:$0x11] %v578
    %v580 = vld [vmem:[%s502 + $0xe0] sm:$0xff]
    %v581 = vsel %vm507, %v444, %v580
    %582 = vst [vmem:[%s502 + $0xe0] sm:$0xff] %v581
    %v583 = vld [vmem:[%s502 + $0xe8] sm:$0x11]
    %v584 = vsel %vm72, %v445, %v583
    %585 = vst [vmem:[%s502 + $0xe8] sm:$0x11] %v584
    %v586 = vld [vmem:[%s502 + $0xf0] sm:$0xff]
    %v587 = vsel %vm507, %v452, %v586
    %588 = vst [vmem:[%s502 + $0xf0] sm:$0xff] %v587
    %v589 = vld [vmem:[%s502 + $0xf8] sm:$0x11]
    %v590 = vsel %vm72, %v453, %v589
    %591 = vst [vmem:[%s502 + $0xf8] sm:$0x11] %v590
    %v592 = vld [vmem:[%s502 + $0x100] sm:$0xff]
    %v593 = vsel %vm507, %v460, %v592
    %594 = vst [vmem:[%s502 + $0x100] sm:$0xff] %v593
    %v595 = vld [vmem:[%s502 + $0x108] sm:$0x11]
    %v596 = vsel %vm72, %v461, %v595
    %597 = vst [vmem:[%s502 + $0x108] sm:$0x11] %v596
    %v598 = vld [vmem:[%s502 + $0x110] sm:$0xff]
    %v599 = vsel %vm507, %v468, %v598
    %600 = vst [vmem:[%s502 + $0x110] sm:$0xff] %v599
    %v601 = vld [vmem:[%s502 + $0x118] sm:$0x11]
    %v602 = vsel %vm72, %v469, %v601
    %603 = vst [vmem:[%s502 + $0x118] sm:$0x11] %v602
    %v604 = vld [vmem:[#allocation2] sm:$0xff]
    %v605 = vld [vmem:[#allocation2 + $0x10] sm:$0xff]
    %v606 = vld [vmem:[#allocation2 + $0x20] sm:$0xff]
    %v607 = vld [vmem:[#allocation2 + $0x30] sm:$0xff]
    %v608 = vld [vmem:[#allocation2 + $0x40] sm:$0xff]
    %v609 = vld [vmem:[#allocation2 + $0x50] sm:$0xff]
    %v610 = vld [vmem:[#allocation2 + $0x60] sm:$0xff]
    %v611 = vld [vmem:[#allocation2 + $0x70] sm:$0xff]
    %v612 = vld [vmem:[#allocation2 + $0xa0] sm:$0xff]
    %v613 = vld [vmem:[#allocation2 + $0xb0] sm:$0xff]
    %v614 = vld [vmem:[#allocation2 + $0xc0] sm:$0xff]
    %v615 = vld [vmem:[#allocation2 + $0xd0] sm:$0xff]
    %v616 = vld [vmem:[#allocation2 + $0xe0] sm:$0xff]
    %v617 = vld [vmem:[#allocation2 + $0xf0] sm:$0xff]
    %v618 = vld [vmem:[#allocation2 + $0x100] sm:$0xff]
    %v619 = vld [vmem:[#allocation2 + $0x110] sm:$0xff]
    %v620 = vld [vmem:[#allocation2 + $0x8] sm:$0x11]
    %v621 = vld [vmem:[#allocation2 + $0x18] sm:$0x11]
    %v622 = vld [vmem:[#allocation2 + $0x28] sm:$0x11]
    %v623 = vld [vmem:[#allocation2 + $0x38] sm:$0x11]
    %v624 = vld [vmem:[#allocation2 + $0x48] sm:$0x11]
    %v625 = vld [vmem:[#allocation2 + $0x58] sm:$0x11]
    %v626 = vld [vmem:[#allocation2 + $0x68] sm:$0x11]
    %v627 = vld [vmem:[#allocation2 + $0x78] sm:$0x11]
    %v628 = vld [vmem:[#allocation2 + $0xa8] sm:$0x11]
    %v629 = vld [vmem:[#allocation2 + $0xb8] sm:$0x11]
    %v630 = vld [vmem:[#allocation2 + $0xc8] sm:$0x11]
    %v631 = vld [vmem:[#allocation2 + $0xd8] sm:$0x11]
    %v632 = vld [vmem:[#allocation2 + $0xe8] sm:$0x11]
    %v633 = vld [vmem:[#allocation2 + $0xf8] sm:$0x11]
    %v634 = vld [vmem:[#allocation2 + $0x108] sm:$0x11]
    %v635 = vld [vmem:[#allocation2 + $0x118] sm:$0x11]
    %v636 = vld [vmem:[#allocation2] sm:$0xee]
    %v637 = vld [vmem:[#allocation2 + $0x10] sm:$0xee]
    %v638 = vld [vmem:[#allocation2 + $0x20] sm:$0xee]
    %v639 = vld [vmem:[#allocation2 + $0x30] sm:$0xee]
    %v640 = vld [vmem:[#allocation2 + $0x40] sm:$0xee]
    %v641 = vld [vmem:[#allocation2 + $0x50] sm:$0xee]
    %v642 = vld [vmem:[#allocation2 + $0x60] sm:$0xee]
    %v643 = vld [vmem:[#allocation2 + $0x70] sm:$0xee]
    %v644 = vld [vmem:[#allocation2 + $0xa0] sm:$0xee]
    %v645 = vld [vmem:[#allocation2 + $0xb0] sm:$0xee]
    %v646 = vld [vmem:[#allocation2 + $0xc0] sm:$0xee]
    %v647 = vld [vmem:[#allocation2 + $0xd0] sm:$0xee]
    %v648 = vld [vmem:[#allocation2 + $0xe0] sm:$0xee]
    %v649 = vld [vmem:[#allocation2 + $0xf0] sm:$0xee]
    %v650 = vld [vmem:[#allocation2 + $0x100] sm:$0xee]
    %v651 = vld [vmem:[#allocation2 + $0x110] sm:$0xee]
    %v652 = vld [vmem:[%s502] sm:$0xff]
    %v653 = vld [vmem:[%s502 + $0x10] sm:$0xff]
    %v654 = vld [vmem:[%s502 + $0x20] sm:$0xff]
    %v655 = vld [vmem:[%s502 + $0x30] sm:$0xff]
    %v656 = vld [vmem:[%s502 + $0x40] sm:$0xff]
    %v657 = vld [vmem:[%s502 + $0x50] sm:$0xff]
    %v658 = vld [vmem:[%s502 + $0x60] sm:$0xff]
    %v659 = vld [vmem:[%s502 + $0x70] sm:$0xff]
    %v660 = vld [vmem:[%s502 + $0xa0] sm:$0xff]
    %v661 = vld [vmem:[%s502 + $0xb0] sm:$0xff]
    %v662 = vld [vmem:[%s502 + $0xc0] sm:$0xff]
    %v663 = vld [vmem:[%s502 + $0xd0] sm:$0xff]
    %v664 = vld [vmem:[%s502 + $0xe0] sm:$0xff]
    %v665 = vld [vmem:[%s502 + $0xf0] sm:$0xff]
    %v666 = vld [vmem:[%s502 + $0x100] sm:$0xff]
    %v667 = vld [vmem:[%s502 + $0x110] sm:$0xff]
    %v668 = vld [vmem:[%s502 + $0x8] sm:$0x11]
    %v669 = vld [vmem:[%s502 + $0x18] sm:$0x11]
    %v670 = vld [vmem:[%s502 + $0x28] sm:$0x11]
    %v671 = vld [vmem:[%s502 + $0x38] sm:$0x11]
    %v672 = vld [vmem:[%s502 + $0x48] sm:$0x11]
    %v673 = vld [vmem:[%s502 + $0x58] sm:$0x11]
    %v674 = vld [vmem:[%s502 + $0x68] sm:$0x11]
    %v675 = vld [vmem:[%s502 + $0x78] sm:$0x11]
    %v676 = vld [vmem:[%s502 + $0xa8] sm:$0x11]
    %v677 = vld [vmem:[%s502 + $0xb8] sm:$0x11]
    %v678 = vld [vmem:[%s502 + $0xc8] sm:$0x11]
    %v679 = vld [vmem:[%s502 + $0xd8] sm:$0x11]
    %v680 = vld [vmem:[%s502 + $0xe8] sm:$0x11]
    %v681 = vld [vmem:[%s502 + $0xf8] sm:$0x11]
    %v682 = vld [vmem:[%s502 + $0x108] sm:$0x11]
    %v683 = vld [vmem:[%s502 + $0x118] sm:$0x11]
    %v684 = vld [vmem:[%s502] sm:$0xee]
    %v685 = vld [vmem:[%s502 + $0x10] sm:$0xee]
    %v686 = vld [vmem:[%s502 + $0x20] sm:$0xee]
    %v687 = vld [vmem:[%s502 + $0x30] sm:$0xee]
    %v688 = vld [vmem:[%s502 + $0x40] sm:$0xee]
    %v689 = vld [vmem:[%s502 + $0x50] sm:$0xee]
    %v690 = vld [vmem:[%s502 + $0x60] sm:$0xee]
    %v691 = vld [vmem:[%s502 + $0x70] sm:$0xee]
    %v692 = vld [vmem:[%s502 + $0xa0] sm:$0xee]
    %v693 = vld [vmem:[%s502 + $0xb0] sm:$0xee]
    %v694 = vld [vmem:[%s502 + $0xc0] sm:$0xee]
    %v695 = vld [vmem:[%s502 + $0xd0] sm:$0xee]
    %v696 = vld [vmem:[%s502 + $0xe0] sm:$0xee]
    %v697 = vld [vmem:[%s502 + $0xf0] sm:$0xee]
    %v698 = vld [vmem:[%s502 + $0x100] sm:$0xee]
    %v699 = vld [vmem:[%s502 + $0x110] sm:$0xee]
    %s700 = scalar_lea.vmem [#allocation2], 32
    %v701 = vld [vmem:[%s700] sm:$0xff]
    %v702 = vld [vmem:[%s700 + $0x10] sm:$0xff]
    %v703 = vld [vmem:[%s700 + $0x20] sm:$0xff]
    %v704 = vld [vmem:[%s700 + $0x30] sm:$0xff]
    %v705 = vld [vmem:[%s700 + $0x40] sm:$0xff]
    %v706 = vld [vmem:[%s700 + $0x50] sm:$0xff]
    %v707 = vld [vmem:[%s700 + $0x60] sm:$0xff]
    %v708 = vld [vmem:[%s700 + $0x70] sm:$0xff]
    %v709 = vld [vmem:[%s700 + $0xa0] sm:$0xff]
    %v710 = vld [vmem:[%s700 + $0xb0] sm:$0xff]
    %v711 = vld [vmem:[%s700 + $0xc0] sm:$0xff]
    %v712 = vld [vmem:[%s700 + $0xd0] sm:$0xff]
    %v713 = vld [vmem:[%s700 + $0xe0] sm:$0xff]
    %v714 = vld [vmem:[%s700 + $0xf0] sm:$0xff]
    %v715 = vld [vmem:[%s700 + $0x100] sm:$0xff]
    %v716 = vld [vmem:[%s700 + $0x110] sm:$0xff]
    %v717 = vld [vmem:[%s700 + $0x8] sm:$0x11]
    %v718 = vld [vmem:[%s700 + $0x18] sm:$0x11]
    %v719 = vld [vmem:[%s700 + $0x28] sm:$0x11]
    %v720 = vld [vmem:[%s700 + $0x38] sm:$0x11]
    %v721 = vld [vmem:[%s700 + $0x48] sm:$0x11]
    %v722 = vld [vmem:[%s700 + $0x58] sm:$0x11]
    %v723 = vld [vmem:[%s700 + $0x68] sm:$0x11]
    %v724 = vld [vmem:[%s700 + $0x78] sm:$0x11]
    %v725 = vld [vmem:[%s700 + $0xa8] sm:$0x11]
    %v726 = vld [vmem:[%s700 + $0xb8] sm:$0x11]
    %v727 = vld [vmem:[%s700 + $0xc8] sm:$0x11]
    %v728 = vld [vmem:[%s700 + $0xd8] sm:$0x11]
    %v729 = vld [vmem:[%s700 + $0xe8] sm:$0x11]
    %v730 = vld [vmem:[%s700 + $0xf8] sm:$0x11]
    %v731 = vld [vmem:[%s700 + $0x108] sm:$0x11]
    %v732 = vld [vmem:[%s700 + $0x118] sm:$0x11]
    %v733 = vld [vmem:[%s700] sm:$0xee]
    %v734 = vld [vmem:[%s700 + $0x10] sm:$0xee]
    %v735 = vld [vmem:[%s700 + $0x20] sm:$0xee]
    %v736 = vld [vmem:[%s700 + $0x30] sm:$0xee]
    %v737 = vld [vmem:[%s700 + $0x40] sm:$0xee]
    %v738 = vld [vmem:[%s700 + $0x50] sm:$0xee]
    %v739 = vld [vmem:[%s700 + $0x60] sm:$0xee]
    %v740 = vld [vmem:[%s700 + $0x70] sm:$0xee]
    %v741 = vld [vmem:[%s700 + $0xa0] sm:$0xee]
    %v742 = vld [vmem:[%s700 + $0xb0] sm:$0xee]
    %v743 = vld [vmem:[%s700 + $0xc0] sm:$0xee]
    %v744 = vld [vmem:[%s700 + $0xd0] sm:$0xee]
    %v745 = vld [vmem:[%s700 + $0xe0] sm:$0xee]
    %v746 = vld [vmem:[%s700 + $0xf0] sm:$0xee]
    %v747 = vld [vmem:[%s700 + $0x100] sm:$0xee]
    %v748 = vld [vmem:[%s700 + $0x110] sm:$0xee]
    %v765 = vunpack.c.l.b16 %v604
    %v766 = vunpack.c.h.b16 %v604
    %v767 = vunpack.c.l.b16 %v605
    %v768 = vunpack.c.h.b16 %v605
    %v769 = vunpack.c.l.b16 %v606
    %v770 = vunpack.c.h.b16 %v606
    %v771 = vunpack.c.l.b16 %v607
    %v772 = vunpack.c.h.b16 %v607
    %v773 = vunpack.c.l.b16 %v608
    %v774 = vunpack.c.h.b16 %v608
    %v775 = vunpack.c.l.b16 %v609
    %v776 = vunpack.c.h.b16 %v609
    %v777 = vunpack.c.l.b16 %v610
    %v778 = vunpack.c.h.b16 %v610
    %v779 = vunpack.c.l.b16 %v611
    %v780 = vunpack.c.h.b16 %v611
    %v781 = vunpack.c.l.b16 %v612
    %v782 = vunpack.c.h.b16 %v612
    %v783 = vunpack.c.l.b16 %v613
    %v784 = vunpack.c.h.b16 %v613
    %v785 = vunpack.c.l.b16 %v614
    %v786 = vunpack.c.h.b16 %v614
    %v787 = vunpack.c.l.b16 %v615
    %v788 = vunpack.c.h.b16 %v615
    %v789 = vunpack.c.l.b16 %v616
    %v790 = vunpack.c.h.b16 %v616
    %v791 = vunpack.c.l.b16 %v617
    %v792 = vunpack.c.h.b16 %v617
    %v793 = vunpack.c.l.b16 %v618
    %v794 = vunpack.c.h.b16 %v618
    %v795 = vunpack.c.l.b16 %v619
    %v796 = vunpack.c.h.b16 %v619
    %v813 = vunpack.c.l.b16 %v620
    %v814 = vunpack.c.h.b16 %v620
    %v815 = vunpack.c.l.b16 %v621
    %v816 = vunpack.c.h.b16 %v621
    %v817 = vunpack.c.l.b16 %v622
    %v818 = vunpack.c.h.b16 %v622
    %v819 = vunpack.c.l.b16 %v623
    %v820 = vunpack.c.h.b16 %v623
    %v821 = vunpack.c.l.b16 %v624
    %v822 = vunpack.c.h.b16 %v624
    %v823 = vunpack.c.l.b16 %v625
    %v824 = vunpack.c.h.b16 %v625
    %v825 = vunpack.c.l.b16 %v626
    %v826 = vunpack.c.h.b16 %v626
    %v827 = vunpack.c.l.b16 %v627
    %v828 = vunpack.c.h.b16 %v627
    %v829 = vunpack.c.l.b16 %v628
    %v830 = vunpack.c.h.b16 %v628
    %v831 = vunpack.c.l.b16 %v629
    %v832 = vunpack.c.h.b16 %v629
    %v833 = vunpack.c.l.b16 %v630
    %v834 = vunpack.c.h.b16 %v630
    %v835 = vunpack.c.l.b16 %v631
    %v836 = vunpack.c.h.b16 %v631
    %v837 = vunpack.c.l.b16 %v632
    %v838 = vunpack.c.h.b16 %v632
    %v839 = vunpack.c.l.b16 %v633
    %v840 = vunpack.c.h.b16 %v633
    %v841 = vunpack.c.l.b16 %v634
    %v842 = vunpack.c.h.b16 %v634
    %v843 = vunpack.c.l.b16 %v635
    %v844 = vunpack.c.h.b16 %v635
    %v845 = vpack.c.b16 %v813, %v765
    %v846 = vpack.c.b16 %v814, %v766
    %v847 = vpack.c.b16 %v815, %v767
    %v848 = vpack.c.b16 %v816, %v768
    %v849 = vpack.c.b16 %v817, %v769
    %v850 = vpack.c.b16 %v818, %v770
    %v851 = vpack.c.b16 %v819, %v771
    %v852 = vpack.c.b16 %v820, %v772
    %v853 = vpack.c.b16 %v821, %v773
    %v854 = vpack.c.b16 %v822, %v774
    %v855 = vpack.c.b16 %v823, %v775
    %v856 = vpack.c.b16 %v824, %v776
    %v857 = vpack.c.b16 %v825, %v777
    %v858 = vpack.c.b16 %v826, %v778
    %v859 = vpack.c.b16 %v827, %v779
    %v860 = vpack.c.b16 %v828, %v780
    %v861 = vpack.c.b16 %v829, %v781
    %v862 = vpack.c.b16 %v830, %v782
    %v863 = vpack.c.b16 %v831, %v783
    %v864 = vpack.c.b16 %v832, %v784
    %v865 = vpack.c.b16 %v833, %v785
    %v866 = vpack.c.b16 %v834, %v786
    %v867 = vpack.c.b16 %v835, %v787
    %v868 = vpack.c.b16 %v836, %v788
    %v869 = vpack.c.b16 %v837, %v789
    %v870 = vpack.c.b16 %v838, %v790
    %v871 = vpack.c.b16 %v839, %v791
    %v872 = vpack.c.b16 %v840, %v792
    %v873 = vpack.c.b16 %v841, %v793
    %v874 = vpack.c.b16 %v842, %v794
    %v875 = vpack.c.b16 %v843, %v795
    %v876 = vpack.c.b16 %v844, %v796
    %v878 = vshrl.u32 %v845, 16
    %v880 = vshll.u32 %v845, 16
    %v882 = vrot.slane %v880, 1
    %v883 = vor.u32 %v878, %v882
    %v885 = vshrl.u32 %v846, 16
    %v887 = vshll.u32 %v846, 16
    %v889 = vrot.slane %v887, 1
    %v890 = vor.u32 %v885, %v889
    %v892 = vshrl.u32 %v847, 16
    %v894 = vshll.u32 %v847, 16
    %v896 = vrot.slane %v894, 1
    %v897 = vor.u32 %v892, %v896
    %v899 = vshrl.u32 %v848, 16
    %v901 = vshll.u32 %v848, 16
    %v903 = vrot.slane %v901, 1
    %v904 = vor.u32 %v899, %v903
    %v906 = vshrl.u32 %v849, 16
    %v908 = vshll.u32 %v849, 16
    %v910 = vrot.slane %v908, 1
    %v911 = vor.u32 %v906, %v910
    %v913 = vshrl.u32 %v850, 16
    %v915 = vshll.u32 %v850, 16
    %v917 = vrot.slane %v915, 1
    %v918 = vor.u32 %v913, %v917
    %v920 = vshrl.u32 %v851, 16
    %v922 = vshll.u32 %v851, 16
    %v924 = vrot.slane %v922, 1
    %v925 = vor.u32 %v920, %v924
    %v927 = vshrl.u32 %v852, 16
    %v929 = vshll.u32 %v852, 16
    %v931 = vrot.slane %v929, 1
    %v932 = vor.u32 %v927, %v931
    %v934 = vshrl.u32 %v853, 16
    %v936 = vshll.u32 %v853, 16
    %v938 = vrot.slane %v936, 1
    %v939 = vor.u32 %v934, %v938
    %v941 = vshrl.u32 %v854, 16
    %v943 = vshll.u32 %v854, 16
    %v945 = vrot.slane %v943, 1
    %v946 = vor.u32 %v941, %v945
    %v948 = vshrl.u32 %v855, 16
    %v950 = vshll.u32 %v855, 16
    %v952 = vrot.slane %v950, 1
    %v953 = vor.u32 %v948, %v952
    %v955 = vshrl.u32 %v856, 16
    %v957 = vshll.u32 %v856, 16
    %v959 = vrot.slane %v957, 1
    %v960 = vor.u32 %v955, %v959
    %v962 = vshrl.u32 %v857, 16
    %v964 = vshll.u32 %v857, 16
    %v966 = vrot.slane %v964, 1
    %v967 = vor.u32 %v962, %v966
    %v969 = vshrl.u32 %v858, 16
    %v971 = vshll.u32 %v858, 16
    %v973 = vrot.slane %v971, 1
    %v974 = vor.u32 %v969, %v973
    %v976 = vshrl.u32 %v859, 16
    %v978 = vshll.u32 %v859, 16
    %v980 = vrot.slane %v978, 1
    %v981 = vor.u32 %v976, %v980
    %v983 = vshrl.u32 %v860, 16
    %v985 = vshll.u32 %v860, 16
    %v987 = vrot.slane %v985, 1
    %v988 = vor.u32 %v983, %v987
    %v990 = vshrl.u32 %v861, 16
    %v992 = vshll.u32 %v861, 16
    %v994 = vrot.slane %v992, 1
    %v995 = vor.u32 %v990, %v994
    %v997 = vshrl.u32 %v862, 16
    %v999 = vshll.u32 %v862, 16
    %v1001 = vrot.slane %v999, 1
    %v1002 = vor.u32 %v997, %v1001
    %v1004 = vshrl.u32 %v863, 16
    %v1006 = vshll.u32 %v863, 16
    %v1008 = vrot.slane %v1006, 1
    %v1009 = vor.u32 %v1004, %v1008
    %v1011 = vshrl.u32 %v864, 16
    %v1013 = vshll.u32 %v864, 16
    %v1015 = vrot.slane %v1013, 1
    %v1016 = vor.u32 %v1011, %v1015
    %v1018 = vshrl.u32 %v865, 16
    %v1020 = vshll.u32 %v865, 16
    %v1022 = vrot.slane %v1020, 1
    %v1023 = vor.u32 %v1018, %v1022
    %v1025 = vshrl.u32 %v866, 16
    %v1027 = vshll.u32 %v866, 16
    %v1029 = vrot.slane %v1027, 1
    %v1030 = vor.u32 %v1025, %v1029
    %v1032 = vshrl.u32 %v867, 16
    %v1034 = vshll.u32 %v867, 16
    %v1036 = vrot.slane %v1034, 1
    %v1037 = vor.u32 %v1032, %v1036
    %v1039 = vshrl.u32 %v868, 16
    %v1041 = vshll.u32 %v868, 16
    %v1043 = vrot.slane %v1041, 1
    %v1044 = vor.u32 %v1039, %v1043
    %v1046 = vshrl.u32 %v869, 16
    %v1048 = vshll.u32 %v869, 16
    %v1050 = vrot.slane %v1048, 1
    %v1051 = vor.u32 %v1046, %v1050
    %v1053 = vshrl.u32 %v870, 16
    %v1055 = vshll.u32 %v870, 16
    %v1057 = vrot.slane %v1055, 1
    %v1058 = vor.u32 %v1053, %v1057
    %v1060 = vshrl.u32 %v871, 16
    %v1062 = vshll.u32 %v871, 16
    %v1064 = vrot.slane %v1062, 1
    %v1065 = vor.u32 %v1060, %v1064
    %v1067 = vshrl.u32 %v872, 16
    %v1069 = vshll.u32 %v872, 16
    %v1071 = vrot.slane %v1069, 1
    %v1072 = vor.u32 %v1067, %v1071
    %v1074 = vshrl.u32 %v873, 16
    %v1076 = vshll.u32 %v873, 16
    %v1078 = vrot.slane %v1076, 1
    %v1079 = vor.u32 %v1074, %v1078
    %v1081 = vshrl.u32 %v874, 16
    %v1083 = vshll.u32 %v874, 16
    %v1085 = vrot.slane %v1083, 1
    %v1086 = vor.u32 %v1081, %v1085
    %v1088 = vshrl.u32 %v875, 16
    %v1090 = vshll.u32 %v875, 16
    %v1092 = vrot.slane %v1090, 1
    %v1093 = vor.u32 %v1088, %v1092
    %v1095 = vshrl.u32 %v876, 16
    %v1097 = vshll.u32 %v876, 16
    %v1099 = vrot.slane %v1097, 1
    %v1100 = vor.u32 %v1095, %v1099
    %v1117 = vunpack.c.l.b16 %v636
    %v1118 = vunpack.c.h.b16 %v636
    %v1119 = vunpack.c.l.b16 %v637
    %v1120 = vunpack.c.h.b16 %v637
    %v1121 = vunpack.c.l.b16 %v638
    %v1122 = vunpack.c.h.b16 %v638
    %v1123 = vunpack.c.l.b16 %v639
    %v1124 = vunpack.c.h.b16 %v639
    %v1125 = vunpack.c.l.b16 %v640
    %v1126 = vunpack.c.h.b16 %v640
    %v1127 = vunpack.c.l.b16 %v641
    %v1128 = vunpack.c.h.b16 %v641
    %v1129 = vunpack.c.l.b16 %v642
    %v1130 = vunpack.c.h.b16 %v642
    %v1131 = vunpack.c.l.b16 %v643
    %v1132 = vunpack.c.h.b16 %v643
    %v1133 = vunpack.c.l.b16 %v644
    %v1134 = vunpack.c.h.b16 %v644
    %v1135 = vunpack.c.l.b16 %v645
    %v1136 = vunpack.c.h.b16 %v645
    %v1137 = vunpack.c.l.b16 %v646
    %v1138 = vunpack.c.h.b16 %v646
    %v1139 = vunpack.c.l.b16 %v647
    %v1140 = vunpack.c.h.b16 %v647
    %v1141 = vunpack.c.l.b16 %v648
    %v1142 = vunpack.c.h.b16 %v648
    %v1143 = vunpack.c.l.b16 %v649
    %v1144 = vunpack.c.h.b16 %v649
    %v1145 = vunpack.c.l.b16 %v650
    %v1146 = vunpack.c.h.b16 %v650
    %v1147 = vunpack.c.l.b16 %v651
    %v1148 = vunpack.c.h.b16 %v651
    %v1149 = vpack.c.b16 %v813, %v1117
    %v1150 = vpack.c.b16 %v814, %v1118
    %v1151 = vpack.c.b16 %v815, %v1119
    %v1152 = vpack.c.b16 %v816, %v1120
    %v1153 = vpack.c.b16 %v817, %v1121
    %v1154 = vpack.c.b16 %v818, %v1122
    %v1155 = vpack.c.b16 %v819, %v1123
    %v1156 = vpack.c.b16 %v820, %v1124
    %v1157 = vpack.c.b16 %v821, %v1125
    %v1158 = vpack.c.b16 %v822, %v1126
    %v1159 = vpack.c.b16 %v823, %v1127
    %v1160 = vpack.c.b16 %v824, %v1128
    %v1161 = vpack.c.b16 %v825, %v1129
    %v1162 = vpack.c.b16 %v826, %v1130
    %v1163 = vpack.c.b16 %v827, %v1131
    %v1164 = vpack.c.b16 %v828, %v1132
    %v1165 = vpack.c.b16 %v829, %v1133
    %v1166 = vpack.c.b16 %v830, %v1134
    %v1167 = vpack.c.b16 %v831, %v1135
    %v1168 = vpack.c.b16 %v832, %v1136
    %v1169 = vpack.c.b16 %v833, %v1137
    %v1170 = vpack.c.b16 %v834, %v1138
    %v1171 = vpack.c.b16 %v835, %v1139
    %v1172 = vpack.c.b16 %v836, %v1140
    %v1173 = vpack.c.b16 %v837, %v1141
    %v1174 = vpack.c.b16 %v838, %v1142
    %v1175 = vpack.c.b16 %v839, %v1143
    %v1176 = vpack.c.b16 %v840, %v1144
    %v1177 = vpack.c.b16 %v841, %v1145
    %v1178 = vpack.c.b16 %v842, %v1146
    %v1179 = vpack.c.b16 %v843, %v1147
    %v1180 = vpack.c.b16 %v844, %v1148
    %v1181 = vrot.slane %v1149, 1
    %v1182 = vrot.slane %v1150, 1
    %v1183 = vrot.slane %v1151, 1
    %v1184 = vrot.slane %v1152, 1
    %v1185 = vrot.slane %v1153, 1
    %v1186 = vrot.slane %v1154, 1
    %v1187 = vrot.slane %v1155, 1
    %v1188 = vrot.slane %v1156, 1
    %v1189 = vrot.slane %v1157, 1
    %v1190 = vrot.slane %v1158, 1
    %v1191 = vrot.slane %v1159, 1
    %v1192 = vrot.slane %v1160, 1
    %v1193 = vrot.slane %v1161, 1
    %v1194 = vrot.slane %v1162, 1
    %v1195 = vrot.slane %v1163, 1
    %v1196 = vrot.slane %v1164, 1
    %v1197 = vrot.slane %v1165, 1
    %v1198 = vrot.slane %v1166, 1
    %v1199 = vrot.slane %v1167, 1
    %v1200 = vrot.slane %v1168, 1
    %v1201 = vrot.slane %v1169, 1
    %v1202 = vrot.slane %v1170, 1
    %v1203 = vrot.slane %v1171, 1
    %v1204 = vrot.slane %v1172, 1
    %v1205 = vrot.slane %v1173, 1
    %v1206 = vrot.slane %v1174, 1
    %v1207 = vrot.slane %v1175, 1
    %v1208 = vrot.slane %v1176, 1
    %v1209 = vrot.slane %v1177, 1
    %v1210 = vrot.slane %v1178, 1
    %v1211 = vrot.slane %v1179, 1
    %v1212 = vrot.slane %v1180, 1
    %v1229 = vunpack.c.l.b16 %v652
    %v1230 = vunpack.c.h.b16 %v652
    %v1231 = vunpack.c.l.b16 %v653
    %v1232 = vunpack.c.h.b16 %v653
    %v1233 = vunpack.c.l.b16 %v654
    %v1234 = vunpack.c.h.b16 %v654
    %v1235 = vunpack.c.l.b16 %v655
    %v1236 = vunpack.c.h.b16 %v655
    %v1237 = vunpack.c.l.b16 %v656
    %v1238 = vunpack.c.h.b16 %v656
    %v1239 = vunpack.c.l.b16 %v657
    %v1240 = vunpack.c.h.b16 %v657
    %v1241 = vunpack.c.l.b16 %v658
    %v1242 = vunpack.c.h.b16 %v658
    %v1243 = vunpack.c.l.b16 %v659
    %v1244 = vunpack.c.h.b16 %v659
    %v1245 = vunpack.c.l.b16 %v660
    %v1246 = vunpack.c.h.b16 %v660
    %v1247 = vunpack.c.l.b16 %v661
    %v1248 = vunpack.c.h.b16 %v661
    %v1249 = vunpack.c.l.b16 %v662
    %v1250 = vunpack.c.h.b16 %v662
    %v1251 = vunpack.c.l.b16 %v663
    %v1252 = vunpack.c.h.b16 %v663
    %v1253 = vunpack.c.l.b16 %v664
    %v1254 = vunpack.c.h.b16 %v664
    %v1255 = vunpack.c.l.b16 %v665
    %v1256 = vunpack.c.h.b16 %v665
    %v1257 = vunpack.c.l.b16 %v666
    %v1258 = vunpack.c.h.b16 %v666
    %v1259 = vunpack.c.l.b16 %v667
    %v1260 = vunpack.c.h.b16 %v667
    %v1277 = vunpack.c.l.b16 %v668
    %v1278 = vunpack.c.h.b16 %v668
    %v1279 = vunpack.c.l.b16 %v669
    %v1280 = vunpack.c.h.b16 %v669
    %v1281 = vunpack.c.l.b16 %v670
    %v1282 = vunpack.c.h.b16 %v670
    %v1283 = vunpack.c.l.b16 %v671
    %v1284 = vunpack.c.h.b16 %v671
    %v1285 = vunpack.c.l.b16 %v672
    %v1286 = vunpack.c.h.b16 %v672
    %v1287 = vunpack.c.l.b16 %v673
    %v1288 = vunpack.c.h.b16 %v673
    %v1289 = vunpack.c.l.b16 %v674
    %v1290 = vunpack.c.h.b16 %v674
    %v1291 = vunpack.c.l.b16 %v675
    %v1292 = vunpack.c.h.b16 %v675
    %v1293 = vunpack.c.l.b16 %v676
    %v1294 = vunpack.c.h.b16 %v676
    %v1295 = vunpack.c.l.b16 %v677
    %v1296 = vunpack.c.h.b16 %v677
    %v1297 = vunpack.c.l.b16 %v678
    %v1298 = vunpack.c.h.b16 %v678
    %v1299 = vunpack.c.l.b16 %v679
    %v1300 = vunpack.c.h.b16 %v679
    %v1301 = vunpack.c.l.b16 %v680
    %v1302 = vunpack.c.h.b16 %v680
    %v1303 = vunpack.c.l.b16 %v681
    %v1304 = vunpack.c.h.b16 %v681
    %v1305 = vunpack.c.l.b16 %v682
    %v1306 = vunpack.c.h.b16 %v682
    %v1307 = vunpack.c.l.b16 %v683
    %v1308 = vunpack.c.h.b16 %v683
    %v1309 = vpack.c.b16 %v1277, %v1229
    %v1310 = vpack.c.b16 %v1278, %v1230
    %v1311 = vpack.c.b16 %v1279, %v1231
    %v1312 = vpack.c.b16 %v1280, %v1232
    %v1313 = vpack.c.b16 %v1281, %v1233
    %v1314 = vpack.c.b16 %v1282, %v1234
    %v1315 = vpack.c.b16 %v1283, %v1235
    %v1316 = vpack.c.b16 %v1284, %v1236
    %v1317 = vpack.c.b16 %v1285, %v1237
    %v1318 = vpack.c.b16 %v1286, %v1238
    %v1319 = vpack.c.b16 %v1287, %v1239
    %v1320 = vpack.c.b16 %v1288, %v1240
    %v1321 = vpack.c.b16 %v1289, %v1241
    %v1322 = vpack.c.b16 %v1290, %v1242
    %v1323 = vpack.c.b16 %v1291, %v1243
    %v1324 = vpack.c.b16 %v1292, %v1244
    %v1325 = vpack.c.b16 %v1293, %v1245
    %v1326 = vpack.c.b16 %v1294, %v1246
    %v1327 = vpack.c.b16 %v1295, %v1247
    %v1328 = vpack.c.b16 %v1296, %v1248
    %v1329 = vpack.c.b16 %v1297, %v1249
    %v1330 = vpack.c.b16 %v1298, %v1250
    %v1331 = vpack.c.b16 %v1299, %v1251
    %v1332 = vpack.c.b16 %v1300, %v1252
    %v1333 = vpack.c.b16 %v1301, %v1253
    %v1334 = vpack.c.b16 %v1302, %v1254
    %v1335 = vpack.c.b16 %v1303, %v1255
    %v1336 = vpack.c.b16 %v1304, %v1256
    %v1337 = vpack.c.b16 %v1305, %v1257
    %v1338 = vpack.c.b16 %v1306, %v1258
    %v1339 = vpack.c.b16 %v1307, %v1259
    %v1340 = vpack.c.b16 %v1308, %v1260
    %v1342 = vshrl.u32 %v1309, 16
    %v1344 = vshll.u32 %v1309, 16
    %v1346 = vrot.slane %v1344, 1
    %v1347 = vor.u32 %v1342, %v1346
    %v1349 = vshrl.u32 %v1310, 16
    %v1351 = vshll.u32 %v1310, 16
    %v1353 = vrot.slane %v1351, 1
    %v1354 = vor.u32 %v1349, %v1353
    %v1356 = vshrl.u32 %v1311, 16
    %v1358 = vshll.u32 %v1311, 16
    %v1360 = vrot.slane %v1358, 1
    %v1361 = vor.u32 %v1356, %v1360
    %v1363 = vshrl.u32 %v1312, 16
    %v1365 = vshll.u32 %v1312, 16
    %v1367 = vrot.slane %v1365, 1
    %v1368 = vor.u32 %v1363, %v1367
    %v1370 = vshrl.u32 %v1313, 16
    %v1372 = vshll.u32 %v1313, 16
    %v1374 = vrot.slane %v1372, 1
    %v1375 = vor.u32 %v1370, %v1374
    %v1377 = vshrl.u32 %v1314, 16
    %v1379 = vshll.u32 %v1314, 16
    %v1381 = vrot.slane %v1379, 1
    %v1382 = vor.u32 %v1377, %v1381
    %v1384 = vshrl.u32 %v1315, 16
    %v1386 = vshll.u32 %v1315, 16
    %v1388 = vrot.slane %v1386, 1
    %v1389 = vor.u32 %v1384, %v1388
    %v1391 = vshrl.u32 %v1316, 16
    %v1393 = vshll.u32 %v1316, 16
    %v1395 = vrot.slane %v1393, 1
    %v1396 = vor.u32 %v1391, %v1395
    %v1398 = vshrl.u32 %v1317, 16
    %v1400 = vshll.u32 %v1317, 16
    %v1402 = vrot.slane %v1400, 1
    %v1403 = vor.u32 %v1398, %v1402
    %v1405 = vshrl.u32 %v1318, 16
    %v1407 = vshll.u32 %v1318, 16
    %v1409 = vrot.slane %v1407, 1
    %v1410 = vor.u32 %v1405, %v1409
    %v1412 = vshrl.u32 %v1319, 16
    %v1414 = vshll.u32 %v1319, 16
    %v1416 = vrot.slane %v1414, 1
    %v1417 = vor.u32 %v1412, %v1416
    %v1419 = vshrl.u32 %v1320, 16
    %v1421 = vshll.u32 %v1320, 16
    %v1423 = vrot.slane %v1421, 1
    %v1424 = vor.u32 %v1419, %v1423
    %v1426 = vshrl.u32 %v1321, 16
    %v1428 = vshll.u32 %v1321, 16
    %v1430 = vrot.slane %v1428, 1
    %v1431 = vor.u32 %v1426, %v1430
    %v1433 = vshrl.u32 %v1322, 16
    %v1435 = vshll.u32 %v1322, 16
    %v1437 = vrot.slane %v1435, 1
    %v1438 = vor.u32 %v1433, %v1437
    %v1440 = vshrl.u32 %v1323, 16
    %v1442 = vshll.u32 %v1323, 16
    %v1444 = vrot.slane %v1442, 1
    %v1445 = vor.u32 %v1440, %v1444
    %v1447 = vshrl.u32 %v1324, 16
    %v1449 = vshll.u32 %v1324, 16
    %v1451 = vrot.slane %v1449, 1
    %v1452 = vor.u32 %v1447, %v1451
    %v1454 = vshrl.u32 %v1325, 16
    %v1456 = vshll.u32 %v1325, 16
    %v1458 = vrot.slane %v1456, 1
    %v1459 = vor.u32 %v1454, %v1458
    %v1461 = vshrl.u32 %v1326, 16
    %v1463 = vshll.u32 %v1326, 16
    %v1465 = vrot.slane %v1463, 1
    %v1466 = vor.u32 %v1461, %v1465
    %v1468 = vshrl.u32 %v1327, 16
    %v1470 = vshll.u32 %v1327, 16
    %v1472 = vrot.slane %v1470, 1
    %v1473 = vor.u32 %v1468, %v1472
    %v1475 = vshrl.u32 %v1328, 16
    %v1477 = vshll.u32 %v1328, 16
    %v1479 = vrot.slane %v1477, 1
    %v1480 = vor.u32 %v1475, %v1479
    %v1482 = vshrl.u32 %v1329, 16
    %v1484 = vshll.u32 %v1329, 16
    %v1486 = vrot.slane %v1484, 1
    %v1487 = vor.u32 %v1482, %v1486
    %v1489 = vshrl.u32 %v1330, 16
    %v1491 = vshll.u32 %v1330, 16
    %v1493 = vrot.slane %v1491, 1
    %v1494 = vor.u32 %v1489, %v1493
    %v1496 = vshrl.u32 %v1331, 16
    %v1498 = vshll.u32 %v1331, 16
    %v1500 = vrot.slane %v1498, 1
    %v1501 = vor.u32 %v1496, %v1500
    %v1503 = vshrl.u32 %v1332, 16
    %v1505 = vshll.u32 %v1332, 16
    %v1507 = vrot.slane %v1505, 1
    %v1508 = vor.u32 %v1503, %v1507
    %v1510 = vshrl.u32 %v1333, 16
    %v1512 = vshll.u32 %v1333, 16
    %v1514 = vrot.slane %v1512, 1
    %v1515 = vor.u32 %v1510, %v1514
    %v1517 = vshrl.u32 %v1334, 16
    %v1519 = vshll.u32 %v1334, 16
    %v1521 = vrot.slane %v1519, 1
    %v1522 = vor.u32 %v1517, %v1521
    %v1524 = vshrl.u32 %v1335, 16
    %v1526 = vshll.u32 %v1335, 16
    %v1528 = vrot.slane %v1526, 1
    %v1529 = vor.u32 %v1524, %v1528
    %v1531 = vshrl.u32 %v1336, 16
    %v1533 = vshll.u32 %v1336, 16
    %v1535 = vrot.slane %v1533, 1
    %v1536 = vor.u32 %v1531, %v1535
    %v1538 = vshrl.u32 %v1337, 16
    %v1540 = vshll.u32 %v1337, 16
    %v1542 = vrot.slane %v1540, 1
    %v1543 = vor.u32 %v1538, %v1542
    %v1545 = vshrl.u32 %v1338, 16
    %v1547 = vshll.u32 %v1338, 16
    %v1549 = vrot.slane %v1547, 1
    %v1550 = vor.u32 %v1545, %v1549
    %v1552 = vshrl.u32 %v1339, 16
    %v1554 = vshll.u32 %v1339, 16
    %v1556 = vrot.slane %v1554, 1
    %v1557 = vor.u32 %v1552, %v1556
    %v1559 = vshrl.u32 %v1340, 16
    %v1561 = vshll.u32 %v1340, 16
    %v1563 = vrot.slane %v1561, 1
    %v1564 = vor.u32 %v1559, %v1563
    %v1581 = vunpack.c.l.b16 %v684
    %v1582 = vunpack.c.h.b16 %v684
    %v1583 = vunpack.c.l.b16 %v685
    %v1584 = vunpack.c.h.b16 %v685
    %v1585 = vunpack.c.l.b16 %v686
    %v1586 = vunpack.c.h.b16 %v686
    %v1587 = vunpack.c.l.b16 %v687
    %v1588 = vunpack.c.h.b16 %v687
    %v1589 = vunpack.c.l.b16 %v688
    %v1590 = vunpack.c.h.b16 %v688
    %v1591 = vunpack.c.l.b16 %v689
    %v1592 = vunpack.c.h.b16 %v689
    %v1593 = vunpack.c.l.b16 %v690
    %v1594 = vunpack.c.h.b16 %v690
    %v1595 = vunpack.c.l.b16 %v691
    %v1596 = vunpack.c.h.b16 %v691
    %v1597 = vunpack.c.l.b16 %v692
    %v1598 = vunpack.c.h.b16 %v692
    %v1599 = vunpack.c.l.b16 %v693
    %v1600 = vunpack.c.h.b16 %v693
    %v1601 = vunpack.c.l.b16 %v694
    %v1602 = vunpack.c.h.b16 %v694
    %v1603 = vunpack.c.l.b16 %v695
    %v1604 = vunpack.c.h.b16 %v695
    %v1605 = vunpack.c.l.b16 %v696
    %v1606 = vunpack.c.h.b16 %v696
    %v1607 = vunpack.c.l.b16 %v697
    %v1608 = vunpack.c.h.b16 %v697
    %v1609 = vunpack.c.l.b16 %v698
    %v1610 = vunpack.c.h.b16 %v698
    %v1611 = vunpack.c.l.b16 %v699
    %v1612 = vunpack.c.h.b16 %v699
    %v1613 = vpack.c.b16 %v1277, %v1581
    %v1614 = vpack.c.b16 %v1278, %v1582
    %v1615 = vpack.c.b16 %v1279, %v1583
    %v1616 = vpack.c.b16 %v1280, %v1584
    %v1617 = vpack.c.b16 %v1281, %v1585
    %v1618 = vpack.c.b16 %v1282, %v1586
    %v1619 = vpack.c.b16 %v1283, %v1587
    %v1620 = vpack.c.b16 %v1284, %v1588
    %v1621 = vpack.c.b16 %v1285, %v1589
    %v1622 = vpack.c.b16 %v1286, %v1590
    %v1623 = vpack.c.b16 %v1287, %v1591
    %v1624 = vpack.c.b16 %v1288, %v1592
    %v1625 = vpack.c.b16 %v1289, %v1593
    %v1626 = vpack.c.b16 %v1290, %v1594
    %v1627 = vpack.c.b16 %v1291, %v1595
    %v1628 = vpack.c.b16 %v1292, %v1596
    %v1629 = vpack.c.b16 %v1293, %v1597
    %v1630 = vpack.c.b16 %v1294, %v1598
    %v1631 = vpack.c.b16 %v1295, %v1599
    %v1632 = vpack.c.b16 %v1296, %v1600
    %v1633 = vpack.c.b16 %v1297, %v1601
    %v1634 = vpack.c.b16 %v1298, %v1602
    %v1635 = vpack.c.b16 %v1299, %v1603
    %v1636 = vpack.c.b16 %v1300, %v1604
    %v1637 = vpack.c.b16 %v1301, %v1605
    %v1638 = vpack.c.b16 %v1302, %v1606
    %v1639 = vpack.c.b16 %v1303, %v1607
    %v1640 = vpack.c.b16 %v1304, %v1608
    %v1641 = vpack.c.b16 %v1305, %v1609
    %v1642 = vpack.c.b16 %v1306, %v1610
    %v1643 = vpack.c.b16 %v1307, %v1611
    %v1644 = vpack.c.b16 %v1308, %v1612
    %v1645 = vrot.slane %v1613, 1
    %v1646 = vrot.slane %v1614, 1
    %v1647 = vrot.slane %v1615, 1
    %v1648 = vrot.slane %v1616, 1
    %v1649 = vrot.slane %v1617, 1
    %v1650 = vrot.slane %v1618, 1
    %v1651 = vrot.slane %v1619, 1
    %v1652 = vrot.slane %v1620, 1
    %v1653 = vrot.slane %v1621, 1
    %v1654 = vrot.slane %v1622, 1
    %v1655 = vrot.slane %v1623, 1
    %v1656 = vrot.slane %v1624, 1
    %v1657 = vrot.slane %v1625, 1
    %v1658 = vrot.slane %v1626, 1
    %v1659 = vrot.slane %v1627, 1
    %v1660 = vrot.slane %v1628, 1
    %v1661 = vrot.slane %v1629, 1
    %v1662 = vrot.slane %v1630, 1
    %v1663 = vrot.slane %v1631, 1
    %v1664 = vrot.slane %v1632, 1
    %v1665 = vrot.slane %v1633, 1
    %v1666 = vrot.slane %v1634, 1
    %v1667 = vrot.slane %v1635, 1
    %v1668 = vrot.slane %v1636, 1
    %v1669 = vrot.slane %v1637, 1
    %v1670 = vrot.slane %v1638, 1
    %v1671 = vrot.slane %v1639, 1
    %v1672 = vrot.slane %v1640, 1
    %v1673 = vrot.slane %v1641, 1
    %v1674 = vrot.slane %v1642, 1
    %v1675 = vrot.slane %v1643, 1
    %v1676 = vrot.slane %v1644, 1
    %v1693 = vunpack.c.l.b16 %v701
    %v1694 = vunpack.c.h.b16 %v701
    %v1695 = vunpack.c.l.b16 %v702
    %v1696 = vunpack.c.h.b16 %v702
    %v1697 = vunpack.c.l.b16 %v703
    %v1698 = vunpack.c.h.b16 %v703
    %v1699 = vunpack.c.l.b16 %v704
    %v1700 = vunpack.c.h.b16 %v704
    %v1701 = vunpack.c.l.b16 %v705
    %v1702 = vunpack.c.h.b16 %v705
    %v1703 = vunpack.c.l.b16 %v706
    %v1704 = vunpack.c.h.b16 %v706
    %v1705 = vunpack.c.l.b16 %v707
    %v1706 = vunpack.c.h.b16 %v707
    %v1707 = vunpack.c.l.b16 %v708
    %v1708 = vunpack.c.h.b16 %v708
    %v1709 = vunpack.c.l.b16 %v709
    %v1710 = vunpack.c.h.b16 %v709
    %v1711 = vunpack.c.l.b16 %v710
    %v1712 = vunpack.c.h.b16 %v710
    %v1713 = vunpack.c.l.b16 %v711
    %v1714 = vunpack.c.h.b16 %v711
    %v1715 = vunpack.c.l.b16 %v712
    %v1716 = vunpack.c.h.b16 %v712
    %v1717 = vunpack.c.l.b16 %v713
    %v1718 = vunpack.c.h.b16 %v713
    %v1719 = vunpack.c.l.b16 %v714
    %v1720 = vunpack.c.h.b16 %v714
    %v1721 = vunpack.c.l.b16 %v715
    %v1722 = vunpack.c.h.b16 %v715
    %v1723 = vunpack.c.l.b16 %v716
    %v1724 = vunpack.c.h.b16 %v716
    %v1741 = vunpack.c.l.b16 %v717
    %v1742 = vunpack.c.h.b16 %v717
    %v1743 = vunpack.c.l.b16 %v718
    %v1744 = vunpack.c.h.b16 %v718
    %v1745 = vunpack.c.l.b16 %v719
    %v1746 = vunpack.c.h.b16 %v719
    %v1747 = vunpack.c.l.b16 %v720
    %v1748 = vunpack.c.h.b16 %v720
    %v1749 = vunpack.c.l.b16 %v721
    %v1750 = vunpack.c.h.b16 %v721
    %v1751 = vunpack.c.l.b16 %v722
    %v1752 = vunpack.c.h.b16 %v722
    %v1753 = vunpack.c.l.b16 %v723
    %v1754 = vunpack.c.h.b16 %v723
    %v1755 = vunpack.c.l.b16 %v724
    %v1756 = vunpack.c.h.b16 %v724
    %v1757 = vunpack.c.l.b16 %v725
    %v1758 = vunpack.c.h.b16 %v725
    %v1759 = vunpack.c.l.b16 %v726
    %v1760 = vunpack.c.h.b16 %v726
    %v1761 = vunpack.c.l.b16 %v727
    %v1762 = vunpack.c.h.b16 %v727
    %v1763 = vunpack.c.l.b16 %v728
    %v1764 = vunpack.c.h.b16 %v728
    %v1765 = vunpack.c.l.b16 %v729
    %v1766 = vunpack.c.h.b16 %v729
    %v1767 = vunpack.c.l.b16 %v730
    %v1768 = vunpack.c.h.b16 %v730
    %v1769 = vunpack.c.l.b16 %v731
    %v1770 = vunpack.c.h.b16 %v731
    %v1771 = vunpack.c.l.b16 %v732
    %v1772 = vunpack.c.h.b16 %v732
    %v1773 = vpack.c.b16 %v1741, %v1693
    %v1774 = vpack.c.b16 %v1742, %v1694
    %v1775 = vpack.c.b16 %v1743, %v1695
    %v1776 = vpack.c.b16 %v1744, %v1696
    %v1777 = vpack.c.b16 %v1745, %v1697
    %v1778 = vpack.c.b16 %v1746, %v1698
    %v1779 = vpack.c.b16 %v1747, %v1699
    %v1780 = vpack.c.b16 %v1748, %v1700
    %v1781 = vpack.c.b16 %v1749, %v1701
    %v1782 = vpack.c.b16 %v1750, %v1702
    %v1783 = vpack.c.b16 %v1751, %v1703
    %v1784 = vpack.c.b16 %v1752, %v1704
    %v1785 = vpack.c.b16 %v1753, %v1705
    %v1786 = vpack.c.b16 %v1754, %v1706
    %v1787 = vpack.c.b16 %v1755, %v1707
    %v1788 = vpack.c.b16 %v1756, %v1708
    %v1789 = vpack.c.b16 %v1757, %v1709
    %v1790 = vpack.c.b16 %v1758, %v1710
    %v1791 = vpack.c.b16 %v1759, %v1711
    %v1792 = vpack.c.b16 %v1760, %v1712
    %v1793 = vpack.c.b16 %v1761, %v1713
    %v1794 = vpack.c.b16 %v1762, %v1714
    %v1795 = vpack.c.b16 %v1763, %v1715
    %v1796 = vpack.c.b16 %v1764, %v1716
    %v1797 = vpack.c.b16 %v1765, %v1717
    %v1798 = vpack.c.b16 %v1766, %v1718
    %v1799 = vpack.c.b16 %v1767, %v1719
    %v1800 = vpack.c.b16 %v1768, %v1720
    %v1801 = vpack.c.b16 %v1769, %v1721
    %v1802 = vpack.c.b16 %v1770, %v1722
    %v1803 = vpack.c.b16 %v1771, %v1723
    %v1804 = vpack.c.b16 %v1772, %v1724
    %v1806 = vshrl.u32 %v1773, 16
    %v1808 = vshll.u32 %v1773, 16
    %v1810 = vrot.slane %v1808, 1
    %v1811 = vor.u32 %v1806, %v1810
    %v1813 = vshrl.u32 %v1774, 16
    %v1815 = vshll.u32 %v1774, 16
    %v1817 = vrot.slane %v1815, 1
    %v1818 = vor.u32 %v1813, %v1817
    %v1820 = vshrl.u32 %v1775, 16
    %v1822 = vshll.u32 %v1775, 16
    %v1824 = vrot.slane %v1822, 1
    %v1825 = vor.u32 %v1820, %v1824
    %v1827 = vshrl.u32 %v1776, 16
    %v1829 = vshll.u32 %v1776, 16
    %v1831 = vrot.slane %v1829, 1
    %v1832 = vor.u32 %v1827, %v1831
    %v1834 = vshrl.u32 %v1777, 16
    %v1836 = vshll.u32 %v1777, 16
    %v1838 = vrot.slane %v1836, 1
    %v1839 = vor.u32 %v1834, %v1838
    %v1841 = vshrl.u32 %v1778, 16
    %v1843 = vshll.u32 %v1778, 16
    %v1845 = vrot.slane %v1843, 1
    %v1846 = vor.u32 %v1841, %v1845
    %v1848 = vshrl.u32 %v1779, 16
    %v1850 = vshll.u32 %v1779, 16
    %v1852 = vrot.slane %v1850, 1
    %v1853 = vor.u32 %v1848, %v1852
    %v1855 = vshrl.u32 %v1780, 16
    %v1857 = vshll.u32 %v1780, 16
    %v1859 = vrot.slane %v1857, 1
    %v1860 = vor.u32 %v1855, %v1859
    %v1862 = vshrl.u32 %v1781, 16
    %v1864 = vshll.u32 %v1781, 16
    %v1866 = vrot.slane %v1864, 1
    %v1867 = vor.u32 %v1862, %v1866
    %v1869 = vshrl.u32 %v1782, 16
    %v1871 = vshll.u32 %v1782, 16
    %v1873 = vrot.slane %v1871, 1
    %v1874 = vor.u32 %v1869, %v1873
    %v1876 = vshrl.u32 %v1783, 16
    %v1878 = vshll.u32 %v1783, 16
    %v1880 = vrot.slane %v1878, 1
    %v1881 = vor.u32 %v1876, %v1880
    %v1883 = vshrl.u32 %v1784, 16
    %v1885 = vshll.u32 %v1784, 16
    %v1887 = vrot.slane %v1885, 1
    %v1888 = vor.u32 %v1883, %v1887
    %v1890 = vshrl.u32 %v1785, 16
    %v1892 = vshll.u32 %v1785, 16
    %v1894 = vrot.slane %v1892, 1
    %v1895 = vor.u32 %v1890, %v1894
    %v1897 = vshrl.u32 %v1786, 16
    %v1899 = vshll.u32 %v1786, 16
    %v1901 = vrot.slane %v1899, 1
    %v1902 = vor.u32 %v1897, %v1901
    %v1904 = vshrl.u32 %v1787, 16
    %v1906 = vshll.u32 %v1787, 16
    %v1908 = vrot.slane %v1906, 1
    %v1909 = vor.u32 %v1904, %v1908
    %v1911 = vshrl.u32 %v1788, 16
    %v1913 = vshll.u32 %v1788, 16
    %v1915 = vrot.slane %v1913, 1
    %v1916 = vor.u32 %v1911, %v1915
    %v1918 = vshrl.u32 %v1789, 16
    %v1920 = vshll.u32 %v1789, 16
    %v1922 = vrot.slane %v1920, 1
    %v1923 = vor.u32 %v1918, %v1922
    %v1925 = vshrl.u32 %v1790, 16
    %v1927 = vshll.u32 %v1790, 16
    %v1929 = vrot.slane %v1927, 1
    %v1930 = vor.u32 %v1925, %v1929
    %v1932 = vshrl.u32 %v1791, 16
    %v1934 = vshll.u32 %v1791, 16
    %v1936 = vrot.slane %v1934, 1
    %v1937 = vor.u32 %v1932, %v1936
    %v1939 = vshrl.u32 %v1792, 16
    %v1941 = vshll.u32 %v1792, 16
    %v1943 = vrot.slane %v1941, 1
    %v1944 = vor.u32 %v1939, %v1943
    %v1946 = vshrl.u32 %v1793, 16
    %v1948 = vshll.u32 %v1793, 16
    %v1950 = vrot.slane %v1948, 1
    %v1951 = vor.u32 %v1946, %v1950
    %v1953 = vshrl.u32 %v1794, 16
    %v1955 = vshll.u32 %v1794, 16
    %v1957 = vrot.slane %v1955, 1
    %v1958 = vor.u32 %v1953, %v1957
    %v1960 = vshrl.u32 %v1795, 16
    %v1962 = vshll.u32 %v1795, 16
    %v1964 = vrot.slane %v1962, 1
    %v1965 = vor.u32 %v1960, %v1964
    %v1967 = vshrl.u32 %v1796, 16
    %v1969 = vshll.u32 %v1796, 16
    %v1971 = vrot.slane %v1969, 1
    %v1972 = vor.u32 %v1967, %v1971
    %v1974 = vshrl.u32 %v1797, 16
    %v1976 = vshll.u32 %v1797, 16
    %v1978 = vrot.slane %v1976, 1
    %v1979 = vor.u32 %v1974, %v1978
    %v1981 = vshrl.u32 %v1798, 16
    %v1983 = vshll.u32 %v1798, 16
    %v1985 = vrot.slane %v1983, 1
    %v1986 = vor.u32 %v1981, %v1985
    %v1988 = vshrl.u32 %v1799, 16
    %v1990 = vshll.u32 %v1799, 16
    %v1992 = vrot.slane %v1990, 1
    %v1993 = vor.u32 %v1988, %v1992
    %v1995 = vshrl.u32 %v1800, 16
    %v1997 = vshll.u32 %v1800, 16
    %v1999 = vrot.slane %v1997, 1
    %v2000 = vor.u32 %v1995, %v1999
    %v2002 = vshrl.u32 %v1801, 16
    %v2004 = vshll.u32 %v1801, 16
    %v2006 = vrot.slane %v2004, 1
    %v2007 = vor.u32 %v2002, %v2006
    %v2009 = vshrl.u32 %v1802, 16
    %v2011 = vshll.u32 %v1802, 16
    %v2013 = vrot.slane %v2011, 1
    %v2014 = vor.u32 %v2009, %v2013
    %v2016 = vshrl.u32 %v1803, 16
    %v2018 = vshll.u32 %v1803, 16
    %v2020 = vrot.slane %v2018, 1
    %v2021 = vor.u32 %v2016, %v2020
    %v2023 = vshrl.u32 %v1804, 16
    %v2025 = vshll.u32 %v1804, 16
    %v2027 = vrot.slane %v2025, 1
    %v2028 = vor.u32 %v2023, %v2027
    %v2045 = vunpack.c.l.b16 %v733
    %v2046 = vunpack.c.h.b16 %v733
    %v2047 = vunpack.c.l.b16 %v734
    %v2048 = vunpack.c.h.b16 %v734
    %v2049 = vunpack.c.l.b16 %v735
    %v2050 = vunpack.c.h.b16 %v735
    %v2051 = vunpack.c.l.b16 %v736
    %v2052 = vunpack.c.h.b16 %v736
    %v2053 = vunpack.c.l.b16 %v737
    %v2054 = vunpack.c.h.b16 %v737
    %v2055 = vunpack.c.l.b16 %v738
    %v2056 = vunpack.c.h.b16 %v738
    %v2057 = vunpack.c.l.b16 %v739
    %v2058 = vunpack.c.h.b16 %v739
    %v2059 = vunpack.c.l.b16 %v740
    %v2060 = vunpack.c.h.b16 %v740
    %v2061 = vunpack.c.l.b16 %v741
    %v2062 = vunpack.c.h.b16 %v741
    %v2063 = vunpack.c.l.b16 %v742
    %v2064 = vunpack.c.h.b16 %v742
    %v2065 = vunpack.c.l.b16 %v743
    %v2066 = vunpack.c.h.b16 %v743
    %v2067 = vunpack.c.l.b16 %v744
    %v2068 = vunpack.c.h.b16 %v744
    %v2069 = vunpack.c.l.b16 %v745
    %v2070 = vunpack.c.h.b16 %v745
    %v2071 = vunpack.c.l.b16 %v746
    %v2072 = vunpack.c.h.b16 %v746
    %v2073 = vunpack.c.l.b16 %v747
    %v2074 = vunpack.c.h.b16 %v747
    %v2075 = vunpack.c.l.b16 %v748
    %v2076 = vunpack.c.h.b16 %v748
    %v2077 = vpack.c.b16 %v1741, %v2045
    %v2078 = vpack.c.b16 %v1742, %v2046
    %v2079 = vpack.c.b16 %v1743, %v2047
    %v2080 = vpack.c.b16 %v1744, %v2048
    %v2081 = vpack.c.b16 %v1745, %v2049
    %v2082 = vpack.c.b16 %v1746, %v2050
    %v2083 = vpack.c.b16 %v1747, %v2051
    %v2084 = vpack.c.b16 %v1748, %v2052
    %v2085 = vpack.c.b16 %v1749, %v2053
    %v2086 = vpack.c.b16 %v1750, %v2054
    %v2087 = vpack.c.b16 %v1751, %v2055
    %v2088 = vpack.c.b16 %v1752, %v2056
    %v2089 = vpack.c.b16 %v1753, %v2057
    %v2090 = vpack.c.b16 %v1754, %v2058
    %v2091 = vpack.c.b16 %v1755, %v2059
    %v2092 = vpack.c.b16 %v1756, %v2060
    %v2093 = vpack.c.b16 %v1757, %v2061
    %v2094 = vpack.c.b16 %v1758, %v2062
    %v2095 = vpack.c.b16 %v1759, %v2063
    %v2096 = vpack.c.b16 %v1760, %v2064
    %v2097 = vpack.c.b16 %v1761, %v2065
    %v2098 = vpack.c.b16 %v1762, %v2066
    %v2099 = vpack.c.b16 %v1763, %v2067
    %v2100 = vpack.c.b16 %v1764, %v2068
    %v2101 = vpack.c.b16 %v1765, %v2069
    %v2102 = vpack.c.b16 %v1766, %v2070
    %v2103 = vpack.c.b16 %v1767, %v2071
    %v2104 = vpack.c.b16 %v1768, %v2072
    %v2105 = vpack.c.b16 %v1769, %v2073
    %v2106 = vpack.c.b16 %v1770, %v2074
    %v2107 = vpack.c.b16 %v1771, %v2075
    %v2108 = vpack.c.b16 %v1772, %v2076
    %v2109 = vrot.slane %v2077, 1
    %v2110 = vrot.slane %v2078, 1
    %v2111 = vrot.slane %v2079, 1
    %v2112 = vrot.slane %v2080, 1
    %v2113 = vrot.slane %v2081, 1
    %v2114 = vrot.slane %v2082, 1
    %v2115 = vrot.slane %v2083, 1
    %v2116 = vrot.slane %v2084, 1
    %v2117 = vrot.slane %v2085, 1
    %v2118 = vrot.slane %v2086, 1
    %v2119 = vrot.slane %v2087, 1
    %v2120 = vrot.slane %v2088, 1
    %v2121 = vrot.slane %v2089, 1
    %v2122 = vrot.slane %v2090, 1
    %v2123 = vrot.slane %v2091, 1
    %v2124 = vrot.slane %v2092, 1
    %v2125 = vrot.slane %v2093, 1
    %v2126 = vrot.slane %v2094, 1
    %v2127 = vrot.slane %v2095, 1
    %v2128 = vrot.slane %v2096, 1
    %v2129 = vrot.slane %v2097, 1
    %v2130 = vrot.slane %v2098, 1
    %v2131 = vrot.slane %v2099, 1
    %v2132 = vrot.slane %v2100, 1
    %v2133 = vrot.slane %v2101, 1
    %v2134 = vrot.slane %v2102, 1
    %v2135 = vrot.slane %v2103, 1
    %v2136 = vrot.slane %v2104, 1
    %v2137 = vrot.slane %v2105, 1
    %v2138 = vrot.slane %v2106, 1
    %v2139 = vrot.slane %v2107, 1
    %v2140 = vrot.slane %v2108, 1
    %v2141 = vunpack.c.l.b16 %v883
    %v2142 = vunpack.c.l.b16 %v890
    %v2143 = vunpack.c.l.b16 %v1181
    %v2144 = vunpack.c.l.b16 %v1182
    %v2145 = vunpack.c.l.b16 %v1347
    %v2146 = vunpack.c.l.b16 %v1354
    %v2147 = vunpack.c.l.b16 %v1645
    %v2148 = vunpack.c.l.b16 %v1646
    %v2149 = vunpack.c.l.b16 %v1811
    %v2150 = vunpack.c.l.b16 %v1818
    %v2151 = vunpack.c.l.b16 %v2109
    %v2152 = vunpack.c.l.b16 %v2110
    %v2153 = vunpack.c.l.b16 %v897
    %v2154 = vunpack.c.l.b16 %v904
    %v2155 = vunpack.c.l.b16 %v1183
    %v2156 = vunpack.c.l.b16 %v1184
    %v2157 = vunpack.c.l.b16 %v1361
    %v2158 = vunpack.c.l.b16 %v1368
    %v2159 = vunpack.c.l.b16 %v1647
    %v2160 = vunpack.c.l.b16 %v1648
    %v2161 = vunpack.c.l.b16 %v1825
    %v2162 = vunpack.c.l.b16 %v1832
    %v2163 = vunpack.c.l.b16 %v2111
    %v2164 = vunpack.c.l.b16 %v2112
    %v2165 = vunpack.c.l.b16 %v911
    %v2166 = vunpack.c.l.b16 %v918
    %v2167 = vunpack.c.l.b16 %v1185
    %v2168 = vunpack.c.l.b16 %v1186
    %v2169 = vunpack.c.l.b16 %v1375
    %v2170 = vunpack.c.l.b16 %v1382
    %v2171 = vunpack.c.l.b16 %v1649
    %v2172 = vunpack.c.l.b16 %v1650
    %v2173 = vunpack.c.l.b16 %v1839
    %v2174 = vunpack.c.l.b16 %v1846
    %v2175 = vunpack.c.l.b16 %v2113
    %v2176 = vunpack.c.l.b16 %v2114
    %v2177 = vunpack.c.l.b16 %v925
    %v2178 = vunpack.c.l.b16 %v932
    %v2179 = vunpack.c.l.b16 %v1187
    %v2180 = vunpack.c.l.b16 %v1188
    %v2181 = vunpack.c.l.b16 %v1389
    %v2182 = vunpack.c.l.b16 %v1396
    %v2183 = vunpack.c.l.b16 %v1651
    %v2184 = vunpack.c.l.b16 %v1652
    %v2185 = vunpack.c.l.b16 %v1853
    %v2186 = vunpack.c.l.b16 %v1860
    %v2187 = vunpack.c.l.b16 %v2115
    %v2188 = vunpack.c.l.b16 %v2116
    %v2189 = vunpack.c.l.b16 %v939
    %v2190 = vunpack.c.l.b16 %v946
    %v2191 = vunpack.c.l.b16 %v1189
    %v2192 = vunpack.c.l.b16 %v1190
    %v2193 = vunpack.c.l.b16 %v1403
    %v2194 = vunpack.c.l.b16 %v1410
    %v2195 = vunpack.c.l.b16 %v1653
    %v2196 = vunpack.c.l.b16 %v1654
    %v2197 = vunpack.c.l.b16 %v1867
    %v2198 = vunpack.c.l.b16 %v1874
    %v2199 = vunpack.c.l.b16 %v2117
    %v2200 = vunpack.c.l.b16 %v2118
    %v2201 = vunpack.c.l.b16 %v953
    %v2202 = vunpack.c.l.b16 %v960
    %v2203 = vunpack.c.l.b16 %v1191
    %v2204 = vunpack.c.l.b16 %v1192
    %v2205 = vunpack.c.l.b16 %v1417
    %v2206 = vunpack.c.l.b16 %v1424
    %v2207 = vunpack.c.l.b16 %v1655
    %v2208 = vunpack.c.l.b16 %v1656
    %v2209 = vunpack.c.l.b16 %v1881
    %v2210 = vunpack.c.l.b16 %v1888
    %v2211 = vunpack.c.l.b16 %v2119
    %v2212 = vunpack.c.l.b16 %v2120
    %v2213 = vunpack.c.l.b16 %v967
    %v2214 = vunpack.c.l.b16 %v974
    %v2215 = vunpack.c.l.b16 %v1193
    %v2216 = vunpack.c.l.b16 %v1194
    %v2217 = vunpack.c.l.b16 %v1431
    %v2218 = vunpack.c.l.b16 %v1438
    %v2219 = vunpack.c.l.b16 %v1657
    %v2220 = vunpack.c.l.b16 %v1658
    %v2221 = vunpack.c.l.b16 %v1895
    %v2222 = vunpack.c.l.b16 %v1902
    %v2223 = vunpack.c.l.b16 %v2121
    %v2224 = vunpack.c.l.b16 %v2122
    %v2225 = vunpack.c.l.b16 %v981
    %v2226 = vunpack.c.l.b16 %v988
    %v2227 = vunpack.c.l.b16 %v1195
    %v2228 = vunpack.c.l.b16 %v1196
    %v2229 = vunpack.c.l.b16 %v1445
    %v2230 = vunpack.c.l.b16 %v1452
    %v2231 = vunpack.c.l.b16 %v1659
    %v2232 = vunpack.c.l.b16 %v1660
    %v2233 = vunpack.c.l.b16 %v1909
    %v2234 = vunpack.c.l.b16 %v1916
    %v2235 = vunpack.c.l.b16 %v2123
    %v2236 = vunpack.c.l.b16 %v2124
    %v2237 = vunpack.c.l.b16 %v995
    %v2238 = vunpack.c.l.b16 %v1002
    %v2239 = vunpack.c.l.b16 %v1197
    %v2240 = vunpack.c.l.b16 %v1198
    %v2241 = vunpack.c.l.b16 %v1459
    %v2242 = vunpack.c.l.b16 %v1466
    %v2243 = vunpack.c.l.b16 %v1661
    %v2244 = vunpack.c.l.b16 %v1662
    %v2245 = vunpack.c.l.b16 %v1923
    %v2246 = vunpack.c.l.b16 %v1930
    %v2247 = vunpack.c.l.b16 %v2125
    %v2248 = vunpack.c.l.b16 %v2126
    %v2249 = vunpack.c.l.b16 %v1009
    %v2250 = vunpack.c.l.b16 %v1016
    %v2251 = vunpack.c.l.b16 %v1199
    %v2252 = vunpack.c.l.b16 %v1200
    %v2253 = vunpack.c.l.b16 %v1473
    %v2254 = vunpack.c.l.b16 %v1480
    %v2255 = vunpack.c.l.b16 %v1663
    %v2256 = vunpack.c.l.b16 %v1664
    %v2257 = vunpack.c.l.b16 %v1937
    %v2258 = vunpack.c.l.b16 %v1944
    %v2259 = vunpack.c.l.b16 %v2127
    %v2260 = vunpack.c.l.b16 %v2128
    %v2261 = vunpack.c.l.b16 %v1023
    %v2262 = vunpack.c.l.b16 %v1030
    %v2263 = vunpack.c.l.b16 %v1201
    %v2264 = vunpack.c.l.b16 %v1202
    %v2265 = vunpack.c.l.b16 %v1487
    %v2266 = vunpack.c.l.b16 %v1494
    %v2267 = vunpack.c.l.b16 %v1665
    %v2268 = vunpack.c.l.b16 %v1666
    %v2269 = vunpack.c.l.b16 %v1951
    %v2270 = vunpack.c.l.b16 %v1958
    %v2271 = vunpack.c.l.b16 %v2129
    %v2272 = vunpack.c.l.b16 %v2130
    %v2273 = vunpack.c.l.b16 %v1037
    %v2274 = vunpack.c.l.b16 %v1044
    %v2275 = vunpack.c.l.b16 %v1203
    %v2276 = vunpack.c.l.b16 %v1204
    %v2277 = vunpack.c.l.b16 %v1501
    %v2278 = vunpack.c.l.b16 %v1508
    %v2279 = vunpack.c.l.b16 %v1667
    %v2280 = vunpack.c.l.b16 %v1668
    %v2281 = vunpack.c.l.b16 %v1965
    %v2282 = vunpack.c.l.b16 %v1972
    %v2283 = vunpack.c.l.b16 %v2131
    %v2284 = vunpack.c.l.b16 %v2132
    %v2285 = vunpack.c.l.b16 %v1051
    %v2286 = vunpack.c.l.b16 %v1058
    %v2287 = vunpack.c.l.b16 %v1205
    %v2288 = vunpack.c.l.b16 %v1206
    %v2289 = vunpack.c.l.b16 %v1515
    %v2290 = vunpack.c.l.b16 %v1522
    %v2291 = vunpack.c.l.b16 %v1669
    %v2292 = vunpack.c.l.b16 %v1670
    %v2293 = vunpack.c.l.b16 %v1979
    %v2294 = vunpack.c.l.b16 %v1986
    %v2295 = vunpack.c.l.b16 %v2133
    %v2296 = vunpack.c.l.b16 %v2134
    %v2297 = vunpack.c.l.b16 %v1065
    %v2298 = vunpack.c.l.b16 %v1072
    %v2299 = vunpack.c.l.b16 %v1207
    %v2300 = vunpack.c.l.b16 %v1208
    %v2301 = vunpack.c.l.b16 %v1529
    %v2302 = vunpack.c.l.b16 %v1536
    %v2303 = vunpack.c.l.b16 %v1671
    %v2304 = vunpack.c.l.b16 %v1672
    %v2305 = vunpack.c.l.b16 %v1993
    %v2306 = vunpack.c.l.b16 %v2000
    %v2307 = vunpack.c.l.b16 %v2135
    %v2308 = vunpack.c.l.b16 %v2136
    %v2309 = vunpack.c.l.b16 %v1079
    %v2310 = vunpack.c.l.b16 %v1086
    %v2311 = vunpack.c.l.b16 %v1209
    %v2312 = vunpack.c.l.b16 %v1210
    %v2313 = vunpack.c.l.b16 %v1543
    %v2314 = vunpack.c.l.b16 %v1550
    %v2315 = vunpack.c.l.b16 %v1673
    %v2316 = vunpack.c.l.b16 %v1674
    %v2317 = vunpack.c.l.b16 %v2007
    %v2318 = vunpack.c.l.b16 %v2014
    %v2319 = vunpack.c.l.b16 %v2137
    %v2320 = vunpack.c.l.b16 %v2138
    %v2321 = vunpack.c.l.b16 %v1093
    %v2322 = vunpack.c.l.b16 %v1100
    %v2323 = vunpack.c.l.b16 %v1211
    %v2324 = vunpack.c.l.b16 %v1212
    %v2325 = vunpack.c.l.b16 %v1557
    %v2326 = vunpack.c.l.b16 %v1564
    %v2327 = vunpack.c.l.b16 %v1675
    %v2328 = vunpack.c.l.b16 %v1676
    %v2329 = vunpack.c.l.b16 %v2021
    %v2330 = vunpack.c.l.b16 %v2028
    %v2331 = vunpack.c.l.b16 %v2139
    %v2332 = vunpack.c.l.b16 %v2140
    %v2333 = vld [vmem:[#allocation6] sm:$0xff]
    %v2334 = vld [vmem:[#allocation6 + $0x8] sm:$0xff]
    %v2335 = vld [vmem:[#allocation6 + $0x10] sm:$0xff]
    %v2336 = vld [vmem:[#allocation6 + $0x18] sm:$0xff]
    %v2337 = vld [vmem:[#allocation6 + $0x20] sm:$0xff]
    %v2338 = vld [vmem:[#allocation6 + $0x28] sm:$0xff]
    %v2339 = vld [vmem:[#allocation6 + $0x30] sm:$0xff]
    %v2340 = vld [vmem:[#allocation6 + $0x38] sm:$0xff]
    %v2341 = vld [vmem:[#allocation6 + $0x40] sm:$0xff]
    %v2342 = vld [vmem:[#allocation6 + $0x48] sm:$0xff]
    %v2343 = vld [vmem:[#allocation6 + $0x50] sm:$0xff]
    %v2344 = vld [vmem:[#allocation6 + $0x58] sm:$0xff]
    %v2345 = vld [vmem:[#allocation6 + $0x60] sm:$0xff]
    %v2346 = vld [vmem:[#allocation6 + $0x68] sm:$0xff]
    %v2347 = vld [vmem:[#allocation6 + $0x70] sm:$0xff]
    %v2348 = vld [vmem:[#allocation6 + $0x78] sm:$0xff]
    %v2349 = vld [vmem:[#allocation6 + $0x80] sm:$0xff]
    %v2350 = vld [vmem:[#allocation6 + $0x88] sm:$0xff]
    %v2351 = vld [vmem:[#allocation6 + $0x90] sm:$0xff]
    %v2352 = vld [vmem:[#allocation6 + $0x98] sm:$0xff]
    %v2353 = vld [vmem:[#allocation6 + $0xa0] sm:$0xff]
    %v2354 = vld [vmem:[#allocation6 + $0xa8] sm:$0xff]
    %v2355 = vld [vmem:[#allocation6 + $0xb0] sm:$0xff]
    %v2356 = vld [vmem:[#allocation6 + $0xb8] sm:$0xff]
    %v2357 = vld [vmem:[#allocation6 + $0xc0] sm:$0xff]
    %v2358 = vld [vmem:[#allocation6 + $0xc8] sm:$0xff]
    %v2359 = vld [vmem:[#allocation6 + $0xd0] sm:$0xff]
    %v2360 = vld [vmem:[#allocation6 + $0xd8] sm:$0xff]
    %v2361 = vld [vmem:[#allocation6 + $0xe0] sm:$0xff]
    %v2362 = vld [vmem:[#allocation6 + $0xe8] sm:$0xff]
    %v2363 = vld [vmem:[#allocation6 + $0xf0] sm:$0xff]
    %v2364 = vld [vmem:[#allocation6 + $0xf8] sm:$0xff]
    %v2365 = vld [vmem:[#allocation6 + $0x100] sm:$0xff]
    %v2366 = vld [vmem:[#allocation6 + $0x108] sm:$0xff]
    %v2367 = vld [vmem:[#allocation6 + $0x110] sm:$0xff]
    %v2368 = vld [vmem:[#allocation6 + $0x118] sm:$0xff]
    %v2369 = vld [vmem:[#allocation6 + $0x120] sm:$0xff]
    %v2370 = vld [vmem:[#allocation6 + $0x128] sm:$0xff]
    %v2371 = vld [vmem:[#allocation6 + $0x130] sm:$0xff]
    %v2372 = vld [vmem:[#allocation6 + $0x138] sm:$0xff]
    %v2373 = vld [vmem:[#allocation6 + $0x140] sm:$0xff]
    %v2374 = vld [vmem:[#allocation6 + $0x148] sm:$0xff]
    %v2375 = vld [vmem:[#allocation6 + $0x150] sm:$0xff]
    %v2376 = vld [vmem:[#allocation6 + $0x158] sm:$0xff]
    %v2377 = vld [vmem:[#allocation6 + $0x160] sm:$0xff]
    %v2378 = vld [vmem:[#allocation6 + $0x168] sm:$0xff]
    %v2379 = vld [vmem:[#allocation6 + $0x170] sm:$0xff]
    %v2380 = vld [vmem:[#allocation6 + $0x178] sm:$0xff]
    %v2381 = vld [vmem:[#allocation6 + $0x180] sm:$0xff]
    %v2382 = vld [vmem:[#allocation6 + $0x188] sm:$0xff]
    %v2383 = vld [vmem:[#allocation6 + $0x190] sm:$0xff]
    %v2384 = vld [vmem:[#allocation6 + $0x198] sm:$0xff]
    %v2385 = vld [vmem:[#allocation6 + $0x1a0] sm:$0xff]
    %v2386 = vld [vmem:[#allocation6 + $0x1a8] sm:$0xff]
    %v2387 = vld [vmem:[#allocation6 + $0x1b0] sm:$0xff]
    %v2388 = vld [vmem:[#allocation6 + $0x1b8] sm:$0xff]
    %v2389 = vld [vmem:[#allocation6 + $0x1c0] sm:$0xff]
    %v2390 = vld [vmem:[#allocation6 + $0x1c8] sm:$0xff]
    %v2391 = vld [vmem:[#allocation6 + $0x1d0] sm:$0xff]
    %v2392 = vld [vmem:[#allocation6 + $0x1d8] sm:$0xff]
    %v2393 = vld [vmem:[#allocation6 + $0x1e0] sm:$0xff]
    %v2394 = vld [vmem:[#allocation6 + $0x1e8] sm:$0xff]
    %v2395 = vld [vmem:[#allocation6 + $0x1f0] sm:$0xff]
    %v2396 = vld [vmem:[#allocation6 + $0x1f8] sm:$0xff]
    %v2397 = vld [vmem:[#allocation6 + $0x200] sm:$0xff]
    %v2398 = vld [vmem:[#allocation6 + $0x208] sm:$0xff]
    %v2399 = vld [vmem:[#allocation6 + $0x210] sm:$0xff]
    %v2400 = vld [vmem:[#allocation6 + $0x218] sm:$0xff]
    %v2401 = vld [vmem:[#allocation6 + $0x220] sm:$0xff]
    %v2402 = vld [vmem:[#allocation6 + $0x228] sm:$0xff]
    %v2403 = vld [vmem:[#allocation6 + $0x230] sm:$0xff]
    %v2404 = vld [vmem:[#allocation6 + $0x238] sm:$0xff]
    %v2405 = vld [vmem:[#allocation6 + $0x240] sm:$0xff]
    %v2406 = vld [vmem:[#allocation6 + $0x248] sm:$0xff]
    %v2407 = vld [vmem:[#allocation6 + $0x250] sm:$0xff]
    %v2408 = vld [vmem:[#allocation6 + $0x258] sm:$0xff]
    %v2409 = vld [vmem:[#allocation6 + $0x260] sm:$0xff]
    %v2410 = vld [vmem:[#allocation6 + $0x268] sm:$0xff]
    %v2411 = vld [vmem:[#allocation6 + $0x270] sm:$0xff]
    %v2412 = vld [vmem:[#allocation6 + $0x278] sm:$0xff]
    %v2413 = vld [vmem:[#allocation6 + $0x280] sm:$0xff]
    %v2414 = vld [vmem:[#allocation6 + $0x288] sm:$0xff]
    %v2415 = vld [vmem:[#allocation6 + $0x290] sm:$0xff]
    %v2416 = vld [vmem:[#allocation6 + $0x298] sm:$0xff]
    %v2417 = vld [vmem:[#allocation6 + $0x2a0] sm:$0xff]
    %v2418 = vld [vmem:[#allocation6 + $0x2a8] sm:$0xff]
    %v2419 = vld [vmem:[#allocation6 + $0x2b0] sm:$0xff]
    %v2420 = vld [vmem:[#allocation6 + $0x2b8] sm:$0xff]
    %v2421 = vld [vmem:[#allocation6 + $0x2c0] sm:$0xff]
    %v2422 = vld [vmem:[#allocation6 + $0x2c8] sm:$0xff]
    %v2423 = vld [vmem:[#allocation6 + $0x2d0] sm:$0xff]
    %v2424 = vld [vmem:[#allocation6 + $0x2d8] sm:$0xff]
    %v2425 = vld [vmem:[#allocation6 + $0x2e0] sm:$0xff]
    %v2426 = vld [vmem:[#allocation6 + $0x2e8] sm:$0xff]
    %v2427 = vld [vmem:[#allocation6 + $0x2f0] sm:$0xff]
    %v2428 = vld [vmem:[#allocation6 + $0x2f8] sm:$0xff]
    %v2429 = vld [vmem:[#allocation6 + $0x300] sm:$0xff]
    %v2430 = vld [vmem:[#allocation6 + $0x308] sm:$0xff]
    %v2431 = vld [vmem:[#allocation6 + $0x310] sm:$0xff]
    %v2432 = vld [vmem:[#allocation6 + $0x318] sm:$0xff]
    %v2433 = vld [vmem:[#allocation6 + $0x320] sm:$0xff]
    %v2434 = vld [vmem:[#allocation6 + $0x328] sm:$0xff]
    %v2435 = vld [vmem:[#allocation6 + $0x330] sm:$0xff]
    %v2436 = vld [vmem:[#allocation6 + $0x338] sm:$0xff]
    %v2437 = vld [vmem:[#allocation6 + $0x340] sm:$0xff]
    %v2438 = vld [vmem:[#allocation6 + $0x348] sm:$0xff]
    %v2439 = vld [vmem:[#allocation6 + $0x350] sm:$0xff]
    %v2440 = vld [vmem:[#allocation6 + $0x358] sm:$0xff]
    %v2441 = vld [vmem:[#allocation6 + $0x360] sm:$0xff]
    %v2442 = vld [vmem:[#allocation6 + $0x368] sm:$0xff]
    %v2443 = vld [vmem:[#allocation6 + $0x370] sm:$0xff]
    %v2444 = vld [vmem:[#allocation6 + $0x378] sm:$0xff]
    %v2445 = vld [vmem:[#allocation6 + $0x380] sm:$0xff]
    %v2446 = vld [vmem:[#allocation6 + $0x388] sm:$0xff]
    %v2447 = vld [vmem:[#allocation6 + $0x390] sm:$0xff]
    %v2448 = vld [vmem:[#allocation6 + $0x398] sm:$0xff]
    %v2449 = vld [vmem:[#allocation6 + $0x3a0] sm:$0xff]
    %v2450 = vld [vmem:[#allocation6 + $0x3a8] sm:$0xff]
    %v2451 = vld [vmem:[#allocation6 + $0x3b0] sm:$0xff]
    %v2452 = vld [vmem:[#allocation6 + $0x3b8] sm:$0xff]
    %v2453 = vld [vmem:[#allocation6 + $0x3c0] sm:$0xff]
    %v2454 = vld [vmem:[#allocation6 + $0x3c8] sm:$0xff]
    %v2455 = vld [vmem:[#allocation6 + $0x3d0] sm:$0xff]
    %v2456 = vld [vmem:[#allocation6 + $0x3d8] sm:$0xff]
    %v2457 = vld [vmem:[#allocation6 + $0x3e0] sm:$0xff]
    %v2458 = vld [vmem:[#allocation6 + $0x3e8] sm:$0xff]
    %v2459 = vld [vmem:[#allocation6 + $0x3f0] sm:$0xff]
    %v2460 = vld [vmem:[#allocation6 + $0x3f8] sm:$0xff]
    %v2461 = vld [vmem:[#allocation6 + $0x400] sm:$0xff]
    %v2462 = vld [vmem:[#allocation6 + $0x408] sm:$0xff]
    %v2463 = vld [vmem:[#allocation6 + $0x410] sm:$0xff]
    %v2464 = vld [vmem:[#allocation6 + $0x418] sm:$0xff]
    %v2465 = vld [vmem:[#allocation6 + $0x420] sm:$0xff]
    %v2466 = vld [vmem:[#allocation6 + $0x428] sm:$0xff]
    %v2467 = vld [vmem:[#allocation6 + $0x430] sm:$0xff]
    %v2468 = vld [vmem:[#allocation6 + $0x438] sm:$0xff]
    %v2469 = vld [vmem:[#allocation6 + $0x440] sm:$0xff]
    %v2470 = vld [vmem:[#allocation6 + $0x448] sm:$0xff]
    %v2471 = vld [vmem:[#allocation6 + $0x450] sm:$0xff]
    %v2472 = vld [vmem:[#allocation6 + $0x458] sm:$0xff]
    %v2473 = vld [vmem:[#allocation6 + $0x460] sm:$0xff]
    %v2474 = vld [vmem:[#allocation6 + $0x468] sm:$0xff]
    %v2475 = vld [vmem:[#allocation6 + $0x470] sm:$0xff]
    %v2476 = vld [vmem:[#allocation6 + $0x478] sm:$0xff]
    %v2477 = vld [vmem:[#allocation6 + $0x480] sm:$0xff]
    %v2478 = vld [vmem:[#allocation6 + $0x488] sm:$0xff]
    %v2479 = vld [vmem:[#allocation6 + $0x490] sm:$0xff]
    %v2480 = vld [vmem:[#allocation6 + $0x498] sm:$0xff]
    %v2481 = vld [vmem:[#allocation6 + $0x4a0] sm:$0xff]
    %v2482 = vld [vmem:[#allocation6 + $0x4a8] sm:$0xff]
    %v2483 = vld [vmem:[#allocation6 + $0x4b0] sm:$0xff]
    %v2484 = vld [vmem:[#allocation6 + $0x4b8] sm:$0xff]
    %v2485 = vld [vmem:[#allocation6 + $0x4c0] sm:$0xff]
    %v2486 = vld [vmem:[#allocation6 + $0x4c8] sm:$0xff]
    %v2487 = vld [vmem:[#allocation6 + $0x4d0] sm:$0xff]
    %v2488 = vld [vmem:[#allocation6 + $0x4d8] sm:$0xff]
    %v2489 = vld [vmem:[#allocation6 + $0x4e0] sm:$0xff]
    %v2490 = vld [vmem:[#allocation6 + $0x4e8] sm:$0xff]
    %v2491 = vld [vmem:[#allocation6 + $0x4f0] sm:$0xff]
    %v2492 = vld [vmem:[#allocation6 + $0x4f8] sm:$0xff]
    %v2493 = vld [vmem:[#allocation6 + $0x500] sm:$0xff]
    %v2494 = vld [vmem:[#allocation6 + $0x508] sm:$0xff]
    %v2495 = vld [vmem:[#allocation6 + $0x510] sm:$0xff]
    %v2496 = vld [vmem:[#allocation6 + $0x518] sm:$0xff]
    %v2497 = vld [vmem:[#allocation6 + $0x520] sm:$0xff]
    %v2498 = vld [vmem:[#allocation6 + $0x528] sm:$0xff]
    %v2499 = vld [vmem:[#allocation6 + $0x530] sm:$0xff]
    %v2500 = vld [vmem:[#allocation6 + $0x538] sm:$0xff]
    %v2501 = vld [vmem:[#allocation6 + $0x540] sm:$0xff]
    %v2502 = vld [vmem:[#allocation6 + $0x548] sm:$0xff]
    %v2503 = vld [vmem:[#allocation6 + $0x550] sm:$0xff]
    %v2504 = vld [vmem:[#allocation6 + $0x558] sm:$0xff]
    %v2505 = vld [vmem:[#allocation6 + $0x560] sm:$0xff]
    %v2506 = vld [vmem:[#allocation6 + $0x568] sm:$0xff]
    %v2507 = vld [vmem:[#allocation6 + $0x570] sm:$0xff]
    %v2508 = vld [vmem:[#allocation6 + $0x578] sm:$0xff]
    %v2509 = vld [vmem:[#allocation6 + $0x580] sm:$0xff]
    %v2510 = vld [vmem:[#allocation6 + $0x588] sm:$0xff]
    %v2511 = vld [vmem:[#allocation6 + $0x590] sm:$0xff]
    %v2512 = vld [vmem:[#allocation6 + $0x598] sm:$0xff]
    %v2513 = vld [vmem:[#allocation6 + $0x5a0] sm:$0xff]
    %v2514 = vld [vmem:[#allocation6 + $0x5a8] sm:$0xff]
    %v2515 = vld [vmem:[#allocation6 + $0x5b0] sm:$0xff]
    %v2516 = vld [vmem:[#allocation6 + $0x5b8] sm:$0xff]
    %v2517 = vld [vmem:[#allocation6 + $0x5c0] sm:$0xff]
    %v2518 = vld [vmem:[#allocation6 + $0x5c8] sm:$0xff]
    %v2519 = vld [vmem:[#allocation6 + $0x5d0] sm:$0xff]
    %v2520 = vld [vmem:[#allocation6 + $0x5d8] sm:$0xff]
    %v2521 = vld [vmem:[#allocation6 + $0x5e0] sm:$0xff]
    %v2522 = vld [vmem:[#allocation6 + $0x5e8] sm:$0xff]
    %v2523 = vld [vmem:[#allocation6 + $0x5f0] sm:$0xff]
    %v2524 = vld [vmem:[#allocation6 + $0x5f8] sm:$0xff]
    %v2525 = vld [vmem:[#allocation6 + $0x600] sm:$0xff]
    %v2526 = vld [vmem:[#allocation6 + $0x608] sm:$0xff]
    %v2527 = vld [vmem:[#allocation6 + $0x610] sm:$0xff]
    %v2528 = vld [vmem:[#allocation6 + $0x618] sm:$0xff]
    %v2529 = vld [vmem:[#allocation6 + $0x620] sm:$0xff]
    %v2530 = vld [vmem:[#allocation6 + $0x628] sm:$0xff]
    %v2531 = vld [vmem:[#allocation6 + $0x630] sm:$0xff]
    %v2532 = vld [vmem:[#allocation6 + $0x638] sm:$0xff]
    %v2533 = vld [vmem:[#allocation6 + $0x640] sm:$0xff]
    %v2534 = vld [vmem:[#allocation6 + $0x648] sm:$0xff]
    %v2535 = vld [vmem:[#allocation6 + $0x650] sm:$0xff]
    %v2536 = vld [vmem:[#allocation6 + $0x658] sm:$0xff]
    %v2537 = vld [vmem:[#allocation6 + $0x660] sm:$0xff]
    %v2538 = vld [vmem:[#allocation6 + $0x668] sm:$0xff]
    %v2539 = vld [vmem:[#allocation6 + $0x670] sm:$0xff]
    %v2540 = vld [vmem:[#allocation6 + $0x678] sm:$0xff]
    %v2541 = vld [vmem:[#allocation6 + $0x680] sm:$0xff]
    %v2542 = vld [vmem:[#allocation6 + $0x688] sm:$0xff]
    %v2543 = vld [vmem:[#allocation6 + $0x690] sm:$0xff]
    %v2544 = vld [vmem:[#allocation6 + $0x698] sm:$0xff]
    %v2545 = vld [vmem:[#allocation6 + $0x6a0] sm:$0xff]
    %v2546 = vld [vmem:[#allocation6 + $0x6a8] sm:$0xff]
    %v2547 = vld [vmem:[#allocation6 + $0x6b0] sm:$0xff]
    %v2548 = vld [vmem:[#allocation6 + $0x6b8] sm:$0xff]
    %v2549 = vld [vmem:[#allocation6 + $0x6c0] sm:$0xff]
    %v2550 = vld [vmem:[#allocation6 + $0x6c8] sm:$0xff]
    %v2551 = vld [vmem:[#allocation6 + $0x6d0] sm:$0xff]
    %v2552 = vld [vmem:[#allocation6 + $0x6d8] sm:$0xff]
    %v2553 = vld [vmem:[#allocation6 + $0x6e0] sm:$0xff]
    %v2554 = vld [vmem:[#allocation6 + $0x6e8] sm:$0xff]
    %v2555 = vld [vmem:[#allocation6 + $0x6f0] sm:$0xff]
    %v2556 = vld [vmem:[#allocation6 + $0x6f8] sm:$0xff]
    %v2557 = vld [vmem:[#allocation6 + $0x700] sm:$0xff]
    %v2558 = vld [vmem:[#allocation6 + $0x708] sm:$0xff]
    %v2559 = vld [vmem:[#allocation6 + $0x710] sm:$0xff]
    %v2560 = vld [vmem:[#allocation6 + $0x718] sm:$0xff]
    %v2561 = vld [vmem:[#allocation6 + $0x720] sm:$0xff]
    %v2562 = vld [vmem:[#allocation6 + $0x728] sm:$0xff]
    %v2563 = vld [vmem:[#allocation6 + $0x730] sm:$0xff]
    %v2564 = vld [vmem:[#allocation6 + $0x738] sm:$0xff]
    %v2565 = vld [vmem:[#allocation6 + $0x740] sm:$0xff]
    %v2566 = vld [vmem:[#allocation6 + $0x748] sm:$0xff]
    %v2567 = vld [vmem:[#allocation6 + $0x750] sm:$0xff]
    %v2568 = vld [vmem:[#allocation6 + $0x758] sm:$0xff]
    %v2569 = vld [vmem:[#allocation6 + $0x760] sm:$0xff]
    %v2570 = vld [vmem:[#allocation6 + $0x768] sm:$0xff]
    %v2571 = vld [vmem:[#allocation6 + $0x770] sm:$0xff]
    %v2572 = vld [vmem:[#allocation6 + $0x778] sm:$0xff]
    %v2573 = vld [vmem:[#allocation6 + $0x780] sm:$0xff]
    %v2574 = vld [vmem:[#allocation6 + $0x788] sm:$0xff]
    %v2575 = vld [vmem:[#allocation6 + $0x790] sm:$0xff]
    %v2576 = vld [vmem:[#allocation6 + $0x798] sm:$0xff]
    %v2577 = vld [vmem:[#allocation6 + $0x7a0] sm:$0xff]
    %v2578 = vld [vmem:[#allocation6 + $0x7a8] sm:$0xff]
    %v2579 = vld [vmem:[#allocation6 + $0x7b0] sm:$0xff]
    %v2580 = vld [vmem:[#allocation6 + $0x7b8] sm:$0xff]
    %v2581 = vld [vmem:[#allocation6 + $0x7c0] sm:$0xff]
    %v2582 = vld [vmem:[#allocation6 + $0x7c8] sm:$0xff]
    %v2583 = vld [vmem:[#allocation6 + $0x7d0] sm:$0xff]
    %v2584 = vld [vmem:[#allocation6 + $0x7d8] sm:$0xff]
    %v2585 = vld [vmem:[#allocation6 + $0x7e0] sm:$0xff]
    %v2586 = vld [vmem:[#allocation6 + $0x7e8] sm:$0xff]
    %v2587 = vld [vmem:[#allocation6 + $0x7f0] sm:$0xff]
    %v2588 = vld [vmem:[#allocation6 + $0x7f8] sm:$0xff]
    %v2589 = vld [vmem:[#allocation6 + $0x800] sm:$0xff]
    %v2590 = vld [vmem:[#allocation6 + $0x808] sm:$0xff]
    %v2591 = vld [vmem:[#allocation6 + $0x810] sm:$0xff]
    %v2592 = vld [vmem:[#allocation6 + $0x818] sm:$0xff]
    %v2593 = vld [vmem:[#allocation6 + $0x820] sm:$0xff]
    %v2594 = vld [vmem:[#allocation6 + $0x828] sm:$0xff]
    %v2595 = vld [vmem:[#allocation6 + $0x830] sm:$0xff]
    %v2596 = vld [vmem:[#allocation6 + $0x838] sm:$0xff]
    %v2597 = vld [vmem:[#allocation6 + $0x840] sm:$0xff]
    %v2598 = vld [vmem:[#allocation6 + $0x848] sm:$0xff]
    %v2599 = vld [vmem:[#allocation6 + $0x850] sm:$0xff]
    %v2600 = vld [vmem:[#allocation6 + $0x858] sm:$0xff]
    %v2601 = vld [vmem:[#allocation6 + $0x860] sm:$0xff]
    %v2602 = vld [vmem:[#allocation6 + $0x868] sm:$0xff]
    %v2603 = vld [vmem:[#allocation6 + $0x870] sm:$0xff]
    %v2604 = vld [vmem:[#allocation6 + $0x878] sm:$0xff]
    %v2605 = vld [vmem:[#allocation6 + $0x880] sm:$0xff]
    %v2606 = vld [vmem:[#allocation6 + $0x888] sm:$0xff]
    %v2607 = vld [vmem:[#allocation6 + $0x890] sm:$0xff]
    %v2608 = vld [vmem:[#allocation6 + $0x898] sm:$0xff]
    %v2609 = vld [vmem:[#allocation6 + $0x8a0] sm:$0xff]
    %v2610 = vld [vmem:[#allocation6 + $0x8a8] sm:$0xff]
    %v2611 = vld [vmem:[#allocation6 + $0x8b0] sm:$0xff]
    %v2612 = vld [vmem:[#allocation6 + $0x8b8] sm:$0xff]
    %v2613 = vld [vmem:[#allocation6 + $0x8c0] sm:$0xff]
    %v2614 = vld [vmem:[#allocation6 + $0x8c8] sm:$0xff]
    %v2615 = vld [vmem:[#allocation6 + $0x8d0] sm:$0xff]
    %v2616 = vld [vmem:[#allocation6 + $0x8d8] sm:$0xff]
    %v2617 = vld [vmem:[#allocation6 + $0x8e0] sm:$0xff]
    %v2618 = vld [vmem:[#allocation6 + $0x8e8] sm:$0xff]
    %v2619 = vld [vmem:[#allocation6 + $0x8f0] sm:$0xff]
    %v2620 = vld [vmem:[#allocation6 + $0x8f8] sm:$0xff]
    %v2621 = vpack.c.b16 %v767, %v765
    %v2622 = vpack.c.b16 %v768, %v766
    %v2623 = vpack.c.b16 %v2153, %v2141
    %v2624 = vpack.c.b16 %v2154, %v2142
    %v2625 = vpack.c.b16 %v2155, %v2143
    %v2626 = vpack.c.b16 %v2156, %v2144
    %v2627 = vpack.c.b16 %v1231, %v1229
    %v2628 = vpack.c.b16 %v1232, %v1230
    %v2629 = vpack.c.b16 %v2157, %v2145
    %v2630 = vpack.c.b16 %v2158, %v2146
    %v2631 = vpack.c.b16 %v2159, %v2147
    %v2632 = vpack.c.b16 %v2160, %v2148
    %v2633 = vpack.c.b16 %v1695, %v1693
    %v2634 = vpack.c.b16 %v1696, %v1694
    %v2635 = vpack.c.b16 %v2161, %v2149
    %v2636 = vpack.c.b16 %v2162, %v2150
    %v2637 = vpack.c.b16 %v2163, %v2151
    %v2638 = vpack.c.b16 %v2164, %v2152
    %v2639 = vpack.c.b16 %v771, %v769
    %v2640 = vpack.c.b16 %v772, %v770
    %v2641 = vpack.c.b16 %v2177, %v2165
    %v2642 = vpack.c.b16 %v2178, %v2166
    %v2643 = vpack.c.b16 %v2179, %v2167
    %v2644 = vpack.c.b16 %v2180, %v2168
    %v2645 = vpack.c.b16 %v1235, %v1233
    %v2646 = vpack.c.b16 %v1236, %v1234
    %v2647 = vpack.c.b16 %v2181, %v2169
    %v2648 = vpack.c.b16 %v2182, %v2170
    %v2649 = vpack.c.b16 %v2183, %v2171
    %v2650 = vpack.c.b16 %v2184, %v2172
    %v2651 = vpack.c.b16 %v1699, %v1697
    %v2652 = vpack.c.b16 %v1700, %v1698
    %v2653 = vpack.c.b16 %v2185, %v2173
    %v2654 = vpack.c.b16 %v2186, %v2174
    %v2655 = vpack.c.b16 %v2187, %v2175
    %v2656 = vpack.c.b16 %v2188, %v2176
    %v2657 = vpack.c.b16 %v775, %v773
    %v2658 = vpack.c.b16 %v776, %v774
    %v2659 = vpack.c.b16 %v2201, %v2189
    %v2660 = vpack.c.b16 %v2202, %v2190
    %v2661 = vpack.c.b16 %v2203, %v2191
    %v2662 = vpack.c.b16 %v2204, %v2192
    %v2663 = vpack.c.b16 %v1239, %v1237
    %v2664 = vpack.c.b16 %v1240, %v1238
    %v2665 = vpack.c.b16 %v2205, %v2193
    %v2666 = vpack.c.b16 %v2206, %v2194
    %v2667 = vpack.c.b16 %v2207, %v2195
    %v2668 = vpack.c.b16 %v2208, %v2196
    %v2669 = vpack.c.b16 %v1703, %v1701
    %v2670 = vpack.c.b16 %v1704, %v1702
    %v2671 = vpack.c.b16 %v2209, %v2197
    %v2672 = vpack.c.b16 %v2210, %v2198
    %v2673 = vpack.c.b16 %v2211, %v2199
    %v2674 = vpack.c.b16 %v2212, %v2200
    %v2675 = vpack.c.b16 %v779, %v777
    %v2676 = vpack.c.b16 %v780, %v778
    %v2677 = vpack.c.b16 %v2225, %v2213
    %v2678 = vpack.c.b16 %v2226, %v2214
    %v2679 = vpack.c.b16 %v2227, %v2215
    %v2680 = vpack.c.b16 %v2228, %v2216
    %v2681 = vpack.c.b16 %v1243, %v1241
    %v2682 = vpack.c.b16 %v1244, %v1242
    %v2683 = vpack.c.b16 %v2229, %v2217
    %v2684 = vpack.c.b16 %v2230, %v2218
    %v2685 = vpack.c.b16 %v2231, %v2219
    %v2686 = vpack.c.b16 %v2232, %v2220
    %v2687 = vpack.c.b16 %v1707, %v1705
    %v2688 = vpack.c.b16 %v1708, %v1706
    %v2689 = vpack.c.b16 %v2233, %v2221
    %v2690 = vpack.c.b16 %v2234, %v2222
    %v2691 = vpack.c.b16 %v2235, %v2223
    %v2692 = vpack.c.b16 %v2236, %v2224
    %v2693 = vpack.c.b16 %v783, %v781
    %v2694 = vpack.c.b16 %v784, %v782
    %v2695 = vpack.c.b16 %v2249, %v2237
    %v2696 = vpack.c.b16 %v2250, %v2238
    %v2697 = vpack.c.b16 %v2251, %v2239
    %v2698 = vpack.c.b16 %v2252, %v2240
    %v2699 = vpack.c.b16 %v1247, %v1245
    %v2700 = vpack.c.b16 %v1248, %v1246
    %v2701 = vpack.c.b16 %v2253, %v2241
    %v2702 = vpack.c.b16 %v2254, %v2242
    %v2703 = vpack.c.b16 %v2255, %v2243
    %v2704 = vpack.c.b16 %v2256, %v2244
    %v2705 = vpack.c.b16 %v1711, %v1709
    %v2706 = vpack.c.b16 %v1712, %v1710
    %v2707 = vpack.c.b16 %v2257, %v2245
    %v2708 = vpack.c.b16 %v2258, %v2246
    %v2709 = vpack.c.b16 %v2259, %v2247
    %v2710 = vpack.c.b16 %v2260, %v2248
    %v2711 = vpack.c.b16 %v787, %v785
    %v2712 = vpack.c.b16 %v788, %v786
    %v2713 = vpack.c.b16 %v2273, %v2261
    %v2714 = vpack.c.b16 %v2274, %v2262
    %v2715 = vpack.c.b16 %v2275, %v2263
    %v2716 = vpack.c.b16 %v2276, %v2264
    %v2717 = vpack.c.b16 %v1251, %v1249
    %v2718 = vpack.c.b16 %v1252, %v1250
    %v2719 = vpack.c.b16 %v2277, %v2265
    %v2720 = vpack.c.b16 %v2278, %v2266
    %v2721 = vpack.c.b16 %v2279, %v2267
    %v2722 = vpack.c.b16 %v2280, %v2268
    %v2723 = vpack.c.b16 %v1715, %v1713
    %v2724 = vpack.c.b16 %v1716, %v1714
    %v2725 = vpack.c.b16 %v2281, %v2269
    %v2726 = vpack.c.b16 %v2282, %v2270
    %v2727 = vpack.c.b16 %v2283, %v2271
    %v2728 = vpack.c.b16 %v2284, %v2272
    %v2729 = vpack.c.b16 %v791, %v789
    %v2730 = vpack.c.b16 %v792, %v790
    %v2731 = vpack.c.b16 %v2297, %v2285
    %v2732 = vpack.c.b16 %v2298, %v2286
    %v2733 = vpack.c.b16 %v2299, %v2287
    %v2734 = vpack.c.b16 %v2300, %v2288
    %v2735 = vpack.c.b16 %v1255, %v1253
    %v2736 = vpack.c.b16 %v1256, %v1254
    %v2737 = vpack.c.b16 %v2301, %v2289
    %v2738 = vpack.c.b16 %v2302, %v2290
    %v2739 = vpack.c.b16 %v2303, %v2291
    %v2740 = vpack.c.b16 %v2304, %v2292
    %v2741 = vpack.c.b16 %v1719, %v1717
    %v2742 = vpack.c.b16 %v1720, %v1718
    %v2743 = vpack.c.b16 %v2305, %v2293
    %v2744 = vpack.c.b16 %v2306, %v2294
    %v2745 = vpack.c.b16 %v2307, %v2295
    %v2746 = vpack.c.b16 %v2308, %v2296
    %v2747 = vpack.c.b16 %v795, %v793
    %v2748 = vpack.c.b16 %v796, %v794
    %v2749 = vpack.c.b16 %v2321, %v2309
    %v2750 = vpack.c.b16 %v2322, %v2310
    %v2751 = vpack.c.b16 %v2323, %v2311
    %v2752 = vpack.c.b16 %v2324, %v2312
    %v2753 = vpack.c.b16 %v1259, %v1257
    %v2754 = vpack.c.b16 %v1260, %v1258
    %v2755 = vpack.c.b16 %v2325, %v2313
    %v2756 = vpack.c.b16 %v2326, %v2314
    %v2757 = vpack.c.b16 %v2327, %v2315
    %v2758 = vpack.c.b16 %v2328, %v2316
    %v2759 = vpack.c.b16 %v1723, %v1721
    %v2760 = vpack.c.b16 %v1724, %v1722
    %v2761 = vpack.c.b16 %v2329, %v2317
    %v2762 = vpack.c.b16 %v2330, %v2318
    %v2763 = vpack.c.b16 %v2331, %v2319
    %v2764 = vpack.c.b16 %v2332, %v2320
    %v3197 = vunpack.c.l.b16 %v2333
    %v3198 = vunpack.c.h.b16 %v2333
    %v3199 = vunpack.c.l.b16 %v2334
    %v3200 = vunpack.c.h.b16 %v2334
    %v3201 = vunpack.c.l.b16 %v2335
    %v3202 = vunpack.c.h.b16 %v2335
    %v3203 = vunpack.c.l.b16 %v2336
    %v3204 = vunpack.c.h.b16 %v2336
    %v3205 = vunpack.c.l.b16 %v2337
    %v3206 = vunpack.c.h.b16 %v2337
    %v3207 = vunpack.c.l.b16 %v2338
    %v3208 = vunpack.c.h.b16 %v2338
    %v3209 = vunpack.c.l.b16 %v2339
    %v3210 = vunpack.c.h.b16 %v2339
    %v3211 = vunpack.c.l.b16 %v2340
    %v3212 = vunpack.c.h.b16 %v2340
    %v3213 = vunpack.c.l.b16 %v2341
    %v3214 = vunpack.c.h.b16 %v2341
    %v3215 = vunpack.c.l.b16 %v2342
    %v3216 = vunpack.c.h.b16 %v2342
    %v3217 = vunpack.c.l.b16 %v2343
    %v3218 = vunpack.c.h.b16 %v2343
    %v3219 = vunpack.c.l.b16 %v2344
    %v3220 = vunpack.c.h.b16 %v2344
    %v3221 = vunpack.c.l.b16 %v2345
    %v3222 = vunpack.c.h.b16 %v2345
    %v3223 = vunpack.c.l.b16 %v2346
    %v3224 = vunpack.c.h.b16 %v2346
    %v3225 = vunpack.c.l.b16 %v2347
    %v3226 = vunpack.c.h.b16 %v2347
    %v3227 = vunpack.c.l.b16 %v2348
    %v3228 = vunpack.c.h.b16 %v2348
    %v3229 = vunpack.c.l.b16 %v2349
    %v3230 = vunpack.c.h.b16 %v2349
    %v3231 = vunpack.c.l.b16 %v2350
    %v3232 = vunpack.c.h.b16 %v2350
    %v3233 = vunpack.c.l.b16 %v2351
    %v3234 = vunpack.c.h.b16 %v2351
    %v3235 = vunpack.c.l.b16 %v2352
    %v3236 = vunpack.c.h.b16 %v2352
    %v3237 = vunpack.c.l.b16 %v2353
    %v3238 = vunpack.c.h.b16 %v2353
    %v3239 = vunpack.c.l.b16 %v2354
    %v3240 = vunpack.c.h.b16 %v2354
    %v3241 = vunpack.c.l.b16 %v2355
    %v3242 = vunpack.c.h.b16 %v2355
    %v3243 = vunpack.c.l.b16 %v2356
    %v3244 = vunpack.c.h.b16 %v2356
    %v3245 = vunpack.c.l.b16 %v2357
    %v3246 = vunpack.c.h.b16 %v2357
    %v3247 = vunpack.c.l.b16 %v2358
    %v3248 = vunpack.c.h.b16 %v2358
    %v3249 = vunpack.c.l.b16 %v2359
    %v3250 = vunpack.c.h.b16 %v2359
    %v3251 = vunpack.c.l.b16 %v2360
    %v3252 = vunpack.c.h.b16 %v2360
    %v3253 = vunpack.c.l.b16 %v2361
    %v3254 = vunpack.c.h.b16 %v2361
    %v3255 = vunpack.c.l.b16 %v2362
    %v3256 = vunpack.c.h.b16 %v2362
    %v3257 = vunpack.c.l.b16 %v2363
    %v3258 = vunpack.c.h.b16 %v2363
    %v3259 = vunpack.c.l.b16 %v2364
    %v3260 = vunpack.c.h.b16 %v2364
    %v3261 = vunpack.c.l.b16 %v2365
    %v3262 = vunpack.c.h.b16 %v2365
    %v3263 = vunpack.c.l.b16 %v2366
    %v3264 = vunpack.c.h.b16 %v2366
    %v3265 = vunpack.c.l.b16 %v2367
    %v3266 = vunpack.c.h.b16 %v2367
    %v3267 = vunpack.c.l.b16 %v2368
    %v3268 = vunpack.c.h.b16 %v2368
    %v3269 = vunpack.c.l.b16 %v2369
    %v3270 = vunpack.c.h.b16 %v2369
    %v3271 = vunpack.c.l.b16 %v2370
    %v3272 = vunpack.c.h.b16 %v2370
    %v3273 = vunpack.c.l.b16 %v2371
    %v3274 = vunpack.c.h.b16 %v2371
    %v3275 = vunpack.c.l.b16 %v2372
    %v3276 = vunpack.c.h.b16 %v2372
    %v3277 = vunpack.c.l.b16 %v2373
    %v3278 = vunpack.c.h.b16 %v2373
    %v3279 = vunpack.c.l.b16 %v2374
    %v3280 = vunpack.c.h.b16 %v2374
    %v3281 = vunpack.c.l.b16 %v2375
    %v3282 = vunpack.c.h.b16 %v2375
    %v3283 = vunpack.c.l.b16 %v2376
    %v3284 = vunpack.c.h.b16 %v2376
    %v3285 = vunpack.c.l.b16 %v2377
    %v3286 = vunpack.c.h.b16 %v2377
    %v3287 = vunpack.c.l.b16 %v2378
    %v3288 = vunpack.c.h.b16 %v2378
    %v3289 = vunpack.c.l.b16 %v2379
    %v3290 = vunpack.c.h.b16 %v2379
    %v3291 = vunpack.c.l.b16 %v2380
    %v3292 = vunpack.c.h.b16 %v2380
    %v3293 = vunpack.c.l.b16 %v2381
    %v3294 = vunpack.c.h.b16 %v2381
    %v3295 = vunpack.c.l.b16 %v2382
    %v3296 = vunpack.c.h.b16 %v2382
    %v3297 = vunpack.c.l.b16 %v2383
    %v3298 = vunpack.c.h.b16 %v2383
    %v3299 = vunpack.c.l.b16 %v2384
    %v3300 = vunpack.c.h.b16 %v2384
    %v3301 = vunpack.c.l.b16 %v2385
    %v3302 = vunpack.c.h.b16 %v2385
    %v3303 = vunpack.c.l.b16 %v2386
    %v3304 = vunpack.c.h.b16 %v2386
    %v3305 = vunpack.c.l.b16 %v2387
    %v3306 = vunpack.c.h.b16 %v2387
    %v3307 = vunpack.c.l.b16 %v2388
    %v3308 = vunpack.c.h.b16 %v2388
    %v3309 = vunpack.c.l.b16 %v2389
    %v3310 = vunpack.c.h.b16 %v2389
    %v3311 = vunpack.c.l.b16 %v2390
    %v3312 = vunpack.c.h.b16 %v2390
    %v3313 = vunpack.c.l.b16 %v2391
    %v3314 = vunpack.c.h.b16 %v2391
    %v3315 = vunpack.c.l.b16 %v2392
    %v3316 = vunpack.c.h.b16 %v2392
    %v3317 = vunpack.c.l.b16 %v2393
    %v3318 = vunpack.c.h.b16 %v2393
    %v3319 = vunpack.c.l.b16 %v2394
    %v3320 = vunpack.c.h.b16 %v2394
    %v3321 = vunpack.c.l.b16 %v2395
    %v3322 = vunpack.c.h.b16 %v2395
    %v3323 = vunpack.c.l.b16 %v2396
    %v3324 = vunpack.c.h.b16 %v2396
    %v3325 = vunpack.c.l.b16 %v2397
    %v3326 = vunpack.c.h.b16 %v2397
    %v3327 = vunpack.c.l.b16 %v2398
    %v3328 = vunpack.c.h.b16 %v2398
    %v3329 = vunpack.c.l.b16 %v2399
    %v3330 = vunpack.c.h.b16 %v2399
    %v3331 = vunpack.c.l.b16 %v2400
    %v3332 = vunpack.c.h.b16 %v2400
    %v3333 = vunpack.c.l.b16 %v2401
    %v3334 = vunpack.c.h.b16 %v2401
    %v3335 = vunpack.c.l.b16 %v2402
    %v3336 = vunpack.c.h.b16 %v2402
    %v3337 = vunpack.c.l.b16 %v2403
    %v3338 = vunpack.c.h.b16 %v2403
    %v3339 = vunpack.c.l.b16 %v2404
    %v3340 = vunpack.c.h.b16 %v2404
    %v3341 = vunpack.c.l.b16 %v2405
    %v3342 = vunpack.c.h.b16 %v2405
    %v3343 = vunpack.c.l.b16 %v2406
    %v3344 = vunpack.c.h.b16 %v2406
    %v3345 = vunpack.c.l.b16 %v2407
    %v3346 = vunpack.c.h.b16 %v2407
    %v3347 = vunpack.c.l.b16 %v2408
    %v3348 = vunpack.c.h.b16 %v2408
    %v3349 = vunpack.c.l.b16 %v2409
    %v3350 = vunpack.c.h.b16 %v2409
    %v3351 = vunpack.c.l.b16 %v2410
    %v3352 = vunpack.c.h.b16 %v2410
    %v3353 = vunpack.c.l.b16 %v2411
    %v3354 = vunpack.c.h.b16 %v2411
    %v3355 = vunpack.c.l.b16 %v2412
    %v3356 = vunpack.c.h.b16 %v2412
    %v3357 = vunpack.c.l.b16 %v2413
    %v3358 = vunpack.c.h.b16 %v2413
    %v3359 = vunpack.c.l.b16 %v2414
    %v3360 = vunpack.c.h.b16 %v2414
    %v3361 = vunpack.c.l.b16 %v2415
    %v3362 = vunpack.c.h.b16 %v2415
    %v3363 = vunpack.c.l.b16 %v2416
    %v3364 = vunpack.c.h.b16 %v2416
    %v3365 = vunpack.c.l.b16 %v2417
    %v3366 = vunpack.c.h.b16 %v2417
    %v3367 = vunpack.c.l.b16 %v2418
    %v3368 = vunpack.c.h.b16 %v2418
    %v3369 = vunpack.c.l.b16 %v2419
    %v3370 = vunpack.c.h.b16 %v2419
    %v3371 = vunpack.c.l.b16 %v2420
    %v3372 = vunpack.c.h.b16 %v2420
    %v3373 = vunpack.c.l.b16 %v2421
    %v3374 = vunpack.c.h.b16 %v2421
    %v3375 = vunpack.c.l.b16 %v2422
    %v3376 = vunpack.c.h.b16 %v2422
    %v3377 = vunpack.c.l.b16 %v2423
    %v3378 = vunpack.c.h.b16 %v2423
    %v3379 = vunpack.c.l.b16 %v2424
    %v3380 = vunpack.c.h.b16 %v2424
    %v3381 = vunpack.c.l.b16 %v2425
    %v3382 = vunpack.c.h.b16 %v2425
    %v3383 = vunpack.c.l.b16 %v2426
    %v3384 = vunpack.c.h.b16 %v2426
    %v3385 = vunpack.c.l.b16 %v2427
    %v3386 = vunpack.c.h.b16 %v2427
    %v3387 = vunpack.c.l.b16 %v2428
    %v3388 = vunpack.c.h.b16 %v2428
    %v3389 = vunpack.c.l.b16 %v2429
    %v3390 = vunpack.c.h.b16 %v2429
    %v3391 = vunpack.c.l.b16 %v2430
    %v3392 = vunpack.c.h.b16 %v2430
    %v3393 = vunpack.c.l.b16 %v2431
    %v3394 = vunpack.c.h.b16 %v2431
    %v3395 = vunpack.c.l.b16 %v2432
    %v3396 = vunpack.c.h.b16 %v2432
    %v3397 = vunpack.c.l.b16 %v2433
    %v3398 = vunpack.c.h.b16 %v2433
    %v3399 = vunpack.c.l.b16 %v2434
    %v3400 = vunpack.c.h.b16 %v2434
    %v3401 = vunpack.c.l.b16 %v2435
    %v3402 = vunpack.c.h.b16 %v2435
    %v3403 = vunpack.c.l.b16 %v2436
    %v3404 = vunpack.c.h.b16 %v2436
    %v3405 = vunpack.c.l.b16 %v2437
    %v3406 = vunpack.c.h.b16 %v2437
    %v3407 = vunpack.c.l.b16 %v2438
    %v3408 = vunpack.c.h.b16 %v2438
    %v3409 = vunpack.c.l.b16 %v2439
    %v3410 = vunpack.c.h.b16 %v2439
    %v3411 = vunpack.c.l.b16 %v2440
    %v3412 = vunpack.c.h.b16 %v2440
    %v3413 = vunpack.c.l.b16 %v2441
    %v3414 = vunpack.c.h.b16 %v2441
    %v3415 = vunpack.c.l.b16 %v2442
    %v3416 = vunpack.c.h.b16 %v2442
    %v3417 = vunpack.c.l.b16 %v2443
    %v3418 = vunpack.c.h.b16 %v2443
    %v3419 = vunpack.c.l.b16 %v2444
    %v3420 = vunpack.c.h.b16 %v2444
    %v3421 = vunpack.c.l.b16 %v2445
    %v3422 = vunpack.c.h.b16 %v2445
    %v3423 = vunpack.c.l.b16 %v2446
    %v3424 = vunpack.c.h.b16 %v2446
    %v3425 = vunpack.c.l.b16 %v2447
    %v3426 = vunpack.c.h.b16 %v2447
    %v3427 = vunpack.c.l.b16 %v2448
    %v3428 = vunpack.c.h.b16 %v2448
    %v3429 = vunpack.c.l.b16 %v2449
    %v3430 = vunpack.c.h.b16 %v2449
    %v3431 = vunpack.c.l.b16 %v2450
    %v3432 = vunpack.c.h.b16 %v2450
    %v3433 = vunpack.c.l.b16 %v2451
    %v3434 = vunpack.c.h.b16 %v2451
    %v3435 = vunpack.c.l.b16 %v2452
    %v3436 = vunpack.c.h.b16 %v2452
    %v3437 = vunpack.c.l.b16 %v2453
    %v3438 = vunpack.c.h.b16 %v2453
    %v3439 = vunpack.c.l.b16 %v2454
    %v3440 = vunpack.c.h.b16 %v2454
    %v3441 = vunpack.c.l.b16 %v2455
    %v3442 = vunpack.c.h.b16 %v2455
    %v3443 = vunpack.c.l.b16 %v2456
    %v3444 = vunpack.c.h.b16 %v2456
    %v3445 = vunpack.c.l.b16 %v2457
    %v3446 = vunpack.c.h.b16 %v2457
    %v3447 = vunpack.c.l.b16 %v2458
    %v3448 = vunpack.c.h.b16 %v2458
    %v3449 = vunpack.c.l.b16 %v2459
    %v3450 = vunpack.c.h.b16 %v2459
    %v3451 = vunpack.c.l.b16 %v2460
    %v3452 = vunpack.c.h.b16 %v2460
    %v3453 = vunpack.c.l.b16 %v2461
    %v3454 = vunpack.c.h.b16 %v2461
    %v3455 = vunpack.c.l.b16 %v2462
    %v3456 = vunpack.c.h.b16 %v2462
    %v3457 = vunpack.c.l.b16 %v2463
    %v3458 = vunpack.c.h.b16 %v2463
    %v3459 = vunpack.c.l.b16 %v2464
    %v3460 = vunpack.c.h.b16 %v2464
    %v3461 = vunpack.c.l.b16 %v2465
    %v3462 = vunpack.c.h.b16 %v2465
    %v3463 = vunpack.c.l.b16 %v2466
    %v3464 = vunpack.c.h.b16 %v2466
    %v3465 = vunpack.c.l.b16 %v2467
    %v3466 = vunpack.c.h.b16 %v2467
    %v3467 = vunpack.c.l.b16 %v2468
    %v3468 = vunpack.c.h.b16 %v2468
    %v3469 = vunpack.c.l.b16 %v2469
    %v3470 = vunpack.c.h.b16 %v2469
    %v3471 = vunpack.c.l.b16 %v2470
    %v3472 = vunpack.c.h.b16 %v2470
    %v3473 = vunpack.c.l.b16 %v2471
    %v3474 = vunpack.c.h.b16 %v2471
    %v3475 = vunpack.c.l.b16 %v2472
    %v3476 = vunpack.c.h.b16 %v2472
    %v3477 = vunpack.c.l.b16 %v2473
    %v3478 = vunpack.c.h.b16 %v2473
    %v3479 = vunpack.c.l.b16 %v2474
    %v3480 = vunpack.c.h.b16 %v2474
    %v3481 = vunpack.c.l.b16 %v2475
    %v3482 = vunpack.c.h.b16 %v2475
    %v3483 = vunpack.c.l.b16 %v2476
    %v3484 = vunpack.c.h.b16 %v2476
    %v3485 = vunpack.c.l.b16 %v2477
    %v3486 = vunpack.c.h.b16 %v2477
    %v3487 = vunpack.c.l.b16 %v2478
    %v3488 = vunpack.c.h.b16 %v2478
    %v3489 = vunpack.c.l.b16 %v2479
    %v3490 = vunpack.c.h.b16 %v2479
    %v3491 = vunpack.c.l.b16 %v2480
    %v3492 = vunpack.c.h.b16 %v2480
    %v3493 = vunpack.c.l.b16 %v2481
    %v3494 = vunpack.c.h.b16 %v2481
    %v3495 = vunpack.c.l.b16 %v2482
    %v3496 = vunpack.c.h.b16 %v2482
    %v3497 = vunpack.c.l.b16 %v2483
    %v3498 = vunpack.c.h.b16 %v2483
    %v3499 = vunpack.c.l.b16 %v2484
    %v3500 = vunpack.c.h.b16 %v2484
    %v3501 = vunpack.c.l.b16 %v2485
    %v3502 = vunpack.c.h.b16 %v2485
    %v3503 = vunpack.c.l.b16 %v2486
    %v3504 = vunpack.c.h.b16 %v2486
    %v3505 = vunpack.c.l.b16 %v2487
    %v3506 = vunpack.c.h.b16 %v2487
    %v3507 = vunpack.c.l.b16 %v2488
    %v3508 = vunpack.c.h.b16 %v2488
    %v3509 = vunpack.c.l.b16 %v2489
    %v3510 = vunpack.c.h.b16 %v2489
    %v3511 = vunpack.c.l.b16 %v2490
    %v3512 = vunpack.c.h.b16 %v2490
    %v3513 = vunpack.c.l.b16 %v2491
    %v3514 = vunpack.c.h.b16 %v2491
    %v3515 = vunpack.c.l.b16 %v2492
    %v3516 = vunpack.c.h.b16 %v2492
    %v3517 = vunpack.c.l.b16 %v2493
    %v3518 = vunpack.c.h.b16 %v2493
    %v3519 = vunpack.c.l.b16 %v2494
    %v3520 = vunpack.c.h.b16 %v2494
    %v3521 = vunpack.c.l.b16 %v2495
    %v3522 = vunpack.c.h.b16 %v2495
    %v3523 = vunpack.c.l.b16 %v2496
    %v3524 = vunpack.c.h.b16 %v2496
    %v3525 = vunpack.c.l.b16 %v2497
    %v3526 = vunpack.c.h.b16 %v2497
    %v3527 = vunpack.c.l.b16 %v2498
    %v3528 = vunpack.c.h.b16 %v2498
    %v3529 = vunpack.c.l.b16 %v2499
    %v3530 = vunpack.c.h.b16 %v2499
    %v3531 = vunpack.c.l.b16 %v2500
    %v3532 = vunpack.c.h.b16 %v2500
    %v3533 = vunpack.c.l.b16 %v2501
    %v3534 = vunpack.c.h.b16 %v2501
    %v3535 = vunpack.c.l.b16 %v2502
    %v3536 = vunpack.c.h.b16 %v2502
    %v3537 = vunpack.c.l.b16 %v2503
    %v3538 = vunpack.c.h.b16 %v2503
    %v3539 = vunpack.c.l.b16 %v2504
    %v3540 = vunpack.c.h.b16 %v2504
    %v3541 = vunpack.c.l.b16 %v2505
    %v3542 = vunpack.c.h.b16 %v2505
    %v3543 = vunpack.c.l.b16 %v2506
    %v3544 = vunpack.c.h.b16 %v2506
    %v3545 = vunpack.c.l.b16 %v2507
    %v3546 = vunpack.c.h.b16 %v2507
    %v3547 = vunpack.c.l.b16 %v2508
    %v3548 = vunpack.c.h.b16 %v2508
    %v3549 = vunpack.c.l.b16 %v2509
    %v3550 = vunpack.c.h.b16 %v2509
    %v3551 = vunpack.c.l.b16 %v2510
    %v3552 = vunpack.c.h.b16 %v2510
    %v3553 = vunpack.c.l.b16 %v2511
    %v3554 = vunpack.c.h.b16 %v2511
    %v3555 = vunpack.c.l.b16 %v2512
    %v3556 = vunpack.c.h.b16 %v2512
    %v3557 = vunpack.c.l.b16 %v2513
    %v3558 = vunpack.c.h.b16 %v2513
    %v3559 = vunpack.c.l.b16 %v2514
    %v3560 = vunpack.c.h.b16 %v2514
    %v3561 = vunpack.c.l.b16 %v2515
    %v3562 = vunpack.c.h.b16 %v2515
    %v3563 = vunpack.c.l.b16 %v2516
    %v3564 = vunpack.c.h.b16 %v2516
    %v3565 = vunpack.c.l.b16 %v2517
    %v3566 = vunpack.c.h.b16 %v2517
    %v3567 = vunpack.c.l.b16 %v2518
    %v3568 = vunpack.c.h.b16 %v2518
    %v3569 = vunpack.c.l.b16 %v2519
    %v3570 = vunpack.c.h.b16 %v2519
    %v3571 = vunpack.c.l.b16 %v2520
    %v3572 = vunpack.c.h.b16 %v2520
    %v3573 = vunpack.c.l.b16 %v2521
    %v3574 = vunpack.c.h.b16 %v2521
    %v3575 = vunpack.c.l.b16 %v2522
    %v3576 = vunpack.c.h.b16 %v2522
    %v3577 = vunpack.c.l.b16 %v2523
    %v3578 = vunpack.c.h.b16 %v2523
    %v3579 = vunpack.c.l.b16 %v2524
    %v3580 = vunpack.c.h.b16 %v2524
    %v3581 = vunpack.c.l.b16 %v2525
    %v3582 = vunpack.c.h.b16 %v2525
    %v3583 = vunpack.c.l.b16 %v2526
    %v3584 = vunpack.c.h.b16 %v2526
    %v3585 = vunpack.c.l.b16 %v2527
    %v3586 = vunpack.c.h.b16 %v2527
    %v3587 = vunpack.c.l.b16 %v2528
    %v3588 = vunpack.c.h.b16 %v2528
    %v3589 = vunpack.c.l.b16 %v2529
    %v3590 = vunpack.c.h.b16 %v2529
    %v3591 = vunpack.c.l.b16 %v2530
    %v3592 = vunpack.c.h.b16 %v2530
    %v3593 = vunpack.c.l.b16 %v2531
    %v3594 = vunpack.c.h.b16 %v2531
    %v3595 = vunpack.c.l.b16 %v2532
    %v3596 = vunpack.c.h.b16 %v2532
    %v3597 = vunpack.c.l.b16 %v2533
    %v3598 = vunpack.c.h.b16 %v2533
    %v3599 = vunpack.c.l.b16 %v2534
    %v3600 = vunpack.c.h.b16 %v2534
    %v3601 = vunpack.c.l.b16 %v2535
    %v3602 = vunpack.c.h.b16 %v2535
    %v3603 = vunpack.c.l.b16 %v2536
    %v3604 = vunpack.c.h.b16 %v2536
    %v3605 = vunpack.c.l.b16 %v2537
    %v3606 = vunpack.c.h.b16 %v2537
    %v3607 = vunpack.c.l.b16 %v2538
    %v3608 = vunpack.c.h.b16 %v2538
    %v3609 = vunpack.c.l.b16 %v2539
    %v3610 = vunpack.c.h.b16 %v2539
    %v3611 = vunpack.c.l.b16 %v2540
    %v3612 = vunpack.c.h.b16 %v2540
    %v3613 = vunpack.c.l.b16 %v2541
    %v3614 = vunpack.c.h.b16 %v2541
    %v3615 = vunpack.c.l.b16 %v2542
    %v3616 = vunpack.c.h.b16 %v2542
    %v3617 = vunpack.c.l.b16 %v2543
    %v3618 = vunpack.c.h.b16 %v2543
    %v3619 = vunpack.c.l.b16 %v2544
    %v3620 = vunpack.c.h.b16 %v2544
    %v3621 = vunpack.c.l.b16 %v2545
    %v3622 = vunpack.c.h.b16 %v2545
    %v3623 = vunpack.c.l.b16 %v2546
    %v3624 = vunpack.c.h.b16 %v2546
    %v3625 = vunpack.c.l.b16 %v2547
    %v3626 = vunpack.c.h.b16 %v2547
    %v3627 = vunpack.c.l.b16 %v2548
    %v3628 = vunpack.c.h.b16 %v2548
    %v3629 = vunpack.c.l.b16 %v2549
    %v3630 = vunpack.c.h.b16 %v2549
    %v3631 = vunpack.c.l.b16 %v2550
    %v3632 = vunpack.c.h.b16 %v2550
    %v3633 = vunpack.c.l.b16 %v2551
    %v3634 = vunpack.c.h.b16 %v2551
    %v3635 = vunpack.c.l.b16 %v2552
    %v3636 = vunpack.c.h.b16 %v2552
    %v3637 = vunpack.c.l.b16 %v2553
    %v3638 = vunpack.c.h.b16 %v2553
    %v3639 = vunpack.c.l.b16 %v2554
    %v3640 = vunpack.c.h.b16 %v2554
    %v3641 = vunpack.c.l.b16 %v2555
    %v3642 = vunpack.c.h.b16 %v2555
    %v3643 = vunpack.c.l.b16 %v2556
    %v3644 = vunpack.c.h.b16 %v2556
    %v3645 = vunpack.c.l.b16 %v2557
    %v3646 = vunpack.c.h.b16 %v2557
    %v3647 = vunpack.c.l.b16 %v2558
    %v3648 = vunpack.c.h.b16 %v2558
    %v3649 = vunpack.c.l.b16 %v2559
    %v3650 = vunpack.c.h.b16 %v2559
    %v3651 = vunpack.c.l.b16 %v2560
    %v3652 = vunpack.c.h.b16 %v2560
    %v3653 = vunpack.c.l.b16 %v2561
    %v3654 = vunpack.c.h.b16 %v2561
    %v3655 = vunpack.c.l.b16 %v2562
    %v3656 = vunpack.c.h.b16 %v2562
    %v3657 = vunpack.c.l.b16 %v2563
    %v3658 = vunpack.c.h.b16 %v2563
    %v3659 = vunpack.c.l.b16 %v2564
    %v3660 = vunpack.c.h.b16 %v2564
    %v3661 = vunpack.c.l.b16 %v2565
    %v3662 = vunpack.c.h.b16 %v2565
    %v3663 = vunpack.c.l.b16 %v2566
    %v3664 = vunpack.c.h.b16 %v2566
    %v3665 = vunpack.c.l.b16 %v2567
    %v3666 = vunpack.c.h.b16 %v2567
    %v3667 = vunpack.c.l.b16 %v2568
    %v3668 = vunpack.c.h.b16 %v2568
    %v3669 = vunpack.c.l.b16 %v2569
    %v3670 = vunpack.c.h.b16 %v2569
    %v3671 = vunpack.c.l.b16 %v2570
    %v3672 = vunpack.c.h.b16 %v2570
    %v3673 = vunpack.c.l.b16 %v2571
    %v3674 = vunpack.c.h.b16 %v2571
    %v3675 = vunpack.c.l.b16 %v2572
    %v3676 = vunpack.c.h.b16 %v2572
    %v3677 = vunpack.c.l.b16 %v2573
    %v3678 = vunpack.c.h.b16 %v2573
    %v3679 = vunpack.c.l.b16 %v2574
    %v3680 = vunpack.c.h.b16 %v2574
    %v3681 = vunpack.c.l.b16 %v2575
    %v3682 = vunpack.c.h.b16 %v2575
    %v3683 = vunpack.c.l.b16 %v2576
    %v3684 = vunpack.c.h.b16 %v2576
    %v3685 = vunpack.c.l.b16 %v2577
    %v3686 = vunpack.c.h.b16 %v2577
    %v3687 = vunpack.c.l.b16 %v2578
    %v3688 = vunpack.c.h.b16 %v2578
    %v3689 = vunpack.c.l.b16 %v2579
    %v3690 = vunpack.c.h.b16 %v2579
    %v3691 = vunpack.c.l.b16 %v2580
    %v3692 = vunpack.c.h.b16 %v2580
    %v3693 = vunpack.c.l.b16 %v2581
    %v3694 = vunpack.c.h.b16 %v2581
    %v3695 = vunpack.c.l.b16 %v2582
    %v3696 = vunpack.c.h.b16 %v2582
    %v3697 = vunpack.c.l.b16 %v2583
    %v3698 = vunpack.c.h.b16 %v2583
    %v3699 = vunpack.c.l.b16 %v2584
    %v3700 = vunpack.c.h.b16 %v2584
    %v3701 = vunpack.c.l.b16 %v2585
    %v3702 = vunpack.c.h.b16 %v2585
    %v3703 = vunpack.c.l.b16 %v2586
    %v3704 = vunpack.c.h.b16 %v2586
    %v3705 = vunpack.c.l.b16 %v2587
    %v3706 = vunpack.c.h.b16 %v2587
    %v3707 = vunpack.c.l.b16 %v2588
    %v3708 = vunpack.c.h.b16 %v2588
    %v3709 = vunpack.c.l.b16 %v2589
    %v3710 = vunpack.c.h.b16 %v2589
    %v3711 = vunpack.c.l.b16 %v2590
    %v3712 = vunpack.c.h.b16 %v2590
    %v3713 = vunpack.c.l.b16 %v2591
    %v3714 = vunpack.c.h.b16 %v2591
    %v3715 = vunpack.c.l.b16 %v2592
    %v3716 = vunpack.c.h.b16 %v2592
    %v3717 = vunpack.c.l.b16 %v2593
    %v3718 = vunpack.c.h.b16 %v2593
    %v3719 = vunpack.c.l.b16 %v2594
    %v3720 = vunpack.c.h.b16 %v2594
    %v3721 = vunpack.c.l.b16 %v2595
    %v3722 = vunpack.c.h.b16 %v2595
    %v3723 = vunpack.c.l.b16 %v2596
    %v3724 = vunpack.c.h.b16 %v2596
    %v3725 = vunpack.c.l.b16 %v2597
    %v3726 = vunpack.c.h.b16 %v2597
    %v3727 = vunpack.c.l.b16 %v2598
    %v3728 = vunpack.c.h.b16 %v2598
    %v3729 = vunpack.c.l.b16 %v2599
    %v3730 = vunpack.c.h.b16 %v2599
    %v3731 = vunpack.c.l.b16 %v2600
    %v3732 = vunpack.c.h.b16 %v2600
    %v3733 = vunpack.c.l.b16 %v2601
    %v3734 = vunpack.c.h.b16 %v2601
    %v3735 = vunpack.c.l.b16 %v2602
    %v3736 = vunpack.c.h.b16 %v2602
    %v3737 = vunpack.c.l.b16 %v2603
    %v3738 = vunpack.c.h.b16 %v2603
    %v3739 = vunpack.c.l.b16 %v2604
    %v3740 = vunpack.c.h.b16 %v2604
    %v3741 = vunpack.c.l.b16 %v2605
    %v3742 = vunpack.c.h.b16 %v2605
    %v3743 = vunpack.c.l.b16 %v2606
    %v3744 = vunpack.c.h.b16 %v2606
    %v3745 = vunpack.c.l.b16 %v2607
    %v3746 = vunpack.c.h.b16 %v2607
    %v3747 = vunpack.c.l.b16 %v2608
    %v3748 = vunpack.c.h.b16 %v2608
    %v3749 = vunpack.c.l.b16 %v2609
    %v3750 = vunpack.c.h.b16 %v2609
    %v3751 = vunpack.c.l.b16 %v2610
    %v3752 = vunpack.c.h.b16 %v2610
    %v3753 = vunpack.c.l.b16 %v2611
    %v3754 = vunpack.c.h.b16 %v2611
    %v3755 = vunpack.c.l.b16 %v2612
    %v3756 = vunpack.c.h.b16 %v2612
    %v3757 = vunpack.c.l.b16 %v2613
    %v3758 = vunpack.c.h.b16 %v2613
    %v3759 = vunpack.c.l.b16 %v2614
    %v3760 = vunpack.c.h.b16 %v2614
    %v3761 = vunpack.c.l.b16 %v2615
    %v3762 = vunpack.c.h.b16 %v2615
    %v3763 = vunpack.c.l.b16 %v2616
    %v3764 = vunpack.c.h.b16 %v2616
    %v3765 = vunpack.c.l.b16 %v2617
    %v3766 = vunpack.c.h.b16 %v2617
    %v3767 = vunpack.c.l.b16 %v2618
    %v3768 = vunpack.c.h.b16 %v2618
    %v3769 = vunpack.c.l.b16 %v2619
    %v3770 = vunpack.c.h.b16 %v2619
    %v3771 = vunpack.c.l.b16 %v2620
    %v3772 = vunpack.c.h.b16 %v2620
    %v3773 = vpack.c.b16 %v3199, %v3197
    %v3774 = vpack.c.b16 %v3200, %v3198
    %v3775 = vpack.c.b16 %v3203, %v3201
    %v3776 = vpack.c.b16 %v3204, %v3202
    %v3777 = vpack.c.b16 %v3207, %v3205
    %v3778 = vpack.c.b16 %v3208, %v3206
    %v3779 = vpack.c.b16 %v3211, %v3209
    %v3780 = vpack.c.b16 %v3212, %v3210
    %v3781 = vpack.c.b16 %v3215, %v3213
    %v3782 = vpack.c.b16 %v3216, %v3214
    %v3783 = vpack.c.b16 %v3219, %v3217
    %v3784 = vpack.c.b16 %v3220, %v3218
    %v3785 = vpack.c.b16 %v3223, %v3221
    %v3786 = vpack.c.b16 %v3224, %v3222
    %v3787 = vpack.c.b16 %v3227, %v3225
    %v3788 = vpack.c.b16 %v3228, %v3226
    %v3789 = vpack.c.b16 %v3231, %v3229
    %v3790 = vpack.c.b16 %v3232, %v3230
    %v3791 = vpack.c.b16 %v3235, %v3233
    %v3792 = vpack.c.b16 %v3236, %v3234
    %v3793 = vpack.c.b16 %v3239, %v3237
    %v3794 = vpack.c.b16 %v3240, %v3238
    %v3795 = vpack.c.b16 %v3243, %v3241
    %v3796 = vpack.c.b16 %v3244, %v3242
    %v3797 = vpack.c.b16 %v3247, %v3245
    %v3798 = vpack.c.b16 %v3248, %v3246
    %v3799 = vpack.c.b16 %v3251, %v3249
    %v3800 = vpack.c.b16 %v3252, %v3250
    %v3801 = vpack.c.b16 %v3255, %v3253
    %v3802 = vpack.c.b16 %v3256, %v3254
    %v3803 = vpack.c.b16 %v3259, %v3257
    %v3804 = vpack.c.b16 %v3260, %v3258
    %v3805 = vpack.c.b16 %v3263, %v3261
    %v3806 = vpack.c.b16 %v3264, %v3262
    %v3807 = vpack.c.b16 %v3267, %v3265
    %v3808 = vpack.c.b16 %v3268, %v3266
    %v3809 = vpack.c.b16 %v3271, %v3269
    %v3810 = vpack.c.b16 %v3272, %v3270
    %v3811 = vpack.c.b16 %v3275, %v3273
    %v3812 = vpack.c.b16 %v3276, %v3274
    %v3813 = vpack.c.b16 %v3279, %v3277
    %v3814 = vpack.c.b16 %v3280, %v3278
    %v3815 = vpack.c.b16 %v3283, %v3281
    %v3816 = vpack.c.b16 %v3284, %v3282
    %v3817 = vpack.c.b16 %v3287, %v3285
    %v3818 = vpack.c.b16 %v3288, %v3286
    %v3819 = vpack.c.b16 %v3291, %v3289
    %v3820 = vpack.c.b16 %v3292, %v3290
    %v3821 = vpack.c.b16 %v3295, %v3293
    %v3822 = vpack.c.b16 %v3296, %v3294
    %v3823 = vpack.c.b16 %v3299, %v3297
    %v3824 = vpack.c.b16 %v3300, %v3298
    %v3825 = vpack.c.b16 %v3303, %v3301
    %v3826 = vpack.c.b16 %v3304, %v3302
    %v3827 = vpack.c.b16 %v3307, %v3305
    %v3828 = vpack.c.b16 %v3308, %v3306
    %v3829 = vpack.c.b16 %v3311, %v3309
    %v3830 = vpack.c.b16 %v3312, %v3310
    %v3831 = vpack.c.b16 %v3315, %v3313
    %v3832 = vpack.c.b16 %v3316, %v3314
    %v3833 = vpack.c.b16 %v3319, %v3317
    %v3834 = vpack.c.b16 %v3320, %v3318
    %v3835 = vpack.c.b16 %v3323, %v3321
    %v3836 = vpack.c.b16 %v3324, %v3322
    %v3837 = vpack.c.b16 %v3327, %v3325
    %v3838 = vpack.c.b16 %v3328, %v3326
    %v3839 = vpack.c.b16 %v3331, %v3329
    %v3840 = vpack.c.b16 %v3332, %v3330
    %v3841 = vpack.c.b16 %v3335, %v3333
    %v3842 = vpack.c.b16 %v3336, %v3334
    %v3843 = vpack.c.b16 %v3339, %v3337
    %v3844 = vpack.c.b16 %v3340, %v3338
    %v3845 = vpack.c.b16 %v3343, %v3341
    %v3846 = vpack.c.b16 %v3344, %v3342
    %v3847 = vpack.c.b16 %v3347, %v3345
    %v3848 = vpack.c.b16 %v3348, %v3346
    %v3849 = vpack.c.b16 %v3351, %v3349
    %v3850 = vpack.c.b16 %v3352, %v3350
    %v3851 = vpack.c.b16 %v3355, %v3353
    %v3852 = vpack.c.b16 %v3356, %v3354
    %v3853 = vpack.c.b16 %v3359, %v3357
    %v3854 = vpack.c.b16 %v3360, %v3358
    %v3855 = vpack.c.b16 %v3363, %v3361
    %v3856 = vpack.c.b16 %v3364, %v3362
    %v3857 = vpack.c.b16 %v3367, %v3365
    %v3858 = vpack.c.b16 %v3368, %v3366
    %v3859 = vpack.c.b16 %v3371, %v3369
    %v3860 = vpack.c.b16 %v3372, %v3370
    %v3861 = vpack.c.b16 %v3375, %v3373
    %v3862 = vpack.c.b16 %v3376, %v3374
    %v3863 = vpack.c.b16 %v3379, %v3377
    %v3864 = vpack.c.b16 %v3380, %v3378
    %v3865 = vpack.c.b16 %v3383, %v3381
    %v3866 = vpack.c.b16 %v3384, %v3382
    %v3867 = vpack.c.b16 %v3387, %v3385
    %v3868 = vpack.c.b16 %v3388, %v3386
    %v3869 = vpack.c.b16 %v3391, %v3389
    %v3870 = vpack.c.b16 %v3392, %v3390
    %v3871 = vpack.c.b16 %v3395, %v3393
    %v3872 = vpack.c.b16 %v3396, %v3394
    %v3873 = vpack.c.b16 %v3399, %v3397
    %v3874 = vpack.c.b16 %v3400, %v3398
    %v3875 = vpack.c.b16 %v3403, %v3401
    %v3876 = vpack.c.b16 %v3404, %v3402
    %v3877 = vpack.c.b16 %v3407, %v3405
    %v3878 = vpack.c.b16 %v3408, %v3406
    %v3879 = vpack.c.b16 %v3411, %v3409
    %v3880 = vpack.c.b16 %v3412, %v3410
    %v3881 = vpack.c.b16 %v3415, %v3413
    %v3882 = vpack.c.b16 %v3416, %v3414
    %v3883 = vpack.c.b16 %v3419, %v3417
    %v3884 = vpack.c.b16 %v3420, %v3418
    %v3885 = vpack.c.b16 %v3423, %v3421
    %v3886 = vpack.c.b16 %v3424, %v3422
    %v3887 = vpack.c.b16 %v3427, %v3425
    %v3888 = vpack.c.b16 %v3428, %v3426
    %v3889 = vpack.c.b16 %v3431, %v3429
    %v3890 = vpack.c.b16 %v3432, %v3430
    %v3891 = vpack.c.b16 %v3435, %v3433
    %v3892 = vpack.c.b16 %v3436, %v3434
    %v3893 = vpack.c.b16 %v3439, %v3437
    %v3894 = vpack.c.b16 %v3440, %v3438
    %v3895 = vpack.c.b16 %v3443, %v3441
    %v3896 = vpack.c.b16 %v3444, %v3442
    %v3897 = vpack.c.b16 %v3447, %v3445
    %v3898 = vpack.c.b16 %v3448, %v3446
    %v3899 = vpack.c.b16 %v3451, %v3449
    %v3900 = vpack.c.b16 %v3452, %v3450
    %v3901 = vpack.c.b16 %v3455, %v3453
    %v3902 = vpack.c.b16 %v3456, %v3454
    %v3903 = vpack.c.b16 %v3459, %v3457
    %v3904 = vpack.c.b16 %v3460, %v3458
    %v3905 = vpack.c.b16 %v3463, %v3461
    %v3906 = vpack.c.b16 %v3464, %v3462
    %v3907 = vpack.c.b16 %v3467, %v3465
    %v3908 = vpack.c.b16 %v3468, %v3466
    %v3909 = vpack.c.b16 %v3471, %v3469
    %v3910 = vpack.c.b16 %v3472, %v3470
    %v3911 = vpack.c.b16 %v3475, %v3473
    %v3912 = vpack.c.b16 %v3476, %v3474
    %v3913 = vpack.c.b16 %v3479, %v3477
    %v3914 = vpack.c.b16 %v3480, %v3478
    %v3915 = vpack.c.b16 %v3483, %v3481
    %v3916 = vpack.c.b16 %v3484, %v3482
    %v3917 = vpack.c.b16 %v3487, %v3485
    %v3918 = vpack.c.b16 %v3488, %v3486
    %v3919 = vpack.c.b16 %v3491, %v3489
    %v3920 = vpack.c.b16 %v3492, %v3490
    %v3921 = vpack.c.b16 %v3495, %v3493
    %v3922 = vpack.c.b16 %v3496, %v3494
    %v3923 = vpack.c.b16 %v3499, %v3497
    %v3924 = vpack.c.b16 %v3500, %v3498
    %v3925 = vpack.c.b16 %v3503, %v3501
    %v3926 = vpack.c.b16 %v3504, %v3502
    %v3927 = vpack.c.b16 %v3507, %v3505
    %v3928 = vpack.c.b16 %v3508, %v3506
    %v3929 = vpack.c.b16 %v3511, %v3509
    %v3930 = vpack.c.b16 %v3512, %v3510
    %v3931 = vpack.c.b16 %v3515, %v3513
    %v3932 = vpack.c.b16 %v3516, %v3514
    %v3933 = vpack.c.b16 %v3519, %v3517
    %v3934 = vpack.c.b16 %v3520, %v3518
    %v3935 = vpack.c.b16 %v3523, %v3521
    %v3936 = vpack.c.b16 %v3524, %v3522
    %v3937 = vpack.c.b16 %v3527, %v3525
    %v3938 = vpack.c.b16 %v3528, %v3526
    %v3939 = vpack.c.b16 %v3531, %v3529
    %v3940 = vpack.c.b16 %v3532, %v3530
    %v3941 = vpack.c.b16 %v3535, %v3533
    %v3942 = vpack.c.b16 %v3536, %v3534
    %v3943 = vpack.c.b16 %v3539, %v3537
    %v3944 = vpack.c.b16 %v3540, %v3538
    %v3945 = vpack.c.b16 %v3543, %v3541
    %v3946 = vpack.c.b16 %v3544, %v3542
    %v3947 = vpack.c.b16 %v3547, %v3545
    %v3948 = vpack.c.b16 %v3548, %v3546
    %v3949 = vpack.c.b16 %v3551, %v3549
    %v3950 = vpack.c.b16 %v3552, %v3550
    %v3951 = vpack.c.b16 %v3555, %v3553
    %v3952 = vpack.c.b16 %v3556, %v3554
    %v3953 = vpack.c.b16 %v3559, %v3557
    %v3954 = vpack.c.b16 %v3560, %v3558
    %v3955 = vpack.c.b16 %v3563, %v3561
    %v3956 = vpack.c.b16 %v3564, %v3562
    %v3957 = vpack.c.b16 %v3567, %v3565
    %v3958 = vpack.c.b16 %v3568, %v3566
    %v3959 = vpack.c.b16 %v3571, %v3569
    %v3960 = vpack.c.b16 %v3572, %v3570
    %v3961 = vpack.c.b16 %v3575, %v3573
    %v3962 = vpack.c.b16 %v3576, %v3574
    %v3963 = vpack.c.b16 %v3579, %v3577
    %v3964 = vpack.c.b16 %v3580, %v3578
    %v3965 = vpack.c.b16 %v3583, %v3581
    %v3966 = vpack.c.b16 %v3584, %v3582
    %v3967 = vpack.c.b16 %v3587, %v3585
    %v3968 = vpack.c.b16 %v3588, %v3586
    %v3969 = vpack.c.b16 %v3591, %v3589
    %v3970 = vpack.c.b16 %v3592, %v3590
    %v3971 = vpack.c.b16 %v3595, %v3593
    %v3972 = vpack.c.b16 %v3596, %v3594
    %v3973 = vpack.c.b16 %v3599, %v3597
    %v3974 = vpack.c.b16 %v3600, %v3598
    %v3975 = vpack.c.b16 %v3603, %v3601
    %v3976 = vpack.c.b16 %v3604, %v3602
    %v3977 = vpack.c.b16 %v3607, %v3605
    %v3978 = vpack.c.b16 %v3608, %v3606
    %v3979 = vpack.c.b16 %v3611, %v3609
    %v3980 = vpack.c.b16 %v3612, %v3610
    %v3981 = vpack.c.b16 %v3615, %v3613
    %v3982 = vpack.c.b16 %v3616, %v3614
    %v3983 = vpack.c.b16 %v3619, %v3617
    %v3984 = vpack.c.b16 %v3620, %v3618
    %v3985 = vpack.c.b16 %v3623, %v3621
    %v3986 = vpack.c.b16 %v3624, %v3622
    %v3987 = vpack.c.b16 %v3627, %v3625
    %v3988 = vpack.c.b16 %v3628, %v3626
    %v3989 = vpack.c.b16 %v3631, %v3629
    %v3990 = vpack.c.b16 %v3632, %v3630
    %v3991 = vpack.c.b16 %v3635, %v3633
    %v3992 = vpack.c.b16 %v3636, %v3634
    %v3993 = vpack.c.b16 %v3639, %v3637
    %v3994 = vpack.c.b16 %v3640, %v3638
    %v3995 = vpack.c.b16 %v3643, %v3641
    %v3996 = vpack.c.b16 %v3644, %v3642
    %v3997 = vpack.c.b16 %v3647, %v3645
    %v3998 = vpack.c.b16 %v3648, %v3646
    %v3999 = vpack.c.b16 %v3651, %v3649
    %v4000 = vpack.c.b16 %v3652, %v3650
    %v4001 = vpack.c.b16 %v3655, %v3653
    %v4002 = vpack.c.b16 %v3656, %v3654
    %v4003 = vpack.c.b16 %v3659, %v3657
    %v4004 = vpack.c.b16 %v3660, %v3658
    %v4005 = vpack.c.b16 %v3663, %v3661
    %v4006 = vpack.c.b16 %v3664, %v3662
    %v4007 = vpack.c.b16 %v3667, %v3665
    %v4008 = vpack.c.b16 %v3668, %v3666
    %v4009 = vpack.c.b16 %v3671, %v3669
    %v4010 = vpack.c.b16 %v3672, %v3670
    %v4011 = vpack.c.b16 %v3675, %v3673
    %v4012 = vpack.c.b16 %v3676, %v3674
    %v4013 = vpack.c.b16 %v3679, %v3677
    %v4014 = vpack.c.b16 %v3680, %v3678
    %v4015 = vpack.c.b16 %v3683, %v3681
    %v4016 = vpack.c.b16 %v3684, %v3682
    %v4017 = vpack.c.b16 %v3687, %v3685
    %v4018 = vpack.c.b16 %v3688, %v3686
    %v4019 = vpack.c.b16 %v3691, %v3689
    %v4020 = vpack.c.b16 %v3692, %v3690
    %v4021 = vpack.c.b16 %v3695, %v3693
    %v4022 = vpack.c.b16 %v3696, %v3694
    %v4023 = vpack.c.b16 %v3699, %v3697
    %v4024 = vpack.c.b16 %v3700, %v3698
    %v4025 = vpack.c.b16 %v3703, %v3701
    %v4026 = vpack.c.b16 %v3704, %v3702
    %v4027 = vpack.c.b16 %v3707, %v3705
    %v4028 = vpack.c.b16 %v3708, %v3706
    %v4029 = vpack.c.b16 %v3711, %v3709
    %v4030 = vpack.c.b16 %v3712, %v3710
    %v4031 = vpack.c.b16 %v3715, %v3713
    %v4032 = vpack.c.b16 %v3716, %v3714
    %v4033 = vpack.c.b16 %v3719, %v3717
    %v4034 = vpack.c.b16 %v3720, %v3718
    %v4035 = vpack.c.b16 %v3723, %v3721
    %v4036 = vpack.c.b16 %v3724, %v3722
    %v4037 = vpack.c.b16 %v3727, %v3725
    %v4038 = vpack.c.b16 %v3728, %v3726
    %v4039 = vpack.c.b16 %v3731, %v3729
    %v4040 = vpack.c.b16 %v3732, %v3730
    %v4041 = vpack.c.b16 %v3735, %v3733
    %v4042 = vpack.c.b16 %v3736, %v3734
    %v4043 = vpack.c.b16 %v3739, %v3737
    %v4044 = vpack.c.b16 %v3740, %v3738
    %v4045 = vpack.c.b16 %v3743, %v3741
    %v4046 = vpack.c.b16 %v3744, %v3742
    %v4047 = vpack.c.b16 %v3747, %v3745
    %v4048 = vpack.c.b16 %v3748, %v3746
    %v4049 = vpack.c.b16 %v3751, %v3749
    %v4050 = vpack.c.b16 %v3752, %v3750
    %v4051 = vpack.c.b16 %v3755, %v3753
    %v4052 = vpack.c.b16 %v3756, %v3754
    %v4053 = vpack.c.b16 %v3759, %v3757
    %v4054 = vpack.c.b16 %v3760, %v3758
    %v4055 = vpack.c.b16 %v3763, %v3761
    %v4056 = vpack.c.b16 %v3764, %v3762
    %v4057 = vpack.c.b16 %v3767, %v3765
    %v4058 = vpack.c.b16 %v3768, %v3766
    %v4059 = vpack.c.b16 %v3771, %v3769
    %v4060 = vpack.c.b16 %v3772, %v3770
    %4349 = vmatprep.subr.bf16.mxu0 %v3788
    %4350 = vmatpush1.bf16.msra.mxu0 %v3787
    %4351 = vmatprep.subr.bf16.mxu0 %v3786
    %4352 = vmatpush1.bf16.msra.mxu0 %v3785
    %4353 = vmatprep.subr.bf16.mxu0 %v3784
    %4354 = vmatpush1.bf16.msra.mxu0 %v3783
    %4355 = vmatprep.subr.bf16.mxu0 %v3782
    %4356 = vmatpush1.bf16.msra.mxu0 %v3781
    %4357 = vmatprep.subr.bf16.mxu0 %v3780
    %4358 = vmatpush1.bf16.msra.mxu0 %v3779
    %4359 = vmatprep.subr.bf16.mxu0 %v3778
    %4360 = vmatpush1.bf16.msra.mxu0 %v3777
    %4361 = vmatprep.subr.bf16.mxu0 %v3776
    %4362 = vmatpush1.bf16.msra.mxu0 %v3775
    %4363 = vmatprep.subr.bf16.mxu0 %v3774
    %4364 = vmatpush1.bf16.msra.mxu0 %v3773
    %4365 = vmatprep.subr.bf16.mxu0 %v3804
    %4366 = vmatpush2.bf16.msra.mxu0 %v3803
    %4367 = vmatprep.subr.bf16.mxu0 %v3802
    %4368 = vmatpush2.bf16.msra.mxu0 %v3801
    %4369 = vmatprep.subr.bf16.mxu0 %v3800
    %4370 = vmatpush2.bf16.msra.mxu0 %v3799
    %4371 = vmatprep.subr.bf16.mxu0 %v3798
    %4372 = vmatpush2.bf16.msra.mxu0 %v3797
    %4373 = vmatprep.subr.bf16.mxu0 %v3796
    %4374 = vmatpush2.bf16.msra.mxu0 %v3795
    %4375 = vmatprep.subr.bf16.mxu0 %v3794
    %4376 = vmatpush2.bf16.msra.mxu0 %v3793
    %4377 = vmatprep.subr.bf16.mxu0 %v3792
    %4378 = vmatpush2.bf16.msra.mxu0 %v3791
    %4379 = vmatprep.subr.bf16.mxu0 %v3790
    %4380 = vmatpush2.bf16.msra.mxu0 %v3789
    %4381 = vmatprep.mubr.bf16.mxu0 %v2622
    %4382 = vmatmul.mubr.bf16.gmra.mxu0 %v2621
    %v4383 = vpop.f32.mrf.mxu0
    %v4384 = vadd.f32 0.0, %v4383
    %v4385 = vpop.f32.mrf.mxu0
    %v4386 = vadd.f32 0.0, %v4385
    %v4387 = vpop.f32.mrf.mxu0
    %v4388 = vadd.f32 0.0, %v4387
    %v4389 = vpop.f32.mrf.mxu0
    %v4390 = vadd.f32 0.0, %v4389
    %4391 = vmatprep.mubr.bf16.mxu0 %v2640
    %4392 = vmatmul.mubr.bf16.gmra.mxu0 %v2639
    %v4393 = vpop.f32.mrf.mxu0
    %v4394 = vadd.f32 0.0, %v4393
    %v4395 = vpop.f32.mrf.mxu0
    %v4396 = vadd.f32 0.0, %v4395
    %v4397 = vpop.f32.mrf.mxu0
    %v4398 = vadd.f32 0.0, %v4397
    %v4399 = vpop.f32.mrf.mxu0
    %v4400 = vadd.f32 0.0, %v4399
    %4401 = vmatprep.mubr.bf16.mxu0 %v2658
    %4402 = vmatmul.mubr.bf16.gmra.mxu0 %v2657
    %v4403 = vpop.f32.mrf.mxu0
    %v4404 = vadd.f32 0.0, %v4403
    %v4405 = vpop.f32.mrf.mxu0
    %v4406 = vadd.f32 0.0, %v4405
    %v4407 = vpop.f32.mrf.mxu0
    %v4408 = vadd.f32 0.0, %v4407
    %v4409 = vpop.f32.mrf.mxu0
    %v4410 = vadd.f32 0.0, %v4409
    %4411 = vmatprep.mubr.bf16.mxu0 %v2676
    %4412 = vmatmul.mubr.bf16.gmra.mxu0 %v2675
    %v4413 = vpop.f32.mrf.mxu0
    %v4414 = vadd.f32 0.0, %v4413
    %v4415 = vpop.f32.mrf.mxu0
    %v4416 = vadd.f32 0.0, %v4415
    %v4417 = vpop.f32.mrf.mxu0
    %v4418 = vadd.f32 0.0, %v4417
    %v4419 = vpop.f32.mrf.mxu0
    %v4420 = vadd.f32 0.0, %v4419
    %4421 = vmatprep.mubr.bf16.mxu0 %v2694
    %4422 = vmatmul.mubr.bf16.gmra.mxu0 %v2693
    %v4423 = vpop.f32.mrf.mxu0
    %v4424 = vadd.f32 0.0, %v4423
    %v4425 = vpop.f32.mrf.mxu0
    %v4426 = vadd.f32 0.0, %v4425
    %v4427 = vpop.f32.mrf.mxu0
    %v4428 = vadd.f32 0.0, %v4427
    %v4429 = vpop.f32.mrf.mxu0
    %v4430 = vadd.f32 0.0, %v4429
    %4431 = vmatprep.mubr.bf16.mxu0 %v2712
    %4432 = vmatmul.mubr.bf16.gmra.mxu0 %v2711
    %v4433 = vpop.f32.mrf.mxu0
    %v4434 = vadd.f32 0.0, %v4433
    %v4435 = vpop.f32.mrf.mxu0
    %v4436 = vadd.f32 0.0, %v4435
    %v4437 = vpop.f32.mrf.mxu0
    %v4438 = vadd.f32 0.0, %v4437
    %v4439 = vpop.f32.mrf.mxu0
    %v4440 = vadd.f32 0.0, %v4439
    %4441 = vmatprep.mubr.bf16.mxu0 %v2730
    %4442 = vmatmul.mubr.bf16.gmra.mxu0 %v2729
    %v4443 = vpop.f32.mrf.mxu0
    %v4444 = vadd.f32 0.0, %v4443
    %v4445 = vpop.f32.mrf.mxu0
    %v4446 = vadd.f32 0.0, %v4445
    %v4447 = vpop.f32.mrf.mxu0
    %v4448 = vadd.f32 0.0, %v4447
    %v4449 = vpop.f32.mrf.mxu0
    %v4450 = vadd.f32 0.0, %v4449
    %4451 = vmatprep.mubr.bf16.mxu0 %v2748
    %4452 = vmatmul.mubr.bf16.gmra.mxu0 %v2747
    %v4453 = vpop.f32.mrf.mxu0
    %v4454 = vadd.f32 0.0, %v4453
    %v4455 = vpop.f32.mrf.mxu0
    %v4456 = vadd.f32 0.0, %v4455
    %v4457 = vpop.f32.mrf.mxu0
    %v4458 = vadd.f32 0.0, %v4457
    %v4459 = vpop.f32.mrf.mxu0
    %v4460 = vadd.f32 0.0, %v4459
    %4461 = vdwg.mxu0
    %4462 = vmatprep.subr.bf16.mxu0 %v3820
    %4463 = vmatpush1.bf16.msra.mxu0 %v3819
    %4464 = vmatprep.subr.bf16.mxu0 %v3818
    %4465 = vmatpush1.bf16.msra.mxu0 %v3817
    %4466 = vmatprep.subr.bf16.mxu0 %v3816
    %4467 = vmatpush1.bf16.msra.mxu0 %v3815
    %4468 = vmatprep.subr.bf16.mxu0 %v3814
    %4469 = vmatpush1.bf16.msra.mxu0 %v3813
    %4470 = vmatprep.subr.bf16.mxu0 %v3812
    %4471 = vmatpush1.bf16.msra.mxu0 %v3811
    %4472 = vmatprep.subr.bf16.mxu0 %v3810
    %4473 = vmatpush1.bf16.msra.mxu0 %v3809
    %4474 = vmatprep.subr.bf16.mxu0 %v3808
    %4475 = vmatpush1.bf16.msra.mxu0 %v3807
    %4476 = vmatprep.subr.bf16.mxu0 %v3806
    %4477 = vmatpush1.bf16.msra.mxu0 %v3805
    %4478 = vmatprep.subr.bf16.mxu0 %v3836
    %4479 = vmatpush2.bf16.msra.mxu0 %v3835
    %4480 = vmatprep.subr.bf16.mxu0 %v3834
    %4481 = vmatpush2.bf16.msra.mxu0 %v3833
    %4482 = vmatprep.subr.bf16.mxu0 %v3832
    %4483 = vmatpush2.bf16.msra.mxu0 %v3831
    %4484 = vmatprep.subr.bf16.mxu0 %v3830
    %4485 = vmatpush2.bf16.msra.mxu0 %v3829
    %4486 = vmatprep.subr.bf16.mxu0 %v3828
    %4487 = vmatpush2.bf16.msra.mxu0 %v3827
    %4488 = vmatprep.subr.bf16.mxu0 %v3826
    %4489 = vmatpush2.bf16.msra.mxu0 %v3825
    %4490 = vmatprep.subr.bf16.mxu0 %v3824
    %4491 = vmatpush2.bf16.msra.mxu0 %v3823
    %4492 = vmatprep.subr.bf16.mxu0 %v3822
    %4493 = vmatpush2.bf16.msra.mxu0 %v3821
    %4494 = vmatprep.mubr.bf16.mxu0 %v2624
    %4495 = vmatmul.mubr.bf16.gmra.mxu0 %v2623
    %v4496 = vpop.f32.mrf.mxu0
    %v4497 = vadd.f32 %v4384, %v4496
    %v4498 = vpop.f32.mrf.mxu0
    %v4499 = vadd.f32 %v4386, %v4498
    %v4500 = vpop.f32.mrf.mxu0
    %v4501 = vadd.f32 %v4388, %v4500
    %v4502 = vpop.f32.mrf.mxu0
    %v4503 = vadd.f32 %v4390, %v4502
    %4504 = vmatprep.mubr.bf16.mxu0 %v2642
    %4505 = vmatmul.mubr.bf16.gmra.mxu0 %v2641
    %v4506 = vpop.f32.mrf.mxu0
    %v4507 = vadd.f32 %v4394, %v4506
    %v4508 = vpop.f32.mrf.mxu0
    %v4509 = vadd.f32 %v4396, %v4508
    %v4510 = vpop.f32.mrf.mxu0
    %v4511 = vadd.f32 %v4398, %v4510
    %v4512 = vpop.f32.mrf.mxu0
    %v4513 = vadd.f32 %v4400, %v4512
    %4514 = vmatprep.mubr.bf16.mxu0 %v2660
    %4515 = vmatmul.mubr.bf16.gmra.mxu0 %v2659
    %v4516 = vpop.f32.mrf.mxu0
    %v4517 = vadd.f32 %v4404, %v4516
    %v4518 = vpop.f32.mrf.mxu0
    %v4519 = vadd.f32 %v4406, %v4518
    %v4520 = vpop.f32.mrf.mxu0
    %v4521 = vadd.f32 %v4408, %v4520
    %v4522 = vpop.f32.mrf.mxu0
    %v4523 = vadd.f32 %v4410, %v4522
    %4524 = vmatprep.mubr.bf16.mxu0 %v2678
    %4525 = vmatmul.mubr.bf16.gmra.mxu0 %v2677
    %v4526 = vpop.f32.mrf.mxu0
    %v4527 = vadd.f32 %v4414, %v4526
    %v4528 = vpop.f32.mrf.mxu0
    %v4529 = vadd.f32 %v4416, %v4528
    %v4530 = vpop.f32.mrf.mxu0
    %v4531 = vadd.f32 %v4418, %v4530
    %v4532 = vpop.f32.mrf.mxu0
    %v4533 = vadd.f32 %v4420, %v4532
    %4534 = vmatprep.mubr.bf16.mxu0 %v2696
    %4535 = vmatmul.mubr.bf16.gmra.mxu0 %v2695
    %v4536 = vpop.f32.mrf.mxu0
    %v4537 = vadd.f32 %v4424, %v4536
    %v4538 = vpop.f32.mrf.mxu0
    %v4539 = vadd.f32 %v4426, %v4538
    %v4540 = vpop.f32.mrf.mxu0
    %v4541 = vadd.f32 %v4428, %v4540
    %v4542 = vpop.f32.mrf.mxu0
    %v4543 = vadd.f32 %v4430, %v4542
    %4544 = vmatprep.mubr.bf16.mxu0 %v2714
    %4545 = vmatmul.mubr.bf16.gmra.mxu0 %v2713
    %v4546 = vpop.f32.mrf.mxu0
    %v4547 = vadd.f32 %v4434, %v4546
    %v4548 = vpop.f32.mrf.mxu0
    %v4549 = vadd.f32 %v4436, %v4548
    %v4550 = vpop.f32.mrf.mxu0
    %v4551 = vadd.f32 %v4438, %v4550
    %v4552 = vpop.f32.mrf.mxu0
    %v4553 = vadd.f32 %v4440, %v4552
    %4554 = vmatprep.mubr.bf16.mxu0 %v2732
    %4555 = vmatmul.mubr.bf16.gmra.mxu0 %v2731
    %v4556 = vpop.f32.mrf.mxu0
    %v4557 = vadd.f32 %v4444, %v4556
    %v4558 = vpop.f32.mrf.mxu0
    %v4559 = vadd.f32 %v4446, %v4558
    %v4560 = vpop.f32.mrf.mxu0
    %v4561 = vadd.f32 %v4448, %v4560
    %v4562 = vpop.f32.mrf.mxu0
    %v4563 = vadd.f32 %v4450, %v4562
    %4564 = vmatprep.mubr.bf16.mxu0 %v2750
    %4565 = vmatmul.mubr.bf16.gmra.mxu0 %v2749
    %v4566 = vpop.f32.mrf.mxu0
    %v4567 = vadd.f32 %v4454, %v4566
    %v4568 = vpop.f32.mrf.mxu0
    %v4569 = vadd.f32 %v4456, %v4568
    %v4570 = vpop.f32.mrf.mxu0
    %v4571 = vadd.f32 %v4458, %v4570
    %v4572 = vpop.f32.mrf.mxu0
    %v4573 = vadd.f32 %v4460, %v4572
    %4574 = vdwg.mxu0
    %4575 = vmatprep.subr.bf16.mxu0 %v3852
    %4576 = vmatpush1.bf16.msra.mxu0 %v3851
    %4577 = vmatprep.subr.bf16.mxu0 %v3850
    %4578 = vmatpush1.bf16.msra.mxu0 %v3849
    %4579 = vmatprep.subr.bf16.mxu0 %v3848
    %4580 = vmatpush1.bf16.msra.mxu0 %v3847
    %4581 = vmatprep.subr.bf16.mxu0 %v3846
    %4582 = vmatpush1.bf16.msra.mxu0 %v3845
    %4583 = vmatprep.subr.bf16.mxu0 %v3844
    %4584 = vmatpush1.bf16.msra.mxu0 %v3843
    %4585 = vmatprep.subr.bf16.mxu0 %v3842
    %4586 = vmatpush1.bf16.msra.mxu0 %v3841
    %4587 = vmatprep.subr.bf16.mxu0 %v3840
    %4588 = vmatpush1.bf16.msra.mxu0 %v3839
    %4589 = vmatprep.subr.bf16.mxu0 %v3838
    %4590 = vmatpush1.bf16.msra.mxu0 %v3837
    %4591 = vmatprep.subr.bf16.mxu0 %v3868
    %4592 = vmatpush2.bf16.msra.mxu0 %v3867
    %4593 = vmatprep.subr.bf16.mxu0 %v3866
    %4594 = vmatpush2.bf16.msra.mxu0 %v3865
    %4595 = vmatprep.subr.bf16.mxu0 %v3864
    %4596 = vmatpush2.bf16.msra.mxu0 %v3863
    %4597 = vmatprep.subr.bf16.mxu0 %v3862
    %4598 = vmatpush2.bf16.msra.mxu0 %v3861
    %4599 = vmatprep.subr.bf16.mxu0 %v3860
    %4600 = vmatpush2.bf16.msra.mxu0 %v3859
    %4601 = vmatprep.subr.bf16.mxu0 %v3858
    %4602 = vmatpush2.bf16.msra.mxu0 %v3857
    %4603 = vmatprep.subr.bf16.mxu0 %v3856
    %4604 = vmatpush2.bf16.msra.mxu0 %v3855
    %4605 = vmatprep.subr.bf16.mxu0 %v3854
    %4606 = vmatpush2.bf16.msra.mxu0 %v3853
    %4607 = vmatprep.mubr.bf16.mxu0 %v2626
    %4608 = vmatmul.mubr.bf16.gmra.mxu0 %v2625
    %v4609 = vpop.f32.mrf.mxu0
    %v4610 = vadd.f32 %v4497, %v4609
    %v4611 = vpop.f32.mrf.mxu0
    %v4612 = vadd.f32 %v4499, %v4611
    %v4613 = vpop.f32.mrf.mxu0
    %v4614 = vadd.f32 %v4501, %v4613
    %v4615 = vpop.f32.mrf.mxu0
    %v4616 = vadd.f32 %v4503, %v4615
    %4617 = vmatprep.mubr.bf16.mxu0 %v2644
    %4618 = vmatmul.mubr.bf16.gmra.mxu0 %v2643
    %v4619 = vpop.f32.mrf.mxu0
    %v4620 = vadd.f32 %v4507, %v4619
    %v4621 = vpop.f32.mrf.mxu0
    %v4622 = vadd.f32 %v4509, %v4621
    %v4623 = vpop.f32.mrf.mxu0
    %v4624 = vadd.f32 %v4511, %v4623
    %v4625 = vpop.f32.mrf.mxu0
    %v4626 = vadd.f32 %v4513, %v4625
    %4627 = vmatprep.mubr.bf16.mxu0 %v2662
    %4628 = vmatmul.mubr.bf16.gmra.mxu0 %v2661
    %v4629 = vpop.f32.mrf.mxu0
    %v4630 = vadd.f32 %v4517, %v4629
    %v4631 = vpop.f32.mrf.mxu0
    %v4632 = vadd.f32 %v4519, %v4631
    %v4633 = vpop.f32.mrf.mxu0
    %v4634 = vadd.f32 %v4521, %v4633
    %v4635 = vpop.f32.mrf.mxu0
    %v4636 = vadd.f32 %v4523, %v4635
    %4637 = vmatprep.mubr.bf16.mxu0 %v2680
    %4638 = vmatmul.mubr.bf16.gmra.mxu0 %v2679
    %v4639 = vpop.f32.mrf.mxu0
    %v4640 = vadd.f32 %v4527, %v4639
    %v4641 = vpop.f32.mrf.mxu0
    %v4642 = vadd.f32 %v4529, %v4641
    %v4643 = vpop.f32.mrf.mxu0
    %v4644 = vadd.f32 %v4531, %v4643
    %v4645 = vpop.f32.mrf.mxu0
    %v4646 = vadd.f32 %v4533, %v4645
    %4647 = vmatprep.mubr.bf16.mxu0 %v2698
    %4648 = vmatmul.mubr.bf16.gmra.mxu0 %v2697
    %v4649 = vpop.f32.mrf.mxu0
    %v4650 = vadd.f32 %v4537, %v4649
    %v4651 = vpop.f32.mrf.mxu0
    %v4652 = vadd.f32 %v4539, %v4651
    %v4653 = vpop.f32.mrf.mxu0
    %v4654 = vadd.f32 %v4541, %v4653
    %v4655 = vpop.f32.mrf.mxu0
    %v4656 = vadd.f32 %v4543, %v4655
    %4657 = vmatprep.mubr.bf16.mxu0 %v2716
    %4658 = vmatmul.mubr.bf16.gmra.mxu0 %v2715
    %v4659 = vpop.f32.mrf.mxu0
    %v4660 = vadd.f32 %v4547, %v4659
    %v4661 = vpop.f32.mrf.mxu0
    %v4662 = vadd.f32 %v4549, %v4661
    %v4663 = vpop.f32.mrf.mxu0
    %v4664 = vadd.f32 %v4551, %v4663
    %v4665 = vpop.f32.mrf.mxu0
    %v4666 = vadd.f32 %v4553, %v4665
    %4667 = vmatprep.mubr.bf16.mxu0 %v2734
    %4668 = vmatmul.mubr.bf16.gmra.mxu0 %v2733
    %v4669 = vpop.f32.mrf.mxu0
    %v4670 = vadd.f32 %v4557, %v4669
    %v4671 = vpop.f32.mrf.mxu0
    %v4672 = vadd.f32 %v4559, %v4671
    %v4673 = vpop.f32.mrf.mxu0
    %v4674 = vadd.f32 %v4561, %v4673
    %v4675 = vpop.f32.mrf.mxu0
    %v4676 = vadd.f32 %v4563, %v4675
    %4677 = vmatprep.mubr.bf16.mxu0 %v2752
    %4678 = vmatmul.mubr.bf16.gmra.mxu0 %v2751
    %v4679 = vpop.f32.mrf.mxu0
    %v4680 = vadd.f32 %v4567, %v4679
    %v4681 = vpop.f32.mrf.mxu0
    %v4682 = vadd.f32 %v4569, %v4681
    %v4683 = vpop.f32.mrf.mxu0
    %v4684 = vadd.f32 %v4571, %v4683
    %v4685 = vpop.f32.mrf.mxu0
    %v4686 = vadd.f32 %v4573, %v4685
    %4687 = vdwg.mxu0
    %4688 = vmatprep.subr.bf16.mxu0 %v3884
    %4689 = vmatpush1.bf16.msra.mxu0 %v3883
    %4690 = vmatprep.subr.bf16.mxu0 %v3882
    %4691 = vmatpush1.bf16.msra.mxu0 %v3881
    %4692 = vmatprep.subr.bf16.mxu0 %v3880
    %4693 = vmatpush1.bf16.msra.mxu0 %v3879
    %4694 = vmatprep.subr.bf16.mxu0 %v3878
    %4695 = vmatpush1.bf16.msra.mxu0 %v3877
    %4696 = vmatprep.subr.bf16.mxu0 %v3876
    %4697 = vmatpush1.bf16.msra.mxu0 %v3875
    %4698 = vmatprep.subr.bf16.mxu0 %v3874
    %4699 = vmatpush1.bf16.msra.mxu0 %v3873
    %4700 = vmatprep.subr.bf16.mxu0 %v3872
    %4701 = vmatpush1.bf16.msra.mxu0 %v3871
    %4702 = vmatprep.subr.bf16.mxu0 %v3870
    %4703 = vmatpush1.bf16.msra.mxu0 %v3869
    %4704 = vmatprep.subr.bf16.mxu0 %v3900
    %4705 = vmatpush2.bf16.msra.mxu0 %v3899
    %4706 = vmatprep.subr.bf16.mxu0 %v3898
    %4707 = vmatpush2.bf16.msra.mxu0 %v3897
    %4708 = vmatprep.subr.bf16.mxu0 %v3896
    %4709 = vmatpush2.bf16.msra.mxu0 %v3895
    %4710 = vmatprep.subr.bf16.mxu0 %v3894
    %4711 = vmatpush2.bf16.msra.mxu0 %v3893
    %4712 = vmatprep.subr.bf16.mxu0 %v3892
    %4713 = vmatpush2.bf16.msra.mxu0 %v3891
    %4714 = vmatprep.subr.bf16.mxu0 %v3890
    %4715 = vmatpush2.bf16.msra.mxu0 %v3889
    %4716 = vmatprep.subr.bf16.mxu0 %v3888
    %4717 = vmatpush2.bf16.msra.mxu0 %v3887
    %4718 = vmatprep.subr.bf16.mxu0 %v3886
    %4719 = vmatpush2.bf16.msra.mxu0 %v3885
    %4720 = vmatprep.mubr.bf16.mxu0 %v2628
    %4721 = vmatmul.mubr.bf16.gmra.mxu0 %v2627
    %v4722 = vpop.f32.mrf.mxu0
    %v4723 = vadd.f32 %v4610, %v4722
    %v4724 = vpop.f32.mrf.mxu0
    %v4725 = vadd.f32 %v4612, %v4724
    %v4726 = vpop.f32.mrf.mxu0
    %v4727 = vadd.f32 %v4614, %v4726
    %v4728 = vpop.f32.mrf.mxu0
    %v4729 = vadd.f32 %v4616, %v4728
    %4730 = vmatprep.mubr.bf16.mxu0 %v2646
    %4731 = vmatmul.mubr.bf16.gmra.mxu0 %v2645
    %v4732 = vpop.f32.mrf.mxu0
    %v4733 = vadd.f32 %v4620, %v4732
    %v4734 = vpop.f32.mrf.mxu0
    %v4735 = vadd.f32 %v4622, %v4734
    %v4736 = vpop.f32.mrf.mxu0
    %v4737 = vadd.f32 %v4624, %v4736
    %v4738 = vpop.f32.mrf.mxu0
    %v4739 = vadd.f32 %v4626, %v4738
    %4740 = vmatprep.mubr.bf16.mxu0 %v2664
    %4741 = vmatmul.mubr.bf16.gmra.mxu0 %v2663
    %v4742 = vpop.f32.mrf.mxu0
    %v4743 = vadd.f32 %v4630, %v4742
    %v4744 = vpop.f32.mrf.mxu0
    %v4745 = vadd.f32 %v4632, %v4744
    %v4746 = vpop.f32.mrf.mxu0
    %v4747 = vadd.f32 %v4634, %v4746
    %v4748 = vpop.f32.mrf.mxu0
    %v4749 = vadd.f32 %v4636, %v4748
    %4750 = vmatprep.mubr.bf16.mxu0 %v2682
    %4751 = vmatmul.mubr.bf16.gmra.mxu0 %v2681
    %v4752 = vpop.f32.mrf.mxu0
    %v4753 = vadd.f32 %v4640, %v4752
    %v4754 = vpop.f32.mrf.mxu0
    %v4755 = vadd.f32 %v4642, %v4754
    %v4756 = vpop.f32.mrf.mxu0
    %v4757 = vadd.f32 %v4644, %v4756
    %v4758 = vpop.f32.mrf.mxu0
    %v4759 = vadd.f32 %v4646, %v4758
    %4760 = vmatprep.mubr.bf16.mxu0 %v2700
    %4761 = vmatmul.mubr.bf16.gmra.mxu0 %v2699
    %v4762 = vpop.f32.mrf.mxu0
    %v4763 = vadd.f32 %v4650, %v4762
    %v4764 = vpop.f32.mrf.mxu0
    %v4765 = vadd.f32 %v4652, %v4764
    %v4766 = vpop.f32.mrf.mxu0
    %v4767 = vadd.f32 %v4654, %v4766
    %v4768 = vpop.f32.mrf.mxu0
    %v4769 = vadd.f32 %v4656, %v4768
    %4770 = vmatprep.mubr.bf16.mxu0 %v2718
    %4771 = vmatmul.mubr.bf16.gmra.mxu0 %v2717
    %v4772 = vpop.f32.mrf.mxu0
    %v4773 = vadd.f32 %v4660, %v4772
    %v4774 = vpop.f32.mrf.mxu0
    %v4775 = vadd.f32 %v4662, %v4774
    %v4776 = vpop.f32.mrf.mxu0
    %v4777 = vadd.f32 %v4664, %v4776
    %v4778 = vpop.f32.mrf.mxu0
    %v4779 = vadd.f32 %v4666, %v4778
    %4780 = vmatprep.mubr.bf16.mxu0 %v2736
    %4781 = vmatmul.mubr.bf16.gmra.mxu0 %v2735
    %v4782 = vpop.f32.mrf.mxu0
    %v4783 = vadd.f32 %v4670, %v4782
    %v4784 = vpop.f32.mrf.mxu0
    %v4785 = vadd.f32 %v4672, %v4784
    %v4786 = vpop.f32.mrf.mxu0
    %v4787 = vadd.f32 %v4674, %v4786
    %v4788 = vpop.f32.mrf.mxu0
    %v4789 = vadd.f32 %v4676, %v4788
    %4790 = vmatprep.mubr.bf16.mxu0 %v2754
    %4791 = vmatmul.mubr.bf16.gmra.mxu0 %v2753
    %v4792 = vpop.f32.mrf.mxu0
    %v4793 = vadd.f32 %v4680, %v4792
    %v4794 = vpop.f32.mrf.mxu0
    %v4795 = vadd.f32 %v4682, %v4794
    %v4796 = vpop.f32.mrf.mxu0
    %v4797 = vadd.f32 %v4684, %v4796
    %v4798 = vpop.f32.mrf.mxu0
    %v4799 = vadd.f32 %v4686, %v4798
    %4800 = vdwg.mxu0
    %4801 = vmatprep.subr.bf16.mxu0 %v3916
    %4802 = vmatpush1.bf16.msra.mxu0 %v3915
    %4803 = vmatprep.subr.bf16.mxu0 %v3914
    %4804 = vmatpush1.bf16.msra.mxu0 %v3913
    %4805 = vmatprep.subr.bf16.mxu0 %v3912
    %4806 = vmatpush1.bf16.msra.mxu0 %v3911
    %4807 = vmatprep.subr.bf16.mxu0 %v3910
    %4808 = vmatpush1.bf16.msra.mxu0 %v3909
    %4809 = vmatprep.subr.bf16.mxu0 %v3908
    %4810 = vmatpush1.bf16.msra.mxu0 %v3907
    %4811 = vmatprep.subr.bf16.mxu0 %v3906
    %4812 = vmatpush1.bf16.msra.mxu0 %v3905
    %4813 = vmatprep.subr.bf16.mxu0 %v3904
    %4814 = vmatpush1.bf16.msra.mxu0 %v3903
    %4815 = vmatprep.subr.bf16.mxu0 %v3902
    %4816 = vmatpush1.bf16.msra.mxu0 %v3901
    %4817 = vmatprep.subr.bf16.mxu0 %v3932
    %4818 = vmatpush2.bf16.msra.mxu0 %v3931
    %4819 = vmatprep.subr.bf16.mxu0 %v3930
    %4820 = vmatpush2.bf16.msra.mxu0 %v3929
    %4821 = vmatprep.subr.bf16.mxu0 %v3928
    %4822 = vmatpush2.bf16.msra.mxu0 %v3927
    %4823 = vmatprep.subr.bf16.mxu0 %v3926
    %4824 = vmatpush2.bf16.msra.mxu0 %v3925
    %4825 = vmatprep.subr.bf16.mxu0 %v3924
    %4826 = vmatpush2.bf16.msra.mxu0 %v3923
    %4827 = vmatprep.subr.bf16.mxu0 %v3922
    %4828 = vmatpush2.bf16.msra.mxu0 %v3921
    %4829 = vmatprep.subr.bf16.mxu0 %v3920
    %4830 = vmatpush2.bf16.msra.mxu0 %v3919
    %4831 = vmatprep.subr.bf16.mxu0 %v3918
    %4832 = vmatpush2.bf16.msra.mxu0 %v3917
    %4833 = vmatprep.mubr.bf16.mxu0 %v2630
    %4834 = vmatmul.mubr.bf16.gmra.mxu0 %v2629
    %v4835 = vpop.f32.mrf.mxu0
    %v4836 = vadd.f32 %v4723, %v4835
    %v4837 = vpop.f32.mrf.mxu0
    %v4838 = vadd.f32 %v4725, %v4837
    %v4839 = vpop.f32.mrf.mxu0
    %v4840 = vadd.f32 %v4727, %v4839
    %v4841 = vpop.f32.mrf.mxu0
    %v4842 = vadd.f32 %v4729, %v4841
    %4843 = vmatprep.mubr.bf16.mxu0 %v2648
    %4844 = vmatmul.mubr.bf16.gmra.mxu0 %v2647
    %v4845 = vpop.f32.mrf.mxu0
    %v4846 = vadd.f32 %v4733, %v4845
    %v4847 = vpop.f32.mrf.mxu0
    %v4848 = vadd.f32 %v4735, %v4847
    %v4849 = vpop.f32.mrf.mxu0
    %v4850 = vadd.f32 %v4737, %v4849
    %v4851 = vpop.f32.mrf.mxu0
    %v4852 = vadd.f32 %v4739, %v4851
    %4853 = vmatprep.mubr.bf16.mxu0 %v2666
    %4854 = vmatmul.mubr.bf16.gmra.mxu0 %v2665
    %v4855 = vpop.f32.mrf.mxu0
    %v4856 = vadd.f32 %v4743, %v4855
    %v4857 = vpop.f32.mrf.mxu0
    %v4858 = vadd.f32 %v4745, %v4857
    %v4859 = vpop.f32.mrf.mxu0
    %v4860 = vadd.f32 %v4747, %v4859
    %v4861 = vpop.f32.mrf.mxu0
    %v4862 = vadd.f32 %v4749, %v4861
    %4863 = vmatprep.mubr.bf16.mxu0 %v2684
    %4864 = vmatmul.mubr.bf16.gmra.mxu0 %v2683
    %v4865 = vpop.f32.mrf.mxu0
    %v4866 = vadd.f32 %v4753, %v4865
    %v4867 = vpop.f32.mrf.mxu0
    %v4868 = vadd.f32 %v4755, %v4867
    %v4869 = vpop.f32.mrf.mxu0
    %v4870 = vadd.f32 %v4757, %v4869
    %v4871 = vpop.f32.mrf.mxu0
    %v4872 = vadd.f32 %v4759, %v4871
    %4873 = vmatprep.mubr.bf16.mxu0 %v2702
    %4874 = vmatmul.mubr.bf16.gmra.mxu0 %v2701
    %v4875 = vpop.f32.mrf.mxu0
    %v4876 = vadd.f32 %v4763, %v4875
    %v4877 = vpop.f32.mrf.mxu0
    %v4878 = vadd.f32 %v4765, %v4877
    %v4879 = vpop.f32.mrf.mxu0
    %v4880 = vadd.f32 %v4767, %v4879
    %v4881 = vpop.f32.mrf.mxu0
    %v4882 = vadd.f32 %v4769, %v4881
    %4883 = vmatprep.mubr.bf16.mxu0 %v2720
    %4884 = vmatmul.mubr.bf16.gmra.mxu0 %v2719
    %v4885 = vpop.f32.mrf.mxu0
    %v4886 = vadd.f32 %v4773, %v4885
    %v4887 = vpop.f32.mrf.mxu0
    %v4888 = vadd.f32 %v4775, %v4887
    %v4889 = vpop.f32.mrf.mxu0
    %v4890 = vadd.f32 %v4777, %v4889
    %v4891 = vpop.f32.mrf.mxu0
    %v4892 = vadd.f32 %v4779, %v4891
    %4893 = vmatprep.mubr.bf16.mxu0 %v2738
    %4894 = vmatmul.mubr.bf16.gmra.mxu0 %v2737
    %v4895 = vpop.f32.mrf.mxu0
    %v4896 = vadd.f32 %v4783, %v4895
    %v4897 = vpop.f32.mrf.mxu0
    %v4898 = vadd.f32 %v4785, %v4897
    %v4899 = vpop.f32.mrf.mxu0
    %v4900 = vadd.f32 %v4787, %v4899
    %v4901 = vpop.f32.mrf.mxu0
    %v4902 = vadd.f32 %v4789, %v4901
    %4903 = vmatprep.mubr.bf16.mxu0 %v2756
    %4904 = vmatmul.mubr.bf16.gmra.mxu0 %v2755
    %v4905 = vpop.f32.mrf.mxu0
    %v4906 = vadd.f32 %v4793, %v4905
    %v4907 = vpop.f32.mrf.mxu0
    %v4908 = vadd.f32 %v4795, %v4907
    %v4909 = vpop.f32.mrf.mxu0
    %v4910 = vadd.f32 %v4797, %v4909
    %v4911 = vpop.f32.mrf.mxu0
    %v4912 = vadd.f32 %v4799, %v4911
    %4913 = vdwg.mxu0
    %4914 = vmatprep.subr.bf16.mxu0 %v3948
    %4915 = vmatpush1.bf16.msra.mxu0 %v3947
    %4916 = vmatprep.subr.bf16.mxu0 %v3946
    %4917 = vmatpush1.bf16.msra.mxu0 %v3945
    %4918 = vmatprep.subr.bf16.mxu0 %v3944
    %4919 = vmatpush1.bf16.msra.mxu0 %v3943
    %4920 = vmatprep.subr.bf16.mxu0 %v3942
    %4921 = vmatpush1.bf16.msra.mxu0 %v3941
    %4922 = vmatprep.subr.bf16.mxu0 %v3940
    %4923 = vmatpush1.bf16.msra.mxu0 %v3939
    %4924 = vmatprep.subr.bf16.mxu0 %v3938
    %4925 = vmatpush1.bf16.msra.mxu0 %v3937
    %4926 = vmatprep.subr.bf16.mxu0 %v3936
    %4927 = vmatpush1.bf16.msra.mxu0 %v3935
    %4928 = vmatprep.subr.bf16.mxu0 %v3934
    %4929 = vmatpush1.bf16.msra.mxu0 %v3933
    %4930 = vmatprep.subr.bf16.mxu0 %v3964
    %4931 = vmatpush2.bf16.msra.mxu0 %v3963
    %4932 = vmatprep.subr.bf16.mxu0 %v3962
    %4933 = vmatpush2.bf16.msra.mxu0 %v3961
    %4934 = vmatprep.subr.bf16.mxu0 %v3960
    %4935 = vmatpush2.bf16.msra.mxu0 %v3959
    %4936 = vmatprep.subr.bf16.mxu0 %v3958
    %4937 = vmatpush2.bf16.msra.mxu0 %v3957
    %4938 = vmatprep.subr.bf16.mxu0 %v3956
    %4939 = vmatpush2.bf16.msra.mxu0 %v3955
    %4940 = vmatprep.subr.bf16.mxu0 %v3954
    %4941 = vmatpush2.bf16.msra.mxu0 %v3953
    %4942 = vmatprep.subr.bf16.mxu0 %v3952
    %4943 = vmatpush2.bf16.msra.mxu0 %v3951
    %4944 = vmatprep.subr.bf16.mxu0 %v3950
    %4945 = vmatpush2.bf16.msra.mxu0 %v3949
    %4946 = vmatprep.mubr.bf16.mxu0 %v2632
    %4947 = vmatmul.mubr.bf16.gmra.mxu0 %v2631
    %v4948 = vpop.f32.mrf.mxu0
    %v4949 = vadd.f32 %v4836, %v4948
    %v4950 = vpop.f32.mrf.mxu0
    %v4951 = vadd.f32 %v4838, %v4950
    %v4952 = vpop.f32.mrf.mxu0
    %v4953 = vadd.f32 %v4840, %v4952
    %v4954 = vpop.f32.mrf.mxu0
    %v4955 = vadd.f32 %v4842, %v4954
    %4956 = vmatprep.mubr.bf16.mxu0 %v2650
    %4957 = vmatmul.mubr.bf16.gmra.mxu0 %v2649
    %v4958 = vpop.f32.mrf.mxu0
    %v4959 = vadd.f32 %v4846, %v4958
    %v4960 = vpop.f32.mrf.mxu0
    %v4961 = vadd.f32 %v4848, %v4960
    %v4962 = vpop.f32.mrf.mxu0
    %v4963 = vadd.f32 %v4850, %v4962
    %v4964 = vpop.f32.mrf.mxu0
    %v4965 = vadd.f32 %v4852, %v4964
    %4966 = vmatprep.mubr.bf16.mxu0 %v2668
    %4967 = vmatmul.mubr.bf16.gmra.mxu0 %v2667
    %v4968 = vpop.f32.mrf.mxu0
    %v4969 = vadd.f32 %v4856, %v4968
    %v4970 = vpop.f32.mrf.mxu0
    %v4971 = vadd.f32 %v4858, %v4970
    %v4972 = vpop.f32.mrf.mxu0
    %v4973 = vadd.f32 %v4860, %v4972
    %v4974 = vpop.f32.mrf.mxu0
    %v4975 = vadd.f32 %v4862, %v4974
    %4976 = vmatprep.mubr.bf16.mxu0 %v2686
    %4977 = vmatmul.mubr.bf16.gmra.mxu0 %v2685
    %v4978 = vpop.f32.mrf.mxu0
    %v4979 = vadd.f32 %v4866, %v4978
    %v4980 = vpop.f32.mrf.mxu0
    %v4981 = vadd.f32 %v4868, %v4980
    %v4982 = vpop.f32.mrf.mxu0
    %v4983 = vadd.f32 %v4870, %v4982
    %v4984 = vpop.f32.mrf.mxu0
    %v4985 = vadd.f32 %v4872, %v4984
    %4986 = vmatprep.mubr.bf16.mxu0 %v2704
    %4987 = vmatmul.mubr.bf16.gmra.mxu0 %v2703
    %v4988 = vpop.f32.mrf.mxu0
    %v4989 = vadd.f32 %v4876, %v4988
    %v4990 = vpop.f32.mrf.mxu0
    %v4991 = vadd.f32 %v4878, %v4990
    %v4992 = vpop.f32.mrf.mxu0
    %v4993 = vadd.f32 %v4880, %v4992
    %v4994 = vpop.f32.mrf.mxu0
    %v4995 = vadd.f32 %v4882, %v4994
    %4996 = vmatprep.mubr.bf16.mxu0 %v2722
    %4997 = vmatmul.mubr.bf16.gmra.mxu0 %v2721
    %v4998 = vpop.f32.mrf.mxu0
    %v4999 = vadd.f32 %v4886, %v4998
    %v5000 = vpop.f32.mrf.mxu0
    %v5001 = vadd.f32 %v4888, %v5000
    %v5002 = vpop.f32.mrf.mxu0
    %v5003 = vadd.f32 %v4890, %v5002
    %v5004 = vpop.f32.mrf.mxu0
    %v5005 = vadd.f32 %v4892, %v5004
    %5006 = vmatprep.mubr.bf16.mxu0 %v2740
    %5007 = vmatmul.mubr.bf16.gmra.mxu0 %v2739
    %v5008 = vpop.f32.mrf.mxu0
    %v5009 = vadd.f32 %v4896, %v5008
    %v5010 = vpop.f32.mrf.mxu0
    %v5011 = vadd.f32 %v4898, %v5010
    %v5012 = vpop.f32.mrf.mxu0
    %v5013 = vadd.f32 %v4900, %v5012
    %v5014 = vpop.f32.mrf.mxu0
    %v5015 = vadd.f32 %v4902, %v5014
    %5016 = vmatprep.mubr.bf16.mxu0 %v2758
    %5017 = vmatmul.mubr.bf16.gmra.mxu0 %v2757
    %v5018 = vpop.f32.mrf.mxu0
    %v5019 = vadd.f32 %v4906, %v5018
    %v5020 = vpop.f32.mrf.mxu0
    %v5021 = vadd.f32 %v4908, %v5020
    %v5022 = vpop.f32.mrf.mxu0
    %v5023 = vadd.f32 %v4910, %v5022
    %v5024 = vpop.f32.mrf.mxu0
    %v5025 = vadd.f32 %v4912, %v5024
    %5026 = vdwg.mxu0
    %5027 = vmatprep.subr.bf16.mxu0 %v3980
    %5028 = vmatpush1.bf16.msra.mxu0 %v3979
    %5029 = vmatprep.subr.bf16.mxu0 %v3978
    %5030 = vmatpush1.bf16.msra.mxu0 %v3977
    %5031 = vmatprep.subr.bf16.mxu0 %v3976
    %5032 = vmatpush1.bf16.msra.mxu0 %v3975
    %5033 = vmatprep.subr.bf16.mxu0 %v3974
    %5034 = vmatpush1.bf16.msra.mxu0 %v3973
    %5035 = vmatprep.subr.bf16.mxu0 %v3972
    %5036 = vmatpush1.bf16.msra.mxu0 %v3971
    %5037 = vmatprep.subr.bf16.mxu0 %v3970
    %5038 = vmatpush1.bf16.msra.mxu0 %v3969
    %5039 = vmatprep.subr.bf16.mxu0 %v3968
    %5040 = vmatpush1.bf16.msra.mxu0 %v3967
    %5041 = vmatprep.subr.bf16.mxu0 %v3966
    %5042 = vmatpush1.bf16.msra.mxu0 %v3965
    %5043 = vmatprep.subr.bf16.mxu0 %v3996
    %5044 = vmatpush2.bf16.msra.mxu0 %v3995
    %5045 = vmatprep.subr.bf16.mxu0 %v3994
    %5046 = vmatpush2.bf16.msra.mxu0 %v3993
    %5047 = vmatprep.subr.bf16.mxu0 %v3992
    %5048 = vmatpush2.bf16.msra.mxu0 %v3991
    %5049 = vmatprep.subr.bf16.mxu0 %v3990
    %5050 = vmatpush2.bf16.msra.mxu0 %v3989
    %5051 = vmatprep.subr.bf16.mxu0 %v3988
    %5052 = vmatpush2.bf16.msra.mxu0 %v3987
    %5053 = vmatprep.subr.bf16.mxu0 %v3986
    %5054 = vmatpush2.bf16.msra.mxu0 %v3985
    %5055 = vmatprep.subr.bf16.mxu0 %v3984
    %5056 = vmatpush2.bf16.msra.mxu0 %v3983
    %5057 = vmatprep.subr.bf16.mxu0 %v3982
    %5058 = vmatpush2.bf16.msra.mxu0 %v3981
    %5059 = vmatprep.mubr.bf16.mxu0 %v2634
    %5060 = vmatmul.mubr.bf16.gmra.mxu0 %v2633
    %v5061 = vpop.f32.mrf.mxu0
    %v5062 = vadd.f32 %v4949, %v5061
    %v5063 = vpop.f32.mrf.mxu0
    %v5064 = vadd.f32 %v4951, %v5063
    %v5065 = vpop.f32.mrf.mxu0
    %v5066 = vadd.f32 %v4953, %v5065
    %v5067 = vpop.f32.mrf.mxu0
    %v5068 = vadd.f32 %v4955, %v5067
    %5069 = vmatprep.mubr.bf16.mxu0 %v2652
    %5070 = vmatmul.mubr.bf16.gmra.mxu0 %v2651
    %v5071 = vpop.f32.mrf.mxu0
    %v5072 = vadd.f32 %v4959, %v5071
    %v5073 = vpop.f32.mrf.mxu0
    %v5074 = vadd.f32 %v4961, %v5073
    %v5075 = vpop.f32.mrf.mxu0
    %v5076 = vadd.f32 %v4963, %v5075
    %v5077 = vpop.f32.mrf.mxu0
    %v5078 = vadd.f32 %v4965, %v5077
    %5079 = vmatprep.mubr.bf16.mxu0 %v2670
    %5080 = vmatmul.mubr.bf16.gmra.mxu0 %v2669
    %v5081 = vpop.f32.mrf.mxu0
    %v5082 = vadd.f32 %v4969, %v5081
    %v5083 = vpop.f32.mrf.mxu0
    %v5084 = vadd.f32 %v4971, %v5083
    %v5085 = vpop.f32.mrf.mxu0
    %v5086 = vadd.f32 %v4973, %v5085
    %v5087 = vpop.f32.mrf.mxu0
    %v5088 = vadd.f32 %v4975, %v5087
    %5089 = vmatprep.mubr.bf16.mxu0 %v2688
    %5090 = vmatmul.mubr.bf16.gmra.mxu0 %v2687
    %v5091 = vpop.f32.mrf.mxu0
    %v5092 = vadd.f32 %v4979, %v5091
    %v5093 = vpop.f32.mrf.mxu0
    %v5094 = vadd.f32 %v4981, %v5093
    %v5095 = vpop.f32.mrf.mxu0
    %v5096 = vadd.f32 %v4983, %v5095
    %v5097 = vpop.f32.mrf.mxu0
    %v5098 = vadd.f32 %v4985, %v5097
    %5099 = vmatprep.mubr.bf16.mxu0 %v2706
    %5100 = vmatmul.mubr.bf16.gmra.mxu0 %v2705
    %v5101 = vpop.f32.mrf.mxu0
    %v5102 = vadd.f32 %v4989, %v5101
    %v5103 = vpop.f32.mrf.mxu0
    %v5104 = vadd.f32 %v4991, %v5103
    %v5105 = vpop.f32.mrf.mxu0
    %v5106 = vadd.f32 %v4993, %v5105
    %v5107 = vpop.f32.mrf.mxu0
    %v5108 = vadd.f32 %v4995, %v5107
    %5109 = vmatprep.mubr.bf16.mxu0 %v2724
    %5110 = vmatmul.mubr.bf16.gmra.mxu0 %v2723
    %v5111 = vpop.f32.mrf.mxu0
    %v5112 = vadd.f32 %v4999, %v5111
    %v5113 = vpop.f32.mrf.mxu0
    %v5114 = vadd.f32 %v5001, %v5113
    %v5115 = vpop.f32.mrf.mxu0
    %v5116 = vadd.f32 %v5003, %v5115
    %v5117 = vpop.f32.mrf.mxu0
    %v5118 = vadd.f32 %v5005, %v5117
    %5119 = vmatprep.mubr.bf16.mxu0 %v2742
    %5120 = vmatmul.mubr.bf16.gmra.mxu0 %v2741
    %v5121 = vpop.f32.mrf.mxu0
    %v5122 = vadd.f32 %v5009, %v5121
    %v5123 = vpop.f32.mrf.mxu0
    %v5124 = vadd.f32 %v5011, %v5123
    %v5125 = vpop.f32.mrf.mxu0
    %v5126 = vadd.f32 %v5013, %v5125
    %v5127 = vpop.f32.mrf.mxu0
    %v5128 = vadd.f32 %v5015, %v5127
    %5129 = vmatprep.mubr.bf16.mxu0 %v2760
    %5130 = vmatmul.mubr.bf16.gmra.mxu0 %v2759
    %v5131 = vpop.f32.mrf.mxu0
    %v5132 = vadd.f32 %v5019, %v5131
    %v5133 = vpop.f32.mrf.mxu0
    %v5134 = vadd.f32 %v5021, %v5133
    %v5135 = vpop.f32.mrf.mxu0
    %v5136 = vadd.f32 %v5023, %v5135
    %v5137 = vpop.f32.mrf.mxu0
    %v5138 = vadd.f32 %v5025, %v5137
    %5139 = vdwg.mxu0
    %5140 = vmatprep.subr.bf16.mxu0 %v4012
    %5141 = vmatpush1.bf16.msra.mxu0 %v4011
    %5142 = vmatprep.subr.bf16.mxu0 %v4010
    %5143 = vmatpush1.bf16.msra.mxu0 %v4009
    %5144 = vmatprep.subr.bf16.mxu0 %v4008
    %5145 = vmatpush1.bf16.msra.mxu0 %v4007
    %5146 = vmatprep.subr.bf16.mxu0 %v4006
    %5147 = vmatpush1.bf16.msra.mxu0 %v4005
    %5148 = vmatprep.subr.bf16.mxu0 %v4004
    %5149 = vmatpush1.bf16.msra.mxu0 %v4003
    %5150 = vmatprep.subr.bf16.mxu0 %v4002
    %5151 = vmatpush1.bf16.msra.mxu0 %v4001
    %5152 = vmatprep.subr.bf16.mxu0 %v4000
    %5153 = vmatpush1.bf16.msra.mxu0 %v3999
    %5154 = vmatprep.subr.bf16.mxu0 %v3998
    %5155 = vmatpush1.bf16.msra.mxu0 %v3997
    %5156 = vmatprep.subr.bf16.mxu0 %v4028
    %5157 = vmatpush2.bf16.msra.mxu0 %v4027
    %5158 = vmatprep.subr.bf16.mxu0 %v4026
    %5159 = vmatpush2.bf16.msra.mxu0 %v4025
    %5160 = vmatprep.subr.bf16.mxu0 %v4024
    %5161 = vmatpush2.bf16.msra.mxu0 %v4023
    %5162 = vmatprep.subr.bf16.mxu0 %v4022
    %5163 = vmatpush2.bf16.msra.mxu0 %v4021
    %5164 = vmatprep.subr.bf16.mxu0 %v4020
    %5165 = vmatpush2.bf16.msra.mxu0 %v4019
    %5166 = vmatprep.subr.bf16.mxu0 %v4018
    %5167 = vmatpush2.bf16.msra.mxu0 %v4017
    %5168 = vmatprep.subr.bf16.mxu0 %v4016
    %5169 = vmatpush2.bf16.msra.mxu0 %v4015
    %5170 = vmatprep.subr.bf16.mxu0 %v4014
    %5171 = vmatpush2.bf16.msra.mxu0 %v4013
    %5172 = vmatprep.mubr.bf16.mxu0 %v2636
    %5173 = vmatmul.mubr.bf16.gmra.mxu0 %v2635
    %v5174 = vpop.f32.mrf.mxu0
    %v5175 = vadd.f32 %v5062, %v5174
    %v5176 = vpop.f32.mrf.mxu0
    %v5177 = vadd.f32 %v5064, %v5176
    %v5178 = vpop.f32.mrf.mxu0
    %v5179 = vadd.f32 %v5066, %v5178
    %v5180 = vpop.f32.mrf.mxu0
    %v5181 = vadd.f32 %v5068, %v5180
    %5182 = vmatprep.mubr.bf16.mxu0 %v2654
    %5183 = vmatmul.mubr.bf16.gmra.mxu0 %v2653
    %v5184 = vpop.f32.mrf.mxu0
    %v5185 = vadd.f32 %v5072, %v5184
    %v5186 = vpop.f32.mrf.mxu0
    %v5187 = vadd.f32 %v5074, %v5186
    %v5188 = vpop.f32.mrf.mxu0
    %v5189 = vadd.f32 %v5076, %v5188
    %v5190 = vpop.f32.mrf.mxu0
    %v5191 = vadd.f32 %v5078, %v5190
    %5192 = vmatprep.mubr.bf16.mxu0 %v2672
    %5193 = vmatmul.mubr.bf16.gmra.mxu0 %v2671
    %v5194 = vpop.f32.mrf.mxu0
    %v5195 = vadd.f32 %v5082, %v5194
    %v5196 = vpop.f32.mrf.mxu0
    %v5197 = vadd.f32 %v5084, %v5196
    %v5198 = vpop.f32.mrf.mxu0
    %v5199 = vadd.f32 %v5086, %v5198
    %v5200 = vpop.f32.mrf.mxu0
    %v5201 = vadd.f32 %v5088, %v5200
    %5202 = vmatprep.mubr.bf16.mxu0 %v2690
    %5203 = vmatmul.mubr.bf16.gmra.mxu0 %v2689
    %v5204 = vpop.f32.mrf.mxu0
    %v5205 = vadd.f32 %v5092, %v5204
    %v5206 = vpop.f32.mrf.mxu0
    %v5207 = vadd.f32 %v5094, %v5206
    %v5208 = vpop.f32.mrf.mxu0
    %v5209 = vadd.f32 %v5096, %v5208
    %v5210 = vpop.f32.mrf.mxu0
    %v5211 = vadd.f32 %v5098, %v5210
    %5212 = vmatprep.mubr.bf16.mxu0 %v2708
    %5213 = vmatmul.mubr.bf16.gmra.mxu0 %v2707
    %v5214 = vpop.f32.mrf.mxu0
    %v5215 = vadd.f32 %v5102, %v5214
    %v5216 = vpop.f32.mrf.mxu0
    %v5217 = vadd.f32 %v5104, %v5216
    %v5218 = vpop.f32.mrf.mxu0
    %v5219 = vadd.f32 %v5106, %v5218
    %v5220 = vpop.f32.mrf.mxu0
    %v5221 = vadd.f32 %v5108, %v5220
    %5222 = vmatprep.mubr.bf16.mxu0 %v2726
    %5223 = vmatmul.mubr.bf16.gmra.mxu0 %v2725
    %v5224 = vpop.f32.mrf.mxu0
    %v5225 = vadd.f32 %v5112, %v5224
    %v5226 = vpop.f32.mrf.mxu0
    %v5227 = vadd.f32 %v5114, %v5226
    %v5228 = vpop.f32.mrf.mxu0
    %v5229 = vadd.f32 %v5116, %v5228
    %v5230 = vpop.f32.mrf.mxu0
    %v5231 = vadd.f32 %v5118, %v5230
    %5232 = vmatprep.mubr.bf16.mxu0 %v2744
    %5233 = vmatmul.mubr.bf16.gmra.mxu0 %v2743
    %v5234 = vpop.f32.mrf.mxu0
    %v5235 = vadd.f32 %v5122, %v5234
    %v5236 = vpop.f32.mrf.mxu0
    %v5237 = vadd.f32 %v5124, %v5236
    %v5238 = vpop.f32.mrf.mxu0
    %v5239 = vadd.f32 %v5126, %v5238
    %v5240 = vpop.f32.mrf.mxu0
    %v5241 = vadd.f32 %v5128, %v5240
    %5242 = vmatprep.mubr.bf16.mxu0 %v2762
    %5243 = vmatmul.mubr.bf16.gmra.mxu0 %v2761
    %v5244 = vpop.f32.mrf.mxu0
    %v5245 = vadd.f32 %v5132, %v5244
    %v5246 = vpop.f32.mrf.mxu0
    %v5247 = vadd.f32 %v5134, %v5246
    %v5248 = vpop.f32.mrf.mxu0
    %v5249 = vadd.f32 %v5136, %v5248
    %v5250 = vpop.f32.mrf.mxu0
    %v5251 = vadd.f32 %v5138, %v5250
    %5252 = vdwg.mxu0
    %5253 = vmatprep.subr.bf16.mxu0 %v4044
    %5254 = vmatpush1.bf16.msra.mxu0 %v4043
    %5255 = vmatprep.subr.bf16.mxu0 %v4042
    %5256 = vmatpush1.bf16.msra.mxu0 %v4041
    %5257 = vmatprep.subr.bf16.mxu0 %v4040
    %5258 = vmatpush1.bf16.msra.mxu0 %v4039
    %5259 = vmatprep.subr.bf16.mxu0 %v4038
    %5260 = vmatpush1.bf16.msra.mxu0 %v4037
    %5261 = vmatprep.subr.bf16.mxu0 %v4036
    %5262 = vmatpush1.bf16.msra.mxu0 %v4035
    %5263 = vmatprep.subr.bf16.mxu0 %v4034
    %5264 = vmatpush1.bf16.msra.mxu0 %v4033
    %5265 = vmatprep.subr.bf16.mxu0 %v4032
    %5266 = vmatpush1.bf16.msra.mxu0 %v4031
    %5267 = vmatprep.subr.bf16.mxu0 %v4030
    %5268 = vmatpush1.bf16.msra.mxu0 %v4029
    %5269 = vmatprep.subr.bf16.mxu0 %v4060
    %5270 = vmatpush2.bf16.msra.mxu0 %v4059
    %5271 = vmatprep.subr.bf16.mxu0 %v4058
    %5272 = vmatpush2.bf16.msra.mxu0 %v4057
    %5273 = vmatprep.subr.bf16.mxu0 %v4056
    %5274 = vmatpush2.bf16.msra.mxu0 %v4055
    %5275 = vmatprep.subr.bf16.mxu0 %v4054
    %5276 = vmatpush2.bf16.msra.mxu0 %v4053
    %5277 = vmatprep.subr.bf16.mxu0 %v4052
    %5278 = vmatpush2.bf16.msra.mxu0 %v4051
    %5279 = vmatprep.subr.bf16.mxu0 %v4050
    %5280 = vmatpush2.bf16.msra.mxu0 %v4049
    %5281 = vmatprep.subr.bf16.mxu0 %v4048
    %5282 = vmatpush2.bf16.msra.mxu0 %v4047
    %5283 = vmatprep.subr.bf16.mxu0 %v4046
    %5284 = vmatpush2.bf16.msra.mxu0 %v4045
    %5285 = vmatprep.mubr.bf16.mxu0 %v2638
    %5286 = vmatmul.mubr.bf16.gmra.mxu0 %v2637
    %v5287 = vpop.f32.mrf.mxu0
    %v5288 = vadd.f32 %v5175, %v5287
    %v5289 = vpop.f32.mrf.mxu0
    %v5290 = vadd.f32 %v5177, %v5289
    %v5291 = vpop.f32.mrf.mxu0
    %v5292 = vadd.f32 %v5179, %v5291
    %v5293 = vpop.f32.mrf.mxu0
    %v5294 = vadd.f32 %v5181, %v5293
    %5295 = vmatprep.mubr.bf16.mxu0 %v2656
    %5296 = vmatmul.mubr.bf16.gmra.mxu0 %v2655
    %v5297 = vpop.f32.mrf.mxu0
    %v5298 = vadd.f32 %v5185, %v5297
    %v5299 = vpop.f32.mrf.mxu0
    %v5300 = vadd.f32 %v5187, %v5299
    %v5301 = vpop.f32.mrf.mxu0
    %v5302 = vadd.f32 %v5189, %v5301
    %v5303 = vpop.f32.mrf.mxu0
    %v5304 = vadd.f32 %v5191, %v5303
    %5305 = vmatprep.mubr.bf16.mxu0 %v2674
    %5306 = vmatmul.mubr.bf16.gmra.mxu0 %v2673
    %v5307 = vpop.f32.mrf.mxu0
    %v5308 = vadd.f32 %v5195, %v5307
    %v5309 = vpop.f32.mrf.mxu0
    %v5310 = vadd.f32 %v5197, %v5309
    %v5311 = vpop.f32.mrf.mxu0
    %v5312 = vadd.f32 %v5199, %v5311
    %v5313 = vpop.f32.mrf.mxu0
    %v5314 = vadd.f32 %v5201, %v5313
    %5315 = vmatprep.mubr.bf16.mxu0 %v2692
    %5316 = vmatmul.mubr.bf16.gmra.mxu0 %v2691
    %v5317 = vpop.f32.mrf.mxu0
    %v5318 = vadd.f32 %v5205, %v5317
    %v5319 = vpop.f32.mrf.mxu0
    %v5320 = vadd.f32 %v5207, %v5319
    %v5321 = vpop.f32.mrf.mxu0
    %v5322 = vadd.f32 %v5209, %v5321
    %v5323 = vpop.f32.mrf.mxu0
    %v5324 = vadd.f32 %v5211, %v5323
    %5325 = vmatprep.mubr.bf16.mxu0 %v2710
    %5326 = vmatmul.mubr.bf16.gmra.mxu0 %v2709
    %v5327 = vpop.f32.mrf.mxu0
    %v5328 = vadd.f32 %v5215, %v5327
    %v5329 = vpop.f32.mrf.mxu0
    %v5330 = vadd.f32 %v5217, %v5329
    %v5331 = vpop.f32.mrf.mxu0
    %v5332 = vadd.f32 %v5219, %v5331
    %v5333 = vpop.f32.mrf.mxu0
    %v5334 = vadd.f32 %v5221, %v5333
    %5335 = vmatprep.mubr.bf16.mxu0 %v2728
    %5336 = vmatmul.mubr.bf16.gmra.mxu0 %v2727
    %v5337 = vpop.f32.mrf.mxu0
    %v5338 = vadd.f32 %v5225, %v5337
    %v5339 = vpop.f32.mrf.mxu0
    %v5340 = vadd.f32 %v5227, %v5339
    %v5341 = vpop.f32.mrf.mxu0
    %v5342 = vadd.f32 %v5229, %v5341
    %v5343 = vpop.f32.mrf.mxu0
    %v5344 = vadd.f32 %v5231, %v5343
    %5345 = vmatprep.mubr.bf16.mxu0 %v2746
    %5346 = vmatmul.mubr.bf16.gmra.mxu0 %v2745
    %v5347 = vpop.f32.mrf.mxu0
    %v5348 = vadd.f32 %v5235, %v5347
    %v5349 = vpop.f32.mrf.mxu0
    %v5350 = vadd.f32 %v5237, %v5349
    %v5351 = vpop.f32.mrf.mxu0
    %v5352 = vadd.f32 %v5239, %v5351
    %v5353 = vpop.f32.mrf.mxu0
    %v5354 = vadd.f32 %v5241, %v5353
    %5355 = vmatprep.mubr.bf16.mxu0 %v2764
    %5356 = vmatmul.mubr.bf16.gmra.mxu0 %v2763
    %v5357 = vpop.f32.mrf.mxu0
    %v5358 = vadd.f32 %v5245, %v5357
    %v5359 = vpop.f32.mrf.mxu0
    %v5360 = vadd.f32 %v5247, %v5359
    %v5361 = vpop.f32.mrf.mxu0
    %v5362 = vadd.f32 %v5249, %v5361
    %v5363 = vpop.f32.mrf.mxu0
    %v5364 = vadd.f32 %v5251, %v5363
    %5365 = vdwg.mxu0
    %v5366 = vadd.f32 %v5288, %v5292
    %v5367 = vadd.f32 %v5366, %v5298
    %v5368 = vadd.f32 %v5367, %v5302
    %v5369 = vadd.f32 %v5368, %v5308
    %v5370 = vadd.f32 %v5369, %v5312
    %v5371 = vadd.f32 %v5370, %v5318
    %v5372 = vadd.f32 %v5371, %v5322
    %v5373 = vrot.slane %v5372, 4
    %v5374 = vadd.f32 %v5372, %v5373
    %v5375 = vrot.slane %v5374, 2
    %v5376 = vadd.f32 %v5374, %v5375
    %v5377 = vrot.slane %v5376, 1
    %v5378 = vadd.f32 %v5376, %v5377
    %v5379 = vadd.f32 %v5290, %v5294
    %v5380 = vadd.f32 %v5379, %v5300
    %v5381 = vadd.f32 %v5380, %v5304
    %v5382 = vadd.f32 %v5381, %v5310
    %v5383 = vadd.f32 %v5382, %v5314
    %v5384 = vadd.f32 %v5383, %v5320
    %v5385 = vadd.f32 %v5384, %v5324
    %v5386 = vrot.slane %v5385, 4
    %v5387 = vadd.f32 %v5385, %v5386
    %v5388 = vrot.slane %v5387, 2
    %v5389 = vadd.f32 %v5387, %v5388
    %v5390 = vrot.slane %v5389, 1
    %v5391 = vadd.f32 %v5389, %v5390
    %v5392 = vadd.f32 %v5328, %v5332
    %v5393 = vadd.f32 %v5392, %v5338
    %v5394 = vadd.f32 %v5393, %v5342
    %v5395 = vadd.f32 %v5394, %v5348
    %v5396 = vadd.f32 %v5395, %v5352
    %v5397 = vadd.f32 %v5396, %v5358
    %v5398 = vadd.f32 %v5397, %v5362
    %v5399 = vrot.slane %v5398, 4
    %v5400 = vadd.f32 %v5398, %v5399
    %v5401 = vrot.slane %v5400, 2
    %v5402 = vadd.f32 %v5400, %v5401
    %v5403 = vrot.slane %v5402, 1
    %v5404 = vadd.f32 %v5402, %v5403
    %v5405 = vadd.f32 %v5330, %v5334
    %v5406 = vadd.f32 %v5405, %v5340
    %v5407 = vadd.f32 %v5406, %v5344
    %v5408 = vadd.f32 %v5407, %v5350
    %v5409 = vadd.f32 %v5408, %v5354
    %v5410 = vadd.f32 %v5409, %v5360
    %v5411 = vadd.f32 %v5410, %v5364
    %v5412 = vrot.slane %v5411, 4
    %v5413 = vadd.f32 %v5411, %v5412
    %v5414 = vrot.slane %v5413, 2
    %v5415 = vadd.f32 %v5413, %v5414
    %v5416 = vrot.slane %v5415, 1
    %v5417 = vadd.f32 %v5415, %v5416
    %v5418 = vrcp.pop 64.0
    %v5419 = vmul.f32 %v5378, %v5418
    %v5420 = vmul.f32 %v5391, %v5418
    %v5421 = vmul.f32 %v5404, %v5418
    %v5422 = vmul.f32 %v5417, %v5418
    %v5423 = vmul.f32 %v5288, %v5288
    %v5424 = vmul.f32 %v5290, %v5290
    %v5425 = vmul.f32 %v5292, %v5292
    %v5426 = vmul.f32 %v5294, %v5294
    %v5427 = vmul.f32 %v5298, %v5298
    %v5428 = vmul.f32 %v5300, %v5300
    %v5429 = vmul.f32 %v5302, %v5302
    %v5430 = vmul.f32 %v5304, %v5304
    %v5431 = vmul.f32 %v5308, %v5308
    %v5432 = vmul.f32 %v5310, %v5310
    %v5433 = vmul.f32 %v5312, %v5312
    %v5434 = vmul.f32 %v5314, %v5314
    %v5435 = vmul.f32 %v5318, %v5318
    %v5436 = vmul.f32 %v5320, %v5320
    %v5437 = vmul.f32 %v5322, %v5322
    %v5438 = vmul.f32 %v5324, %v5324
    %v5439 = vmul.f32 %v5328, %v5328
    %v5440 = vmul.f32 %v5330, %v5330
    %v5441 = vmul.f32 %v5332, %v5332
    %v5442 = vmul.f32 %v5334, %v5334
    %v5443 = vmul.f32 %v5338, %v5338
    %v5444 = vmul.f32 %v5340, %v5340
    %v5445 = vmul.f32 %v5342, %v5342
    %v5446 = vmul.f32 %v5344, %v5344
    %v5447 = vmul.f32 %v5348, %v5348
    %v5448 = vmul.f32 %v5350, %v5350
    %v5449 = vmul.f32 %v5352, %v5352
    %v5450 = vmul.f32 %v5354, %v5354
    %v5451 = vmul.f32 %v5358, %v5358
    %v5452 = vmul.f32 %v5360, %v5360
    %v5453 = vmul.f32 %v5362, %v5362
    %v5454 = vmul.f32 %v5364, %v5364
    %v5455 = vadd.f32 %v5423, %v5425
    %v5456 = vadd.f32 %v5455, %v5427
    %v5457 = vadd.f32 %v5456, %v5429
    %v5458 = vadd.f32 %v5457, %v5431
    %v5459 = vadd.f32 %v5458, %v5433
    %v5460 = vadd.f32 %v5459, %v5435
    %v5461 = vadd.f32 %v5460, %v5437
    %v5462 = vrot.slane %v5461, 4
    %v5463 = vadd.f32 %v5461, %v5462
    %v5464 = vrot.slane %v5463, 2
    %v5465 = vadd.f32 %v5463, %v5464
    %v5466 = vrot.slane %v5465, 1
    %v5467 = vadd.f32 %v5465, %v5466
    %v5468 = vadd.f32 %v5424, %v5426
    %v5469 = vadd.f32 %v5468, %v5428
    %v5470 = vadd.f32 %v5469, %v5430
    %v5471 = vadd.f32 %v5470, %v5432
    %v5472 = vadd.f32 %v5471, %v5434
    %v5473 = vadd.f32 %v5472, %v5436
    %v5474 = vadd.f32 %v5473, %v5438
    %v5475 = vrot.slane %v5474, 4
    %v5476 = vadd.f32 %v5474, %v5475
    %v5477 = vrot.slane %v5476, 2
    %v5478 = vadd.f32 %v5476, %v5477
    %v5479 = vrot.slane %v5478, 1
    %v5480 = vadd.f32 %v5478, %v5479
    %v5481 = vadd.f32 %v5439, %v5441
    %v5482 = vadd.f32 %v5481, %v5443
    %v5483 = vadd.f32 %v5482, %v5445
    %v5484 = vadd.f32 %v5483, %v5447
    %v5485 = vadd.f32 %v5484, %v5449
    %v5486 = vadd.f32 %v5485, %v5451
    %v5487 = vadd.f32 %v5486, %v5453
    %v5488 = vrot.slane %v5487, 4
    %v5489 = vadd.f32 %v5487, %v5488
    %v5490 = vrot.slane %v5489, 2
    %v5491 = vadd.f32 %v5489, %v5490
    %v5492 = vrot.slane %v5491, 1
    %v5493 = vadd.f32 %v5491, %v5492
    %v5494 = vadd.f32 %v5440, %v5442
    %v5495 = vadd.f32 %v5494, %v5444
    %v5496 = vadd.f32 %v5495, %v5446
    %v5497 = vadd.f32 %v5496, %v5448
    %v5498 = vadd.f32 %v5497, %v5450
    %v5499 = vadd.f32 %v5498, %v5452
    %v5500 = vadd.f32 %v5499, %v5454
    %v5501 = vrot.slane %v5500, 4
    %v5502 = vadd.f32 %v5500, %v5501
    %v5503 = vrot.slane %v5502, 2
    %v5504 = vadd.f32 %v5502, %v5503
    %v5505 = vrot.slane %v5504, 1
    %v5506 = vadd.f32 %v5504, %v5505
    %v5507 = vmul.f32 %v5467, %v5418
    %v5508 = vmul.f32 %v5480, %v5418
    %v5509 = vmul.f32 %v5493, %v5418
    %v5510 = vmul.f32 %v5506, %v5418
    %v5511 = vmul.f32 %v5419, %v5419
    %v5512 = vmul.f32 %v5420, %v5420
    %v5513 = vmul.f32 %v5421, %v5421
    %v5514 = vmul.f32 %v5422, %v5422
    %v5515 = vsub.f32 %v5507, %v5511
    %v5516 = vsub.f32 %v5508, %v5512
    %v5517 = vsub.f32 %v5509, %v5513
    %v5518 = vsub.f32 %v5510, %v5514
    %v5519 = vadd.f32 %v5515, 1e-05
    %v5520 = vadd.f32 %v5516, 1e-05
    %v5521 = vadd.f32 %v5517, 1e-05
    %v5522 = vadd.f32 %v5518, 1e-05
    %v5523 = vrsqrt.pop %v5519
    %v5524 = vrsqrt.pop %v5520
    %v5525 = vrsqrt.pop %v5521
    %v5526 = vrsqrt.pop %v5522
    %v5527 = vmul.f32 %v5288, %v5523
    %v5528 = vmul.f32 %v5290, %v5524
    %v5529 = vmul.f32 %v5292, %v5523
    %v5530 = vmul.f32 %v5294, %v5524
    %v5531 = vmul.f32 %v5298, %v5523
    %v5532 = vmul.f32 %v5300, %v5524
    %v5533 = vmul.f32 %v5302, %v5523
    %v5534 = vmul.f32 %v5304, %v5524
    %v5535 = vmul.f32 %v5308, %v5523
    %v5536 = vmul.f32 %v5310, %v5524
    %v5537 = vmul.f32 %v5312, %v5523
    %v5538 = vmul.f32 %v5314, %v5524
    %v5539 = vmul.f32 %v5318, %v5523
    %v5540 = vmul.f32 %v5320, %v5524
    %v5541 = vmul.f32 %v5322, %v5523
    %v5542 = vmul.f32 %v5324, %v5524
    %v5543 = vmul.f32 %v5328, %v5525
    %v5544 = vmul.f32 %v5330, %v5526
    %v5545 = vmul.f32 %v5332, %v5525
    %v5546 = vmul.f32 %v5334, %v5526
    %v5547 = vmul.f32 %v5338, %v5525
    %v5548 = vmul.f32 %v5340, %v5526
    %v5549 = vmul.f32 %v5342, %v5525
    %v5550 = vmul.f32 %v5344, %v5526
    %v5551 = vmul.f32 %v5348, %v5525
    %v5552 = vmul.f32 %v5350, %v5526
    %v5553 = vmul.f32 %v5352, %v5525
    %v5554 = vmul.f32 %v5354, %v5526
    %v5555 = vmul.f32 %v5358, %v5525
    %v5556 = vmul.f32 %v5360, %v5526
    %v5557 = vmul.f32 %v5362, %v5525
    %v5558 = vmul.f32 %v5364, %v5526
    %v5559 = vmul.f32 %v5419, %v5523
    %v5560 = vmul.f32 %v5420, %v5524
    %v5561 = vmul.f32 %v5421, %v5525
    %v5562 = vmul.f32 %v5422, %v5526
    %v5563 = vsub.f32 %v5527, %v5559
    %v5564 = vsub.f32 %v5528, %v5560
    %v5565 = vsub.f32 %v5529, %v5559
    %v5566 = vsub.f32 %v5530, %v5560
    %v5567 = vsub.f32 %v5531, %v5559
    %v5568 = vsub.f32 %v5532, %v5560
    %v5569 = vsub.f32 %v5533, %v5559
    %v5570 = vsub.f32 %v5534, %v5560
    %v5571 = vsub.f32 %v5535, %v5559
    %v5572 = vsub.f32 %v5536, %v5560
    %v5573 = vsub.f32 %v5537, %v5559
    %v5574 = vsub.f32 %v5538, %v5560
    %v5575 = vsub.f32 %v5539, %v5559
    %v5576 = vsub.f32 %v5540, %v5560
    %v5577 = vsub.f32 %v5541, %v5559
    %v5578 = vsub.f32 %v5542, %v5560
    %v5579 = vsub.f32 %v5543, %v5561
    %v5580 = vsub.f32 %v5544, %v5562
    %v5581 = vsub.f32 %v5545, %v5561
    %v5582 = vsub.f32 %v5546, %v5562
    %v5583 = vsub.f32 %v5547, %v5561
    %v5584 = vsub.f32 %v5548, %v5562
    %v5585 = vsub.f32 %v5549, %v5561
    %v5586 = vsub.f32 %v5550, %v5562
    %v5587 = vsub.f32 %v5551, %v5561
    %v5588 = vsub.f32 %v5552, %v5562
    %v5589 = vsub.f32 %v5553, %v5561
    %v5590 = vsub.f32 %v5554, %v5562
    %v5591 = vsub.f32 %v5555, %v5561
    %v5592 = vsub.f32 %v5556, %v5562
    %v5593 = vsub.f32 %v5557, %v5561
    %v5594 = vsub.f32 %v5558, %v5562
    %v5595 = vmax.f32 %v5563, 0.0
    %v5596 = vmax.f32 %v5564, 0.0
    %v5597 = vmax.f32 %v5565, 0.0
    %v5598 = vmax.f32 %v5566, 0.0
    %v5599 = vmax.f32 %v5567, 0.0
    %v5600 = vmax.f32 %v5568, 0.0
    %v5601 = vmax.f32 %v5569, 0.0
    %v5602 = vmax.f32 %v5570, 0.0
    %v5603 = vmax.f32 %v5571, 0.0
    %v5604 = vmax.f32 %v5572, 0.0
    %v5605 = vmax.f32 %v5573, 0.0
    %v5606 = vmax.f32 %v5574, 0.0
    %v5607 = vmax.f32 %v5575, 0.0
    %v5608 = vmax.f32 %v5576, 0.0
    %v5609 = vmax.f32 %v5577, 0.0
    %v5610 = vmax.f32 %v5578, 0.0
    %v5611 = vmax.f32 %v5579, 0.0
    %v5612 = vmax.f32 %v5580, 0.0
    %v5613 = vmax.f32 %v5581, 0.0
    %v5614 = vmax.f32 %v5582, 0.0
    %v5615 = vmax.f32 %v5583, 0.0
    %v5616 = vmax.f32 %v5584, 0.0
    %v5617 = vmax.f32 %v5585, 0.0
    %v5618 = vmax.f32 %v5586, 0.0
    %v5619 = vmax.f32 %v5587, 0.0
    %v5620 = vmax.f32 %v5588, 0.0
    %v5621 = vmax.f32 %v5589, 0.0
    %v5622 = vmax.f32 %v5590, 0.0
    %v5623 = vmax.f32 %v5591, 0.0
    %v5624 = vmax.f32 %v5592, 0.0
    %v5625 = vmax.f32 %v5593, 0.0
    %v5626 = vmax.f32 %v5594, 0.0
    %v5627 = vpack.c.bf16 %v5595, %v5595
    %v5628 = vpack.c.bf16 %v5596, %v5596
    %v5629 = vpack.c.bf16 %v5597, %v5597
    %v5630 = vpack.c.bf16 %v5598, %v5598
    %v5631 = vpack.c.bf16 %v5599, %v5599
    %v5632 = vpack.c.bf16 %v5600, %v5600
    %v5633 = vpack.c.bf16 %v5601, %v5601
    %v5634 = vpack.c.bf16 %v5602, %v5602
    %v5635 = vpack.c.bf16 %v5603, %v5603
    %v5636 = vpack.c.bf16 %v5604, %v5604
    %v5637 = vpack.c.bf16 %v5605, %v5605
    %v5638 = vpack.c.bf16 %v5606, %v5606
    %v5639 = vpack.c.bf16 %v5607, %v5607
    %v5640 = vpack.c.bf16 %v5608, %v5608
    %v5641 = vpack.c.bf16 %v5609, %v5609
    %v5642 = vpack.c.bf16 %v5610, %v5610
    %v5643 = vpack.c.bf16 %v5611, %v5611
    %v5644 = vpack.c.bf16 %v5612, %v5612
    %v5645 = vpack.c.bf16 %v5613, %v5613
    %v5646 = vpack.c.bf16 %v5614, %v5614
    %v5647 = vpack.c.bf16 %v5615, %v5615
    %v5648 = vpack.c.bf16 %v5616, %v5616
    %v5649 = vpack.c.bf16 %v5617, %v5617
    %v5650 = vpack.c.bf16 %v5618, %v5618
    %v5651 = vpack.c.bf16 %v5619, %v5619
    %v5652 = vpack.c.bf16 %v5620, %v5620
    %v5653 = vpack.c.bf16 %v5621, %v5621
    %v5654 = vpack.c.bf16 %v5622, %v5622
    %v5655 = vpack.c.bf16 %v5623, %v5623
    %v5656 = vpack.c.bf16 %v5624, %v5624
    %v5657 = vpack.c.bf16 %v5625, %v5625
    %v5658 = vpack.c.bf16 %v5626, %v5626
    %v5691 = vunpack.c.l.b16 %v5627
    %v5692 = vunpack.c.l.b16 %v5628
    %v5693 = vunpack.c.l.b16 %v5629
    %v5694 = vunpack.c.l.b16 %v5630
    %v5695 = vunpack.c.l.b16 %v5631
    %v5696 = vunpack.c.l.b16 %v5632
    %v5697 = vunpack.c.l.b16 %v5633
    %v5698 = vunpack.c.l.b16 %v5634
    %v5699 = vunpack.c.l.b16 %v5635
    %v5700 = vunpack.c.l.b16 %v5636
    %v5701 = vunpack.c.l.b16 %v5637
    %v5702 = vunpack.c.l.b16 %v5638
    %v5703 = vunpack.c.l.b16 %v5639
    %v5704 = vunpack.c.l.b16 %v5640
    %v5705 = vunpack.c.l.b16 %v5641
    %v5706 = vunpack.c.l.b16 %v5642
    %v5707 = vunpack.c.l.b16 %v5643
    %v5708 = vunpack.c.l.b16 %v5644
    %v5709 = vunpack.c.l.b16 %v5645
    %v5710 = vunpack.c.l.b16 %v5646
    %v5711 = vunpack.c.l.b16 %v5647
    %v5712 = vunpack.c.l.b16 %v5648
    %v5713 = vunpack.c.l.b16 %v5649
    %v5714 = vunpack.c.l.b16 %v5650
    %v5715 = vunpack.c.l.b16 %v5651
    %v5716 = vunpack.c.l.b16 %v5652
    %v5717 = vunpack.c.l.b16 %v5653
    %v5718 = vunpack.c.l.b16 %v5654
    %v5719 = vunpack.c.l.b16 %v5655
    %v5720 = vunpack.c.l.b16 %v5656
    %v5721 = vunpack.c.l.b16 %v5657
    %v5722 = vunpack.c.l.b16 %v5658
    %v5723 = vpack.c.b16 %v5692, %v5691
    %v5724 = vpack.c.b16 %v5694, %v5693
    %v5725 = vpack.c.b16 %v5696, %v5695
    %v5726 = vpack.c.b16 %v5698, %v5697
    %v5727 = vpack.c.b16 %v5700, %v5699
    %v5728 = vpack.c.b16 %v5702, %v5701
    %v5729 = vpack.c.b16 %v5704, %v5703
    %v5730 = vpack.c.b16 %v5706, %v5705
    %v5731 = vpack.c.b16 %v5708, %v5707
    %v5732 = vpack.c.b16 %v5710, %v5709
    %v5733 = vpack.c.b16 %v5712, %v5711
    %v5734 = vpack.c.b16 %v5714, %v5713
    %v5735 = vpack.c.b16 %v5716, %v5715
    %v5736 = vpack.c.b16 %v5718, %v5717
    %v5737 = vpack.c.b16 %v5720, %v5719
    %v5738 = vpack.c.b16 %v5722, %v5721
    %v5740 = vshrl.u32 %v5723, 16
    %v5742 = vrot.slane %v5740, 7
    %v5743 = vshll.u32 %v5723, 16
    %v5745 = vor.u32 %v5742, %v5743
    %v5746 = vrot.slane %v5742, 4
    %v5748 = vshrl.u32 %v5724, 16
    %v5750 = vrot.slane %v5748, 7
    %v5751 = vshll.u32 %v5724, 16
    %v5753 = vor.u32 %v5750, %v5751
    %v5754 = vrot.slane %v5750, 4
    %v5756 = vshrl.u32 %v5725, 16
    %v5758 = vrot.slane %v5756, 7
    %v5759 = vshll.u32 %v5725, 16
    %v5761 = vor.u32 %v5758, %v5759
    %v5762 = vrot.slane %v5758, 4
    %v5764 = vshrl.u32 %v5726, 16
    %v5766 = vrot.slane %v5764, 7
    %v5767 = vshll.u32 %v5726, 16
    %v5769 = vor.u32 %v5766, %v5767
    %v5770 = vrot.slane %v5766, 4
    %v5772 = vshrl.u32 %v5727, 16
    %v5774 = vrot.slane %v5772, 7
    %v5775 = vshll.u32 %v5727, 16
    %v5777 = vor.u32 %v5774, %v5775
    %v5778 = vrot.slane %v5774, 4
    %v5780 = vshrl.u32 %v5728, 16
    %v5782 = vrot.slane %v5780, 7
    %v5783 = vshll.u32 %v5728, 16
    %v5785 = vor.u32 %v5782, %v5783
    %v5786 = vrot.slane %v5782, 4
    %v5788 = vshrl.u32 %v5729, 16
    %v5790 = vrot.slane %v5788, 7
    %v5791 = vshll.u32 %v5729, 16
    %v5793 = vor.u32 %v5790, %v5791
    %v5794 = vrot.slane %v5790, 4
    %v5796 = vshrl.u32 %v5730, 16
    %v5798 = vrot.slane %v5796, 7
    %v5799 = vshll.u32 %v5730, 16
    %v5801 = vor.u32 %v5798, %v5799
    %v5802 = vrot.slane %v5798, 4
    %v5804 = vshrl.u32 %v5731, 16
    %v5806 = vrot.slane %v5804, 7
    %v5807 = vshll.u32 %v5731, 16
    %v5809 = vor.u32 %v5806, %v5807
    %v5810 = vrot.slane %v5806, 4
    %v5812 = vshrl.u32 %v5732, 16
    %v5814 = vrot.slane %v5812, 7
    %v5815 = vshll.u32 %v5732, 16
    %v5817 = vor.u32 %v5814, %v5815
    %v5818 = vrot.slane %v5814, 4
    %v5820 = vshrl.u32 %v5733, 16
    %v5822 = vrot.slane %v5820, 7
    %v5823 = vshll.u32 %v5733, 16
    %v5825 = vor.u32 %v5822, %v5823
    %v5826 = vrot.slane %v5822, 4
    %v5828 = vshrl.u32 %v5734, 16
    %v5830 = vrot.slane %v5828, 7
    %v5831 = vshll.u32 %v5734, 16
    %v5833 = vor.u32 %v5830, %v5831
    %v5834 = vrot.slane %v5830, 4
    %v5836 = vshrl.u32 %v5735, 16
    %v5838 = vrot.slane %v5836, 7
    %v5839 = vshll.u32 %v5735, 16
    %v5841 = vor.u32 %v5838, %v5839
    %v5842 = vrot.slane %v5838, 4
    %v5844 = vshrl.u32 %v5736, 16
    %v5846 = vrot.slane %v5844, 7
    %v5847 = vshll.u32 %v5736, 16
    %v5849 = vor.u32 %v5846, %v5847
    %v5850 = vrot.slane %v5846, 4
    %v5852 = vshrl.u32 %v5737, 16
    %v5854 = vrot.slane %v5852, 7
    %v5855 = vshll.u32 %v5737, 16
    %v5857 = vor.u32 %v5854, %v5855
    %v5858 = vrot.slane %v5854, 4
    %v5860 = vshrl.u32 %v5738, 16
    %v5862 = vrot.slane %v5860, 7
    %v5863 = vshll.u32 %v5738, 16
    %v5865 = vor.u32 %v5862, %v5863
    %v5866 = vrot.slane %v5862, 4
    %v5899 = vsel %vm507, %v5745, %v652
    %5900 = vst [vmem:[%s502] sm:$0xff] %v5899
    %v5901 = vld [vmem:[%s502 + $0x8] sm:$0x11]
    %v5902 = vsel %vm72, %v5746, %v5901
    %5903 = vst [vmem:[%s502 + $0x8] sm:$0x11] %v5902
    %v5904 = vld [vmem:[%s502 + $0x10] sm:$0xff]
    %v5905 = vsel %vm507, %v5753, %v5904
    %5906 = vst [vmem:[%s502 + $0x10] sm:$0xff] %v5905
    %v5907 = vld [vmem:[%s502 + $0x18] sm:$0x11]
    %v5908 = vsel %vm72, %v5754, %v5907
    %5909 = vst [vmem:[%s502 + $0x18] sm:$0x11] %v5908
    %v5910 = vld [vmem:[%s502 + $0x20] sm:$0xff]
    %v5911 = vsel %vm507, %v5761, %v5910
    %5912 = vst [vmem:[%s502 + $0x20] sm:$0xff] %v5911
    %v5913 = vld [vmem:[%s502 + $0x28] sm:$0x11]
    %v5914 = vsel %vm72, %v5762, %v5913
    %5915 = vst [vmem:[%s502 + $0x28] sm:$0x11] %v5914
    %v5916 = vld [vmem:[%s502 + $0x30] sm:$0xff]
    %v5917 = vsel %vm507, %v5769, %v5916
    %5918 = vst [vmem:[%s502 + $0x30] sm:$0xff] %v5917
    %v5919 = vld [vmem:[%s502 + $0x38] sm:$0x11]
    %v5920 = vsel %vm72, %v5770, %v5919
    %5921 = vst [vmem:[%s502 + $0x38] sm:$0x11] %v5920
    %v5922 = vld [vmem:[%s502 + $0x40] sm:$0xff]
    %v5923 = vsel %vm507, %v5777, %v5922
    %5924 = vst [vmem:[%s502 + $0x40] sm:$0xff] %v5923
    %v5925 = vld [vmem:[%s502 + $0x48] sm:$0x11]
    %v5926 = vsel %vm72, %v5778, %v5925
    %5927 = vst [vmem:[%s502 + $0x48] sm:$0x11] %v5926
    %v5928 = vld [vmem:[%s502 + $0x50] sm:$0xff]
    %v5929 = vsel %vm507, %v5785, %v5928
    %5930 = vst [vmem:[%s502 + $0x50] sm:$0xff] %v5929
    %v5931 = vld [vmem:[%s502 + $0x58] sm:$0x11]
    %v5932 = vsel %vm72, %v5786, %v5931
    %5933 = vst [vmem:[%s502 + $0x58] sm:$0x11] %v5932
    %v5934 = vld [vmem:[%s502 + $0x60] sm:$0xff]
    %v5935 = vsel %vm507, %v5793, %v5934
    %5936 = vst [vmem:[%s502 + $0x60] sm:$0xff] %v5935
    %v5937 = vld [vmem:[%s502 + $0x68] sm:$0x11]
    %v5938 = vsel %vm72, %v5794, %v5937
    %5939 = vst [vmem:[%s502 + $0x68] sm:$0x11] %v5938
    %v5940 = vld [vmem:[%s502 + $0x70] sm:$0xff]
    %v5941 = vsel %vm507, %v5801, %v5940
    %5942 = vst [vmem:[%s502 + $0x70] sm:$0xff] %v5941
    %v5943 = vld [vmem:[%s502 + $0x78] sm:$0x11]
    %v5944 = vsel %vm72, %v5802, %v5943
    %5945 = vst [vmem:[%s502 + $0x78] sm:$0x11] %v5944
    %v5946 = vld [vmem:[%s502 + $0xa0] sm:$0xff]
    %v5947 = vsel %vm507, %v5809, %v5946
    %5948 = vst [vmem:[%s502 + $0xa0] sm:$0xff] %v5947
    %v5949 = vld [vmem:[%s502 + $0xa8] sm:$0x11]
    %v5950 = vsel %vm72, %v5810, %v5949
    %5951 = vst [vmem:[%s502 + $0xa8] sm:$0x11] %v5950
    %v5952 = vld [vmem:[%s502 + $0xb0] sm:$0xff]
    %v5953 = vsel %vm507, %v5817, %v5952
    %5954 = vst [vmem:[%s502 + $0xb0] sm:$0xff] %v5953
    %v5955 = vld [vmem:[%s502 + $0xb8] sm:$0x11]
    %v5956 = vsel %vm72, %v5818, %v5955
    %5957 = vst [vmem:[%s502 + $0xb8] sm:$0x11] %v5956
    %v5958 = vld [vmem:[%s502 + $0xc0] sm:$0xff]
    %v5959 = vsel %vm507, %v5825, %v5958
    %5960 = vst [vmem:[%s502 + $0xc0] sm:$0xff] %v5959
    %v5961 = vld [vmem:[%s502 + $0xc8] sm:$0x11]
    %v5962 = vsel %vm72, %v5826, %v5961
    %5963 = vst [vmem:[%s502 + $0xc8] sm:$0x11] %v5962
    %v5964 = vld [vmem:[%s502 + $0xd0] sm:$0xff]
    %v5965 = vsel %vm507, %v5833, %v5964
    %5966 = vst [vmem:[%s502 + $0xd0] sm:$0xff] %v5965
    %v5967 = vld [vmem:[%s502 + $0xd8] sm:$0x11]
    %v5968 = vsel %vm72, %v5834, %v5967
    %5969 = vst [vmem:[%s502 + $0xd8] sm:$0x11] %v5968
    %v5970 = vld [vmem:[%s502 + $0xe0] sm:$0xff]
    %v5971 = vsel %vm507, %v5841, %v5970
    %5972 = vst [vmem:[%s502 + $0xe0] sm:$0xff] %v5971
    %v5973 = vld [vmem:[%s502 + $0xe8] sm:$0x11]
    %v5974 = vsel %vm72, %v5842, %v5973
    %5975 = vst [vmem:[%s502 + $0xe8] sm:$0x11] %v5974
    %v5976 = vld [vmem:[%s502 + $0xf0] sm:$0xff]
    %v5977 = vsel %vm507, %v5849, %v5976
    %5978 = vst [vmem:[%s502 + $0xf0] sm:$0xff] %v5977
    %v5979 = vld [vmem:[%s502 + $0xf8] sm:$0x11]
    %v5980 = vsel %vm72, %v5850, %v5979
    %5981 = vst [vmem:[%s502 + $0xf8] sm:$0x11] %v5980
    %v5982 = vld [vmem:[%s502 + $0x100] sm:$0xff]
    %v5983 = vsel %vm507, %v5857, %v5982
    %5984 = vst [vmem:[%s502 + $0x100] sm:$0xff] %v5983
    %v5985 = vld [vmem:[%s502 + $0x108] sm:$0x11]
    %v5986 = vsel %vm72, %v5858, %v5985
    %5987 = vst [vmem:[%s502 + $0x108] sm:$0x11] %v5986
    %v5988 = vld [vmem:[%s502 + $0x110] sm:$0xff]
    %v5989 = vsel %vm507, %v5865, %v5988
    %5990 = vst [vmem:[%s502 + $0x110] sm:$0xff] %v5989
    %v5991 = vld [vmem:[%s502 + $0x118] sm:$0x11]
    %v5992 = vsel %vm72, %v5866, %v5991
    %5993 = vst [vmem:[%s502 + $0x118] sm:$0x11] %v5992
    %v5994 = vld [vmem:[#allocation2] sm:$0xff]
    %v5995 = vld [vmem:[#allocation2 + $0x10] sm:$0xff]
    %v5996 = vld [vmem:[#allocation2 + $0x20] sm:$0xff]
    %v5997 = vld [vmem:[#allocation2 + $0x30] sm:$0xff]
    %v5998 = vld [vmem:[#allocation2 + $0x40] sm:$0xff]
    %v5999 = vld [vmem:[#allocation2 + $0x50] sm:$0xff]
    %v6000 = vld [vmem:[#allocation2 + $0x60] sm:$0xff]
    %v6001 = vld [vmem:[#allocation2 + $0x70] sm:$0xff]
    %v6002 = vld [vmem:[#allocation2 + $0xa0] sm:$0xff]
    %v6003 = vld [vmem:[#allocation2 + $0xb0] sm:$0xff]
    %v6004 = vld [vmem:[#allocation2 + $0xc0] sm:$0xff]
    %v6005 = vld [vmem:[#allocation2 + $0xd0] sm:$0xff]
    %v6006 = vld [vmem:[#allocation2 + $0xe0] sm:$0xff]
    %v6007 = vld [vmem:[#allocation2 + $0xf0] sm:$0xff]
    %v6008 = vld [vmem:[#allocation2 + $0x100] sm:$0xff]
    %v6009 = vld [vmem:[#allocation2 + $0x110] sm:$0xff]
    %v6010 = vld [vmem:[#allocation2 + $0x8] sm:$0x11]
    %v6011 = vld [vmem:[#allocation2 + $0x18] sm:$0x11]
    %v6012 = vld [vmem:[#allocation2 + $0x28] sm:$0x11]
    %v6013 = vld [vmem:[#allocation2 + $0x38] sm:$0x11]
    %v6014 = vld [vmem:[#allocation2 + $0x48] sm:$0x11]
    %v6015 = vld [vmem:[#allocation2 + $0x58] sm:$0x11]
    %v6016 = vld [vmem:[#allocation2 + $0x68] sm:$0x11]
    %v6017 = vld [vmem:[#allocation2 + $0x78] sm:$0x11]
    %v6018 = vld [vmem:[#allocation2 + $0xa8] sm:$0x11]
    %v6019 = vld [vmem:[#allocation2 + $0xb8] sm:$0x11]
    %v6020 = vld [vmem:[#allocation2 + $0xc8] sm:$0x11]
    %v6021 = vld [vmem:[#allocation2 + $0xd8] sm:$0x11]
    %v6022 = vld [vmem:[#allocation2 + $0xe8] sm:$0x11]
    %v6023 = vld [vmem:[#allocation2 + $0xf8] sm:$0x11]
    %v6024 = vld [vmem:[#allocation2 + $0x108] sm:$0x11]
    %v6025 = vld [vmem:[#allocation2 + $0x118] sm:$0x11]
    %v6026 = vld [vmem:[#allocation2] sm:$0xee]
    %v6027 = vld [vmem:[#allocation2 + $0x10] sm:$0xee]
    %v6028 = vld [vmem:[#allocation2 + $0x20] sm:$0xee]
    %v6029 = vld [vmem:[#allocation2 + $0x30] sm:$0xee]
    %v6030 = vld [vmem:[#allocation2 + $0x40] sm:$0xee]
    %v6031 = vld [vmem:[#allocation2 + $0x50] sm:$0xee]
    %v6032 = vld [vmem:[#allocation2 + $0x60] sm:$0xee]
    %v6033 = vld [vmem:[#allocation2 + $0x70] sm:$0xee]
    %v6034 = vld [vmem:[#allocation2 + $0xa0] sm:$0xee]
    %v6035 = vld [vmem:[#allocation2 + $0xb0] sm:$0xee]
    %v6036 = vld [vmem:[#allocation2 + $0xc0] sm:$0xee]
    %v6037 = vld [vmem:[#allocation2 + $0xd0] sm:$0xee]
    %v6038 = vld [vmem:[#allocation2 + $0xe0] sm:$0xee]
    %v6039 = vld [vmem:[#allocation2 + $0xf0] sm:$0xee]
    %v6040 = vld [vmem:[#allocation2 + $0x100] sm:$0xee]
    %v6041 = vld [vmem:[#allocation2 + $0x110] sm:$0xee]
    %v6042 = vld [vmem:[%s502] sm:$0xff]
    %v6043 = vld [vmem:[%s502 + $0x10] sm:$0xff]
    %v6044 = vld [vmem:[%s502 + $0x20] sm:$0xff]
    %v6045 = vld [vmem:[%s502 + $0x30] sm:$0xff]
    %v6046 = vld [vmem:[%s502 + $0x40] sm:$0xff]
    %v6047 = vld [vmem:[%s502 + $0x50] sm:$0xff]
    %v6048 = vld [vmem:[%s502 + $0x60] sm:$0xff]
    %v6049 = vld [vmem:[%s502 + $0x70] sm:$0xff]
    %v6050 = vld [vmem:[%s502 + $0xa0] sm:$0xff]
    %v6051 = vld [vmem:[%s502 + $0xb0] sm:$0xff]
    %v6052 = vld [vmem:[%s502 + $0xc0] sm:$0xff]
    %v6053 = vld [vmem:[%s502 + $0xd0] sm:$0xff]
    %v6054 = vld [vmem:[%s502 + $0xe0] sm:$0xff]
    %v6055 = vld [vmem:[%s502 + $0xf0] sm:$0xff]
    %v6056 = vld [vmem:[%s502 + $0x100] sm:$0xff]
    %v6057 = vld [vmem:[%s502 + $0x110] sm:$0xff]
    %v6058 = vld [vmem:[%s502 + $0x8] sm:$0x11]
    %v6059 = vld [vmem:[%s502 + $0x18] sm:$0x11]
    %v6060 = vld [vmem:[%s502 + $0x28] sm:$0x11]
    %v6061 = vld [vmem:[%s502 + $0x38] sm:$0x11]
    %v6062 = vld [vmem:[%s502 + $0x48] sm:$0x11]
    %v6063 = vld [vmem:[%s502 + $0x58] sm:$0x11]
    %v6064 = vld [vmem:[%s502 + $0x68] sm:$0x11]
    %v6065 = vld [vmem:[%s502 + $0x78] sm:$0x11]
    %v6066 = vld [vmem:[%s502 + $0xa8] sm:$0x11]
    %v6067 = vld [vmem:[%s502 + $0xb8] sm:$0x11]
    %v6068 = vld [vmem:[%s502 + $0xc8] sm:$0x11]
    %v6069 = vld [vmem:[%s502 + $0xd8] sm:$0x11]
    %v6070 = vld [vmem:[%s502 + $0xe8] sm:$0x11]
    %v6071 = vld [vmem:[%s502 + $0xf8] sm:$0x11]
    %v6072 = vld [vmem:[%s502 + $0x108] sm:$0x11]
    %v6073 = vld [vmem:[%s502 + $0x118] sm:$0x11]
    %v6074 = vld [vmem:[%s502] sm:$0xee]
    %v6075 = vld [vmem:[%s502 + $0x10] sm:$0xee]
    %v6076 = vld [vmem:[%s502 + $0x20] sm:$0xee]
    %v6077 = vld [vmem:[%s502 + $0x30] sm:$0xee]
    %v6078 = vld [vmem:[%s502 + $0x40] sm:$0xee]
    %v6079 = vld [vmem:[%s502 + $0x50] sm:$0xee]
    %v6080 = vld [vmem:[%s502 + $0x60] sm:$0xee]
    %v6081 = vld [vmem:[%s502 + $0x70] sm:$0xee]
    %v6082 = vld [vmem:[%s502 + $0xa0] sm:$0xee]
    %v6083 = vld [vmem:[%s502 + $0xb0] sm:$0xee]
    %v6084 = vld [vmem:[%s502 + $0xc0] sm:$0xee]
    %v6085 = vld [vmem:[%s502 + $0xd0] sm:$0xee]
    %v6086 = vld [vmem:[%s502 + $0xe0] sm:$0xee]
    %v6087 = vld [vmem:[%s502 + $0xf0] sm:$0xee]
    %v6088 = vld [vmem:[%s502 + $0x100] sm:$0xee]
    %v6089 = vld [vmem:[%s502 + $0x110] sm:$0xee]
    %v6090 = vld [vmem:[%s700] sm:$0xff]
    %v6091 = vld [vmem:[%s700 + $0x10] sm:$0xff]
    %v6092 = vld [vmem:[%s700 + $0x20] sm:$0xff]
    %v6093 = vld [vmem:[%s700 + $0x30] sm:$0xff]
    %v6094 = vld [vmem:[%s700 + $0x40] sm:$0xff]
    %v6095 = vld [vmem:[%s700 + $0x50] sm:$0xff]
    %v6096 = vld [vmem:[%s700 + $0x60] sm:$0xff]
    %v6097 = vld [vmem:[%s700 + $0x70] sm:$0xff]
    %v6098 = vld [vmem:[%s700 + $0xa0] sm:$0xff]
    %v6099 = vld [vmem:[%s700 + $0xb0] sm:$0xff]
    %v6100 = vld [vmem:[%s700 + $0xc0] sm:$0xff]
    %v6101 = vld [vmem:[%s700 + $0xd0] sm:$0xff]
    %v6102 = vld [vmem:[%s700 + $0xe0] sm:$0xff]
    %v6103 = vld [vmem:[%s700 + $0xf0] sm:$0xff]
    %v6104 = vld [vmem:[%s700 + $0x100] sm:$0xff]
    %v6105 = vld [vmem:[%s700 + $0x110] sm:$0xff]
    %v6106 = vld [vmem:[%s700 + $0x8] sm:$0x11]
    %v6107 = vld [vmem:[%s700 + $0x18] sm:$0x11]
    %v6108 = vld [vmem:[%s700 + $0x28] sm:$0x11]
    %v6109 = vld [vmem:[%s700 + $0x38] sm:$0x11]
    %v6110 = vld [vmem:[%s700 + $0x48] sm:$0x11]
    %v6111 = vld [vmem:[%s700 + $0x58] sm:$0x11]
    %v6112 = vld [vmem:[%s700 + $0x68] sm:$0x11]
    %v6113 = vld [vmem:[%s700 + $0x78] sm:$0x11]
    %v6114 = vld [vmem:[%s700 + $0xa8] sm:$0x11]
    %v6115 = vld [vmem:[%s700 + $0xb8] sm:$0x11]
    %v6116 = vld [vmem:[%s700 + $0xc8] sm:$0x11]
    %v6117 = vld [vmem:[%s700 + $0xd8] sm:$0x11]
    %v6118 = vld [vmem:[%s700 + $0xe8] sm:$0x11]
    %v6119 = vld [vmem:[%s700 + $0xf8] sm:$0x11]
    %v6120 = vld [vmem:[%s700 + $0x108] sm:$0x11]
    %v6121 = vld [vmem:[%s700 + $0x118] sm:$0x11]
    %v6122 = vld [vmem:[%s700] sm:$0xee]
    %v6123 = vld [vmem:[%s700 + $0x10] sm:$0xee]
    %v6124 = vld [vmem:[%s700 + $0x20] sm:$0xee]
    %v6125 = vld [vmem:[%s700 + $0x30] sm:$0xee]
    %v6126 = vld [vmem:[%s700 + $0x40] sm:$0xee]
    %v6127 = vld [vmem:[%s700 + $0x50] sm:$0xee]
    %v6128 = vld [vmem:[%s700 + $0x60] sm:$0xee]
    %v6129 = vld [vmem:[%s700 + $0x70] sm:$0xee]
    %v6130 = vld [vmem:[%s700 + $0xa0] sm:$0xee]
    %v6131 = vld [vmem:[%s700 + $0xb0] sm:$0xee]
    %v6132 = vld [vmem:[%s700 + $0xc0] sm:$0xee]
    %v6133 = vld [vmem:[%s700 + $0xd0] sm:$0xee]
    %v6134 = vld [vmem:[%s700 + $0xe0] sm:$0xee]
    %v6135 = vld [vmem:[%s700 + $0xf0] sm:$0xee]
    %v6136 = vld [vmem:[%s700 + $0x100] sm:$0xee]
    %v6137 = vld [vmem:[%s700 + $0x110] sm:$0xee]
    %v6154 = vunpack.c.l.b16 %v5994
    %v6155 = vunpack.c.h.b16 %v5994
    %v6156 = vunpack.c.l.b16 %v5995
    %v6157 = vunpack.c.h.b16 %v5995
    %v6158 = vunpack.c.l.b16 %v5996
    %v6159 = vunpack.c.h.b16 %v5996
    %v6160 = vunpack.c.l.b16 %v5997
    %v6161 = vunpack.c.h.b16 %v5997
    %v6162 = vunpack.c.l.b16 %v5998
    %v6163 = vunpack.c.h.b16 %v5998
    %v6164 = vunpack.c.l.b16 %v5999
    %v6165 = vunpack.c.h.b16 %v5999
    %v6166 = vunpack.c.l.b16 %v6000
    %v6167 = vunpack.c.h.b16 %v6000
    %v6168 = vunpack.c.l.b16 %v6001
    %v6169 = vunpack.c.h.b16 %v6001
    %v6170 = vunpack.c.l.b16 %v6002
    %v6171 = vunpack.c.h.b16 %v6002
    %v6172 = vunpack.c.l.b16 %v6003
    %v6173 = vunpack.c.h.b16 %v6003
    %v6174 = vunpack.c.l.b16 %v6004
    %v6175 = vunpack.c.h.b16 %v6004
    %v6176 = vunpack.c.l.b16 %v6005
    %v6177 = vunpack.c.h.b16 %v6005
    %v6178 = vunpack.c.l.b16 %v6006
    %v6179 = vunpack.c.h.b16 %v6006
    %v6180 = vunpack.c.l.b16 %v6007
    %v6181 = vunpack.c.h.b16 %v6007
    %v6182 = vunpack.c.l.b16 %v6008
    %v6183 = vunpack.c.h.b16 %v6008
    %v6184 = vunpack.c.l.b16 %v6009
    %v6185 = vunpack.c.h.b16 %v6009
    %v6202 = vunpack.c.l.b16 %v6010
    %v6203 = vunpack.c.h.b16 %v6010
    %v6204 = vunpack.c.l.b16 %v6011
    %v6205 = vunpack.c.h.b16 %v6011
    %v6206 = vunpack.c.l.b16 %v6012
    %v6207 = vunpack.c.h.b16 %v6012
    %v6208 = vunpack.c.l.b16 %v6013
    %v6209 = vunpack.c.h.b16 %v6013
    %v6210 = vunpack.c.l.b16 %v6014
    %v6211 = vunpack.c.h.b16 %v6014
    %v6212 = vunpack.c.l.b16 %v6015
    %v6213 = vunpack.c.h.b16 %v6015
    %v6214 = vunpack.c.l.b16 %v6016
    %v6215 = vunpack.c.h.b16 %v6016
    %v6216 = vunpack.c.l.b16 %v6017
    %v6217 = vunpack.c.h.b16 %v6017
    %v6218 = vunpack.c.l.b16 %v6018
    %v6219 = vunpack.c.h.b16 %v6018
    %v6220 = vunpack.c.l.b16 %v6019
    %v6221 = vunpack.c.h.b16 %v6019
    %v6222 = vunpack.c.l.b16 %v6020
    %v6223 = vunpack.c.h.b16 %v6020
    %v6224 = vunpack.c.l.b16 %v6021
    %v6225 = vunpack.c.h.b16 %v6021
    %v6226 = vunpack.c.l.b16 %v6022
    %v6227 = vunpack.c.h.b16 %v6022
    %v6228 = vunpack.c.l.b16 %v6023
    %v6229 = vunpack.c.h.b16 %v6023
    %v6230 = vunpack.c.l.b16 %v6024
    %v6231 = vunpack.c.h.b16 %v6024
    %v6232 = vunpack.c.l.b16 %v6025
    %v6233 = vunpack.c.h.b16 %v6025
    %v6234 = vpack.c.b16 %v6202, %v6154
    %v6235 = vpack.c.b16 %v6203, %v6155
    %v6236 = vpack.c.b16 %v6204, %v6156
    %v6237 = vpack.c.b16 %v6205, %v6157
    %v6238 = vpack.c.b16 %v6206, %v6158
    %v6239 = vpack.c.b16 %v6207, %v6159
    %v6240 = vpack.c.b16 %v6208, %v6160
    %v6241 = vpack.c.b16 %v6209, %v6161
    %v6242 = vpack.c.b16 %v6210, %v6162
    %v6243 = vpack.c.b16 %v6211, %v6163
    %v6244 = vpack.c.b16 %v6212, %v6164
    %v6245 = vpack.c.b16 %v6213, %v6165
    %v6246 = vpack.c.b16 %v6214, %v6166
    %v6247 = vpack.c.b16 %v6215, %v6167
    %v6248 = vpack.c.b16 %v6216, %v6168
    %v6249 = vpack.c.b16 %v6217, %v6169
    %v6250 = vpack.c.b16 %v6218, %v6170
    %v6251 = vpack.c.b16 %v6219, %v6171
    %v6252 = vpack.c.b16 %v6220, %v6172
    %v6253 = vpack.c.b16 %v6221, %v6173
    %v6254 = vpack.c.b16 %v6222, %v6174
    %v6255 = vpack.c.b16 %v6223, %v6175
    %v6256 = vpack.c.b16 %v6224, %v6176
    %v6257 = vpack.c.b16 %v6225, %v6177
    %v6258 = vpack.c.b16 %v6226, %v6178
    %v6259 = vpack.c.b16 %v6227, %v6179
    %v6260 = vpack.c.b16 %v6228, %v6180
    %v6261 = vpack.c.b16 %v6229, %v6181
    %v6262 = vpack.c.b16 %v6230, %v6182
    %v6263 = vpack.c.b16 %v6231, %v6183
    %v6264 = vpack.c.b16 %v6232, %v6184
    %v6265 = vpack.c.b16 %v6233, %v6185
    %v6267 = vshrl.u32 %v6234, 16
    %v6269 = vshll.u32 %v6234, 16
    %v6271 = vrot.slane %v6269, 1
    %v6272 = vor.u32 %v6267, %v6271
    %v6274 = vshrl.u32 %v6235, 16
    %v6276 = vshll.u32 %v6235, 16
    %v6278 = vrot.slane %v6276, 1
    %v6279 = vor.u32 %v6274, %v6278
    %v6281 = vshrl.u32 %v6236, 16
    %v6283 = vshll.u32 %v6236, 16
    %v6285 = vrot.slane %v6283, 1
    %v6286 = vor.u32 %v6281, %v6285
    %v6288 = vshrl.u32 %v6237, 16
    %v6290 = vshll.u32 %v6237, 16
    %v6292 = vrot.slane %v6290, 1
    %v6293 = vor.u32 %v6288, %v6292
    %v6295 = vshrl.u32 %v6238, 16
    %v6297 = vshll.u32 %v6238, 16
    %v6299 = vrot.slane %v6297, 1
    %v6300 = vor.u32 %v6295, %v6299
    %v6302 = vshrl.u32 %v6239, 16
    %v6304 = vshll.u32 %v6239, 16
    %v6306 = vrot.slane %v6304, 1
    %v6307 = vor.u32 %v6302, %v6306
    %v6309 = vshrl.u32 %v6240, 16
    %v6311 = vshll.u32 %v6240, 16
    %v6313 = vrot.slane %v6311, 1
    %v6314 = vor.u32 %v6309, %v6313
    %v6316 = vshrl.u32 %v6241, 16
    %v6318 = vshll.u32 %v6241, 16
    %v6320 = vrot.slane %v6318, 1
    %v6321 = vor.u32 %v6316, %v6320
    %v6323 = vshrl.u32 %v6242, 16
    %v6325 = vshll.u32 %v6242, 16
    %v6327 = vrot.slane %v6325, 1
    %v6328 = vor.u32 %v6323, %v6327
    %v6330 = vshrl.u32 %v6243, 16
    %v6332 = vshll.u32 %v6243, 16
    %v6334 = vrot.slane %v6332, 1
    %v6335 = vor.u32 %v6330, %v6334
    %v6337 = vshrl.u32 %v6244, 16
    %v6339 = vshll.u32 %v6244, 16
    %v6341 = vrot.slane %v6339, 1
    %v6342 = vor.u32 %v6337, %v6341
    %v6344 = vshrl.u32 %v6245, 16
    %v6346 = vshll.u32 %v6245, 16
    %v6348 = vrot.slane %v6346, 1
    %v6349 = vor.u32 %v6344, %v6348
    %v6351 = vshrl.u32 %v6246, 16
    %v6353 = vshll.u32 %v6246, 16
    %v6355 = vrot.slane %v6353, 1
    %v6356 = vor.u32 %v6351, %v6355
    %v6358 = vshrl.u32 %v6247, 16
    %v6360 = vshll.u32 %v6247, 16
    %v6362 = vrot.slane %v6360, 1
    %v6363 = vor.u32 %v6358, %v6362
    %v6365 = vshrl.u32 %v6248, 16
    %v6367 = vshll.u32 %v6248, 16
    %v6369 = vrot.slane %v6367, 1
    %v6370 = vor.u32 %v6365, %v6369
    %v6372 = vshrl.u32 %v6249, 16
    %v6374 = vshll.u32 %v6249, 16
    %v6376 = vrot.slane %v6374, 1
    %v6377 = vor.u32 %v6372, %v6376
    %v6379 = vshrl.u32 %v6250, 16
    %v6381 = vshll.u32 %v6250, 16
    %v6383 = vrot.slane %v6381, 1
    %v6384 = vor.u32 %v6379, %v6383
    %v6386 = vshrl.u32 %v6251, 16
    %v6388 = vshll.u32 %v6251, 16
    %v6390 = vrot.slane %v6388, 1
    %v6391 = vor.u32 %v6386, %v6390
    %v6393 = vshrl.u32 %v6252, 16
    %v6395 = vshll.u32 %v6252, 16
    %v6397 = vrot.slane %v6395, 1
    %v6398 = vor.u32 %v6393, %v6397
    %v6400 = vshrl.u32 %v6253, 16
    %v6402 = vshll.u32 %v6253, 16
    %v6404 = vrot.slane %v6402, 1
    %v6405 = vor.u32 %v6400, %v6404
    %v6407 = vshrl.u32 %v6254, 16
    %v6409 = vshll.u32 %v6254, 16
    %v6411 = vrot.slane %v6409, 1
    %v6412 = vor.u32 %v6407, %v6411
    %v6414 = vshrl.u32 %v6255, 16
    %v6416 = vshll.u32 %v6255, 16
    %v6418 = vrot.slane %v6416, 1
    %v6419 = vor.u32 %v6414, %v6418
    %v6421 = vshrl.u32 %v6256, 16
    %v6423 = vshll.u32 %v6256, 16
    %v6425 = vrot.slane %v6423, 1
    %v6426 = vor.u32 %v6421, %v6425
    %v6428 = vshrl.u32 %v6257, 16
    %v6430 = vshll.u32 %v6257, 16
    %v6432 = vrot.slane %v6430, 1
    %v6433 = vor.u32 %v6428, %v6432
    %v6435 = vshrl.u32 %v6258, 16
    %v6437 = vshll.u32 %v6258, 16
    %v6439 = vrot.slane %v6437, 1
    %v6440 = vor.u32 %v6435, %v6439
    %v6442 = vshrl.u32 %v6259, 16
    %v6444 = vshll.u32 %v6259, 16
    %v6446 = vrot.slane %v6444, 1
    %v6447 = vor.u32 %v6442, %v6446
    %v6449 = vshrl.u32 %v6260, 16
    %v6451 = vshll.u32 %v6260, 16
    %v6453 = vrot.slane %v6451, 1
    %v6454 = vor.u32 %v6449, %v6453
    %v6456 = vshrl.u32 %v6261, 16
    %v6458 = vshll.u32 %v6261, 16
    %v6460 = vrot.slane %v6458, 1
    %v6461 = vor.u32 %v6456, %v6460
    %v6463 = vshrl.u32 %v6262, 16
    %v6465 = vshll.u32 %v6262, 16
    %v6467 = vrot.slane %v6465, 1
    %v6468 = vor.u32 %v6463, %v6467
    %v6470 = vshrl.u32 %v6263, 16
    %v6472 = vshll.u32 %v6263, 16
    %v6474 = vrot.slane %v6472, 1
    %v6475 = vor.u32 %v6470, %v6474
    %v6477 = vshrl.u32 %v6264, 16
    %v6479 = vshll.u32 %v6264, 16
    %v6481 = vrot.slane %v6479, 1
    %v6482 = vor.u32 %v6477, %v6481
    %v6484 = vshrl.u32 %v6265, 16
    %v6486 = vshll.u32 %v6265, 16
    %v6488 = vrot.slane %v6486, 1
    %v6489 = vor.u32 %v6484, %v6488
    %v6506 = vunpack.c.l.b16 %v6026
    %v6507 = vunpack.c.h.b16 %v6026
    %v6508 = vunpack.c.l.b16 %v6027
    %v6509 = vunpack.c.h.b16 %v6027
    %v6510 = vunpack.c.l.b16 %v6028
    %v6511 = vunpack.c.h.b16 %v6028
    %v6512 = vunpack.c.l.b16 %v6029
    %v6513 = vunpack.c.h.b16 %v6029
    %v6514 = vunpack.c.l.b16 %v6030
    %v6515 = vunpack.c.h.b16 %v6030
    %v6516 = vunpack.c.l.b16 %v6031
    %v6517 = vunpack.c.h.b16 %v6031
    %v6518 = vunpack.c.l.b16 %v6032
    %v6519 = vunpack.c.h.b16 %v6032
    %v6520 = vunpack.c.l.b16 %v6033
    %v6521 = vunpack.c.h.b16 %v6033
    %v6522 = vunpack.c.l.b16 %v6034
    %v6523 = vunpack.c.h.b16 %v6034
    %v6524 = vunpack.c.l.b16 %v6035
    %v6525 = vunpack.c.h.b16 %v6035
    %v6526 = vunpack.c.l.b16 %v6036
    %v6527 = vunpack.c.h.b16 %v6036
    %v6528 = vunpack.c.l.b16 %v6037
    %v6529 = vunpack.c.h.b16 %v6037
    %v6530 = vunpack.c.l.b16 %v6038
    %v6531 = vunpack.c.h.b16 %v6038
    %v6532 = vunpack.c.l.b16 %v6039
    %v6533 = vunpack.c.h.b16 %v6039
    %v6534 = vunpack.c.l.b16 %v6040
    %v6535 = vunpack.c.h.b16 %v6040
    %v6536 = vunpack.c.l.b16 %v6041
    %v6537 = vunpack.c.h.b16 %v6041
    %v6538 = vpack.c.b16 %v6202, %v6506
    %v6539 = vpack.c.b16 %v6203, %v6507
    %v6540 = vpack.c.b16 %v6204, %v6508
    %v6541 = vpack.c.b16 %v6205, %v6509
    %v6542 = vpack.c.b16 %v6206, %v6510
    %v6543 = vpack.c.b16 %v6207, %v6511
    %v6544 = vpack.c.b16 %v6208, %v6512
    %v6545 = vpack.c.b16 %v6209, %v6513
    %v6546 = vpack.c.b16 %v6210, %v6514
    %v6547 = vpack.c.b16 %v6211, %v6515
    %v6548 = vpack.c.b16 %v6212, %v6516
    %v6549 = vpack.c.b16 %v6213, %v6517
    %v6550 = vpack.c.b16 %v6214, %v6518
    %v6551 = vpack.c.b16 %v6215, %v6519
    %v6552 = vpack.c.b16 %v6216, %v6520
    %v6553 = vpack.c.b16 %v6217, %v6521
    %v6554 = vpack.c.b16 %v6218, %v6522
    %v6555 = vpack.c.b16 %v6219, %v6523
    %v6556 = vpack.c.b16 %v6220, %v6524
    %v6557 = vpack.c.b16 %v6221, %v6525
    %v6558 = vpack.c.b16 %v6222, %v6526
    %v6559 = vpack.c.b16 %v6223, %v6527
    %v6560 = vpack.c.b16 %v6224, %v6528
    %v6561 = vpack.c.b16 %v6225, %v6529
    %v6562 = vpack.c.b16 %v6226, %v6530
    %v6563 = vpack.c.b16 %v6227, %v6531
    %v6564 = vpack.c.b16 %v6228, %v6532
    %v6565 = vpack.c.b16 %v6229, %v6533
    %v6566 = vpack.c.b16 %v6230, %v6534
    %v6567 = vpack.c.b16 %v6231, %v6535
    %v6568 = vpack.c.b16 %v6232, %v6536
    %v6569 = vpack.c.b16 %v6233, %v6537
    %v6570 = vrot.slane %v6538, 1
    %v6571 = vrot.slane %v6539, 1
    %v6572 = vrot.slane %v6540, 1
    %v6573 = vrot.slane %v6541, 1
    %v6574 = vrot.slane %v6542, 1
    %v6575 = vrot.slane %v6543, 1
    %v6576 = vrot.slane %v6544, 1
    %v6577 = vrot.slane %v6545, 1
    %v6578 = vrot.slane %v6546, 1
    %v6579 = vrot.slane %v6547, 1
    %v6580 = vrot.slane %v6548, 1
    %v6581 = vrot.slane %v6549, 1
    %v6582 = vrot.slane %v6550, 1
    %v6583 = vrot.slane %v6551, 1
    %v6584 = vrot.slane %v6552, 1
    %v6585 = vrot.slane %v6553, 1
    %v6586 = vrot.slane %v6554, 1
    %v6587 = vrot.slane %v6555, 1
    %v6588 = vrot.slane %v6556, 1
    %v6589 = vrot.slane %v6557, 1
    %v6590 = vrot.slane %v6558, 1
    %v6591 = vrot.slane %v6559, 1
    %v6592 = vrot.slane %v6560, 1
    %v6593 = vrot.slane %v6561, 1
    %v6594 = vrot.slane %v6562, 1
    %v6595 = vrot.slane %v6563, 1
    %v6596 = vrot.slane %v6564, 1
    %v6597 = vrot.slane %v6565, 1
    %v6598 = vrot.slane %v6566, 1
    %v6599 = vrot.slane %v6567, 1
    %v6600 = vrot.slane %v6568, 1
    %v6601 = vrot.slane %v6569, 1
    %v6618 = vunpack.c.l.b16 %v6042
    %v6619 = vunpack.c.h.b16 %v6042
    %v6620 = vunpack.c.l.b16 %v6043
    %v6621 = vunpack.c.h.b16 %v6043
    %v6622 = vunpack.c.l.b16 %v6044
    %v6623 = vunpack.c.h.b16 %v6044
    %v6624 = vunpack.c.l.b16 %v6045
    %v6625 = vunpack.c.h.b16 %v6045
    %v6626 = vunpack.c.l.b16 %v6046
    %v6627 = vunpack.c.h.b16 %v6046
    %v6628 = vunpack.c.l.b16 %v6047
    %v6629 = vunpack.c.h.b16 %v6047
    %v6630 = vunpack.c.l.b16 %v6048
    %v6631 = vunpack.c.h.b16 %v6048
    %v6632 = vunpack.c.l.b16 %v6049
    %v6633 = vunpack.c.h.b16 %v6049
    %v6634 = vunpack.c.l.b16 %v6050
    %v6635 = vunpack.c.h.b16 %v6050
    %v6636 = vunpack.c.l.b16 %v6051
    %v6637 = vunpack.c.h.b16 %v6051
    %v6638 = vunpack.c.l.b16 %v6052
    %v6639 = vunpack.c.h.b16 %v6052
    %v6640 = vunpack.c.l.b16 %v6053
    %v6641 = vunpack.c.h.b16 %v6053
    %v6642 = vunpack.c.l.b16 %v6054
    %v6643 = vunpack.c.h.b16 %v6054
    %v6644 = vunpack.c.l.b16 %v6055
    %v6645 = vunpack.c.h.b16 %v6055
    %v6646 = vunpack.c.l.b16 %v6056
    %v6647 = vunpack.c.h.b16 %v6056
    %v6648 = vunpack.c.l.b16 %v6057
    %v6649 = vunpack.c.h.b16 %v6057
    %v6666 = vunpack.c.l.b16 %v6058
    %v6667 = vunpack.c.h.b16 %v6058
    %v6668 = vunpack.c.l.b16 %v6059
    %v6669 = vunpack.c.h.b16 %v6059
    %v6670 = vunpack.c.l.b16 %v6060
    %v6671 = vunpack.c.h.b16 %v6060
    %v6672 = vunpack.c.l.b16 %v6061
    %v6673 = vunpack.c.h.b16 %v6061
    %v6674 = vunpack.c.l.b16 %v6062
    %v6675 = vunpack.c.h.b16 %v6062
    %v6676 = vunpack.c.l.b16 %v6063
    %v6677 = vunpack.c.h.b16 %v6063
    %v6678 = vunpack.c.l.b16 %v6064
    %v6679 = vunpack.c.h.b16 %v6064
    %v6680 = vunpack.c.l.b16 %v6065
    %v6681 = vunpack.c.h.b16 %v6065
    %v6682 = vunpack.c.l.b16 %v6066
    %v6683 = vunpack.c.h.b16 %v6066
    %v6684 = vunpack.c.l.b16 %v6067
    %v6685 = vunpack.c.h.b16 %v6067
    %v6686 = vunpack.c.l.b16 %v6068
    %v6687 = vunpack.c.h.b16 %v6068
    %v6688 = vunpack.c.l.b16 %v6069
    %v6689 = vunpack.c.h.b16 %v6069
    %v6690 = vunpack.c.l.b16 %v6070
    %v6691 = vunpack.c.h.b16 %v6070
    %v6692 = vunpack.c.l.b16 %v6071
    %v6693 = vunpack.c.h.b16 %v6071
    %v6694 = vunpack.c.l.b16 %v6072
    %v6695 = vunpack.c.h.b16 %v6072
    %v6696 = vunpack.c.l.b16 %v6073
    %v6697 = vunpack.c.h.b16 %v6073
    %v6698 = vpack.c.b16 %v6666, %v6618
    %v6699 = vpack.c.b16 %v6667, %v6619
    %v6700 = vpack.c.b16 %v6668, %v6620
    %v6701 = vpack.c.b16 %v6669, %v6621
    %v6702 = vpack.c.b16 %v6670, %v6622
    %v6703 = vpack.c.b16 %v6671, %v6623
    %v6704 = vpack.c.b16 %v6672, %v6624
    %v6705 = vpack.c.b16 %v6673, %v6625
    %v6706 = vpack.c.b16 %v6674, %v6626
    %v6707 = vpack.c.b16 %v6675, %v6627
    %v6708 = vpack.c.b16 %v6676, %v6628
    %v6709 = vpack.c.b16 %v6677, %v6629
    %v6710 = vpack.c.b16 %v6678, %v6630
    %v6711 = vpack.c.b16 %v6679, %v6631
    %v6712 = vpack.c.b16 %v6680, %v6632
    %v6713 = vpack.c.b16 %v6681, %v6633
    %v6714 = vpack.c.b16 %v6682, %v6634
    %v6715 = vpack.c.b16 %v6683, %v6635
    %v6716 = vpack.c.b16 %v6684, %v6636
    %v6717 = vpack.c.b16 %v6685, %v6637
    %v6718 = vpack.c.b16 %v6686, %v6638
    %v6719 = vpack.c.b16 %v6687, %v6639
    %v6720 = vpack.c.b16 %v6688, %v6640
    %v6721 = vpack.c.b16 %v6689, %v6641
    %v6722 = vpack.c.b16 %v6690, %v6642
    %v6723 = vpack.c.b16 %v6691, %v6643
    %v6724 = vpack.c.b16 %v6692, %v6644
    %v6725 = vpack.c.b16 %v6693, %v6645
    %v6726 = vpack.c.b16 %v6694, %v6646
    %v6727 = vpack.c.b16 %v6695, %v6647
    %v6728 = vpack.c.b16 %v6696, %v6648
    %v6729 = vpack.c.b16 %v6697, %v6649
    %v6731 = vshrl.u32 %v6698, 16
    %v6733 = vshll.u32 %v6698, 16
    %v6735 = vrot.slane %v6733, 1
    %v6736 = vor.u32 %v6731, %v6735
    %v6738 = vshrl.u32 %v6699, 16
    %v6740 = vshll.u32 %v6699, 16
    %v6742 = vrot.slane %v6740, 1
    %v6743 = vor.u32 %v6738, %v6742
    %v6745 = vshrl.u32 %v6700, 16
    %v6747 = vshll.u32 %v6700, 16
    %v6749 = vrot.slane %v6747, 1
    %v6750 = vor.u32 %v6745, %v6749
    %v6752 = vshrl.u32 %v6701, 16
    %v6754 = vshll.u32 %v6701, 16
    %v6756 = vrot.slane %v6754, 1
    %v6757 = vor.u32 %v6752, %v6756
    %v6759 = vshrl.u32 %v6702, 16
    %v6761 = vshll.u32 %v6702, 16
    %v6763 = vrot.slane %v6761, 1
    %v6764 = vor.u32 %v6759, %v6763
    %v6766 = vshrl.u32 %v6703, 16
    %v6768 = vshll.u32 %v6703, 16
    %v6770 = vrot.slane %v6768, 1
    %v6771 = vor.u32 %v6766, %v6770
    %v6773 = vshrl.u32 %v6704, 16
    %v6775 = vshll.u32 %v6704, 16
    %v6777 = vrot.slane %v6775, 1
    %v6778 = vor.u32 %v6773, %v6777
    %v6780 = vshrl.u32 %v6705, 16
    %v6782 = vshll.u32 %v6705, 16
    %v6784 = vrot.slane %v6782, 1
    %v6785 = vor.u32 %v6780, %v6784
    %v6787 = vshrl.u32 %v6706, 16
    %v6789 = vshll.u32 %v6706, 16
    %v6791 = vrot.slane %v6789, 1
    %v6792 = vor.u32 %v6787, %v6791
    %v6794 = vshrl.u32 %v6707, 16
    %v6796 = vshll.u32 %v6707, 16
    %v6798 = vrot.slane %v6796, 1
    %v6799 = vor.u32 %v6794, %v6798
    %v6801 = vshrl.u32 %v6708, 16
    %v6803 = vshll.u32 %v6708, 16
    %v6805 = vrot.slane %v6803, 1
    %v6806 = vor.u32 %v6801, %v6805
    %v6808 = vshrl.u32 %v6709, 16
    %v6810 = vshll.u32 %v6709, 16
    %v6812 = vrot.slane %v6810, 1
    %v6813 = vor.u32 %v6808, %v6812
    %v6815 = vshrl.u32 %v6710, 16
    %v6817 = vshll.u32 %v6710, 16
    %v6819 = vrot.slane %v6817, 1
    %v6820 = vor.u32 %v6815, %v6819
    %v6822 = vshrl.u32 %v6711, 16
    %v6824 = vshll.u32 %v6711, 16
    %v6826 = vrot.slane %v6824, 1
    %v6827 = vor.u32 %v6822, %v6826
    %v6829 = vshrl.u32 %v6712, 16
    %v6831 = vshll.u32 %v6712, 16
    %v6833 = vrot.slane %v6831, 1
    %v6834 = vor.u32 %v6829, %v6833
    %v6836 = vshrl.u32 %v6713, 16
    %v6838 = vshll.u32 %v6713, 16
    %v6840 = vrot.slane %v6838, 1
    %v6841 = vor.u32 %v6836, %v6840
    %v6843 = vshrl.u32 %v6714, 16
    %v6845 = vshll.u32 %v6714, 16
    %v6847 = vrot.slane %v6845, 1
    %v6848 = vor.u32 %v6843, %v6847
    %v6850 = vshrl.u32 %v6715, 16
    %v6852 = vshll.u32 %v6715, 16
    %v6854 = vrot.slane %v6852, 1
    %v6855 = vor.u32 %v6850, %v6854
    %v6857 = vshrl.u32 %v6716, 16
    %v6859 = vshll.u32 %v6716, 16
    %v6861 = vrot.slane %v6859, 1
    %v6862 = vor.u32 %v6857, %v6861
    %v6864 = vshrl.u32 %v6717, 16
    %v6866 = vshll.u32 %v6717, 16
    %v6868 = vrot.slane %v6866, 1
    %v6869 = vor.u32 %v6864, %v6868
    %v6871 = vshrl.u32 %v6718, 16
    %v6873 = vshll.u32 %v6718, 16
    %v6875 = vrot.slane %v6873, 1
    %v6876 = vor.u32 %v6871, %v6875
    %v6878 = vshrl.u32 %v6719, 16
    %v6880 = vshll.u32 %v6719, 16
    %v6882 = vrot.slane %v6880, 1
    %v6883 = vor.u32 %v6878, %v6882
    %v6885 = vshrl.u32 %v6720, 16
    %v6887 = vshll.u32 %v6720, 16
    %v6889 = vrot.slane %v6887, 1
    %v6890 = vor.u32 %v6885, %v6889
    %v6892 = vshrl.u32 %v6721, 16
    %v6894 = vshll.u32 %v6721, 16
    %v6896 = vrot.slane %v6894, 1
    %v6897 = vor.u32 %v6892, %v6896
    %v6899 = vshrl.u32 %v6722, 16
    %v6901 = vshll.u32 %v6722, 16
    %v6903 = vrot.slane %v6901, 1
    %v6904 = vor.u32 %v6899, %v6903
    %v6906 = vshrl.u32 %v6723, 16
    %v6908 = vshll.u32 %v6723, 16
    %v6910 = vrot.slane %v6908, 1
    %v6911 = vor.u32 %v6906, %v6910
    %v6913 = vshrl.u32 %v6724, 16
    %v6915 = vshll.u32 %v6724, 16
    %v6917 = vrot.slane %v6915, 1
    %v6918 = vor.u32 %v6913, %v6917
    %v6920 = vshrl.u32 %v6725, 16
    %v6922 = vshll.u32 %v6725, 16
    %v6924 = vrot.slane %v6922, 1
    %v6925 = vor.u32 %v6920, %v6924
    %v6927 = vshrl.u32 %v6726, 16
    %v6929 = vshll.u32 %v6726, 16
    %v6931 = vrot.slane %v6929, 1
    %v6932 = vor.u32 %v6927, %v6931
    %v6934 = vshrl.u32 %v6727, 16
    %v6936 = vshll.u32 %v6727, 16
    %v6938 = vrot.slane %v6936, 1
    %v6939 = vor.u32 %v6934, %v6938
    %v6941 = vshrl.u32 %v6728, 16
    %v6943 = vshll.u32 %v6728, 16
    %v6945 = vrot.slane %v6943, 1
    %v6946 = vor.u32 %v6941, %v6945
    %v6948 = vshrl.u32 %v6729, 16
    %v6950 = vshll.u32 %v6729, 16
    %v6952 = vrot.slane %v6950, 1
    %v6953 = vor.u32 %v6948, %v6952
    %v6970 = vunpack.c.l.b16 %v6074
    %v6971 = vunpack.c.h.b16 %v6074
    %v6972 = vunpack.c.l.b16 %v6075
    %v6973 = vunpack.c.h.b16 %v6075
    %v6974 = vunpack.c.l.b16 %v6076
    %v6975 = vunpack.c.h.b16 %v6076
    %v6976 = vunpack.c.l.b16 %v6077
    %v6977 = vunpack.c.h.b16 %v6077
    %v6978 = vunpack.c.l.b16 %v6078
    %v6979 = vunpack.c.h.b16 %v6078
    %v6980 = vunpack.c.l.b16 %v6079
    %v6981 = vunpack.c.h.b16 %v6079
    %v6982 = vunpack.c.l.b16 %v6080
    %v6983 = vunpack.c.h.b16 %v6080
    %v6984 = vunpack.c.l.b16 %v6081
    %v6985 = vunpack.c.h.b16 %v6081
    %v6986 = vunpack.c.l.b16 %v6082
    %v6987 = vunpack.c.h.b16 %v6082
    %v6988 = vunpack.c.l.b16 %v6083
    %v6989 = vunpack.c.h.b16 %v6083
    %v6990 = vunpack.c.l.b16 %v6084
    %v6991 = vunpack.c.h.b16 %v6084
    %v6992 = vunpack.c.l.b16 %v6085
    %v6993 = vunpack.c.h.b16 %v6085
    %v6994 = vunpack.c.l.b16 %v6086
    %v6995 = vunpack.c.h.b16 %v6086
    %v6996 = vunpack.c.l.b16 %v6087
    %v6997 = vunpack.c.h.b16 %v6087
    %v6998 = vunpack.c.l.b16 %v6088
    %v6999 = vunpack.c.h.b16 %v6088
    %v7000 = vunpack.c.l.b16 %v6089
    %v7001 = vunpack.c.h.b16 %v6089
    %v7002 = vpack.c.b16 %v6666, %v6970
    %v7003 = vpack.c.b16 %v6667, %v6971
    %v7004 = vpack.c.b16 %v6668, %v6972
    %v7005 = vpack.c.b16 %v6669, %v6973
    %v7006 = vpack.c.b16 %v6670, %v6974
    %v7007 = vpack.c.b16 %v6671, %v6975
    %v7008 = vpack.c.b16 %v6672, %v6976
    %v7009 = vpack.c.b16 %v6673, %v6977
    %v7010 = vpack.c.b16 %v6674, %v6978
    %v7011 = vpack.c.b16 %v6675, %v6979
    %v7012 = vpack.c.b16 %v6676, %v6980
    %v7013 = vpack.c.b16 %v6677, %v6981
    %v7014 = vpack.c.b16 %v6678, %v6982
    %v7015 = vpack.c.b16 %v6679, %v6983
    %v7016 = vpack.c.b16 %v6680, %v6984
    %v7017 = vpack.c.b16 %v6681, %v6985
    %v7018 = vpack.c.b16 %v6682, %v6986
    %v7019 = vpack.c.b16 %v6683, %v6987
    %v7020 = vpack.c.b16 %v6684, %v6988
    %v7021 = vpack.c.b16 %v6685, %v6989
    %v7022 = vpack.c.b16 %v6686, %v6990
    %v7023 = vpack.c.b16 %v6687, %v6991
    %v7024 = vpack.c.b16 %v6688, %v6992
    %v7025 = vpack.c.b16 %v6689, %v6993
    %v7026 = vpack.c.b16 %v6690, %v6994
    %v7027 = vpack.c.b16 %v6691, %v6995
    %v7028 = vpack.c.b16 %v6692, %v6996
    %v7029 = vpack.c.b16 %v6693, %v6997
    %v7030 = vpack.c.b16 %v6694, %v6998
    %v7031 = vpack.c.b16 %v6695, %v6999
    %v7032 = vpack.c.b16 %v6696, %v7000
    %v7033 = vpack.c.b16 %v6697, %v7001
    %v7034 = vrot.slane %v7002, 1
    %v7035 = vrot.slane %v7003, 1
    %v7036 = vrot.slane %v7004, 1
    %v7037 = vrot.slane %v7005, 1
    %v7038 = vrot.slane %v7006, 1
    %v7039 = vrot.slane %v7007, 1
    %v7040 = vrot.slane %v7008, 1
    %v7041 = vrot.slane %v7009, 1
    %v7042 = vrot.slane %v7010, 1
    %v7043 = vrot.slane %v7011, 1
    %v7044 = vrot.slane %v7012, 1
    %v7045 = vrot.slane %v7013, 1
    %v7046 = vrot.slane %v7014, 1
    %v7047 = vrot.slane %v7015, 1
    %v7048 = vrot.slane %v7016, 1
    %v7049 = vrot.slane %v7017, 1
    %v7050 = vrot.slane %v7018, 1
    %v7051 = vrot.slane %v7019, 1
    %v7052 = vrot.slane %v7020, 1
    %v7053 = vrot.slane %v7021, 1
    %v7054 = vrot.slane %v7022, 1
    %v7055 = vrot.slane %v7023, 1
    %v7056 = vrot.slane %v7024, 1
    %v7057 = vrot.slane %v7025, 1
    %v7058 = vrot.slane %v7026, 1
    %v7059 = vrot.slane %v7027, 1
    %v7060 = vrot.slane %v7028, 1
    %v7061 = vrot.slane %v7029, 1
    %v7062 = vrot.slane %v7030, 1
    %v7063 = vrot.slane %v7031, 1
    %v7064 = vrot.slane %v7032, 1
    %v7065 = vrot.slane %v7033, 1
    %v7082 = vunpack.c.l.b16 %v6090
    %v7083 = vunpack.c.h.b16 %v6090
    %v7084 = vunpack.c.l.b16 %v6091
    %v7085 = vunpack.c.h.b16 %v6091
    %v7086 = vunpack.c.l.b16 %v6092
    %v7087 = vunpack.c.h.b16 %v6092
    %v7088 = vunpack.c.l.b16 %v6093
    %v7089 = vunpack.c.h.b16 %v6093
    %v7090 = vunpack.c.l.b16 %v6094
    %v7091 = vunpack.c.h.b16 %v6094
    %v7092 = vunpack.c.l.b16 %v6095
    %v7093 = vunpack.c.h.b16 %v6095
    %v7094 = vunpack.c.l.b16 %v6096
    %v7095 = vunpack.c.h.b16 %v6096
    %v7096 = vunpack.c.l.b16 %v6097
    %v7097 = vunpack.c.h.b16 %v6097
    %v7098 = vunpack.c.l.b16 %v6098
    %v7099 = vunpack.c.h.b16 %v6098
    %v7100 = vunpack.c.l.b16 %v6099
    %v7101 = vunpack.c.h.b16 %v6099
    %v7102 = vunpack.c.l.b16 %v6100
    %v7103 = vunpack.c.h.b16 %v6100
    %v7104 = vunpack.c.l.b16 %v6101
    %v7105 = vunpack.c.h.b16 %v6101
    %v7106 = vunpack.c.l.b16 %v6102
    %v7107 = vunpack.c.h.b16 %v6102
    %v7108 = vunpack.c.l.b16 %v6103
    %v7109 = vunpack.c.h.b16 %v6103
    %v7110 = vunpack.c.l.b16 %v6104
    %v7111 = vunpack.c.h.b16 %v6104
    %v7112 = vunpack.c.l.b16 %v6105
    %v7113 = vunpack.c.h.b16 %v6105
    %v7130 = vunpack.c.l.b16 %v6106
    %v7131 = vunpack.c.h.b16 %v6106
    %v7132 = vunpack.c.l.b16 %v6107
    %v7133 = vunpack.c.h.b16 %v6107
    %v7134 = vunpack.c.l.b16 %v6108
    %v7135 = vunpack.c.h.b16 %v6108
    %v7136 = vunpack.c.l.b16 %v6109
    %v7137 = vunpack.c.h.b16 %v6109
    %v7138 = vunpack.c.l.b16 %v6110
    %v7139 = vunpack.c.h.b16 %v6110
    %v7140 = vunpack.c.l.b16 %v6111
    %v7141 = vunpack.c.h.b16 %v6111
    %v7142 = vunpack.c.l.b16 %v6112
    %v7143 = vunpack.c.h.b16 %v6112
    %v7144 = vunpack.c.l.b16 %v6113
    %v7145 = vunpack.c.h.b16 %v6113
    %v7146 = vunpack.c.l.b16 %v6114
    %v7147 = vunpack.c.h.b16 %v6114
    %v7148 = vunpack.c.l.b16 %v6115
    %v7149 = vunpack.c.h.b16 %v6115
    %v7150 = vunpack.c.l.b16 %v6116
    %v7151 = vunpack.c.h.b16 %v6116
    %v7152 = vunpack.c.l.b16 %v6117
    %v7153 = vunpack.c.h.b16 %v6117
    %v7154 = vunpack.c.l.b16 %v6118
    %v7155 = vunpack.c.h.b16 %v6118
    %v7156 = vunpack.c.l.b16 %v6119
    %v7157 = vunpack.c.h.b16 %v6119
    %v7158 = vunpack.c.l.b16 %v6120
    %v7159 = vunpack.c.h.b16 %v6120
    %v7160 = vunpack.c.l.b16 %v6121
    %v7161 = vunpack.c.h.b16 %v6121
    %v7162 = vpack.c.b16 %v7130, %v7082
    %v7163 = vpack.c.b16 %v7131, %v7083
    %v7164 = vpack.c.b16 %v7132, %v7084
    %v7165 = vpack.c.b16 %v7133, %v7085
    %v7166 = vpack.c.b16 %v7134, %v7086
    %v7167 = vpack.c.b16 %v7135, %v7087
    %v7168 = vpack.c.b16 %v7136, %v7088
    %v7169 = vpack.c.b16 %v7137, %v7089
    %v7170 = vpack.c.b16 %v7138, %v7090
    %v7171 = vpack.c.b16 %v7139, %v7091
    %v7172 = vpack.c.b16 %v7140, %v7092
    %v7173 = vpack.c.b16 %v7141, %v7093
    %v7174 = vpack.c.b16 %v7142, %v7094
    %v7175 = vpack.c.b16 %v7143, %v7095
    %v7176 = vpack.c.b16 %v7144, %v7096
    %v7177 = vpack.c.b16 %v7145, %v7097
    %v7178 = vpack.c.b16 %v7146, %v7098
    %v7179 = vpack.c.b16 %v7147, %v7099
    %v7180 = vpack.c.b16 %v7148, %v7100
    %v7181 = vpack.c.b16 %v7149, %v7101
    %v7182 = vpack.c.b16 %v7150, %v7102
    %v7183 = vpack.c.b16 %v7151, %v7103
    %v7184 = vpack.c.b16 %v7152, %v7104
    %v7185 = vpack.c.b16 %v7153, %v7105
    %v7186 = vpack.c.b16 %v7154, %v7106
    %v7187 = vpack.c.b16 %v7155, %v7107
    %v7188 = vpack.c.b16 %v7156, %v7108
    %v7189 = vpack.c.b16 %v7157, %v7109
    %v7190 = vpack.c.b16 %v7158, %v7110
    %v7191 = vpack.c.b16 %v7159, %v7111
    %v7192 = vpack.c.b16 %v7160, %v7112
    %v7193 = vpack.c.b16 %v7161, %v7113
    %v7195 = vshrl.u32 %v7162, 16
    %v7197 = vshll.u32 %v7162, 16
    %v7199 = vrot.slane %v7197, 1
    %v7200 = vor.u32 %v7195, %v7199
    %v7202 = vshrl.u32 %v7163, 16
    %v7204 = vshll.u32 %v7163, 16
    %v7206 = vrot.slane %v7204, 1
    %v7207 = vor.u32 %v7202, %v7206
    %v7209 = vshrl.u32 %v7164, 16
    %v7211 = vshll.u32 %v7164, 16
    %v7213 = vrot.slane %v7211, 1
    %v7214 = vor.u32 %v7209, %v7213
    %v7216 = vshrl.u32 %v7165, 16
    %v7218 = vshll.u32 %v7165, 16
    %v7220 = vrot.slane %v7218, 1
    %v7221 = vor.u32 %v7216, %v7220
    %v7223 = vshrl.u32 %v7166, 16
    %v7225 = vshll.u32 %v7166, 16
    %v7227 = vrot.slane %v7225, 1
    %v7228 = vor.u32 %v7223, %v7227
    %v7230 = vshrl.u32 %v7167, 16
    %v7232 = vshll.u32 %v7167, 16
    %v7234 = vrot.slane %v7232, 1
    %v7235 = vor.u32 %v7230, %v7234
    %v7237 = vshrl.u32 %v7168, 16
    %v7239 = vshll.u32 %v7168, 16
    %v7241 = vrot.slane %v7239, 1
    %v7242 = vor.u32 %v7237, %v7241
    %v7244 = vshrl.u32 %v7169, 16
    %v7246 = vshll.u32 %v7169, 16
    %v7248 = vrot.slane %v7246, 1
    %v7249 = vor.u32 %v7244, %v7248
    %v7251 = vshrl.u32 %v7170, 16
    %v7253 = vshll.u32 %v7170, 16
    %v7255 = vrot.slane %v7253, 1
    %v7256 = vor.u32 %v7251, %v7255
    %v7258 = vshrl.u32 %v7171, 16
    %v7260 = vshll.u32 %v7171, 16
    %v7262 = vrot.slane %v7260, 1
    %v7263 = vor.u32 %v7258, %v7262
    %v7265 = vshrl.u32 %v7172, 16
    %v7267 = vshll.u32 %v7172, 16
    %v7269 = vrot.slane %v7267, 1
    %v7270 = vor.u32 %v7265, %v7269
    %v7272 = vshrl.u32 %v7173, 16
    %v7274 = vshll.u32 %v7173, 16
    %v7276 = vrot.slane %v7274, 1
    %v7277 = vor.u32 %v7272, %v7276
    %v7279 = vshrl.u32 %v7174, 16
    %v7281 = vshll.u32 %v7174, 16
    %v7283 = vrot.slane %v7281, 1
    %v7284 = vor.u32 %v7279, %v7283
    %v7286 = vshrl.u32 %v7175, 16
    %v7288 = vshll.u32 %v7175, 16
    %v7290 = vrot.slane %v7288, 1
    %v7291 = vor.u32 %v7286, %v7290
    %v7293 = vshrl.u32 %v7176, 16
    %v7295 = vshll.u32 %v7176, 16
    %v7297 = vrot.slane %v7295, 1
    %v7298 = vor.u32 %v7293, %v7297
    %v7300 = vshrl.u32 %v7177, 16
    %v7302 = vshll.u32 %v7177, 16
    %v7304 = vrot.slane %v7302, 1
    %v7305 = vor.u32 %v7300, %v7304
    %v7307 = vshrl.u32 %v7178, 16
    %v7309 = vshll.u32 %v7178, 16
    %v7311 = vrot.slane %v7309, 1
    %v7312 = vor.u32 %v7307, %v7311
    %v7314 = vshrl.u32 %v7179, 16
    %v7316 = vshll.u32 %v7179, 16
    %v7318 = vrot.slane %v7316, 1
    %v7319 = vor.u32 %v7314, %v7318
    %v7321 = vshrl.u32 %v7180, 16
    %v7323 = vshll.u32 %v7180, 16
    %v7325 = vrot.slane %v7323, 1
    %v7326 = vor.u32 %v7321, %v7325
    %v7328 = vshrl.u32 %v7181, 16
    %v7330 = vshll.u32 %v7181, 16
    %v7332 = vrot.slane %v7330, 1
    %v7333 = vor.u32 %v7328, %v7332
    %v7335 = vshrl.u32 %v7182, 16
    %v7337 = vshll.u32 %v7182, 16
    %v7339 = vrot.slane %v7337, 1
    %v7340 = vor.u32 %v7335, %v7339
    %v7342 = vshrl.u32 %v7183, 16
    %v7344 = vshll.u32 %v7183, 16
    %v7346 = vrot.slane %v7344, 1
    %v7347 = vor.u32 %v7342, %v7346
    %v7349 = vshrl.u32 %v7184, 16
    %v7351 = vshll.u32 %v7184, 16
    %v7353 = vrot.slane %v7351, 1
    %v7354 = vor.u32 %v7349, %v7353
    %v7356 = vshrl.u32 %v7185, 16
    %v7358 = vshll.u32 %v7185, 16
    %v7360 = vrot.slane %v7358, 1
    %v7361 = vor.u32 %v7356, %v7360
    %v7363 = vshrl.u32 %v7186, 16
    %v7365 = vshll.u32 %v7186, 16
    %v7367 = vrot.slane %v7365, 1
    %v7368 = vor.u32 %v7363, %v7367
    %v7370 = vshrl.u32 %v7187, 16
    %v7372 = vshll.u32 %v7187, 16
    %v7374 = vrot.slane %v7372, 1
    %v7375 = vor.u32 %v7370, %v7374
    %v7377 = vshrl.u32 %v7188, 16
    %v7379 = vshll.u32 %v7188, 16
    %v7381 = vrot.slane %v7379, 1
    %v7382 = vor.u32 %v7377, %v7381
    %v7384 = vshrl.u32 %v7189, 16
    %v7386 = vshll.u32 %v7189, 16
    %v7388 = vrot.slane %v7386, 1
    %v7389 = vor.u32 %v7384, %v7388
    %v7391 = vshrl.u32 %v7190, 16
    %v7393 = vshll.u32 %v7190, 16
    %v7395 = vrot.slane %v7393, 1
    %v7396 = vor.u32 %v7391, %v7395
    %v7398 = vshrl.u32 %v7191, 16
    %v7400 = vshll.u32 %v7191, 16
    %v7402 = vrot.slane %v7400, 1
    %v7403 = vor.u32 %v7398, %v7402
    %v7405 = vshrl.u32 %v7192, 16
    %v7407 = vshll.u32 %v7192, 16
    %v7409 = vrot.slane %v7407, 1
    %v7410 = vor.u32 %v7405, %v7409
    %v7412 = vshrl.u32 %v7193, 16
    %v7414 = vshll.u32 %v7193, 16
    %v7416 = vrot.slane %v7414, 1
    %v7417 = vor.u32 %v7412, %v7416
    %v7434 = vunpack.c.l.b16 %v6122
    %v7435 = vunpack.c.h.b16 %v6122
    %v7436 = vunpack.c.l.b16 %v6123
    %v7437 = vunpack.c.h.b16 %v6123
    %v7438 = vunpack.c.l.b16 %v6124
    %v7439 = vunpack.c.h.b16 %v6124
    %v7440 = vunpack.c.l.b16 %v6125
    %v7441 = vunpack.c.h.b16 %v6125
    %v7442 = vunpack.c.l.b16 %v6126
    %v7443 = vunpack.c.h.b16 %v6126
    %v7444 = vunpack.c.l.b16 %v6127
    %v7445 = vunpack.c.h.b16 %v6127
    %v7446 = vunpack.c.l.b16 %v6128
    %v7447 = vunpack.c.h.b16 %v6128
    %v7448 = vunpack.c.l.b16 %v6129
    %v7449 = vunpack.c.h.b16 %v6129
    %v7450 = vunpack.c.l.b16 %v6130
    %v7451 = vunpack.c.h.b16 %v6130
    %v7452 = vunpack.c.l.b16 %v6131
    %v7453 = vunpack.c.h.b16 %v6131
    %v7454 = vunpack.c.l.b16 %v6132
    %v7455 = vunpack.c.h.b16 %v6132
    %v7456 = vunpack.c.l.b16 %v6133
    %v7457 = vunpack.c.h.b16 %v6133
    %v7458 = vunpack.c.l.b16 %v6134
    %v7459 = vunpack.c.h.b16 %v6134
    %v7460 = vunpack.c.l.b16 %v6135
    %v7461 = vunpack.c.h.b16 %v6135
    %v7462 = vunpack.c.l.b16 %v6136
    %v7463 = vunpack.c.h.b16 %v6136
    %v7464 = vunpack.c.l.b16 %v6137
    %v7465 = vunpack.c.h.b16 %v6137
    %v7466 = vpack.c.b16 %v7130, %v7434
    %v7467 = vpack.c.b16 %v7131, %v7435
    %v7468 = vpack.c.b16 %v7132, %v7436
    %v7469 = vpack.c.b16 %v7133, %v7437
    %v7470 = vpack.c.b16 %v7134, %v7438
    %v7471 = vpack.c.b16 %v7135, %v7439
    %v7472 = vpack.c.b16 %v7136, %v7440
    %v7473 = vpack.c.b16 %v7137, %v7441
    %v7474 = vpack.c.b16 %v7138, %v7442
    %v7475 = vpack.c.b16 %v7139, %v7443
    %v7476 = vpack.c.b16 %v7140, %v7444
    %v7477 = vpack.c.b16 %v7141, %v7445
    %v7478 = vpack.c.b16 %v7142, %v7446
    %v7479 = vpack.c.b16 %v7143, %v7447
    %v7480 = vpack.c.b16 %v7144, %v7448
    %v7481 = vpack.c.b16 %v7145, %v7449
    %v7482 = vpack.c.b16 %v7146, %v7450
    %v7483 = vpack.c.b16 %v7147, %v7451
    %v7484 = vpack.c.b16 %v7148, %v7452
    %v7485 = vpack.c.b16 %v7149, %v7453
    %v7486 = vpack.c.b16 %v7150, %v7454
    %v7487 = vpack.c.b16 %v7151, %v7455
    %v7488 = vpack.c.b16 %v7152, %v7456
    %v7489 = vpack.c.b16 %v7153, %v7457
    %v7490 = vpack.c.b16 %v7154, %v7458
    %v7491 = vpack.c.b16 %v7155, %v7459
    %v7492 = vpack.c.b16 %v7156, %v7460
    %v7493 = vpack.c.b16 %v7157, %v7461
    %v7494 = vpack.c.b16 %v7158, %v7462
    %v7495 = vpack.c.b16 %v7159, %v7463
    %v7496 = vpack.c.b16 %v7160, %v7464
    %v7497 = vpack.c.b16 %v7161, %v7465
    %v7498 = vrot.slane %v7466, 1
    %v7499 = vrot.slane %v7467, 1
    %v7500 = vrot.slane %v7468, 1
    %v7501 = vrot.slane %v7469, 1
    %v7502 = vrot.slane %v7470, 1
    %v7503 = vrot.slane %v7471, 1
    %v7504 = vrot.slane %v7472, 1
    %v7505 = vrot.slane %v7473, 1
    %v7506 = vrot.slane %v7474, 1
    %v7507 = vrot.slane %v7475, 1
    %v7508 = vrot.slane %v7476, 1
    %v7509 = vrot.slane %v7477, 1
    %v7510 = vrot.slane %v7478, 1
    %v7511 = vrot.slane %v7479, 1
    %v7512 = vrot.slane %v7480, 1
    %v7513 = vrot.slane %v7481, 1
    %v7514 = vrot.slane %v7482, 1
    %v7515 = vrot.slane %v7483, 1
    %v7516 = vrot.slane %v7484, 1
    %v7517 = vrot.slane %v7485, 1
    %v7518 = vrot.slane %v7486, 1
    %v7519 = vrot.slane %v7487, 1
    %v7520 = vrot.slane %v7488, 1
    %v7521 = vrot.slane %v7489, 1
    %v7522 = vrot.slane %v7490, 1
    %v7523 = vrot.slane %v7491, 1
    %v7524 = vrot.slane %v7492, 1
    %v7525 = vrot.slane %v7493, 1
    %v7526 = vrot.slane %v7494, 1
    %v7527 = vrot.slane %v7495, 1
    %v7528 = vrot.slane %v7496, 1
    %v7529 = vrot.slane %v7497, 1
    %v7530 = vunpack.c.l.b16 %v6272
    %v7531 = vunpack.c.l.b16 %v6279
    %v7532 = vunpack.c.l.b16 %v6570
    %v7533 = vunpack.c.l.b16 %v6571
    %v7534 = vunpack.c.l.b16 %v6736
    %v7535 = vunpack.c.l.b16 %v6743
    %v7536 = vunpack.c.l.b16 %v7034
    %v7537 = vunpack.c.l.b16 %v7035
    %v7538 = vunpack.c.l.b16 %v7200
    %v7539 = vunpack.c.l.b16 %v7207
    %v7540 = vunpack.c.l.b16 %v7498
    %v7541 = vunpack.c.l.b16 %v7499
    %v7542 = vunpack.c.l.b16 %v6286
    %v7543 = vunpack.c.l.b16 %v6293
    %v7544 = vunpack.c.l.b16 %v6572
    %v7545 = vunpack.c.l.b16 %v6573
    %v7546 = vunpack.c.l.b16 %v6750
    %v7547 = vunpack.c.l.b16 %v6757
    %v7548 = vunpack.c.l.b16 %v7036
    %v7549 = vunpack.c.l.b16 %v7037
    %v7550 = vunpack.c.l.b16 %v7214
    %v7551 = vunpack.c.l.b16 %v7221
    %v7552 = vunpack.c.l.b16 %v7500
    %v7553 = vunpack.c.l.b16 %v7501
    %v7554 = vunpack.c.l.b16 %v6300
    %v7555 = vunpack.c.l.b16 %v6307
    %v7556 = vunpack.c.l.b16 %v6574
    %v7557 = vunpack.c.l.b16 %v6575
    %v7558 = vunpack.c.l.b16 %v6764
    %v7559 = vunpack.c.l.b16 %v6771
    %v7560 = vunpack.c.l.b16 %v7038
    %v7561 = vunpack.c.l.b16 %v7039
    %v7562 = vunpack.c.l.b16 %v7228
    %v7563 = vunpack.c.l.b16 %v7235
    %v7564 = vunpack.c.l.b16 %v7502
    %v7565 = vunpack.c.l.b16 %v7503
    %v7566 = vunpack.c.l.b16 %v6314
    %v7567 = vunpack.c.l.b16 %v6321
    %v7568 = vunpack.c.l.b16 %v6576
    %v7569 = vunpack.c.l.b16 %v6577
    %v7570 = vunpack.c.l.b16 %v6778
    %v7571 = vunpack.c.l.b16 %v6785
    %v7572 = vunpack.c.l.b16 %v7040
    %v7573 = vunpack.c.l.b16 %v7041
    %v7574 = vunpack.c.l.b16 %v7242
    %v7575 = vunpack.c.l.b16 %v7249
    %v7576 = vunpack.c.l.b16 %v7504
    %v7577 = vunpack.c.l.b16 %v7505
    %v7578 = vunpack.c.l.b16 %v6328
    %v7579 = vunpack.c.l.b16 %v6335
    %v7580 = vunpack.c.l.b16 %v6578
    %v7581 = vunpack.c.l.b16 %v6579
    %v7582 = vunpack.c.l.b16 %v6792
    %v7583 = vunpack.c.l.b16 %v6799
    %v7584 = vunpack.c.l.b16 %v7042
    %v7585 = vunpack.c.l.b16 %v7043
    %v7586 = vunpack.c.l.b16 %v7256
    %v7587 = vunpack.c.l.b16 %v7263
    %v7588 = vunpack.c.l.b16 %v7506
    %v7589 = vunpack.c.l.b16 %v7507
    %v7590 = vunpack.c.l.b16 %v6342
    %v7591 = vunpack.c.l.b16 %v6349
    %v7592 = vunpack.c.l.b16 %v6580
    %v7593 = vunpack.c.l.b16 %v6581
    %v7594 = vunpack.c.l.b16 %v6806
    %v7595 = vunpack.c.l.b16 %v6813
    %v7596 = vunpack.c.l.b16 %v7044
    %v7597 = vunpack.c.l.b16 %v7045
    %v7598 = vunpack.c.l.b16 %v7270
    %v7599 = vunpack.c.l.b16 %v7277
    %v7600 = vunpack.c.l.b16 %v7508
    %v7601 = vunpack.c.l.b16 %v7509
    %v7602 = vunpack.c.l.b16 %v6356
    %v7603 = vunpack.c.l.b16 %v6363
    %v7604 = vunpack.c.l.b16 %v6582
    %v7605 = vunpack.c.l.b16 %v6583
    %v7606 = vunpack.c.l.b16 %v6820
    %v7607 = vunpack.c.l.b16 %v6827
    %v7608 = vunpack.c.l.b16 %v7046
    %v7609 = vunpack.c.l.b16 %v7047
    %v7610 = vunpack.c.l.b16 %v7284
    %v7611 = vunpack.c.l.b16 %v7291
    %v7612 = vunpack.c.l.b16 %v7510
    %v7613 = vunpack.c.l.b16 %v7511
    %v7614 = vunpack.c.l.b16 %v6370
    %v7615 = vunpack.c.l.b16 %v6377
    %v7616 = vunpack.c.l.b16 %v6584
    %v7617 = vunpack.c.l.b16 %v6585
    %v7618 = vunpack.c.l.b16 %v6834
    %v7619 = vunpack.c.l.b16 %v6841
    %v7620 = vunpack.c.l.b16 %v7048
    %v7621 = vunpack.c.l.b16 %v7049
    %v7622 = vunpack.c.l.b16 %v7298
    %v7623 = vunpack.c.l.b16 %v7305
    %v7624 = vunpack.c.l.b16 %v7512
    %v7625 = vunpack.c.l.b16 %v7513
    %v7626 = vunpack.c.l.b16 %v6384
    %v7627 = vunpack.c.l.b16 %v6391
    %v7628 = vunpack.c.l.b16 %v6586
    %v7629 = vunpack.c.l.b16 %v6587
    %v7630 = vunpack.c.l.b16 %v6848
    %v7631 = vunpack.c.l.b16 %v6855
    %v7632 = vunpack.c.l.b16 %v7050
    %v7633 = vunpack.c.l.b16 %v7051
    %v7634 = vunpack.c.l.b16 %v7312
    %v7635 = vunpack.c.l.b16 %v7319
    %v7636 = vunpack.c.l.b16 %v7514
    %v7637 = vunpack.c.l.b16 %v7515
    %v7638 = vunpack.c.l.b16 %v6398
    %v7639 = vunpack.c.l.b16 %v6405
    %v7640 = vunpack.c.l.b16 %v6588
    %v7641 = vunpack.c.l.b16 %v6589
    %v7642 = vunpack.c.l.b16 %v6862
    %v7643 = vunpack.c.l.b16 %v6869
    %v7644 = vunpack.c.l.b16 %v7052
    %v7645 = vunpack.c.l.b16 %v7053
    %v7646 = vunpack.c.l.b16 %v7326
    %v7647 = vunpack.c.l.b16 %v7333
    %v7648 = vunpack.c.l.b16 %v7516
    %v7649 = vunpack.c.l.b16 %v7517
    %v7650 = vunpack.c.l.b16 %v6412
    %v7651 = vunpack.c.l.b16 %v6419
    %v7652 = vunpack.c.l.b16 %v6590
    %v7653 = vunpack.c.l.b16 %v6591
    %v7654 = vunpack.c.l.b16 %v6876
    %v7655 = vunpack.c.l.b16 %v6883
    %v7656 = vunpack.c.l.b16 %v7054
    %v7657 = vunpack.c.l.b16 %v7055
    %v7658 = vunpack.c.l.b16 %v7340
    %v7659 = vunpack.c.l.b16 %v7347
    %v7660 = vunpack.c.l.b16 %v7518
    %v7661 = vunpack.c.l.b16 %v7519
    %v7662 = vunpack.c.l.b16 %v6426
    %v7663 = vunpack.c.l.b16 %v6433
    %v7664 = vunpack.c.l.b16 %v6592
    %v7665 = vunpack.c.l.b16 %v6593
    %v7666 = vunpack.c.l.b16 %v6890
    %v7667 = vunpack.c.l.b16 %v6897
    %v7668 = vunpack.c.l.b16 %v7056
    %v7669 = vunpack.c.l.b16 %v7057
    %v7670 = vunpack.c.l.b16 %v7354
    %v7671 = vunpack.c.l.b16 %v7361
    %v7672 = vunpack.c.l.b16 %v7520
    %v7673 = vunpack.c.l.b16 %v7521
    %v7674 = vunpack.c.l.b16 %v6440
    %v7675 = vunpack.c.l.b16 %v6447
    %v7676 = vunpack.c.l.b16 %v6594
    %v7677 = vunpack.c.l.b16 %v6595
    %v7678 = vunpack.c.l.b16 %v6904
    %v7679 = vunpack.c.l.b16 %v6911
    %v7680 = vunpack.c.l.b16 %v7058
    %v7681 = vunpack.c.l.b16 %v7059
    %v7682 = vunpack.c.l.b16 %v7368
    %v7683 = vunpack.c.l.b16 %v7375
    %v7684 = vunpack.c.l.b16 %v7522
    %v7685 = vunpack.c.l.b16 %v7523
    %v7686 = vunpack.c.l.b16 %v6454
    %v7687 = vunpack.c.l.b16 %v6461
    %v7688 = vunpack.c.l.b16 %v6596
    %v7689 = vunpack.c.l.b16 %v6597
    %v7690 = vunpack.c.l.b16 %v6918
    %v7691 = vunpack.c.l.b16 %v6925
    %v7692 = vunpack.c.l.b16 %v7060
    %v7693 = vunpack.c.l.b16 %v7061
    %v7694 = vunpack.c.l.b16 %v7382
    %v7695 = vunpack.c.l.b16 %v7389
    %v7696 = vunpack.c.l.b16 %v7524
    %v7697 = vunpack.c.l.b16 %v7525
    %v7698 = vunpack.c.l.b16 %v6468
    %v7699 = vunpack.c.l.b16 %v6475
    %v7700 = vunpack.c.l.b16 %v6598
    %v7701 = vunpack.c.l.b16 %v6599
    %v7702 = vunpack.c.l.b16 %v6932
    %v7703 = vunpack.c.l.b16 %v6939
    %v7704 = vunpack.c.l.b16 %v7062
    %v7705 = vunpack.c.l.b16 %v7063
    %v7706 = vunpack.c.l.b16 %v7396
    %v7707 = vunpack.c.l.b16 %v7403
    %v7708 = vunpack.c.l.b16 %v7526
    %v7709 = vunpack.c.l.b16 %v7527
    %v7710 = vunpack.c.l.b16 %v6482
    %v7711 = vunpack.c.l.b16 %v6489
    %v7712 = vunpack.c.l.b16 %v6600
    %v7713 = vunpack.c.l.b16 %v6601
    %v7714 = vunpack.c.l.b16 %v6946
    %v7715 = vunpack.c.l.b16 %v6953
    %v7716 = vunpack.c.l.b16 %v7064
    %v7717 = vunpack.c.l.b16 %v7065
    %v7718 = vunpack.c.l.b16 %v7410
    %v7719 = vunpack.c.l.b16 %v7417
    %v7720 = vunpack.c.l.b16 %v7528
    %v7721 = vunpack.c.l.b16 %v7529
    %v7722 = vld [vmem:[#allocation8] sm:$0xff]
    %v7723 = vld [vmem:[#allocation8 + $0x8] sm:$0xff]
    %v7724 = vld [vmem:[#allocation8 + $0x10] sm:$0xff]
    %v7725 = vld [vmem:[#allocation8 + $0x18] sm:$0xff]
    %v7726 = vld [vmem:[#allocation8 + $0x20] sm:$0xff]
    %v7727 = vld [vmem:[#allocation8 + $0x28] sm:$0xff]
    %v7728 = vld [vmem:[#allocation8 + $0x30] sm:$0xff]
    %v7729 = vld [vmem:[#allocation8 + $0x38] sm:$0xff]
    %v7730 = vld [vmem:[#allocation8 + $0x40] sm:$0xff]
    %v7731 = vld [vmem:[#allocation8 + $0x48] sm:$0xff]
    %v7732 = vld [vmem:[#allocation8 + $0x50] sm:$0xff]
    %v7733 = vld [vmem:[#allocation8 + $0x58] sm:$0xff]
    %v7734 = vld [vmem:[#allocation8 + $0x60] sm:$0xff]
    %v7735 = vld [vmem:[#allocation8 + $0x68] sm:$0xff]
    %v7736 = vld [vmem:[#allocation8 + $0x70] sm:$0xff]
    %v7737 = vld [vmem:[#allocation8 + $0x78] sm:$0xff]
    %v7738 = vld [vmem:[#allocation8 + $0x80] sm:$0xff]
    %v7739 = vld [vmem:[#allocation8 + $0x88] sm:$0xff]
    %v7740 = vld [vmem:[#allocation8 + $0x90] sm:$0xff]
    %v7741 = vld [vmem:[#allocation8 + $0x98] sm:$0xff]
    %v7742 = vld [vmem:[#allocation8 + $0xa0] sm:$0xff]
    %v7743 = vld [vmem:[#allocation8 + $0xa8] sm:$0xff]
    %v7744 = vld [vmem:[#allocation8 + $0xb0] sm:$0xff]
    %v7745 = vld [vmem:[#allocation8 + $0xb8] sm:$0xff]
    %v7746 = vld [vmem:[#allocation8 + $0xc0] sm:$0xff]
    %v7747 = vld [vmem:[#allocation8 + $0xc8] sm:$0xff]
    %v7748 = vld [vmem:[#allocation8 + $0xd0] sm:$0xff]
    %v7749 = vld [vmem:[#allocation8 + $0xd8] sm:$0xff]
    %v7750 = vld [vmem:[#allocation8 + $0xe0] sm:$0xff]
    %v7751 = vld [vmem:[#allocation8 + $0xe8] sm:$0xff]
    %v7752 = vld [vmem:[#allocation8 + $0xf0] sm:$0xff]
    %v7753 = vld [vmem:[#allocation8 + $0xf8] sm:$0xff]
    %v7754 = vld [vmem:[#allocation8 + $0x100] sm:$0xff]
    %v7755 = vld [vmem:[#allocation8 + $0x108] sm:$0xff]
    %v7756 = vld [vmem:[#allocation8 + $0x110] sm:$0xff]
    %v7757 = vld [vmem:[#allocation8 + $0x118] sm:$0xff]
    %v7758 = vld [vmem:[#allocation8 + $0x120] sm:$0xff]
    %v7759 = vld [vmem:[#allocation8 + $0x128] sm:$0xff]
    %v7760 = vld [vmem:[#allocation8 + $0x130] sm:$0xff]
    %v7761 = vld [vmem:[#allocation8 + $0x138] sm:$0xff]
    %v7762 = vld [vmem:[#allocation8 + $0x140] sm:$0xff]
    %v7763 = vld [vmem:[#allocation8 + $0x148] sm:$0xff]
    %v7764 = vld [vmem:[#allocation8 + $0x150] sm:$0xff]
    %v7765 = vld [vmem:[#allocation8 + $0x158] sm:$0xff]
    %v7766 = vld [vmem:[#allocation8 + $0x160] sm:$0xff]
    %v7767 = vld [vmem:[#allocation8 + $0x168] sm:$0xff]
    %v7768 = vld [vmem:[#allocation8 + $0x170] sm:$0xff]
    %v7769 = vld [vmem:[#allocation8 + $0x178] sm:$0xff]
    %v7770 = vld [vmem:[#allocation8 + $0x180] sm:$0xff]
    %v7771 = vld [vmem:[#allocation8 + $0x188] sm:$0xff]
    %v7772 = vld [vmem:[#allocation8 + $0x190] sm:$0xff]
    %v7773 = vld [vmem:[#allocation8 + $0x198] sm:$0xff]
    %v7774 = vld [vmem:[#allocation8 + $0x1a0] sm:$0xff]
    %v7775 = vld [vmem:[#allocation8 + $0x1a8] sm:$0xff]
    %v7776 = vld [vmem:[#allocation8 + $0x1b0] sm:$0xff]
    %v7777 = vld [vmem:[#allocation8 + $0x1b8] sm:$0xff]
    %v7778 = vld [vmem:[#allocation8 + $0x1c0] sm:$0xff]
    %v7779 = vld [vmem:[#allocation8 + $0x1c8] sm:$0xff]
    %v7780 = vld [vmem:[#allocation8 + $0x1d0] sm:$0xff]
    %v7781 = vld [vmem:[#allocation8 + $0x1d8] sm:$0xff]
    %v7782 = vld [vmem:[#allocation8 + $0x1e0] sm:$0xff]
    %v7783 = vld [vmem:[#allocation8 + $0x1e8] sm:$0xff]
    %v7784 = vld [vmem:[#allocation8 + $0x1f0] sm:$0xff]
    %v7785 = vld [vmem:[#allocation8 + $0x1f8] sm:$0xff]
    %v7786 = vld [vmem:[#allocation8 + $0x200] sm:$0xff]
    %v7787 = vld [vmem:[#allocation8 + $0x208] sm:$0xff]
    %v7788 = vld [vmem:[#allocation8 + $0x210] sm:$0xff]
    %v7789 = vld [vmem:[#allocation8 + $0x218] sm:$0xff]
    %v7790 = vld [vmem:[#allocation8 + $0x220] sm:$0xff]
    %v7791 = vld [vmem:[#allocation8 + $0x228] sm:$0xff]
    %v7792 = vld [vmem:[#allocation8 + $0x230] sm:$0xff]
    %v7793 = vld [vmem:[#allocation8 + $0x238] sm:$0xff]
    %v7794 = vld [vmem:[#allocation8 + $0x240] sm:$0xff]
    %v7795 = vld [vmem:[#allocation8 + $0x248] sm:$0xff]
    %v7796 = vld [vmem:[#allocation8 + $0x250] sm:$0xff]
    %v7797 = vld [vmem:[#allocation8 + $0x258] sm:$0xff]
    %v7798 = vld [vmem:[#allocation8 + $0x260] sm:$0xff]
    %v7799 = vld [vmem:[#allocation8 + $0x268] sm:$0xff]
    %v7800 = vld [vmem:[#allocation8 + $0x270] sm:$0xff]
    %v7801 = vld [vmem:[#allocation8 + $0x278] sm:$0xff]
    %v7802 = vld [vmem:[#allocation8 + $0x280] sm:$0xff]
    %v7803 = vld [vmem:[#allocation8 + $0x288] sm:$0xff]
    %v7804 = vld [vmem:[#allocation8 + $0x290] sm:$0xff]
    %v7805 = vld [vmem:[#allocation8 + $0x298] sm:$0xff]
    %v7806 = vld [vmem:[#allocation8 + $0x2a0] sm:$0xff]
    %v7807 = vld [vmem:[#allocation8 + $0x2a8] sm:$0xff]
    %v7808 = vld [vmem:[#allocation8 + $0x2b0] sm:$0xff]
    %v7809 = vld [vmem:[#allocation8 + $0x2b8] sm:$0xff]
    %v7810 = vld [vmem:[#allocation8 + $0x2c0] sm:$0xff]
    %v7811 = vld [vmem:[#allocation8 + $0x2c8] sm:$0xff]
    %v7812 = vld [vmem:[#allocation8 + $0x2d0] sm:$0xff]
    %v7813 = vld [vmem:[#allocation8 + $0x2d8] sm:$0xff]
    %v7814 = vld [vmem:[#allocation8 + $0x2e0] sm:$0xff]
    %v7815 = vld [vmem:[#allocation8 + $0x2e8] sm:$0xff]
    %v7816 = vld [vmem:[#allocation8 + $0x2f0] sm:$0xff]
    %v7817 = vld [vmem:[#allocation8 + $0x2f8] sm:$0xff]
    %v7818 = vld [vmem:[#allocation8 + $0x300] sm:$0xff]
    %v7819 = vld [vmem:[#allocation8 + $0x308] sm:$0xff]
    %v7820 = vld [vmem:[#allocation8 + $0x310] sm:$0xff]
    %v7821 = vld [vmem:[#allocation8 + $0x318] sm:$0xff]
    %v7822 = vld [vmem:[#allocation8 + $0x320] sm:$0xff]
    %v7823 = vld [vmem:[#allocation8 + $0x328] sm:$0xff]
    %v7824 = vld [vmem:[#allocation8 + $0x330] sm:$0xff]
    %v7825 = vld [vmem:[#allocation8 + $0x338] sm:$0xff]
    %v7826 = vld [vmem:[#allocation8 + $0x340] sm:$0xff]
    %v7827 = vld [vmem:[#allocation8 + $0x348] sm:$0xff]
    %v7828 = vld [vmem:[#allocation8 + $0x350] sm:$0xff]
    %v7829 = vld [vmem:[#allocation8 + $0x358] sm:$0xff]
    %v7830 = vld [vmem:[#allocation8 + $0x360] sm:$0xff]
    %v7831 = vld [vmem:[#allocation8 + $0x368] sm:$0xff]
    %v7832 = vld [vmem:[#allocation8 + $0x370] sm:$0xff]
    %v7833 = vld [vmem:[#allocation8 + $0x378] sm:$0xff]
    %v7834 = vld [vmem:[#allocation8 + $0x380] sm:$0xff]
    %v7835 = vld [vmem:[#allocation8 + $0x388] sm:$0xff]
    %v7836 = vld [vmem:[#allocation8 + $0x390] sm:$0xff]
    %v7837 = vld [vmem:[#allocation8 + $0x398] sm:$0xff]
    %v7838 = vld [vmem:[#allocation8 + $0x3a0] sm:$0xff]
    %v7839 = vld [vmem:[#allocation8 + $0x3a8] sm:$0xff]
    %v7840 = vld [vmem:[#allocation8 + $0x3b0] sm:$0xff]
    %v7841 = vld [vmem:[#allocation8 + $0x3b8] sm:$0xff]
    %v7842 = vld [vmem:[#allocation8 + $0x3c0] sm:$0xff]
    %v7843 = vld [vmem:[#allocation8 + $0x3c8] sm:$0xff]
    %v7844 = vld [vmem:[#allocation8 + $0x3d0] sm:$0xff]
    %v7845 = vld [vmem:[#allocation8 + $0x3d8] sm:$0xff]
    %v7846 = vld [vmem:[#allocation8 + $0x3e0] sm:$0xff]
    %v7847 = vld [vmem:[#allocation8 + $0x3e8] sm:$0xff]
    %v7848 = vld [vmem:[#allocation8 + $0x3f0] sm:$0xff]
    %v7849 = vld [vmem:[#allocation8 + $0x3f8] sm:$0xff]
    %v7850 = vld [vmem:[#allocation8 + $0x400] sm:$0xff]
    %v7851 = vld [vmem:[#allocation8 + $0x408] sm:$0xff]
    %v7852 = vld [vmem:[#allocation8 + $0x410] sm:$0xff]
    %v7853 = vld [vmem:[#allocation8 + $0x418] sm:$0xff]
    %v7854 = vld [vmem:[#allocation8 + $0x420] sm:$0xff]
    %v7855 = vld [vmem:[#allocation8 + $0x428] sm:$0xff]
    %v7856 = vld [vmem:[#allocation8 + $0x430] sm:$0xff]
    %v7857 = vld [vmem:[#allocation8 + $0x438] sm:$0xff]
    %v7858 = vld [vmem:[#allocation8 + $0x440] sm:$0xff]
    %v7859 = vld [vmem:[#allocation8 + $0x448] sm:$0xff]
    %v7860 = vld [vmem:[#allocation8 + $0x450] sm:$0xff]
    %v7861 = vld [vmem:[#allocation8 + $0x458] sm:$0xff]
    %v7862 = vld [vmem:[#allocation8 + $0x460] sm:$0xff]
    %v7863 = vld [vmem:[#allocation8 + $0x468] sm:$0xff]
    %v7864 = vld [vmem:[#allocation8 + $0x470] sm:$0xff]
    %v7865 = vld [vmem:[#allocation8 + $0x478] sm:$0xff]
    %v7866 = vld [vmem:[#allocation8 + $0x480] sm:$0xff]
    %v7867 = vld [vmem:[#allocation8 + $0x488] sm:$0xff]
    %v7868 = vld [vmem:[#allocation8 + $0x490] sm:$0xff]
    %v7869 = vld [vmem:[#allocation8 + $0x498] sm:$0xff]
    %v7870 = vld [vmem:[#allocation8 + $0x4a0] sm:$0xff]
    %v7871 = vld [vmem:[#allocation8 + $0x4a8] sm:$0xff]
    %v7872 = vld [vmem:[#allocation8 + $0x4b0] sm:$0xff]
    %v7873 = vld [vmem:[#allocation8 + $0x4b8] sm:$0xff]
    %v7874 = vld [vmem:[#allocation8 + $0x4c0] sm:$0xff]
    %v7875 = vld [vmem:[#allocation8 + $0x4c8] sm:$0xff]
    %v7876 = vld [vmem:[#allocation8 + $0x4d0] sm:$0xff]
    %v7877 = vld [vmem:[#allocation8 + $0x4d8] sm:$0xff]
    %v7878 = vld [vmem:[#allocation8 + $0x4e0] sm:$0xff]
    %v7879 = vld [vmem:[#allocation8 + $0x4e8] sm:$0xff]
    %v7880 = vld [vmem:[#allocation8 + $0x4f0] sm:$0xff]
    %v7881 = vld [vmem:[#allocation8 + $0x4f8] sm:$0xff]
    %v7882 = vld [vmem:[#allocation8 + $0x500] sm:$0xff]
    %v7883 = vld [vmem:[#allocation8 + $0x508] sm:$0xff]
    %v7884 = vld [vmem:[#allocation8 + $0x510] sm:$0xff]
    %v7885 = vld [vmem:[#allocation8 + $0x518] sm:$0xff]
    %v7886 = vld [vmem:[#allocation8 + $0x520] sm:$0xff]
    %v7887 = vld [vmem:[#allocation8 + $0x528] sm:$0xff]
    %v7888 = vld [vmem:[#allocation8 + $0x530] sm:$0xff]
    %v7889 = vld [vmem:[#allocation8 + $0x538] sm:$0xff]
    %v7890 = vld [vmem:[#allocation8 + $0x540] sm:$0xff]
    %v7891 = vld [vmem:[#allocation8 + $0x548] sm:$0xff]
    %v7892 = vld [vmem:[#allocation8 + $0x550] sm:$0xff]
    %v7893 = vld [vmem:[#allocation8 + $0x558] sm:$0xff]
    %v7894 = vld [vmem:[#allocation8 + $0x560] sm:$0xff]
    %v7895 = vld [vmem:[#allocation8 + $0x568] sm:$0xff]
    %v7896 = vld [vmem:[#allocation8 + $0x570] sm:$0xff]
    %v7897 = vld [vmem:[#allocation8 + $0x578] sm:$0xff]
    %v7898 = vld [vmem:[#allocation8 + $0x580] sm:$0xff]
    %v7899 = vld [vmem:[#allocation8 + $0x588] sm:$0xff]
    %v7900 = vld [vmem:[#allocation8 + $0x590] sm:$0xff]
    %v7901 = vld [vmem:[#allocation8 + $0x598] sm:$0xff]
    %v7902 = vld [vmem:[#allocation8 + $0x5a0] sm:$0xff]
    %v7903 = vld [vmem:[#allocation8 + $0x5a8] sm:$0xff]
    %v7904 = vld [vmem:[#allocation8 + $0x5b0] sm:$0xff]
    %v7905 = vld [vmem:[#allocation8 + $0x5b8] sm:$0xff]
    %v7906 = vld [vmem:[#allocation8 + $0x5c0] sm:$0xff]
    %v7907 = vld [vmem:[#allocation8 + $0x5c8] sm:$0xff]
    %v7908 = vld [vmem:[#allocation8 + $0x5d0] sm:$0xff]
    %v7909 = vld [vmem:[#allocation8 + $0x5d8] sm:$0xff]
    %v7910 = vld [vmem:[#allocation8 + $0x5e0] sm:$0xff]
    %v7911 = vld [vmem:[#allocation8 + $0x5e8] sm:$0xff]
    %v7912 = vld [vmem:[#allocation8 + $0x5f0] sm:$0xff]
    %v7913 = vld [vmem:[#allocation8 + $0x5f8] sm:$0xff]
    %v7914 = vld [vmem:[#allocation8 + $0x600] sm:$0xff]
    %v7915 = vld [vmem:[#allocation8 + $0x608] sm:$0xff]
    %v7916 = vld [vmem:[#allocation8 + $0x610] sm:$0xff]
    %v7917 = vld [vmem:[#allocation8 + $0x618] sm:$0xff]
    %v7918 = vld [vmem:[#allocation8 + $0x620] sm:$0xff]
    %v7919 = vld [vmem:[#allocation8 + $0x628] sm:$0xff]
    %v7920 = vld [vmem:[#allocation8 + $0x630] sm:$0xff]
    %v7921 = vld [vmem:[#allocation8 + $0x638] sm:$0xff]
    %v7922 = vld [vmem:[#allocation8 + $0x640] sm:$0xff]
    %v7923 = vld [vmem:[#allocation8 + $0x648] sm:$0xff]
    %v7924 = vld [vmem:[#allocation8 + $0x650] sm:$0xff]
    %v7925 = vld [vmem:[#allocation8 + $0x658] sm:$0xff]
    %v7926 = vld [vmem:[#allocation8 + $0x660] sm:$0xff]
    %v7927 = vld [vmem:[#allocation8 + $0x668] sm:$0xff]
    %v7928 = vld [vmem:[#allocation8 + $0x670] sm:$0xff]
    %v7929 = vld [vmem:[#allocation8 + $0x678] sm:$0xff]
    %v7930 = vld [vmem:[#allocation8 + $0x680] sm:$0xff]
    %v7931 = vld [vmem:[#allocation8 + $0x688] sm:$0xff]
    %v7932 = vld [vmem:[#allocation8 + $0x690] sm:$0xff]
    %v7933 = vld [vmem:[#allocation8 + $0x698] sm:$0xff]
    %v7934 = vld [vmem:[#allocation8 + $0x6a0] sm:$0xff]
    %v7935 = vld [vmem:[#allocation8 + $0x6a8] sm:$0xff]
    %v7936 = vld [vmem:[#allocation8 + $0x6b0] sm:$0xff]
    %v7937 = vld [vmem:[#allocation8 + $0x6b8] sm:$0xff]
    %v7938 = vld [vmem:[#allocation8 + $0x6c0] sm:$0xff]
    %v7939 = vld [vmem:[#allocation8 + $0x6c8] sm:$0xff]
    %v7940 = vld [vmem:[#allocation8 + $0x6d0] sm:$0xff]
    %v7941 = vld [vmem:[#allocation8 + $0x6d8] sm:$0xff]
    %v7942 = vld [vmem:[#allocation8 + $0x6e0] sm:$0xff]
    %v7943 = vld [vmem:[#allocation8 + $0x6e8] sm:$0xff]
    %v7944 = vld [vmem:[#allocation8 + $0x6f0] sm:$0xff]
    %v7945 = vld [vmem:[#allocation8 + $0x6f8] sm:$0xff]
    %v7946 = vld [vmem:[#allocation8 + $0x700] sm:$0xff]
    %v7947 = vld [vmem:[#allocation8 + $0x708] sm:$0xff]
    %v7948 = vld [vmem:[#allocation8 + $0x710] sm:$0xff]
    %v7949 = vld [vmem:[#allocation8 + $0x718] sm:$0xff]
    %v7950 = vld [vmem:[#allocation8 + $0x720] sm:$0xff]
    %v7951 = vld [vmem:[#allocation8 + $0x728] sm:$0xff]
    %v7952 = vld [vmem:[#allocation8 + $0x730] sm:$0xff]
    %v7953 = vld [vmem:[#allocation8 + $0x738] sm:$0xff]
    %v7954 = vld [vmem:[#allocation8 + $0x740] sm:$0xff]
    %v7955 = vld [vmem:[#allocation8 + $0x748] sm:$0xff]
    %v7956 = vld [vmem:[#allocation8 + $0x750] sm:$0xff]
    %v7957 = vld [vmem:[#allocation8 + $0x758] sm:$0xff]
    %v7958 = vld [vmem:[#allocation8 + $0x760] sm:$0xff]
    %v7959 = vld [vmem:[#allocation8 + $0x768] sm:$0xff]
    %v7960 = vld [vmem:[#allocation8 + $0x770] sm:$0xff]
    %v7961 = vld [vmem:[#allocation8 + $0x778] sm:$0xff]
    %v7962 = vld [vmem:[#allocation8 + $0x780] sm:$0xff]
    %v7963 = vld [vmem:[#allocation8 + $0x788] sm:$0xff]
    %v7964 = vld [vmem:[#allocation8 + $0x790] sm:$0xff]
    %v7965 = vld [vmem:[#allocation8 + $0x798] sm:$0xff]
    %v7966 = vld [vmem:[#allocation8 + $0x7a0] sm:$0xff]
    %v7967 = vld [vmem:[#allocation8 + $0x7a8] sm:$0xff]
    %v7968 = vld [vmem:[#allocation8 + $0x7b0] sm:$0xff]
    %v7969 = vld [vmem:[#allocation8 + $0x7b8] sm:$0xff]
    %v7970 = vld [vmem:[#allocation8 + $0x7c0] sm:$0xff]
    %v7971 = vld [vmem:[#allocation8 + $0x7c8] sm:$0xff]
    %v7972 = vld [vmem:[#allocation8 + $0x7d0] sm:$0xff]
    %v7973 = vld [vmem:[#allocation8 + $0x7d8] sm:$0xff]
    %v7974 = vld [vmem:[#allocation8 + $0x7e0] sm:$0xff]
    %v7975 = vld [vmem:[#allocation8 + $0x7e8] sm:$0xff]
    %v7976 = vld [vmem:[#allocation8 + $0x7f0] sm:$0xff]
    %v7977 = vld [vmem:[#allocation8 + $0x7f8] sm:$0xff]
    %v7978 = vld [vmem:[#allocation8 + $0x800] sm:$0xff]
    %v7979 = vld [vmem:[#allocation8 + $0x808] sm:$0xff]
    %v7980 = vld [vmem:[#allocation8 + $0x810] sm:$0xff]
    %v7981 = vld [vmem:[#allocation8 + $0x818] sm:$0xff]
    %v7982 = vld [vmem:[#allocation8 + $0x820] sm:$0xff]
    %v7983 = vld [vmem:[#allocation8 + $0x828] sm:$0xff]
    %v7984 = vld [vmem:[#allocation8 + $0x830] sm:$0xff]
    %v7985 = vld [vmem:[#allocation8 + $0x838] sm:$0xff]
    %v7986 = vld [vmem:[#allocation8 + $0x840] sm:$0xff]
    %v7987 = vld [vmem:[#allocation8 + $0x848] sm:$0xff]
    %v7988 = vld [vmem:[#allocation8 + $0x850] sm:$0xff]
    %v7989 = vld [vmem:[#allocation8 + $0x858] sm:$0xff]
    %v7990 = vld [vmem:[#allocation8 + $0x860] sm:$0xff]
    %v7991 = vld [vmem:[#allocation8 + $0x868] sm:$0xff]
    %v7992 = vld [vmem:[#allocation8 + $0x870] sm:$0xff]
    %v7993 = vld [vmem:[#allocation8 + $0x878] sm:$0xff]
    %v7994 = vld [vmem:[#allocation8 + $0x880] sm:$0xff]
    %v7995 = vld [vmem:[#allocation8 + $0x888] sm:$0xff]
    %v7996 = vld [vmem:[#allocation8 + $0x890] sm:$0xff]
    %v7997 = vld [vmem:[#allocation8 + $0x898] sm:$0xff]
    %v7998 = vld [vmem:[#allocation8 + $0x8a0] sm:$0xff]
    %v7999 = vld [vmem:[#allocation8 + $0x8a8] sm:$0xff]
    %v8000 = vld [vmem:[#allocation8 + $0x8b0] sm:$0xff]
    %v8001 = vld [vmem:[#allocation8 + $0x8b8] sm:$0xff]
    %v8002 = vld [vmem:[#allocation8 + $0x8c0] sm:$0xff]
    %v8003 = vld [vmem:[#allocation8 + $0x8c8] sm:$0xff]
    %v8004 = vld [vmem:[#allocation8 + $0x8d0] sm:$0xff]
    %v8005 = vld [vmem:[#allocation8 + $0x8d8] sm:$0xff]
    %v8006 = vld [vmem:[#allocation8 + $0x8e0] sm:$0xff]
    %v8007 = vld [vmem:[#allocation8 + $0x8e8] sm:$0xff]
    %v8008 = vld [vmem:[#allocation8 + $0x8f0] sm:$0xff]
    %v8009 = vld [vmem:[#allocation8 + $0x8f8] sm:$0xff]
    %v8010 = vpack.c.b16 %v6156, %v6154
    %v8011 = vpack.c.b16 %v6157, %v6155
    %v8012 = vpack.c.b16 %v7542, %v7530
    %v8013 = vpack.c.b16 %v7543, %v7531
    %v8014 = vpack.c.b16 %v7544, %v7532
    %v8015 = vpack.c.b16 %v7545, %v7533
    %v8016 = vpack.c.b16 %v6620, %v6618
    %v8017 = vpack.c.b16 %v6621, %v6619
    %v8018 = vpack.c.b16 %v7546, %v7534
    %v8019 = vpack.c.b16 %v7547, %v7535
    %v8020 = vpack.c.b16 %v7548, %v7536
    %v8021 = vpack.c.b16 %v7549, %v7537
    %v8022 = vpack.c.b16 %v7084, %v7082
    %v8023 = vpack.c.b16 %v7085, %v7083
    %v8024 = vpack.c.b16 %v7550, %v7538
    %v8025 = vpack.c.b16 %v7551, %v7539
    %v8026 = vpack.c.b16 %v7552, %v7540
    %v8027 = vpack.c.b16 %v7553, %v7541
    %v8028 = vpack.c.b16 %v6160, %v6158
    %v8029 = vpack.c.b16 %v6161, %v6159
    %v8030 = vpack.c.b16 %v7566, %v7554
    %v8031 = vpack.c.b16 %v7567, %v7555
    %v8032 = vpack.c.b16 %v7568, %v7556
    %v8033 = vpack.c.b16 %v7569, %v7557
    %v8034 = vpack.c.b16 %v6624, %v6622
    %v8035 = vpack.c.b16 %v6625, %v6623
    %v8036 = vpack.c.b16 %v7570, %v7558
    %v8037 = vpack.c.b16 %v7571, %v7559
    %v8038 = vpack.c.b16 %v7572, %v7560
    %v8039 = vpack.c.b16 %v7573, %v7561
    %v8040 = vpack.c.b16 %v7088, %v7086
    %v8041 = vpack.c.b16 %v7089, %v7087
    %v8042 = vpack.c.b16 %v7574, %v7562
    %v8043 = vpack.c.b16 %v7575, %v7563
    %v8044 = vpack.c.b16 %v7576, %v7564
    %v8045 = vpack.c.b16 %v7577, %v7565
    %v8046 = vpack.c.b16 %v6164, %v6162
    %v8047 = vpack.c.b16 %v6165, %v6163
    %v8048 = vpack.c.b16 %v7590, %v7578
    %v8049 = vpack.c.b16 %v7591, %v7579
    %v8050 = vpack.c.b16 %v7592, %v7580
    %v8051 = vpack.c.b16 %v7593, %v7581
    %v8052 = vpack.c.b16 %v6628, %v6626
    %v8053 = vpack.c.b16 %v6629, %v6627
    %v8054 = vpack.c.b16 %v7594, %v7582
    %v8055 = vpack.c.b16 %v7595, %v7583
    %v8056 = vpack.c.b16 %v7596, %v7584
    %v8057 = vpack.c.b16 %v7597, %v7585
    %v8058 = vpack.c.b16 %v7092, %v7090
    %v8059 = vpack.c.b16 %v7093, %v7091
    %v8060 = vpack.c.b16 %v7598, %v7586
    %v8061 = vpack.c.b16 %v7599, %v7587
    %v8062 = vpack.c.b16 %v7600, %v7588
    %v8063 = vpack.c.b16 %v7601, %v7589
    %v8064 = vpack.c.b16 %v6168, %v6166
    %v8065 = vpack.c.b16 %v6169, %v6167
    %v8066 = vpack.c.b16 %v7614, %v7602
    %v8067 = vpack.c.b16 %v7615, %v7603
    %v8068 = vpack.c.b16 %v7616, %v7604
    %v8069 = vpack.c.b16 %v7617, %v7605
    %v8070 = vpack.c.b16 %v6632, %v6630
    %v8071 = vpack.c.b16 %v6633, %v6631
    %v8072 = vpack.c.b16 %v7618, %v7606
    %v8073 = vpack.c.b16 %v7619, %v7607
    %v8074 = vpack.c.b16 %v7620, %v7608
    %v8075 = vpack.c.b16 %v7621, %v7609
    %v8076 = vpack.c.b16 %v7096, %v7094
    %v8077 = vpack.c.b16 %v7097, %v7095
    %v8078 = vpack.c.b16 %v7622, %v7610
    %v8079 = vpack.c.b16 %v7623, %v7611
    %v8080 = vpack.c.b16 %v7624, %v7612
    %v8081 = vpack.c.b16 %v7625, %v7613
    %v8082 = vpack.c.b16 %v6172, %v6170
    %v8083 = vpack.c.b16 %v6173, %v6171
    %v8084 = vpack.c.b16 %v7638, %v7626
    %v8085 = vpack.c.b16 %v7639, %v7627
    %v8086 = vpack.c.b16 %v7640, %v7628
    %v8087 = vpack.c.b16 %v7641, %v7629
    %v8088 = vpack.c.b16 %v6636, %v6634
    %v8089 = vpack.c.b16 %v6637, %v6635
    %v8090 = vpack.c.b16 %v7642, %v7630
    %v8091 = vpack.c.b16 %v7643, %v7631
    %v8092 = vpack.c.b16 %v7644, %v7632
    %v8093 = vpack.c.b16 %v7645, %v7633
    %v8094 = vpack.c.b16 %v7100, %v7098
    %v8095 = vpack.c.b16 %v7101, %v7099
    %v8096 = vpack.c.b16 %v7646, %v7634
    %v8097 = vpack.c.b16 %v7647, %v7635
    %v8098 = vpack.c.b16 %v7648, %v7636
    %v8099 = vpack.c.b16 %v7649, %v7637
    %v8100 = vpack.c.b16 %v6176, %v6174
    %v8101 = vpack.c.b16 %v6177, %v6175
    %v8102 = vpack.c.b16 %v7662, %v7650
    %v8103 = vpack.c.b16 %v7663, %v7651
    %v8104 = vpack.c.b16 %v7664, %v7652
    %v8105 = vpack.c.b16 %v7665, %v7653
    %v8106 = vpack.c.b16 %v6640, %v6638
    %v8107 = vpack.c.b16 %v6641, %v6639
    %v8108 = vpack.c.b16 %v7666, %v7654
    %v8109 = vpack.c.b16 %v7667, %v7655
    %v8110 = vpack.c.b16 %v7668, %v7656
    %v8111 = vpack.c.b16 %v7669, %v7657
    %v8112 = vpack.c.b16 %v7104, %v7102
    %v8113 = vpack.c.b16 %v7105, %v7103
    %v8114 = vpack.c.b16 %v7670, %v7658
    %v8115 = vpack.c.b16 %v7671, %v7659
    %v8116 = vpack.c.b16 %v7672, %v7660
    %v8117 = vpack.c.b16 %v7673, %v7661
    %v8118 = vpack.c.b16 %v6180, %v6178
    %v8119 = vpack.c.b16 %v6181, %v6179
    %v8120 = vpack.c.b16 %v7686, %v7674
    %v8121 = vpack.c.b16 %v7687, %v7675
    %v8122 = vpack.c.b16 %v7688, %v7676
    %v8123 = vpack.c.b16 %v7689, %v7677
    %v8124 = vpack.c.b16 %v6644, %v6642
    %v8125 = vpack.c.b16 %v6645, %v6643
    %v8126 = vpack.c.b16 %v7690, %v7678
    %v8127 = vpack.c.b16 %v7691, %v7679
    %v8128 = vpack.c.b16 %v7692, %v7680
    %v8129 = vpack.c.b16 %v7693, %v7681
    %v8130 = vpack.c.b16 %v7108, %v7106
    %v8131 = vpack.c.b16 %v7109, %v7107
    %v8132 = vpack.c.b16 %v7694, %v7682
    %v8133 = vpack.c.b16 %v7695, %v7683
    %v8134 = vpack.c.b16 %v7696, %v7684
    %v8135 = vpack.c.b16 %v7697, %v7685
    %v8136 = vpack.c.b16 %v6184, %v6182
    %v8137 = vpack.c.b16 %v6185, %v6183
    %v8138 = vpack.c.b16 %v7710, %v7698
    %v8139 = vpack.c.b16 %v7711, %v7699
    %v8140 = vpack.c.b16 %v7712, %v7700
    %v8141 = vpack.c.b16 %v7713, %v7701
    %v8142 = vpack.c.b16 %v6648, %v6646
    %v8143 = vpack.c.b16 %v6649, %v6647
    %v8144 = vpack.c.b16 %v7714, %v7702
    %v8145 = vpack.c.b16 %v7715, %v7703
    %v8146 = vpack.c.b16 %v7716, %v7704
    %v8147 = vpack.c.b16 %v7717, %v7705
    %v8148 = vpack.c.b16 %v7112, %v7110
    %v8149 = vpack.c.b16 %v7113, %v7111
    %v8150 = vpack.c.b16 %v7718, %v7706
    %v8151 = vpack.c.b16 %v7719, %v7707
    %v8152 = vpack.c.b16 %v7720, %v7708
    %v8153 = vpack.c.b16 %v7721, %v7709
    %v8586 = vunpack.c.l.b16 %v7722
    %v8587 = vunpack.c.h.b16 %v7722
    %v8588 = vunpack.c.l.b16 %v7723
    %v8589 = vunpack.c.h.b16 %v7723
    %v8590 = vunpack.c.l.b16 %v7724
    %v8591 = vunpack.c.h.b16 %v7724
    %v8592 = vunpack.c.l.b16 %v7725
    %v8593 = vunpack.c.h.b16 %v7725
    %v8594 = vunpack.c.l.b16 %v7726
    %v8595 = vunpack.c.h.b16 %v7726
    %v8596 = vunpack.c.l.b16 %v7727
    %v8597 = vunpack.c.h.b16 %v7727
    %v8598 = vunpack.c.l.b16 %v7728
    %v8599 = vunpack.c.h.b16 %v7728
    %v8600 = vunpack.c.l.b16 %v7729
    %v8601 = vunpack.c.h.b16 %v7729
    %v8602 = vunpack.c.l.b16 %v7730
    %v8603 = vunpack.c.h.b16 %v7730
    %v8604 = vunpack.c.l.b16 %v7731
    %v8605 = vunpack.c.h.b16 %v7731
    %v8606 = vunpack.c.l.b16 %v7732
    %v8607 = vunpack.c.h.b16 %v7732
    %v8608 = vunpack.c.l.b16 %v7733
    %v8609 = vunpack.c.h.b16 %v7733
    %v8610 = vunpack.c.l.b16 %v7734
    %v8611 = vunpack.c.h.b16 %v7734
    %v8612 = vunpack.c.l.b16 %v7735
    %v8613 = vunpack.c.h.b16 %v7735
    %v8614 = vunpack.c.l.b16 %v7736
    %v8615 = vunpack.c.h.b16 %v7736
    %v8616 = vunpack.c.l.b16 %v7737
    %v8617 = vunpack.c.h.b16 %v7737
    %v8618 = vunpack.c.l.b16 %v7738
    %v8619 = vunpack.c.h.b16 %v7738
    %v8620 = vunpack.c.l.b16 %v7739
    %v8621 = vunpack.c.h.b16 %v7739
    %v8622 = vunpack.c.l.b16 %v7740
    %v8623 = vunpack.c.h.b16 %v7740
    %v8624 = vunpack.c.l.b16 %v7741
    %v8625 = vunpack.c.h.b16 %v7741
    %v8626 = vunpack.c.l.b16 %v7742
    %v8627 = vunpack.c.h.b16 %v7742
    %v8628 = vunpack.c.l.b16 %v7743
    %v8629 = vunpack.c.h.b16 %v7743
    %v8630 = vunpack.c.l.b16 %v7744
    %v8631 = vunpack.c.h.b16 %v7744
    %v8632 = vunpack.c.l.b16 %v7745
    %v8633 = vunpack.c.h.b16 %v7745
    %v8634 = vunpack.c.l.b16 %v7746
    %v8635 = vunpack.c.h.b16 %v7746
    %v8636 = vunpack.c.l.b16 %v7747
    %v8637 = vunpack.c.h.b16 %v7747
    %v8638 = vunpack.c.l.b16 %v7748
    %v8639 = vunpack.c.h.b16 %v7748
    %v8640 = vunpack.c.l.b16 %v7749
    %v8641 = vunpack.c.h.b16 %v7749
    %v8642 = vunpack.c.l.b16 %v7750
    %v8643 = vunpack.c.h.b16 %v7750
    %v8644 = vunpack.c.l.b16 %v7751
    %v8645 = vunpack.c.h.b16 %v7751
    %v8646 = vunpack.c.l.b16 %v7752
    %v8647 = vunpack.c.h.b16 %v7752
    %v8648 = vunpack.c.l.b16 %v7753
    %v8649 = vunpack.c.h.b16 %v7753
    %v8650 = vunpack.c.l.b16 %v7754
    %v8651 = vunpack.c.h.b16 %v7754
    %v8652 = vunpack.c.l.b16 %v7755
    %v8653 = vunpack.c.h.b16 %v7755
    %v8654 = vunpack.c.l.b16 %v7756
    %v8655 = vunpack.c.h.b16 %v7756
    %v8656 = vunpack.c.l.b16 %v7757
    %v8657 = vunpack.c.h.b16 %v7757
    %v8658 = vunpack.c.l.b16 %v7758
    %v8659 = vunpack.c.h.b16 %v7758
    %v8660 = vunpack.c.l.b16 %v7759
    %v8661 = vunpack.c.h.b16 %v7759
    %v8662 = vunpack.c.l.b16 %v7760
    %v8663 = vunpack.c.h.b16 %v7760
    %v8664 = vunpack.c.l.b16 %v7761
    %v8665 = vunpack.c.h.b16 %v7761
    %v8666 = vunpack.c.l.b16 %v7762
    %v8667 = vunpack.c.h.b16 %v7762
    %v8668 = vunpack.c.l.b16 %v7763
    %v8669 = vunpack.c.h.b16 %v7763
    %v8670 = vunpack.c.l.b16 %v7764
    %v8671 = vunpack.c.h.b16 %v7764
    %v8672 = vunpack.c.l.b16 %v7765
    %v8673 = vunpack.c.h.b16 %v7765
    %v8674 = vunpack.c.l.b16 %v7766
    %v8675 = vunpack.c.h.b16 %v7766
    %v8676 = vunpack.c.l.b16 %v7767
    %v8677 = vunpack.c.h.b16 %v7767
    %v8678 = vunpack.c.l.b16 %v7768
    %v8679 = vunpack.c.h.b16 %v7768
    %v8680 = vunpack.c.l.b16 %v7769
    %v8681 = vunpack.c.h.b16 %v7769
    %v8682 = vunpack.c.l.b16 %v7770
    %v8683 = vunpack.c.h.b16 %v7770
    %v8684 = vunpack.c.l.b16 %v7771
    %v8685 = vunpack.c.h.b16 %v7771
    %v8686 = vunpack.c.l.b16 %v7772
    %v8687 = vunpack.c.h.b16 %v7772
    %v8688 = vunpack.c.l.b16 %v7773
    %v8689 = vunpack.c.h.b16 %v7773
    %v8690 = vunpack.c.l.b16 %v7774
    %v8691 = vunpack.c.h.b16 %v7774
    %v8692 = vunpack.c.l.b16 %v7775
    %v8693 = vunpack.c.h.b16 %v7775
    %v8694 = vunpack.c.l.b16 %v7776
    %v8695 = vunpack.c.h.b16 %v7776
    %v8696 = vunpack.c.l.b16 %v7777
    %v8697 = vunpack.c.h.b16 %v7777
    %v8698 = vunpack.c.l.b16 %v7778
    %v8699 = vunpack.c.h.b16 %v7778
    %v8700 = vunpack.c.l.b16 %v7779
    %v8701 = vunpack.c.h.b16 %v7779
    %v8702 = vunpack.c.l.b16 %v7780
    %v8703 = vunpack.c.h.b16 %v7780
    %v8704 = vunpack.c.l.b16 %v7781
    %v8705 = vunpack.c.h.b16 %v7781
    %v8706 = vunpack.c.l.b16 %v7782
    %v8707 = vunpack.c.h.b16 %v7782
    %v8708 = vunpack.c.l.b16 %v7783
    %v8709 = vunpack.c.h.b16 %v7783
    %v8710 = vunpack.c.l.b16 %v7784
    %v8711 = vunpack.c.h.b16 %v7784
    %v8712 = vunpack.c.l.b16 %v7785
    %v8713 = vunpack.c.h.b16 %v7785
    %v8714 = vunpack.c.l.b16 %v7786
    %v8715 = vunpack.c.h.b16 %v7786
    %v8716 = vunpack.c.l.b16 %v7787
    %v8717 = vunpack.c.h.b16 %v7787
    %v8718 = vunpack.c.l.b16 %v7788
    %v8719 = vunpack.c.h.b16 %v7788
    %v8720 = vunpack.c.l.b16 %v7789
    %v8721 = vunpack.c.h.b16 %v7789
    %v8722 = vunpack.c.l.b16 %v7790
    %v8723 = vunpack.c.h.b16 %v7790
    %v8724 = vunpack.c.l.b16 %v7791
    %v8725 = vunpack.c.h.b16 %v7791
    %v8726 = vunpack.c.l.b16 %v7792
    %v8727 = vunpack.c.h.b16 %v7792
    %v8728 = vunpack.c.l.b16 %v7793
    %v8729 = vunpack.c.h.b16 %v7793
    %v8730 = vunpack.c.l.b16 %v7794
    %v8731 = vunpack.c.h.b16 %v7794
    %v8732 = vunpack.c.l.b16 %v7795
    %v8733 = vunpack.c.h.b16 %v7795
    %v8734 = vunpack.c.l.b16 %v7796
    %v8735 = vunpack.c.h.b16 %v7796
    %v8736 = vunpack.c.l.b16 %v7797
    %v8737 = vunpack.c.h.b16 %v7797
    %v8738 = vunpack.c.l.b16 %v7798
    %v8739 = vunpack.c.h.b16 %v7798
    %v8740 = vunpack.c.l.b16 %v7799
    %v8741 = vunpack.c.h.b16 %v7799
    %v8742 = vunpack.c.l.b16 %v7800
    %v8743 = vunpack.c.h.b16 %v7800
    %v8744 = vunpack.c.l.b16 %v7801
    %v8745 = vunpack.c.h.b16 %v7801
    %v8746 = vunpack.c.l.b16 %v7802
    %v8747 = vunpack.c.h.b16 %v7802
    %v8748 = vunpack.c.l.b16 %v7803
    %v8749 = vunpack.c.h.b16 %v7803
    %v8750 = vunpack.c.l.b16 %v7804
    %v8751 = vunpack.c.h.b16 %v7804
    %v8752 = vunpack.c.l.b16 %v7805
    %v8753 = vunpack.c.h.b16 %v7805
    %v8754 = vunpack.c.l.b16 %v7806
    %v8755 = vunpack.c.h.b16 %v7806
    %v8756 = vunpack.c.l.b16 %v7807
    %v8757 = vunpack.c.h.b16 %v7807
    %v8758 = vunpack.c.l.b16 %v7808
    %v8759 = vunpack.c.h.b16 %v7808
    %v8760 = vunpack.c.l.b16 %v7809
    %v8761 = vunpack.c.h.b16 %v7809
    %v8762 = vunpack.c.l.b16 %v7810
    %v8763 = vunpack.c.h.b16 %v7810
    %v8764 = vunpack.c.l.b16 %v7811
    %v8765 = vunpack.c.h.b16 %v7811
    %v8766 = vunpack.c.l.b16 %v7812
    %v8767 = vunpack.c.h.b16 %v7812
    %v8768 = vunpack.c.l.b16 %v7813
    %v8769 = vunpack.c.h.b16 %v7813
    %v8770 = vunpack.c.l.b16 %v7814
    %v8771 = vunpack.c.h.b16 %v7814
    %v8772 = vunpack.c.l.b16 %v7815
    %v8773 = vunpack.c.h.b16 %v7815
    %v8774 = vunpack.c.l.b16 %v7816
    %v8775 = vunpack.c.h.b16 %v7816
    %v8776 = vunpack.c.l.b16 %v7817
    %v8777 = vunpack.c.h.b16 %v7817
    %v8778 = vunpack.c.l.b16 %v7818
    %v8779 = vunpack.c.h.b16 %v7818
    %v8780 = vunpack.c.l.b16 %v7819
    %v8781 = vunpack.c.h.b16 %v7819
    %v8782 = vunpack.c.l.b16 %v7820
    %v8783 = vunpack.c.h.b16 %v7820
    %v8784 = vunpack.c.l.b16 %v7821
    %v8785 = vunpack.c.h.b16 %v7821
    %v8786 = vunpack.c.l.b16 %v7822
    %v8787 = vunpack.c.h.b16 %v7822
    %v8788 = vunpack.c.l.b16 %v7823
    %v8789 = vunpack.c.h.b16 %v7823
    %v8790 = vunpack.c.l.b16 %v7824
    %v8791 = vunpack.c.h.b16 %v7824
    %v8792 = vunpack.c.l.b16 %v7825
    %v8793 = vunpack.c.h.b16 %v7825
    %v8794 = vunpack.c.l.b16 %v7826
    %v8795 = vunpack.c.h.b16 %v7826
    %v8796 = vunpack.c.l.b16 %v7827
    %v8797 = vunpack.c.h.b16 %v7827
    %v8798 = vunpack.c.l.b16 %v7828
    %v8799 = vunpack.c.h.b16 %v7828
    %v8800 = vunpack.c.l.b16 %v7829
    %v8801 = vunpack.c.h.b16 %v7829
    %v8802 = vunpack.c.l.b16 %v7830
    %v8803 = vunpack.c.h.b16 %v7830
    %v8804 = vunpack.c.l.b16 %v7831
    %v8805 = vunpack.c.h.b16 %v7831
    %v8806 = vunpack.c.l.b16 %v7832
    %v8807 = vunpack.c.h.b16 %v7832
    %v8808 = vunpack.c.l.b16 %v7833
    %v8809 = vunpack.c.h.b16 %v7833
    %v8810 = vunpack.c.l.b16 %v7834
    %v8811 = vunpack.c.h.b16 %v7834
    %v8812 = vunpack.c.l.b16 %v7835
    %v8813 = vunpack.c.h.b16 %v7835
    %v8814 = vunpack.c.l.b16 %v7836
    %v8815 = vunpack.c.h.b16 %v7836
    %v8816 = vunpack.c.l.b16 %v7837
    %v8817 = vunpack.c.h.b16 %v7837
    %v8818 = vunpack.c.l.b16 %v7838
    %v8819 = vunpack.c.h.b16 %v7838
    %v8820 = vunpack.c.l.b16 %v7839
    %v8821 = vunpack.c.h.b16 %v7839
    %v8822 = vunpack.c.l.b16 %v7840
    %v8823 = vunpack.c.h.b16 %v7840
    %v8824 = vunpack.c.l.b16 %v7841
    %v8825 = vunpack.c.h.b16 %v7841
    %v8826 = vunpack.c.l.b16 %v7842
    %v8827 = vunpack.c.h.b16 %v7842
    %v8828 = vunpack.c.l.b16 %v7843
    %v8829 = vunpack.c.h.b16 %v7843
    %v8830 = vunpack.c.l.b16 %v7844
    %v8831 = vunpack.c.h.b16 %v7844
    %v8832 = vunpack.c.l.b16 %v7845
    %v8833 = vunpack.c.h.b16 %v7845
    %v8834 = vunpack.c.l.b16 %v7846
    %v8835 = vunpack.c.h.b16 %v7846
    %v8836 = vunpack.c.l.b16 %v7847
    %v8837 = vunpack.c.h.b16 %v7847
    %v8838 = vunpack.c.l.b16 %v7848
    %v8839 = vunpack.c.h.b16 %v7848
    %v8840 = vunpack.c.l.b16 %v7849
    %v8841 = vunpack.c.h.b16 %v7849
    %v8842 = vunpack.c.l.b16 %v7850
    %v8843 = vunpack.c.h.b16 %v7850
    %v8844 = vunpack.c.l.b16 %v7851
    %v8845 = vunpack.c.h.b16 %v7851
    %v8846 = vunpack.c.l.b16 %v7852
    %v8847 = vunpack.c.h.b16 %v7852
    %v8848 = vunpack.c.l.b16 %v7853
    %v8849 = vunpack.c.h.b16 %v7853
    %v8850 = vunpack.c.l.b16 %v7854
    %v8851 = vunpack.c.h.b16 %v7854
    %v8852 = vunpack.c.l.b16 %v7855
    %v8853 = vunpack.c.h.b16 %v7855
    %v8854 = vunpack.c.l.b16 %v7856
    %v8855 = vunpack.c.h.b16 %v7856
    %v8856 = vunpack.c.l.b16 %v7857
    %v8857 = vunpack.c.h.b16 %v7857
    %v8858 = vunpack.c.l.b16 %v7858
    %v8859 = vunpack.c.h.b16 %v7858
    %v8860 = vunpack.c.l.b16 %v7859
    %v8861 = vunpack.c.h.b16 %v7859
    %v8862 = vunpack.c.l.b16 %v7860
    %v8863 = vunpack.c.h.b16 %v7860
    %v8864 = vunpack.c.l.b16 %v7861
    %v8865 = vunpack.c.h.b16 %v7861
    %v8866 = vunpack.c.l.b16 %v7862
    %v8867 = vunpack.c.h.b16 %v7862
    %v8868 = vunpack.c.l.b16 %v7863
    %v8869 = vunpack.c.h.b16 %v7863
    %v8870 = vunpack.c.l.b16 %v7864
    %v8871 = vunpack.c.h.b16 %v7864
    %v8872 = vunpack.c.l.b16 %v7865
    %v8873 = vunpack.c.h.b16 %v7865
    %v8874 = vunpack.c.l.b16 %v7866
    %v8875 = vunpack.c.h.b16 %v7866
    %v8876 = vunpack.c.l.b16 %v7867
    %v8877 = vunpack.c.h.b16 %v7867
    %v8878 = vunpack.c.l.b16 %v7868
    %v8879 = vunpack.c.h.b16 %v7868
    %v8880 = vunpack.c.l.b16 %v7869
    %v8881 = vunpack.c.h.b16 %v7869
    %v8882 = vunpack.c.l.b16 %v7870
    %v8883 = vunpack.c.h.b16 %v7870
    %v8884 = vunpack.c.l.b16 %v7871
    %v8885 = vunpack.c.h.b16 %v7871
    %v8886 = vunpack.c.l.b16 %v7872
    %v8887 = vunpack.c.h.b16 %v7872
    %v8888 = vunpack.c.l.b16 %v7873
    %v8889 = vunpack.c.h.b16 %v7873
    %v8890 = vunpack.c.l.b16 %v7874
    %v8891 = vunpack.c.h.b16 %v7874
    %v8892 = vunpack.c.l.b16 %v7875
    %v8893 = vunpack.c.h.b16 %v7875
    %v8894 = vunpack.c.l.b16 %v7876
    %v8895 = vunpack.c.h.b16 %v7876
    %v8896 = vunpack.c.l.b16 %v7877
    %v8897 = vunpack.c.h.b16 %v7877
    %v8898 = vunpack.c.l.b16 %v7878
    %v8899 = vunpack.c.h.b16 %v7878
    %v8900 = vunpack.c.l.b16 %v7879
    %v8901 = vunpack.c.h.b16 %v7879
    %v8902 = vunpack.c.l.b16 %v7880
    %v8903 = vunpack.c.h.b16 %v7880
    %v8904 = vunpack.c.l.b16 %v7881
    %v8905 = vunpack.c.h.b16 %v7881
    %v8906 = vunpack.c.l.b16 %v7882
    %v8907 = vunpack.c.h.b16 %v7882
    %v8908 = vunpack.c.l.b16 %v7883
    %v8909 = vunpack.c.h.b16 %v7883
    %v8910 = vunpack.c.l.b16 %v7884
    %v8911 = vunpack.c.h.b16 %v7884
    %v8912 = vunpack.c.l.b16 %v7885
    %v8913 = vunpack.c.h.b16 %v7885
    %v8914 = vunpack.c.l.b16 %v7886
    %v8915 = vunpack.c.h.b16 %v7886
    %v8916 = vunpack.c.l.b16 %v7887
    %v8917 = vunpack.c.h.b16 %v7887
    %v8918 = vunpack.c.l.b16 %v7888
    %v8919 = vunpack.c.h.b16 %v7888
    %v8920 = vunpack.c.l.b16 %v7889
    %v8921 = vunpack.c.h.b16 %v7889
    %v8922 = vunpack.c.l.b16 %v7890
    %v8923 = vunpack.c.h.b16 %v7890
    %v8924 = vunpack.c.l.b16 %v7891
    %v8925 = vunpack.c.h.b16 %v7891
    %v8926 = vunpack.c.l.b16 %v7892
    %v8927 = vunpack.c.h.b16 %v7892
    %v8928 = vunpack.c.l.b16 %v7893
    %v8929 = vunpack.c.h.b16 %v7893
    %v8930 = vunpack.c.l.b16 %v7894
    %v8931 = vunpack.c.h.b16 %v7894
    %v8932 = vunpack.c.l.b16 %v7895
    %v8933 = vunpack.c.h.b16 %v7895
    %v8934 = vunpack.c.l.b16 %v7896
    %v8935 = vunpack.c.h.b16 %v7896
    %v8936 = vunpack.c.l.b16 %v7897
    %v8937 = vunpack.c.h.b16 %v7897
    %v8938 = vunpack.c.l.b16 %v7898
    %v8939 = vunpack.c.h.b16 %v7898
    %v8940 = vunpack.c.l.b16 %v7899
    %v8941 = vunpack.c.h.b16 %v7899
    %v8942 = vunpack.c.l.b16 %v7900
    %v8943 = vunpack.c.h.b16 %v7900
    %v8944 = vunpack.c.l.b16 %v7901
    %v8945 = vunpack.c.h.b16 %v7901
    %v8946 = vunpack.c.l.b16 %v7902
    %v8947 = vunpack.c.h.b16 %v7902
    %v8948 = vunpack.c.l.b16 %v7903
    %v8949 = vunpack.c.h.b16 %v7903
    %v8950 = vunpack.c.l.b16 %v7904
    %v8951 = vunpack.c.h.b16 %v7904
    %v8952 = vunpack.c.l.b16 %v7905
    %v8953 = vunpack.c.h.b16 %v7905
    %v8954 = vunpack.c.l.b16 %v7906
    %v8955 = vunpack.c.h.b16 %v7906
    %v8956 = vunpack.c.l.b16 %v7907
    %v8957 = vunpack.c.h.b16 %v7907
    %v8958 = vunpack.c.l.b16 %v7908
    %v8959 = vunpack.c.h.b16 %v7908
    %v8960 = vunpack.c.l.b16 %v7909
    %v8961 = vunpack.c.h.b16 %v7909
    %v8962 = vunpack.c.l.b16 %v7910
    %v8963 = vunpack.c.h.b16 %v7910
    %v8964 = vunpack.c.l.b16 %v7911
    %v8965 = vunpack.c.h.b16 %v7911
    %v8966 = vunpack.c.l.b16 %v7912
    %v8967 = vunpack.c.h.b16 %v7912
    %v8968 = vunpack.c.l.b16 %v7913
    %v8969 = vunpack.c.h.b16 %v7913
    %v8970 = vunpack.c.l.b16 %v7914
    %v8971 = vunpack.c.h.b16 %v7914
    %v8972 = vunpack.c.l.b16 %v7915
    %v8973 = vunpack.c.h.b16 %v7915
    %v8974 = vunpack.c.l.b16 %v7916
    %v8975 = vunpack.c.h.b16 %v7916
    %v8976 = vunpack.c.l.b16 %v7917
    %v8977 = vunpack.c.h.b16 %v7917
    %v8978 = vunpack.c.l.b16 %v7918
    %v8979 = vunpack.c.h.b16 %v7918
    %v8980 = vunpack.c.l.b16 %v7919
    %v8981 = vunpack.c.h.b16 %v7919
    %v8982 = vunpack.c.l.b16 %v7920
    %v8983 = vunpack.c.h.b16 %v7920
    %v8984 = vunpack.c.l.b16 %v7921
    %v8985 = vunpack.c.h.b16 %v7921
    %v8986 = vunpack.c.l.b16 %v7922
    %v8987 = vunpack.c.h.b16 %v7922
    %v8988 = vunpack.c.l.b16 %v7923
    %v8989 = vunpack.c.h.b16 %v7923
    %v8990 = vunpack.c.l.b16 %v7924
    %v8991 = vunpack.c.h.b16 %v7924
    %v8992 = vunpack.c.l.b16 %v7925
    %v8993 = vunpack.c.h.b16 %v7925
    %v8994 = vunpack.c.l.b16 %v7926
    %v8995 = vunpack.c.h.b16 %v7926
    %v8996 = vunpack.c.l.b16 %v7927
    %v8997 = vunpack.c.h.b16 %v7927
    %v8998 = vunpack.c.l.b16 %v7928
    %v8999 = vunpack.c.h.b16 %v7928
    %v9000 = vunpack.c.l.b16 %v7929
    %v9001 = vunpack.c.h.b16 %v7929
    %v9002 = vunpack.c.l.b16 %v7930
    %v9003 = vunpack.c.h.b16 %v7930
    %v9004 = vunpack.c.l.b16 %v7931
    %v9005 = vunpack.c.h.b16 %v7931
    %v9006 = vunpack.c.l.b16 %v7932
    %v9007 = vunpack.c.h.b16 %v7932
    %v9008 = vunpack.c.l.b16 %v7933
    %v9009 = vunpack.c.h.b16 %v7933
    %v9010 = vunpack.c.l.b16 %v7934
    %v9011 = vunpack.c.h.b16 %v7934
    %v9012 = vunpack.c.l.b16 %v7935
    %v9013 = vunpack.c.h.b16 %v7935
    %v9014 = vunpack.c.l.b16 %v7936
    %v9015 = vunpack.c.h.b16 %v7936
    %v9016 = vunpack.c.l.b16 %v7937
    %v9017 = vunpack.c.h.b16 %v7937
    %v9018 = vunpack.c.l.b16 %v7938
    %v9019 = vunpack.c.h.b16 %v7938
    %v9020 = vunpack.c.l.b16 %v7939
    %v9021 = vunpack.c.h.b16 %v7939
    %v9022 = vunpack.c.l.b16 %v7940
    %v9023 = vunpack.c.h.b16 %v7940
    %v9024 = vunpack.c.l.b16 %v7941
    %v9025 = vunpack.c.h.b16 %v7941
    %v9026 = vunpack.c.l.b16 %v7942
    %v9027 = vunpack.c.h.b16 %v7942
    %v9028 = vunpack.c.l.b16 %v7943
    %v9029 = vunpack.c.h.b16 %v7943
    %v9030 = vunpack.c.l.b16 %v7944
    %v9031 = vunpack.c.h.b16 %v7944
    %v9032 = vunpack.c.l.b16 %v7945
    %v9033 = vunpack.c.h.b16 %v7945
    %v9034 = vunpack.c.l.b16 %v7946
    %v9035 = vunpack.c.h.b16 %v7946
    %v9036 = vunpack.c.l.b16 %v7947
    %v9037 = vunpack.c.h.b16 %v7947
    %v9038 = vunpack.c.l.b16 %v7948
    %v9039 = vunpack.c.h.b16 %v7948
    %v9040 = vunpack.c.l.b16 %v7949
    %v9041 = vunpack.c.h.b16 %v7949
    %v9042 = vunpack.c.l.b16 %v7950
    %v9043 = vunpack.c.h.b16 %v7950
    %v9044 = vunpack.c.l.b16 %v7951
    %v9045 = vunpack.c.h.b16 %v7951
    %v9046 = vunpack.c.l.b16 %v7952
    %v9047 = vunpack.c.h.b16 %v7952
    %v9048 = vunpack.c.l.b16 %v7953
    %v9049 = vunpack.c.h.b16 %v7953
    %v9050 = vunpack.c.l.b16 %v7954
    %v9051 = vunpack.c.h.b16 %v7954
    %v9052 = vunpack.c.l.b16 %v7955
    %v9053 = vunpack.c.h.b16 %v7955
    %v9054 = vunpack.c.l.b16 %v7956
    %v9055 = vunpack.c.h.b16 %v7956
    %v9056 = vunpack.c.l.b16 %v7957
    %v9057 = vunpack.c.h.b16 %v7957
    %v9058 = vunpack.c.l.b16 %v7958
    %v9059 = vunpack.c.h.b16 %v7958
    %v9060 = vunpack.c.l.b16 %v7959
    %v9061 = vunpack.c.h.b16 %v7959
    %v9062 = vunpack.c.l.b16 %v7960
    %v9063 = vunpack.c.h.b16 %v7960
    %v9064 = vunpack.c.l.b16 %v7961
    %v9065 = vunpack.c.h.b16 %v7961
    %v9066 = vunpack.c.l.b16 %v7962
    %v9067 = vunpack.c.h.b16 %v7962
    %v9068 = vunpack.c.l.b16 %v7963
    %v9069 = vunpack.c.h.b16 %v7963
    %v9070 = vunpack.c.l.b16 %v7964
    %v9071 = vunpack.c.h.b16 %v7964
    %v9072 = vunpack.c.l.b16 %v7965
    %v9073 = vunpack.c.h.b16 %v7965
    %v9074 = vunpack.c.l.b16 %v7966
    %v9075 = vunpack.c.h.b16 %v7966
    %v9076 = vunpack.c.l.b16 %v7967
    %v9077 = vunpack.c.h.b16 %v7967
    %v9078 = vunpack.c.l.b16 %v7968
    %v9079 = vunpack.c.h.b16 %v7968
    %v9080 = vunpack.c.l.b16 %v7969
    %v9081 = vunpack.c.h.b16 %v7969
    %v9082 = vunpack.c.l.b16 %v7970
    %v9083 = vunpack.c.h.b16 %v7970
    %v9084 = vunpack.c.l.b16 %v7971
    %v9085 = vunpack.c.h.b16 %v7971
    %v9086 = vunpack.c.l.b16 %v7972
    %v9087 = vunpack.c.h.b16 %v7972
    %v9088 = vunpack.c.l.b16 %v7973
    %v9089 = vunpack.c.h.b16 %v7973
    %v9090 = vunpack.c.l.b16 %v7974
    %v9091 = vunpack.c.h.b16 %v7974
    %v9092 = vunpack.c.l.b16 %v7975
    %v9093 = vunpack.c.h.b16 %v7975
    %v9094 = vunpack.c.l.b16 %v7976
    %v9095 = vunpack.c.h.b16 %v7976
    %v9096 = vunpack.c.l.b16 %v7977
    %v9097 = vunpack.c.h.b16 %v7977
    %v9098 = vunpack.c.l.b16 %v7978
    %v9099 = vunpack.c.h.b16 %v7978
    %v9100 = vunpack.c.l.b16 %v7979
    %v9101 = vunpack.c.h.b16 %v7979
    %v9102 = vunpack.c.l.b16 %v7980
    %v9103 = vunpack.c.h.b16 %v7980
    %v9104 = vunpack.c.l.b16 %v7981
    %v9105 = vunpack.c.h.b16 %v7981
    %v9106 = vunpack.c.l.b16 %v7982
    %v9107 = vunpack.c.h.b16 %v7982
    %v9108 = vunpack.c.l.b16 %v7983
    %v9109 = vunpack.c.h.b16 %v7983
    %v9110 = vunpack.c.l.b16 %v7984
    %v9111 = vunpack.c.h.b16 %v7984
    %v9112 = vunpack.c.l.b16 %v7985
    %v9113 = vunpack.c.h.b16 %v7985
    %v9114 = vunpack.c.l.b16 %v7986
    %v9115 = vunpack.c.h.b16 %v7986
    %v9116 = vunpack.c.l.b16 %v7987
    %v9117 = vunpack.c.h.b16 %v7987
    %v9118 = vunpack.c.l.b16 %v7988
    %v9119 = vunpack.c.h.b16 %v7988
    %v9120 = vunpack.c.l.b16 %v7989
    %v9121 = vunpack.c.h.b16 %v7989
    %v9122 = vunpack.c.l.b16 %v7990
    %v9123 = vunpack.c.h.b16 %v7990
    %v9124 = vunpack.c.l.b16 %v7991
    %v9125 = vunpack.c.h.b16 %v7991
    %v9126 = vunpack.c.l.b16 %v7992
    %v9127 = vunpack.c.h.b16 %v7992
    %v9128 = vunpack.c.l.b16 %v7993
    %v9129 = vunpack.c.h.b16 %v7993
    %v9130 = vunpack.c.l.b16 %v7994
    %v9131 = vunpack.c.h.b16 %v7994
    %v9132 = vunpack.c.l.b16 %v7995
    %v9133 = vunpack.c.h.b16 %v7995
    %v9134 = vunpack.c.l.b16 %v7996
    %v9135 = vunpack.c.h.b16 %v7996
    %v9136 = vunpack.c.l.b16 %v7997
    %v9137 = vunpack.c.h.b16 %v7997
    %v9138 = vunpack.c.l.b16 %v7998
    %v9139 = vunpack.c.h.b16 %v7998
    %v9140 = vunpack.c.l.b16 %v7999
    %v9141 = vunpack.c.h.b16 %v7999
    %v9142 = vunpack.c.l.b16 %v8000
    %v9143 = vunpack.c.h.b16 %v8000
    %v9144 = vunpack.c.l.b16 %v8001
    %v9145 = vunpack.c.h.b16 %v8001
    %v9146 = vunpack.c.l.b16 %v8002
    %v9147 = vunpack.c.h.b16 %v8002
    %v9148 = vunpack.c.l.b16 %v8003
    %v9149 = vunpack.c.h.b16 %v8003
    %v9150 = vunpack.c.l.b16 %v8004
    %v9151 = vunpack.c.h.b16 %v8004
    %v9152 = vunpack.c.l.b16 %v8005
    %v9153 = vunpack.c.h.b16 %v8005
    %v9154 = vunpack.c.l.b16 %v8006
    %v9155 = vunpack.c.h.b16 %v8006
    %v9156 = vunpack.c.l.b16 %v8007
    %v9157 = vunpack.c.h.b16 %v8007
    %v9158 = vunpack.c.l.b16 %v8008
    %v9159 = vunpack.c.h.b16 %v8008
    %v9160 = vunpack.c.l.b16 %v8009
    %v9161 = vunpack.c.h.b16 %v8009
    %v9162 = vpack.c.b16 %v8588, %v8586
    %v9163 = vpack.c.b16 %v8589, %v8587
    %v9164 = vpack.c.b16 %v8592, %v8590
    %v9165 = vpack.c.b16 %v8593, %v8591
    %v9166 = vpack.c.b16 %v8596, %v8594
    %v9167 = vpack.c.b16 %v8597, %v8595
    %v9168 = vpack.c.b16 %v8600, %v8598
    %v9169 = vpack.c.b16 %v8601, %v8599
    %v9170 = vpack.c.b16 %v8604, %v8602
    %v9171 = vpack.c.b16 %v8605, %v8603
    %v9172 = vpack.c.b16 %v8608, %v8606
    %v9173 = vpack.c.b16 %v8609, %v8607
    %v9174 = vpack.c.b16 %v8612, %v8610
    %v9175 = vpack.c.b16 %v8613, %v8611
    %v9176 = vpack.c.b16 %v8616, %v8614
    %v9177 = vpack.c.b16 %v8617, %v8615
    %v9178 = vpack.c.b16 %v8620, %v8618
    %v9179 = vpack.c.b16 %v8621, %v8619
    %v9180 = vpack.c.b16 %v8624, %v8622
    %v9181 = vpack.c.b16 %v8625, %v8623
    %v9182 = vpack.c.b16 %v8628, %v8626
    %v9183 = vpack.c.b16 %v8629, %v8627
    %v9184 = vpack.c.b16 %v8632, %v8630
    %v9185 = vpack.c.b16 %v8633, %v8631
    %v9186 = vpack.c.b16 %v8636, %v8634
    %v9187 = vpack.c.b16 %v8637, %v8635
    %v9188 = vpack.c.b16 %v8640, %v8638
    %v9189 = vpack.c.b16 %v8641, %v8639
    %v9190 = vpack.c.b16 %v8644, %v8642
    %v9191 = vpack.c.b16 %v8645, %v8643
    %v9192 = vpack.c.b16 %v8648, %v8646
    %v9193 = vpack.c.b16 %v8649, %v8647
    %v9194 = vpack.c.b16 %v8652, %v8650
    %v9195 = vpack.c.b16 %v8653, %v8651
    %v9196 = vpack.c.b16 %v8656, %v8654
    %v9197 = vpack.c.b16 %v8657, %v8655
    %v9198 = vpack.c.b16 %v8660, %v8658
    %v9199 = vpack.c.b16 %v8661, %v8659
    %v9200 = vpack.c.b16 %v8664, %v8662
    %v9201 = vpack.c.b16 %v8665, %v8663
    %v9202 = vpack.c.b16 %v8668, %v8666
    %v9203 = vpack.c.b16 %v8669, %v8667
    %v9204 = vpack.c.b16 %v8672, %v8670
    %v9205 = vpack.c.b16 %v8673, %v8671
    %v9206 = vpack.c.b16 %v8676, %v8674
    %v9207 = vpack.c.b16 %v8677, %v8675
    %v9208 = vpack.c.b16 %v8680, %v8678
    %v9209 = vpack.c.b16 %v8681, %v8679
    %v9210 = vpack.c.b16 %v8684, %v8682
    %v9211 = vpack.c.b16 %v8685, %v8683
    %v9212 = vpack.c.b16 %v8688, %v8686
    %v9213 = vpack.c.b16 %v8689, %v8687
    %v9214 = vpack.c.b16 %v8692, %v8690
    %v9215 = vpack.c.b16 %v8693, %v8691
    %v9216 = vpack.c.b16 %v8696, %v8694
    %v9217 = vpack.c.b16 %v8697, %v8695
    %v9218 = vpack.c.b16 %v8700, %v8698
    %v9219 = vpack.c.b16 %v8701, %v8699
    %v9220 = vpack.c.b16 %v8704, %v8702
    %v9221 = vpack.c.b16 %v8705, %v8703
    %v9222 = vpack.c.b16 %v8708, %v8706
    %v9223 = vpack.c.b16 %v8709, %v8707
    %v9224 = vpack.c.b16 %v8712, %v8710
    %v9225 = vpack.c.b16 %v8713, %v8711
    %v9226 = vpack.c.b16 %v8716, %v8714
    %v9227 = vpack.c.b16 %v8717, %v8715
    %v9228 = vpack.c.b16 %v8720, %v8718
    %v9229 = vpack.c.b16 %v8721, %v8719
    %v9230 = vpack.c.b16 %v8724, %v8722
    %v9231 = vpack.c.b16 %v8725, %v8723
    %v9232 = vpack.c.b16 %v8728, %v8726
    %v9233 = vpack.c.b16 %v8729, %v8727
    %v9234 = vpack.c.b16 %v8732, %v8730
    %v9235 = vpack.c.b16 %v8733, %v8731
    %v9236 = vpack.c.b16 %v8736, %v8734
    %v9237 = vpack.c.b16 %v8737, %v8735
    %v9238 = vpack.c.b16 %v8740, %v8738
    %v9239 = vpack.c.b16 %v8741, %v8739
    %v9240 = vpack.c.b16 %v8744, %v8742
    %v9241 = vpack.c.b16 %v8745, %v8743
    %v9242 = vpack.c.b16 %v8748, %v8746
    %v9243 = vpack.c.b16 %v8749, %v8747
    %v9244 = vpack.c.b16 %v8752, %v8750
    %v9245 = vpack.c.b16 %v8753, %v8751
    %v9246 = vpack.c.b16 %v8756, %v8754
    %v9247 = vpack.c.b16 %v8757, %v8755
    %v9248 = vpack.c.b16 %v8760, %v8758
    %v9249 = vpack.c.b16 %v8761, %v8759
    %v9250 = vpack.c.b16 %v8764, %v8762
    %v9251 = vpack.c.b16 %v8765, %v8763
    %v9252 = vpack.c.b16 %v8768, %v8766
    %v9253 = vpack.c.b16 %v8769, %v8767
    %v9254 = vpack.c.b16 %v8772, %v8770
    %v9255 = vpack.c.b16 %v8773, %v8771
    %v9256 = vpack.c.b16 %v8776, %v8774
    %v9257 = vpack.c.b16 %v8777, %v8775
    %v9258 = vpack.c.b16 %v8780, %v8778
    %v9259 = vpack.c.b16 %v8781, %v8779
    %v9260 = vpack.c.b16 %v8784, %v8782
    %v9261 = vpack.c.b16 %v8785, %v8783
    %v9262 = vpack.c.b16 %v8788, %v8786
    %v9263 = vpack.c.b16 %v8789, %v8787
    %v9264 = vpack.c.b16 %v8792, %v8790
    %v9265 = vpack.c.b16 %v8793, %v8791
    %v9266 = vpack.c.b16 %v8796, %v8794
    %v9267 = vpack.c.b16 %v8797, %v8795
    %v9268 = vpack.c.b16 %v8800, %v8798
    %v9269 = vpack.c.b16 %v8801, %v8799
    %v9270 = vpack.c.b16 %v8804, %v8802
    %v9271 = vpack.c.b16 %v8805, %v8803
    %v9272 = vpack.c.b16 %v8808, %v8806
    %v9273 = vpack.c.b16 %v8809, %v8807
    %v9274 = vpack.c.b16 %v8812, %v8810
    %v9275 = vpack.c.b16 %v8813, %v8811
    %v9276 = vpack.c.b16 %v8816, %v8814
    %v9277 = vpack.c.b16 %v8817, %v8815
    %v9278 = vpack.c.b16 %v8820, %v8818
    %v9279 = vpack.c.b16 %v8821, %v8819
    %v9280 = vpack.c.b16 %v8824, %v8822
    %v9281 = vpack.c.b16 %v8825, %v8823
    %v9282 = vpack.c.b16 %v8828, %v8826
    %v9283 = vpack.c.b16 %v8829, %v8827
    %v9284 = vpack.c.b16 %v8832, %v8830
    %v9285 = vpack.c.b16 %v8833, %v8831
    %v9286 = vpack.c.b16 %v8836, %v8834
    %v9287 = vpack.c.b16 %v8837, %v8835
    %v9288 = vpack.c.b16 %v8840, %v8838
    %v9289 = vpack.c.b16 %v8841, %v8839
    %v9290 = vpack.c.b16 %v8844, %v8842
    %v9291 = vpack.c.b16 %v8845, %v8843
    %v9292 = vpack.c.b16 %v8848, %v8846
    %v9293 = vpack.c.b16 %v8849, %v8847
    %v9294 = vpack.c.b16 %v8852, %v8850
    %v9295 = vpack.c.b16 %v8853, %v8851
    %v9296 = vpack.c.b16 %v8856, %v8854
    %v9297 = vpack.c.b16 %v8857, %v8855
    %v9298 = vpack.c.b16 %v8860, %v8858
    %v9299 = vpack.c.b16 %v8861, %v8859
    %v9300 = vpack.c.b16 %v8864, %v8862
    %v9301 = vpack.c.b16 %v8865, %v8863
    %v9302 = vpack.c.b16 %v8868, %v8866
    %v9303 = vpack.c.b16 %v8869, %v8867
    %v9304 = vpack.c.b16 %v8872, %v8870
    %v9305 = vpack.c.b16 %v8873, %v8871
    %v9306 = vpack.c.b16 %v8876, %v8874
    %v9307 = vpack.c.b16 %v8877, %v8875
    %v9308 = vpack.c.b16 %v8880, %v8878
    %v9309 = vpack.c.b16 %v8881, %v8879
    %v9310 = vpack.c.b16 %v8884, %v8882
    %v9311 = vpack.c.b16 %v8885, %v8883
    %v9312 = vpack.c.b16 %v8888, %v8886
    %v9313 = vpack.c.b16 %v8889, %v8887
    %v9314 = vpack.c.b16 %v8892, %v8890
    %v9315 = vpack.c.b16 %v8893, %v8891
    %v9316 = vpack.c.b16 %v8896, %v8894
    %v9317 = vpack.c.b16 %v8897, %v8895
    %v9318 = vpack.c.b16 %v8900, %v8898
    %v9319 = vpack.c.b16 %v8901, %v8899
    %v9320 = vpack.c.b16 %v8904, %v8902
    %v9321 = vpack.c.b16 %v8905, %v8903
    %v9322 = vpack.c.b16 %v8908, %v8906
    %v9323 = vpack.c.b16 %v8909, %v8907
    %v9324 = vpack.c.b16 %v8912, %v8910
    %v9325 = vpack.c.b16 %v8913, %v8911
    %v9326 = vpack.c.b16 %v8916, %v8914
    %v9327 = vpack.c.b16 %v8917, %v8915
    %v9328 = vpack.c.b16 %v8920, %v8918
    %v9329 = vpack.c.b16 %v8921, %v8919
    %v9330 = vpack.c.b16 %v8924, %v8922
    %v9331 = vpack.c.b16 %v8925, %v8923
    %v9332 = vpack.c.b16 %v8928, %v8926
    %v9333 = vpack.c.b16 %v8929, %v8927
    %v9334 = vpack.c.b16 %v8932, %v8930
    %v9335 = vpack.c.b16 %v8933, %v8931
    %v9336 = vpack.c.b16 %v8936, %v8934
    %v9337 = vpack.c.b16 %v8937, %v8935
    %v9338 = vpack.c.b16 %v8940, %v8938
    %v9339 = vpack.c.b16 %v8941, %v8939
    %v9340 = vpack.c.b16 %v8944, %v8942
    %v9341 = vpack.c.b16 %v8945, %v8943
    %v9342 = vpack.c.b16 %v8948, %v8946
    %v9343 = vpack.c.b16 %v8949, %v8947
    %v9344 = vpack.c.b16 %v8952, %v8950
    %v9345 = vpack.c.b16 %v8953, %v8951
    %v9346 = vpack.c.b16 %v8956, %v8954
    %v9347 = vpack.c.b16 %v8957, %v8955
    %v9348 = vpack.c.b16 %v8960, %v8958
    %v9349 = vpack.c.b16 %v8961, %v8959
    %v9350 = vpack.c.b16 %v8964, %v8962
    %v9351 = vpack.c.b16 %v8965, %v8963
    %v9352 = vpack.c.b16 %v8968, %v8966
    %v9353 = vpack.c.b16 %v8969, %v8967
    %v9354 = vpack.c.b16 %v8972, %v8970
    %v9355 = vpack.c.b16 %v8973, %v8971
    %v9356 = vpack.c.b16 %v8976, %v8974
    %v9357 = vpack.c.b16 %v8977, %v8975
    %v9358 = vpack.c.b16 %v8980, %v8978
    %v9359 = vpack.c.b16 %v8981, %v8979
    %v9360 = vpack.c.b16 %v8984, %v8982
    %v9361 = vpack.c.b16 %v8985, %v8983
    %v9362 = vpack.c.b16 %v8988, %v8986
    %v9363 = vpack.c.b16 %v8989, %v8987
    %v9364 = vpack.c.b16 %v8992, %v8990
    %v9365 = vpack.c.b16 %v8993, %v8991
    %v9366 = vpack.c.b16 %v8996, %v8994
    %v9367 = vpack.c.b16 %v8997, %v8995
    %v9368 = vpack.c.b16 %v9000, %v8998
    %v9369 = vpack.c.b16 %v9001, %v8999
    %v9370 = vpack.c.b16 %v9004, %v9002
    %v9371 = vpack.c.b16 %v9005, %v9003
    %v9372 = vpack.c.b16 %v9008, %v9006
    %v9373 = vpack.c.b16 %v9009, %v9007
    %v9374 = vpack.c.b16 %v9012, %v9010
    %v9375 = vpack.c.b16 %v9013, %v9011
    %v9376 = vpack.c.b16 %v9016, %v9014
    %v9377 = vpack.c.b16 %v9017, %v9015
    %v9378 = vpack.c.b16 %v9020, %v9018
    %v9379 = vpack.c.b16 %v9021, %v9019
    %v9380 = vpack.c.b16 %v9024, %v9022
    %v9381 = vpack.c.b16 %v9025, %v9023
    %v9382 = vpack.c.b16 %v9028, %v9026
    %v9383 = vpack.c.b16 %v9029, %v9027
    %v9384 = vpack.c.b16 %v9032, %v9030
    %v9385 = vpack.c.b16 %v9033, %v9031
    %v9386 = vpack.c.b16 %v9036, %v9034
    %v9387 = vpack.c.b16 %v9037, %v9035
    %v9388 = vpack.c.b16 %v9040, %v9038
    %v9389 = vpack.c.b16 %v9041, %v9039
    %v9390 = vpack.c.b16 %v9044, %v9042
    %v9391 = vpack.c.b16 %v9045, %v9043
    %v9392 = vpack.c.b16 %v9048, %v9046
    %v9393 = vpack.c.b16 %v9049, %v9047
    %v9394 = vpack.c.b16 %v9052, %v9050
    %v9395 = vpack.c.b16 %v9053, %v9051
    %v9396 = vpack.c.b16 %v9056, %v9054
    %v9397 = vpack.c.b16 %v9057, %v9055
    %v9398 = vpack.c.b16 %v9060, %v9058
    %v9399 = vpack.c.b16 %v9061, %v9059
    %v9400 = vpack.c.b16 %v9064, %v9062
    %v9401 = vpack.c.b16 %v9065, %v9063
    %v9402 = vpack.c.b16 %v9068, %v9066
    %v9403 = vpack.c.b16 %v9069, %v9067
    %v9404 = vpack.c.b16 %v9072, %v9070
    %v9405 = vpack.c.b16 %v9073, %v9071
    %v9406 = vpack.c.b16 %v9076, %v9074
    %v9407 = vpack.c.b16 %v9077, %v9075
    %v9408 = vpack.c.b16 %v9080, %v9078
    %v9409 = vpack.c.b16 %v9081, %v9079
    %v9410 = vpack.c.b16 %v9084, %v9082
    %v9411 = vpack.c.b16 %v9085, %v9083
    %v9412 = vpack.c.b16 %v9088, %v9086
    %v9413 = vpack.c.b16 %v9089, %v9087
    %v9414 = vpack.c.b16 %v9092, %v9090
    %v9415 = vpack.c.b16 %v9093, %v9091
    %v9416 = vpack.c.b16 %v9096, %v9094
    %v9417 = vpack.c.b16 %v9097, %v9095
    %v9418 = vpack.c.b16 %v9100, %v9098
    %v9419 = vpack.c.b16 %v9101, %v9099
    %v9420 = vpack.c.b16 %v9104, %v9102
    %v9421 = vpack.c.b16 %v9105, %v9103
    %v9422 = vpack.c.b16 %v9108, %v9106
    %v9423 = vpack.c.b16 %v9109, %v9107
    %v9424 = vpack.c.b16 %v9112, %v9110
    %v9425 = vpack.c.b16 %v9113, %v9111
    %v9426 = vpack.c.b16 %v9116, %v9114
    %v9427 = vpack.c.b16 %v9117, %v9115
    %v9428 = vpack.c.b16 %v9120, %v9118
    %v9429 = vpack.c.b16 %v9121, %v9119
    %v9430 = vpack.c.b16 %v9124, %v9122
    %v9431 = vpack.c.b16 %v9125, %v9123
    %v9432 = vpack.c.b16 %v9128, %v9126
    %v9433 = vpack.c.b16 %v9129, %v9127
    %v9434 = vpack.c.b16 %v9132, %v9130
    %v9435 = vpack.c.b16 %v9133, %v9131
    %v9436 = vpack.c.b16 %v9136, %v9134
    %v9437 = vpack.c.b16 %v9137, %v9135
    %v9438 = vpack.c.b16 %v9140, %v9138
    %v9439 = vpack.c.b16 %v9141, %v9139
    %v9440 = vpack.c.b16 %v9144, %v9142
    %v9441 = vpack.c.b16 %v9145, %v9143
    %v9442 = vpack.c.b16 %v9148, %v9146
    %v9443 = vpack.c.b16 %v9149, %v9147
    %v9444 = vpack.c.b16 %v9152, %v9150
    %v9445 = vpack.c.b16 %v9153, %v9151
    %v9446 = vpack.c.b16 %v9156, %v9154
    %v9447 = vpack.c.b16 %v9157, %v9155
    %v9448 = vpack.c.b16 %v9160, %v9158
    %v9449 = vpack.c.b16 %v9161, %v9159
    %9738 = vmatprep.subr.bf16.mxu0 %v9177
    %9739 = vmatpush1.bf16.msra.mxu0 %v9176
    %9740 = vmatprep.subr.bf16.mxu0 %v9175
    %9741 = vmatpush1.bf16.msra.mxu0 %v9174
    %9742 = vmatprep.subr.bf16.mxu0 %v9173
    %9743 = vmatpush1.bf16.msra.mxu0 %v9172
    %9744 = vmatprep.subr.bf16.mxu0 %v9171
    %9745 = vmatpush1.bf16.msra.mxu0 %v9170
    %9746 = vmatprep.subr.bf16.mxu0 %v9169
    %9747 = vmatpush1.bf16.msra.mxu0 %v9168
    %9748 = vmatprep.subr.bf16.mxu0 %v9167
    %9749 = vmatpush1.bf16.msra.mxu0 %v9166
    %9750 = vmatprep.subr.bf16.mxu0 %v9165
    %9751 = vmatpush1.bf16.msra.mxu0 %v9164
    %9752 = vmatprep.subr.bf16.mxu0 %v9163
    %9753 = vmatpush1.bf16.msra.mxu0 %v9162
    %9754 = vmatprep.subr.bf16.mxu0 %v9193
    %9755 = vmatpush2.bf16.msra.mxu0 %v9192
    %9756 = vmatprep.subr.bf16.mxu0 %v9191
    %9757 = vmatpush2.bf16.msra.mxu0 %v9190
    %9758 = vmatprep.subr.bf16.mxu0 %v9189
    %9759 = vmatpush2.bf16.msra.mxu0 %v9188
    %9760 = vmatprep.subr.bf16.mxu0 %v9187
    %9761 = vmatpush2.bf16.msra.mxu0 %v9186
    %9762 = vmatprep.subr.bf16.mxu0 %v9185
    %9763 = vmatpush2.bf16.msra.mxu0 %v9184
    %9764 = vmatprep.subr.bf16.mxu0 %v9183
    %9765 = vmatpush2.bf16.msra.mxu0 %v9182
    %9766 = vmatprep.subr.bf16.mxu0 %v9181
    %9767 = vmatpush2.bf16.msra.mxu0 %v9180
    %9768 = vmatprep.subr.bf16.mxu0 %v9179
    %9769 = vmatpush2.bf16.msra.mxu0 %v9178
    %9770 = vmatprep.mubr.bf16.mxu0 %v8011
    %9771 = vmatmul.mubr.bf16.gmra.mxu0 %v8010
    %v9772 = vpop.f32.mrf.mxu0
    %v9773 = vadd.f32 0.0, %v9772
    %v9774 = vpop.f32.mrf.mxu0
    %v9775 = vadd.f32 0.0, %v9774
    %v9776 = vpop.f32.mrf.mxu0
    %v9777 = vadd.f32 0.0, %v9776
    %v9778 = vpop.f32.mrf.mxu0
    %v9779 = vadd.f32 0.0, %v9778
    %9780 = vmatprep.mubr.bf16.mxu0 %v8029
    %9781 = vmatmul.mubr.bf16.gmra.mxu0 %v8028
    %v9782 = vpop.f32.mrf.mxu0
    %v9783 = vadd.f32 0.0, %v9782
    %v9784 = vpop.f32.mrf.mxu0
    %v9785 = vadd.f32 0.0, %v9784
    %v9786 = vpop.f32.mrf.mxu0
    %v9787 = vadd.f32 0.0, %v9786
    %v9788 = vpop.f32.mrf.mxu0
    %v9789 = vadd.f32 0.0, %v9788
    %9790 = vmatprep.mubr.bf16.mxu0 %v8047
    %9791 = vmatmul.mubr.bf16.gmra.mxu0 %v8046
    %v9792 = vpop.f32.mrf.mxu0
    %v9793 = vadd.f32 0.0, %v9792
    %v9794 = vpop.f32.mrf.mxu0
    %v9795 = vadd.f32 0.0, %v9794
    %v9796 = vpop.f32.mrf.mxu0
    %v9797 = vadd.f32 0.0, %v9796
    %v9798 = vpop.f32.mrf.mxu0
    %v9799 = vadd.f32 0.0, %v9798
    %9800 = vmatprep.mubr.bf16.mxu0 %v8065
    %9801 = vmatmul.mubr.bf16.gmra.mxu0 %v8064
    %v9802 = vpop.f32.mrf.mxu0
    %v9803 = vadd.f32 0.0, %v9802
    %v9804 = vpop.f32.mrf.mxu0
    %v9805 = vadd.f32 0.0, %v9804
    %v9806 = vpop.f32.mrf.mxu0
    %v9807 = vadd.f32 0.0, %v9806
    %v9808 = vpop.f32.mrf.mxu0
    %v9809 = vadd.f32 0.0, %v9808
    %9810 = vmatprep.mubr.bf16.mxu0 %v8083
    %9811 = vmatmul.mubr.bf16.gmra.mxu0 %v8082
    %v9812 = vpop.f32.mrf.mxu0
    %v9813 = vadd.f32 0.0, %v9812
    %v9814 = vpop.f32.mrf.mxu0
    %v9815 = vadd.f32 0.0, %v9814
    %v9816 = vpop.f32.mrf.mxu0
    %v9817 = vadd.f32 0.0, %v9816
    %v9818 = vpop.f32.mrf.mxu0
    %v9819 = vadd.f32 0.0, %v9818
    %9820 = vmatprep.mubr.bf16.mxu0 %v8101
    %9821 = vmatmul.mubr.bf16.gmra.mxu0 %v8100
    %v9822 = vpop.f32.mrf.mxu0
    %v9823 = vadd.f32 0.0, %v9822
    %v9824 = vpop.f32.mrf.mxu0
    %v9825 = vadd.f32 0.0, %v9824
    %v9826 = vpop.f32.mrf.mxu0
    %v9827 = vadd.f32 0.0, %v9826
    %v9828 = vpop.f32.mrf.mxu0
    %v9829 = vadd.f32 0.0, %v9828
    %9830 = vmatprep.mubr.bf16.mxu0 %v8119
    %9831 = vmatmul.mubr.bf16.gmra.mxu0 %v8118
    %v9832 = vpop.f32.mrf.mxu0
    %v9833 = vadd.f32 0.0, %v9832
    %v9834 = vpop.f32.mrf.mxu0
    %v9835 = vadd.f32 0.0, %v9834
    %v9836 = vpop.f32.mrf.mxu0
    %v9837 = vadd.f32 0.0, %v9836
    %v9838 = vpop.f32.mrf.mxu0
    %v9839 = vadd.f32 0.0, %v9838
    %9840 = vmatprep.mubr.bf16.mxu0 %v8137
    %9841 = vmatmul.mubr.bf16.gmra.mxu0 %v8136
    %v9842 = vpop.f32.mrf.mxu0
    %v9843 = vadd.f32 0.0, %v9842
    %v9844 = vpop.f32.mrf.mxu0
    %v9845 = vadd.f32 0.0, %v9844
    %v9846 = vpop.f32.mrf.mxu0
    %v9847 = vadd.f32 0.0, %v9846
    %v9848 = vpop.f32.mrf.mxu0
    %v9849 = vadd.f32 0.0, %v9848
    %9850 = vdwg.mxu0
    %9851 = vmatprep.subr.bf16.mxu0 %v9209
    %9852 = vmatpush1.bf16.msra.mxu0 %v9208
    %9853 = vmatprep.subr.bf16.mxu0 %v9207
    %9854 = vmatpush1.bf16.msra.mxu0 %v9206
    %9855 = vmatprep.subr.bf16.mxu0 %v9205
    %9856 = vmatpush1.bf16.msra.mxu0 %v9204
    %9857 = vmatprep.subr.bf16.mxu0 %v9203
    %9858 = vmatpush1.bf16.msra.mxu0 %v9202
    %9859 = vmatprep.subr.bf16.mxu0 %v9201
    %9860 = vmatpush1.bf16.msra.mxu0 %v9200
    %9861 = vmatprep.subr.bf16.mxu0 %v9199
    %9862 = vmatpush1.bf16.msra.mxu0 %v9198
    %9863 = vmatprep.subr.bf16.mxu0 %v9197
    %9864 = vmatpush1.bf16.msra.mxu0 %v9196
    %9865 = vmatprep.subr.bf16.mxu0 %v9195
    %9866 = vmatpush1.bf16.msra.mxu0 %v9194
    %9867 = vmatprep.subr.bf16.mxu0 %v9225
    %9868 = vmatpush2.bf16.msra.mxu0 %v9224
    %9869 = vmatprep.subr.bf16.mxu0 %v9223
    %9870 = vmatpush2.bf16.msra.mxu0 %v9222
    %9871 = vmatprep.subr.bf16.mxu0 %v9221
    %9872 = vmatpush2.bf16.msra.mxu0 %v9220
    %9873 = vmatprep.subr.bf16.mxu0 %v9219
    %9874 = vmatpush2.bf16.msra.mxu0 %v9218
    %9875 = vmatprep.subr.bf16.mxu0 %v9217
    %9876 = vmatpush2.bf16.msra.mxu0 %v9216
    %9877 = vmatprep.subr.bf16.mxu0 %v9215
    %9878 = vmatpush2.bf16.msra.mxu0 %v9214
    %9879 = vmatprep.subr.bf16.mxu0 %v9213
    %9880 = vmatpush2.bf16.msra.mxu0 %v9212
    %9881 = vmatprep.subr.bf16.mxu0 %v9211
    %9882 = vmatpush2.bf16.msra.mxu0 %v9210
    %9883 = vmatprep.mubr.bf16.mxu0 %v8013
    %9884 = vmatmul.mubr.bf16.gmra.mxu0 %v8012
    %v9885 = vpop.f32.mrf.mxu0
    %v9886 = vadd.f32 %v9773, %v9885
    %v9887 = vpop.f32.mrf.mxu0
    %v9888 = vadd.f32 %v9775, %v9887
    %v9889 = vpop.f32.mrf.mxu0
    %v9890 = vadd.f32 %v9777, %v9889
    %v9891 = vpop.f32.mrf.mxu0
    %v9892 = vadd.f32 %v9779, %v9891
    %9893 = vmatprep.mubr.bf16.mxu0 %v8031
    %9894 = vmatmul.mubr.bf16.gmra.mxu0 %v8030
    %v9895 = vpop.f32.mrf.mxu0
    %v9896 = vadd.f32 %v9783, %v9895
    %v9897 = vpop.f32.mrf.mxu0
    %v9898 = vadd.f32 %v9785, %v9897
    %v9899 = vpop.f32.mrf.mxu0
    %v9900 = vadd.f32 %v9787, %v9899
    %v9901 = vpop.f32.mrf.mxu0
    %v9902 = vadd.f32 %v9789, %v9901
    %9903 = vmatprep.mubr.bf16.mxu0 %v8049
    %9904 = vmatmul.mubr.bf16.gmra.mxu0 %v8048
    %v9905 = vpop.f32.mrf.mxu0
    %v9906 = vadd.f32 %v9793, %v9905
    %v9907 = vpop.f32.mrf.mxu0
    %v9908 = vadd.f32 %v9795, %v9907
    %v9909 = vpop.f32.mrf.mxu0
    %v9910 = vadd.f32 %v9797, %v9909
    %v9911 = vpop.f32.mrf.mxu0
    %v9912 = vadd.f32 %v9799, %v9911
    %9913 = vmatprep.mubr.bf16.mxu0 %v8067
    %9914 = vmatmul.mubr.bf16.gmra.mxu0 %v8066
    %v9915 = vpop.f32.mrf.mxu0
    %v9916 = vadd.f32 %v9803, %v9915
    %v9917 = vpop.f32.mrf.mxu0
    %v9918 = vadd.f32 %v9805, %v9917
    %v9919 = vpop.f32.mrf.mxu0
    %v9920 = vadd.f32 %v9807, %v9919
    %v9921 = vpop.f32.mrf.mxu0
    %v9922 = vadd.f32 %v9809, %v9921
    %9923 = vmatprep.mubr.bf16.mxu0 %v8085
    %9924 = vmatmul.mubr.bf16.gmra.mxu0 %v8084
    %v9925 = vpop.f32.mrf.mxu0
    %v9926 = vadd.f32 %v9813, %v9925
    %v9927 = vpop.f32.mrf.mxu0
    %v9928 = vadd.f32 %v9815, %v9927
    %v9929 = vpop.f32.mrf.mxu0
    %v9930 = vadd.f32 %v9817, %v9929
    %v9931 = vpop.f32.mrf.mxu0
    %v9932 = vadd.f32 %v9819, %v9931
    %9933 = vmatprep.mubr.bf16.mxu0 %v8103
    %9934 = vmatmul.mubr.bf16.gmra.mxu0 %v8102
    %v9935 = vpop.f32.mrf.mxu0
    %v9936 = vadd.f32 %v9823, %v9935
    %v9937 = vpop.f32.mrf.mxu0
    %v9938 = vadd.f32 %v9825, %v9937
    %v9939 = vpop.f32.mrf.mxu0
    %v9940 = vadd.f32 %v9827, %v9939
    %v9941 = vpop.f32.mrf.mxu0
    %v9942 = vadd.f32 %v9829, %v9941
    %9943 = vmatprep.mubr.bf16.mxu0 %v8121
    %9944 = vmatmul.mubr.bf16.gmra.mxu0 %v8120
    %v9945 = vpop.f32.mrf.mxu0
    %v9946 = vadd.f32 %v9833, %v9945
    %v9947 = vpop.f32.mrf.mxu0
    %v9948 = vadd.f32 %v9835, %v9947
    %v9949 = vpop.f32.mrf.mxu0
    %v9950 = vadd.f32 %v9837, %v9949
    %v9951 = vpop.f32.mrf.mxu0
    %v9952 = vadd.f32 %v9839, %v9951
    %9953 = vmatprep.mubr.bf16.mxu0 %v8139
    %9954 = vmatmul.mubr.bf16.gmra.mxu0 %v8138
    %v9955 = vpop.f32.mrf.mxu0
    %v9956 = vadd.f32 %v9843, %v9955
    %v9957 = vpop.f32.mrf.mxu0
    %v9958 = vadd.f32 %v9845, %v9957
    %v9959 = vpop.f32.mrf.mxu0
    %v9960 = vadd.f32 %v9847, %v9959
    %v9961 = vpop.f32.mrf.mxu0
    %v9962 = vadd.f32 %v9849, %v9961
    %9963 = vdwg.mxu0
    %9964 = vmatprep.subr.bf16.mxu0 %v9241
    %9965 = vmatpush1.bf16.msra.mxu0 %v9240
    %9966 = vmatprep.subr.bf16.mxu0 %v9239
    %9967 = vmatpush1.bf16.msra.mxu0 %v9238
    %9968 = vmatprep.subr.bf16.mxu0 %v9237
    %9969 = vmatpush1.bf16.msra.mxu0 %v9236
    %9970 = vmatprep.subr.bf16.mxu0 %v9235
    %9971 = vmatpush1.bf16.msra.mxu0 %v9234
    %9972 = vmatprep.subr.bf16.mxu0 %v9233
    %9973 = vmatpush1.bf16.msra.mxu0 %v9232
    %9974 = vmatprep.subr.bf16.mxu0 %v9231
    %9975 = vmatpush1.bf16.msra.mxu0 %v9230
    %9976 = vmatprep.subr.bf16.mxu0 %v9229
    %9977 = vmatpush1.bf16.msra.mxu0 %v9228
    %9978 = vmatprep.subr.bf16.mxu0 %v9227
    %9979 = vmatpush1.bf16.msra.mxu0 %v9226
    %9980 = vmatprep.subr.bf16.mxu0 %v9257
    %9981 = vmatpush2.bf16.msra.mxu0 %v9256
    %9982 = vmatprep.subr.bf16.mxu0 %v9255
    %9983 = vmatpush2.bf16.msra.mxu0 %v9254
    %9984 = vmatprep.subr.bf16.mxu0 %v9253
    %9985 = vmatpush2.bf16.msra.mxu0 %v9252
    %9986 = vmatprep.subr.bf16.mxu0 %v9251
    %9987 = vmatpush2.bf16.msra.mxu0 %v9250
    %9988 = vmatprep.subr.bf16.mxu0 %v9249
    %9989 = vmatpush2.bf16.msra.mxu0 %v9248
    %9990 = vmatprep.subr.bf16.mxu0 %v9247
    %9991 = vmatpush2.bf16.msra.mxu0 %v9246
    %9992 = vmatprep.subr.bf16.mxu0 %v9245
    %9993 = vmatpush2.bf16.msra.mxu0 %v9244
    %9994 = vmatprep.subr.bf16.mxu0 %v9243
    %9995 = vmatpush2.bf16.msra.mxu0 %v9242
    %9996 = vmatprep.mubr.bf16.mxu0 %v8015
    %9997 = vmatmul.mubr.bf16.gmra.mxu0 %v8014
    %v9998 = vpop.f32.mrf.mxu0
    %v9999 = vadd.f32 %v9886, %v9998
    %v10000 = vpop.f32.mrf.mxu0
    %v10001 = vadd.f32 %v9888, %v10000
    %v10002 = vpop.f32.mrf.mxu0
    %v10003 = vadd.f32 %v9890, %v10002
    %v10004 = vpop.f32.mrf.mxu0
    %v10005 = vadd.f32 %v9892, %v10004
    %10006 = vmatprep.mubr.bf16.mxu0 %v8033
    %10007 = vmatmul.mubr.bf16.gmra.mxu0 %v8032
    %v10008 = vpop.f32.mrf.mxu0
    %v10009 = vadd.f32 %v9896, %v10008
    %v10010 = vpop.f32.mrf.mxu0
    %v10011 = vadd.f32 %v9898, %v10010
    %v10012 = vpop.f32.mrf.mxu0
    %v10013 = vadd.f32 %v9900, %v10012
    %v10014 = vpop.f32.mrf.mxu0
    %v10015 = vadd.f32 %v9902, %v10014
    %10016 = vmatprep.mubr.bf16.mxu0 %v8051
    %10017 = vmatmul.mubr.bf16.gmra.mxu0 %v8050
    %v10018 = vpop.f32.mrf.mxu0
    %v10019 = vadd.f32 %v9906, %v10018
    %v10020 = vpop.f32.mrf.mxu0
    %v10021 = vadd.f32 %v9908, %v10020
    %v10022 = vpop.f32.mrf.mxu0
    %v10023 = vadd.f32 %v9910, %v10022
    %v10024 = vpop.f32.mrf.mxu0
    %v10025 = vadd.f32 %v9912, %v10024
    %10026 = vmatprep.mubr.bf16.mxu0 %v8069
    %10027 = vmatmul.mubr.bf16.gmra.mxu0 %v8068
    %v10028 = vpop.f32.mrf.mxu0
    %v10029 = vadd.f32 %v9916, %v10028
    %v10030 = vpop.f32.mrf.mxu0
    %v10031 = vadd.f32 %v9918, %v10030
    %v10032 = vpop.f32.mrf.mxu0
    %v10033 = vadd.f32 %v9920, %v10032
    %v10034 = vpop.f32.mrf.mxu0
    %v10035 = vadd.f32 %v9922, %v10034
    %10036 = vmatprep.mubr.bf16.mxu0 %v8087
    %10037 = vmatmul.mubr.bf16.gmra.mxu0 %v8086
    %v10038 = vpop.f32.mrf.mxu0
    %v10039 = vadd.f32 %v9926, %v10038
    %v10040 = vpop.f32.mrf.mxu0
    %v10041 = vadd.f32 %v9928, %v10040
    %v10042 = vpop.f32.mrf.mxu0
    %v10043 = vadd.f32 %v9930, %v10042
    %v10044 = vpop.f32.mrf.mxu0
    %v10045 = vadd.f32 %v9932, %v10044
    %10046 = vmatprep.mubr.bf16.mxu0 %v8105
    %10047 = vmatmul.mubr.bf16.gmra.mxu0 %v8104
    %v10048 = vpop.f32.mrf.mxu0
    %v10049 = vadd.f32 %v9936, %v10048
    %v10050 = vpop.f32.mrf.mxu0
    %v10051 = vadd.f32 %v9938, %v10050
    %v10052 = vpop.f32.mrf.mxu0
    %v10053 = vadd.f32 %v9940, %v10052
    %v10054 = vpop.f32.mrf.mxu0
    %v10055 = vadd.f32 %v9942, %v10054
    %10056 = vmatprep.mubr.bf16.mxu0 %v8123
    %10057 = vmatmul.mubr.bf16.gmra.mxu0 %v8122
    %v10058 = vpop.f32.mrf.mxu0
    %v10059 = vadd.f32 %v9946, %v10058
    %v10060 = vpop.f32.mrf.mxu0
    %v10061 = vadd.f32 %v9948, %v10060
    %v10062 = vpop.f32.mrf.mxu0
    %v10063 = vadd.f32 %v9950, %v10062
    %v10064 = vpop.f32.mrf.mxu0
    %v10065 = vadd.f32 %v9952, %v10064
    %10066 = vmatprep.mubr.bf16.mxu0 %v8141
    %10067 = vmatmul.mubr.bf16.gmra.mxu0 %v8140
    %v10068 = vpop.f32.mrf.mxu0
    %v10069 = vadd.f32 %v9956, %v10068
    %v10070 = vpop.f32.mrf.mxu0
    %v10071 = vadd.f32 %v9958, %v10070
    %v10072 = vpop.f32.mrf.mxu0
    %v10073 = vadd.f32 %v9960, %v10072
    %v10074 = vpop.f32.mrf.mxu0
    %v10075 = vadd.f32 %v9962, %v10074
    %10076 = vdwg.mxu0
    %10077 = vmatprep.subr.bf16.mxu0 %v9273
    %10078 = vmatpush1.bf16.msra.mxu0 %v9272
    %10079 = vmatprep.subr.bf16.mxu0 %v9271
    %10080 = vmatpush1.bf16.msra.mxu0 %v9270
    %10081 = vmatprep.subr.bf16.mxu0 %v9269
    %10082 = vmatpush1.bf16.msra.mxu0 %v9268
    %10083 = vmatprep.subr.bf16.mxu0 %v9267
    %10084 = vmatpush1.bf16.msra.mxu0 %v9266
    %10085 = vmatprep.subr.bf16.mxu0 %v9265
    %10086 = vmatpush1.bf16.msra.mxu0 %v9264
    %10087 = vmatprep.subr.bf16.mxu0 %v9263
    %10088 = vmatpush1.bf16.msra.mxu0 %v9262
    %10089 = vmatprep.subr.bf16.mxu0 %v9261
    %10090 = vmatpush1.bf16.msra.mxu0 %v9260
    %10091 = vmatprep.subr.bf16.mxu0 %v9259
    %10092 = vmatpush1.bf16.msra.mxu0 %v9258
    %10093 = vmatprep.subr.bf16.mxu0 %v9289
    %10094 = vmatpush2.bf16.msra.mxu0 %v9288
    %10095 = vmatprep.subr.bf16.mxu0 %v9287
    %10096 = vmatpush2.bf16.msra.mxu0 %v9286
    %10097 = vmatprep.subr.bf16.mxu0 %v9285
    %10098 = vmatpush2.bf16.msra.mxu0 %v9284
    %10099 = vmatprep.subr.bf16.mxu0 %v9283
    %10100 = vmatpush2.bf16.msra.mxu0 %v9282
    %10101 = vmatprep.subr.bf16.mxu0 %v9281
    %10102 = vmatpush2.bf16.msra.mxu0 %v9280
    %10103 = vmatprep.subr.bf16.mxu0 %v9279
    %10104 = vmatpush2.bf16.msra.mxu0 %v9278
    %10105 = vmatprep.subr.bf16.mxu0 %v9277
    %10106 = vmatpush2.bf16.msra.mxu0 %v9276
    %10107 = vmatprep.subr.bf16.mxu0 %v9275
    %10108 = vmatpush2.bf16.msra.mxu0 %v9274
    %10109 = vmatprep.mubr.bf16.mxu0 %v8017
    %10110 = vmatmul.mubr.bf16.gmra.mxu0 %v8016
    %v10111 = vpop.f32.mrf.mxu0
    %v10112 = vadd.f32 %v9999, %v10111
    %v10113 = vpop.f32.mrf.mxu0
    %v10114 = vadd.f32 %v10001, %v10113
    %v10115 = vpop.f32.mrf.mxu0
    %v10116 = vadd.f32 %v10003, %v10115
    %v10117 = vpop.f32.mrf.mxu0
    %v10118 = vadd.f32 %v10005, %v10117
    %10119 = vmatprep.mubr.bf16.mxu0 %v8035
    %10120 = vmatmul.mubr.bf16.gmra.mxu0 %v8034
    %v10121 = vpop.f32.mrf.mxu0
    %v10122 = vadd.f32 %v10009, %v10121
    %v10123 = vpop.f32.mrf.mxu0
    %v10124 = vadd.f32 %v10011, %v10123
    %v10125 = vpop.f32.mrf.mxu0
    %v10126 = vadd.f32 %v10013, %v10125
    %v10127 = vpop.f32.mrf.mxu0
    %v10128 = vadd.f32 %v10015, %v10127
    %10129 = vmatprep.mubr.bf16.mxu0 %v8053
    %10130 = vmatmul.mubr.bf16.gmra.mxu0 %v8052
    %v10131 = vpop.f32.mrf.mxu0
    %v10132 = vadd.f32 %v10019, %v10131
    %v10133 = vpop.f32.mrf.mxu0
    %v10134 = vadd.f32 %v10021, %v10133
    %v10135 = vpop.f32.mrf.mxu0
    %v10136 = vadd.f32 %v10023, %v10135
    %v10137 = vpop.f32.mrf.mxu0
    %v10138 = vadd.f32 %v10025, %v10137
    %10139 = vmatprep.mubr.bf16.mxu0 %v8071
    %10140 = vmatmul.mubr.bf16.gmra.mxu0 %v8070
    %v10141 = vpop.f32.mrf.mxu0
    %v10142 = vadd.f32 %v10029, %v10141
    %v10143 = vpop.f32.mrf.mxu0
    %v10144 = vadd.f32 %v10031, %v10143
    %v10145 = vpop.f32.mrf.mxu0
    %v10146 = vadd.f32 %v10033, %v10145
    %v10147 = vpop.f32.mrf.mxu0
    %v10148 = vadd.f32 %v10035, %v10147
    %10149 = vmatprep.mubr.bf16.mxu0 %v8089
    %10150 = vmatmul.mubr.bf16.gmra.mxu0 %v8088
    %v10151 = vpop.f32.mrf.mxu0
    %v10152 = vadd.f32 %v10039, %v10151
    %v10153 = vpop.f32.mrf.mxu0
    %v10154 = vadd.f32 %v10041, %v10153
    %v10155 = vpop.f32.mrf.mxu0
    %v10156 = vadd.f32 %v10043, %v10155
    %v10157 = vpop.f32.mrf.mxu0
    %v10158 = vadd.f32 %v10045, %v10157
    %10159 = vmatprep.mubr.bf16.mxu0 %v8107
    %10160 = vmatmul.mubr.bf16.gmra.mxu0 %v8106
    %v10161 = vpop.f32.mrf.mxu0
    %v10162 = vadd.f32 %v10049, %v10161
    %v10163 = vpop.f32.mrf.mxu0
    %v10164 = vadd.f32 %v10051, %v10163
    %v10165 = vpop.f32.mrf.mxu0
    %v10166 = vadd.f32 %v10053, %v10165
    %v10167 = vpop.f32.mrf.mxu0
    %v10168 = vadd.f32 %v10055, %v10167
    %10169 = vmatprep.mubr.bf16.mxu0 %v8125
    %10170 = vmatmul.mubr.bf16.gmra.mxu0 %v8124
    %v10171 = vpop.f32.mrf.mxu0
    %v10172 = vadd.f32 %v10059, %v10171
    %v10173 = vpop.f32.mrf.mxu0
    %v10174 = vadd.f32 %v10061, %v10173
    %v10175 = vpop.f32.mrf.mxu0
    %v10176 = vadd.f32 %v10063, %v10175
    %v10177 = vpop.f32.mrf.mxu0
    %v10178 = vadd.f32 %v10065, %v10177
    %10179 = vmatprep.mubr.bf16.mxu0 %v8143
    %10180 = vmatmul.mubr.bf16.gmra.mxu0 %v8142
    %v10181 = vpop.f32.mrf.mxu0
    %v10182 = vadd.f32 %v10069, %v10181
    %v10183 = vpop.f32.mrf.mxu0
    %v10184 = vadd.f32 %v10071, %v10183
    %v10185 = vpop.f32.mrf.mxu0
    %v10186 = vadd.f32 %v10073, %v10185
    %v10187 = vpop.f32.mrf.mxu0
    %v10188 = vadd.f32 %v10075, %v10187
    %10189 = vdwg.mxu0
    %10190 = vmatprep.subr.bf16.mxu0 %v9305
    %10191 = vmatpush1.bf16.msra.mxu0 %v9304
    %10192 = vmatprep.subr.bf16.mxu0 %v9303
    %10193 = vmatpush1.bf16.msra.mxu0 %v9302
    %10194 = vmatprep.subr.bf16.mxu0 %v9301
    %10195 = vmatpush1.bf16.msra.mxu0 %v9300
    %10196 = vmatprep.subr.bf16.mxu0 %v9299
    %10197 = vmatpush1.bf16.msra.mxu0 %v9298
    %10198 = vmatprep.subr.bf16.mxu0 %v9297
    %10199 = vmatpush1.bf16.msra.mxu0 %v9296
    %10200 = vmatprep.subr.bf16.mxu0 %v9295
    %10201 = vmatpush1.bf16.msra.mxu0 %v9294
    %10202 = vmatprep.subr.bf16.mxu0 %v9293
    %10203 = vmatpush1.bf16.msra.mxu0 %v9292
    %10204 = vmatprep.subr.bf16.mxu0 %v9291
    %10205 = vmatpush1.bf16.msra.mxu0 %v9290
    %10206 = vmatprep.subr.bf16.mxu0 %v9321
    %10207 = vmatpush2.bf16.msra.mxu0 %v9320
    %10208 = vmatprep.subr.bf16.mxu0 %v9319
    %10209 = vmatpush2.bf16.msra.mxu0 %v9318
    %10210 = vmatprep.subr.bf16.mxu0 %v9317
    %10211 = vmatpush2.bf16.msra.mxu0 %v9316
    %10212 = vmatprep.subr.bf16.mxu0 %v9315
    %10213 = vmatpush2.bf16.msra.mxu0 %v9314
    %10214 = vmatprep.subr.bf16.mxu0 %v9313
    %10215 = vmatpush2.bf16.msra.mxu0 %v9312
    %10216 = vmatprep.subr.bf16.mxu0 %v9311
    %10217 = vmatpush2.bf16.msra.mxu0 %v9310
    %10218 = vmatprep.subr.bf16.mxu0 %v9309
    %10219 = vmatpush2.bf16.msra.mxu0 %v9308
    %10220 = vmatprep.subr.bf16.mxu0 %v9307
    %10221 = vmatpush2.bf16.msra.mxu0 %v9306
    %10222 = vmatprep.mubr.bf16.mxu0 %v8019
    %10223 = vmatmul.mubr.bf16.gmra.mxu0 %v8018
    %v10224 = vpop.f32.mrf.mxu0
    %v10225 = vadd.f32 %v10112, %v10224
    %v10226 = vpop.f32.mrf.mxu0
    %v10227 = vadd.f32 %v10114, %v10226
    %v10228 = vpop.f32.mrf.mxu0
    %v10229 = vadd.f32 %v10116, %v10228
    %v10230 = vpop.f32.mrf.mxu0
    %v10231 = vadd.f32 %v10118, %v10230
    %10232 = vmatprep.mubr.bf16.mxu0 %v8037
    %10233 = vmatmul.mubr.bf16.gmra.mxu0 %v8036
    %v10234 = vpop.f32.mrf.mxu0
    %v10235 = vadd.f32 %v10122, %v10234
    %v10236 = vpop.f32.mrf.mxu0
    %v10237 = vadd.f32 %v10124, %v10236
    %v10238 = vpop.f32.mrf.mxu0
    %v10239 = vadd.f32 %v10126, %v10238
    %v10240 = vpop.f32.mrf.mxu0
    %v10241 = vadd.f32 %v10128, %v10240
    %10242 = vmatprep.mubr.bf16.mxu0 %v8055
    %10243 = vmatmul.mubr.bf16.gmra.mxu0 %v8054
    %v10244 = vpop.f32.mrf.mxu0
    %v10245 = vadd.f32 %v10132, %v10244
    %v10246 = vpop.f32.mrf.mxu0
    %v10247 = vadd.f32 %v10134, %v10246
    %v10248 = vpop.f32.mrf.mxu0
    %v10249 = vadd.f32 %v10136, %v10248
    %v10250 = vpop.f32.mrf.mxu0
    %v10251 = vadd.f32 %v10138, %v10250
    %10252 = vmatprep.mubr.bf16.mxu0 %v8073
    %10253 = vmatmul.mubr.bf16.gmra.mxu0 %v8072
    %v10254 = vpop.f32.mrf.mxu0
    %v10255 = vadd.f32 %v10142, %v10254
    %v10256 = vpop.f32.mrf.mxu0
    %v10257 = vadd.f32 %v10144, %v10256
    %v10258 = vpop.f32.mrf.mxu0
    %v10259 = vadd.f32 %v10146, %v10258
    %v10260 = vpop.f32.mrf.mxu0
    %v10261 = vadd.f32 %v10148, %v10260
    %10262 = vmatprep.mubr.bf16.mxu0 %v8091
    %10263 = vmatmul.mubr.bf16.gmra.mxu0 %v8090
    %v10264 = vpop.f32.mrf.mxu0
    %v10265 = vadd.f32 %v10152, %v10264
    %v10266 = vpop.f32.mrf.mxu0
    %v10267 = vadd.f32 %v10154, %v10266
    %v10268 = vpop.f32.mrf.mxu0
    %v10269 = vadd.f32 %v10156, %v10268
    %v10270 = vpop.f32.mrf.mxu0
    %v10271 = vadd.f32 %v10158, %v10270
    %10272 = vmatprep.mubr.bf16.mxu0 %v8109
    %10273 = vmatmul.mubr.bf16.gmra.mxu0 %v8108
    %v10274 = vpop.f32.mrf.mxu0
    %v10275 = vadd.f32 %v10162, %v10274
    %v10276 = vpop.f32.mrf.mxu0
    %v10277 = vadd.f32 %v10164, %v10276
    %v10278 = vpop.f32.mrf.mxu0
    %v10279 = vadd.f32 %v10166, %v10278
    %v10280 = vpop.f32.mrf.mxu0
    %v10281 = vadd.f32 %v10168, %v10280
    %10282 = vmatprep.mubr.bf16.mxu0 %v8127
    %10283 = vmatmul.mubr.bf16.gmra.mxu0 %v8126
    %v10284 = vpop.f32.mrf.mxu0
    %v10285 = vadd.f32 %v10172, %v10284
    %v10286 = vpop.f32.mrf.mxu0
    %v10287 = vadd.f32 %v10174, %v10286
    %v10288 = vpop.f32.mrf.mxu0
    %v10289 = vadd.f32 %v10176, %v10288
    %v10290 = vpop.f32.mrf.mxu0
    %v10291 = vadd.f32 %v10178, %v10290
    %10292 = vmatprep.mubr.bf16.mxu0 %v8145
    %10293 = vmatmul.mubr.bf16.gmra.mxu0 %v8144
    %v10294 = vpop.f32.mrf.mxu0
    %v10295 = vadd.f32 %v10182, %v10294
    %v10296 = vpop.f32.mrf.mxu0
    %v10297 = vadd.f32 %v10184, %v10296
    %v10298 = vpop.f32.mrf.mxu0
    %v10299 = vadd.f32 %v10186, %v10298
    %v10300 = vpop.f32.mrf.mxu0
    %v10301 = vadd.f32 %v10188, %v10300
    %10302 = vdwg.mxu0
    %10303 = vmatprep.subr.bf16.mxu0 %v9337
    %10304 = vmatpush1.bf16.msra.mxu0 %v9336
    %10305 = vmatprep.subr.bf16.mxu0 %v9335
    %10306 = vmatpush1.bf16.msra.mxu0 %v9334
    %10307 = vmatprep.subr.bf16.mxu0 %v9333
    %10308 = vmatpush1.bf16.msra.mxu0 %v9332
    %10309 = vmatprep.subr.bf16.mxu0 %v9331
    %10310 = vmatpush1.bf16.msra.mxu0 %v9330
    %10311 = vmatprep.subr.bf16.mxu0 %v9329
    %10312 = vmatpush1.bf16.msra.mxu0 %v9328
    %10313 = vmatprep.subr.bf16.mxu0 %v9327
    %10314 = vmatpush1.bf16.msra.mxu0 %v9326
    %10315 = vmatprep.subr.bf16.mxu0 %v9325
    %10316 = vmatpush1.bf16.msra.mxu0 %v9324
    %10317 = vmatprep.subr.bf16.mxu0 %v9323
    %10318 = vmatpush1.bf16.msra.mxu0 %v9322
    %10319 = vmatprep.subr.bf16.mxu0 %v9353
    %10320 = vmatpush2.bf16.msra.mxu0 %v9352
    %10321 = vmatprep.subr.bf16.mxu0 %v9351
    %10322 = vmatpush2.bf16.msra.mxu0 %v9350
    %10323 = vmatprep.subr.bf16.mxu0 %v9349
    %10324 = vmatpush2.bf16.msra.mxu0 %v9348
    %10325 = vmatprep.subr.bf16.mxu0 %v9347
    %10326 = vmatpush2.bf16.msra.mxu0 %v9346
    %10327 = vmatprep.subr.bf16.mxu0 %v9345
    %10328 = vmatpush2.bf16.msra.mxu0 %v9344
    %10329 = vmatprep.subr.bf16.mxu0 %v9343
    %10330 = vmatpush2.bf16.msra.mxu0 %v9342
    %10331 = vmatprep.subr.bf16.mxu0 %v9341
    %10332 = vmatpush2.bf16.msra.mxu0 %v9340
    %10333 = vmatprep.subr.bf16.mxu0 %v9339
    %10334 = vmatpush2.bf16.msra.mxu0 %v9338
    %10335 = vmatprep.mubr.bf16.mxu0 %v8021
    %10336 = vmatmul.mubr.bf16.gmra.mxu0 %v8020
    %v10337 = vpop.f32.mrf.mxu0
    %v10338 = vadd.f32 %v10225, %v10337
    %v10339 = vpop.f32.mrf.mxu0
    %v10340 = vadd.f32 %v10227, %v10339
    %v10341 = vpop.f32.mrf.mxu0
    %v10342 = vadd.f32 %v10229, %v10341
    %v10343 = vpop.f32.mrf.mxu0
    %v10344 = vadd.f32 %v10231, %v10343
    %10345 = vmatprep.mubr.bf16.mxu0 %v8039
    %10346 = vmatmul.mubr.bf16.gmra.mxu0 %v8038
    %v10347 = vpop.f32.mrf.mxu0
    %v10348 = vadd.f32 %v10235, %v10347
    %v10349 = vpop.f32.mrf.mxu0
    %v10350 = vadd.f32 %v10237, %v10349
    %v10351 = vpop.f32.mrf.mxu0
    %v10352 = vadd.f32 %v10239, %v10351
    %v10353 = vpop.f32.mrf.mxu0
    %v10354 = vadd.f32 %v10241, %v10353
    %10355 = vmatprep.mubr.bf16.mxu0 %v8057
    %10356 = vmatmul.mubr.bf16.gmra.mxu0 %v8056
    %v10357 = vpop.f32.mrf.mxu0
    %v10358 = vadd.f32 %v10245, %v10357
    %v10359 = vpop.f32.mrf.mxu0
    %v10360 = vadd.f32 %v10247, %v10359
    %v10361 = vpop.f32.mrf.mxu0
    %v10362 = vadd.f32 %v10249, %v10361
    %v10363 = vpop.f32.mrf.mxu0
    %v10364 = vadd.f32 %v10251, %v10363
    %10365 = vmatprep.mubr.bf16.mxu0 %v8075
    %10366 = vmatmul.mubr.bf16.gmra.mxu0 %v8074
    %v10367 = vpop.f32.mrf.mxu0
    %v10368 = vadd.f32 %v10255, %v10367
    %v10369 = vpop.f32.mrf.mxu0
    %v10370 = vadd.f32 %v10257, %v10369
    %v10371 = vpop.f32.mrf.mxu0
    %v10372 = vadd.f32 %v10259, %v10371
    %v10373 = vpop.f32.mrf.mxu0
    %v10374 = vadd.f32 %v10261, %v10373
    %10375 = vmatprep.mubr.bf16.mxu0 %v8093
    %10376 = vmatmul.mubr.bf16.gmra.mxu0 %v8092
    %v10377 = vpop.f32.mrf.mxu0
    %v10378 = vadd.f32 %v10265, %v10377
    %v10379 = vpop.f32.mrf.mxu0
    %v10380 = vadd.f32 %v10267, %v10379
    %v10381 = vpop.f32.mrf.mxu0
    %v10382 = vadd.f32 %v10269, %v10381
    %v10383 = vpop.f32.mrf.mxu0
    %v10384 = vadd.f32 %v10271, %v10383
    %10385 = vmatprep.mubr.bf16.mxu0 %v8111
    %10386 = vmatmul.mubr.bf16.gmra.mxu0 %v8110
    %v10387 = vpop.f32.mrf.mxu0
    %v10388 = vadd.f32 %v10275, %v10387
    %v10389 = vpop.f32.mrf.mxu0
    %v10390 = vadd.f32 %v10277, %v10389
    %v10391 = vpop.f32.mrf.mxu0
    %v10392 = vadd.f32 %v10279, %v10391
    %v10393 = vpop.f32.mrf.mxu0
    %v10394 = vadd.f32 %v10281, %v10393
    %10395 = vmatprep.mubr.bf16.mxu0 %v8129
    %10396 = vmatmul.mubr.bf16.gmra.mxu0 %v8128
    %v10397 = vpop.f32.mrf.mxu0
    %v10398 = vadd.f32 %v10285, %v10397
    %v10399 = vpop.f32.mrf.mxu0
    %v10400 = vadd.f32 %v10287, %v10399
    %v10401 = vpop.f32.mrf.mxu0
    %v10402 = vadd.f32 %v10289, %v10401
    %v10403 = vpop.f32.mrf.mxu0
    %v10404 = vadd.f32 %v10291, %v10403
    %10405 = vmatprep.mubr.bf16.mxu0 %v8147
    %10406 = vmatmul.mubr.bf16.gmra.mxu0 %v8146
    %v10407 = vpop.f32.mrf.mxu0
    %v10408 = vadd.f32 %v10295, %v10407
    %v10409 = vpop.f32.mrf.mxu0
    %v10410 = vadd.f32 %v10297, %v10409
    %v10411 = vpop.f32.mrf.mxu0
    %v10412 = vadd.f32 %v10299, %v10411
    %v10413 = vpop.f32.mrf.mxu0
    %v10414 = vadd.f32 %v10301, %v10413
    %10415 = vdwg.mxu0
    %10416 = vmatprep.subr.bf16.mxu0 %v9369
    %10417 = vmatpush1.bf16.msra.mxu0 %v9368
    %10418 = vmatprep.subr.bf16.mxu0 %v9367
    %10419 = vmatpush1.bf16.msra.mxu0 %v9366
    %10420 = vmatprep.subr.bf16.mxu0 %v9365
    %10421 = vmatpush1.bf16.msra.mxu0 %v9364
    %10422 = vmatprep.subr.bf16.mxu0 %v9363
    %10423 = vmatpush1.bf16.msra.mxu0 %v9362
    %10424 = vmatprep.subr.bf16.mxu0 %v9361
    %10425 = vmatpush1.bf16.msra.mxu0 %v9360
    %10426 = vmatprep.subr.bf16.mxu0 %v9359
    %10427 = vmatpush1.bf16.msra.mxu0 %v9358
    %10428 = vmatprep.subr.bf16.mxu0 %v9357
    %10429 = vmatpush1.bf16.msra.mxu0 %v9356
    %10430 = vmatprep.subr.bf16.mxu0 %v9355
    %10431 = vmatpush1.bf16.msra.mxu0 %v9354
    %10432 = vmatprep.subr.bf16.mxu0 %v9385
    %10433 = vmatpush2.bf16.msra.mxu0 %v9384
    %10434 = vmatprep.subr.bf16.mxu0 %v9383
    %10435 = vmatpush2.bf16.msra.mxu0 %v9382
    %10436 = vmatprep.subr.bf16.mxu0 %v9381
    %10437 = vmatpush2.bf16.msra.mxu0 %v9380
    %10438 = vmatprep.subr.bf16.mxu0 %v9379
    %10439 = vmatpush2.bf16.msra.mxu0 %v9378
    %10440 = vmatprep.subr.bf16.mxu0 %v9377
    %10441 = vmatpush2.bf16.msra.mxu0 %v9376
    %10442 = vmatprep.subr.bf16.mxu0 %v9375
    %10443 = vmatpush2.bf16.msra.mxu0 %v9374
    %10444 = vmatprep.subr.bf16.mxu0 %v9373
    %10445 = vmatpush2.bf16.msra.mxu0 %v9372
    %10446 = vmatprep.subr.bf16.mxu0 %v9371
    %10447 = vmatpush2.bf16.msra.mxu0 %v9370
    %10448 = vmatprep.mubr.bf16.mxu0 %v8023
    %10449 = vmatmul.mubr.bf16.gmra.mxu0 %v8022
    %v10450 = vpop.f32.mrf.mxu0
    %v10451 = vadd.f32 %v10338, %v10450
    %v10452 = vpop.f32.mrf.mxu0
    %v10453 = vadd.f32 %v10340, %v10452
    %v10454 = vpop.f32.mrf.mxu0
    %v10455 = vadd.f32 %v10342, %v10454
    %v10456 = vpop.f32.mrf.mxu0
    %v10457 = vadd.f32 %v10344, %v10456
    %10458 = vmatprep.mubr.bf16.mxu0 %v8041
    %10459 = vmatmul.mubr.bf16.gmra.mxu0 %v8040
    %v10460 = vpop.f32.mrf.mxu0
    %v10461 = vadd.f32 %v10348, %v10460
    %v10462 = vpop.f32.mrf.mxu0
    %v10463 = vadd.f32 %v10350, %v10462
    %v10464 = vpop.f32.mrf.mxu0
    %v10465 = vadd.f32 %v10352, %v10464
    %v10466 = vpop.f32.mrf.mxu0
    %v10467 = vadd.f32 %v10354, %v10466
    %10468 = vmatprep.mubr.bf16.mxu0 %v8059
    %10469 = vmatmul.mubr.bf16.gmra.mxu0 %v8058
    %v10470 = vpop.f32.mrf.mxu0
    %v10471 = vadd.f32 %v10358, %v10470
    %v10472 = vpop.f32.mrf.mxu0
    %v10473 = vadd.f32 %v10360, %v10472
    %v10474 = vpop.f32.mrf.mxu0
    %v10475 = vadd.f32 %v10362, %v10474
    %v10476 = vpop.f32.mrf.mxu0
    %v10477 = vadd.f32 %v10364, %v10476
    %10478 = vmatprep.mubr.bf16.mxu0 %v8077
    %10479 = vmatmul.mubr.bf16.gmra.mxu0 %v8076
    %v10480 = vpop.f32.mrf.mxu0
    %v10481 = vadd.f32 %v10368, %v10480
    %v10482 = vpop.f32.mrf.mxu0
    %v10483 = vadd.f32 %v10370, %v10482
    %v10484 = vpop.f32.mrf.mxu0
    %v10485 = vadd.f32 %v10372, %v10484
    %v10486 = vpop.f32.mrf.mxu0
    %v10487 = vadd.f32 %v10374, %v10486
    %10488 = vmatprep.mubr.bf16.mxu0 %v8095
    %10489 = vmatmul.mubr.bf16.gmra.mxu0 %v8094
    %v10490 = vpop.f32.mrf.mxu0
    %v10491 = vadd.f32 %v10378, %v10490
    %v10492 = vpop.f32.mrf.mxu0
    %v10493 = vadd.f32 %v10380, %v10492
    %v10494 = vpop.f32.mrf.mxu0
    %v10495 = vadd.f32 %v10382, %v10494
    %v10496 = vpop.f32.mrf.mxu0
    %v10497 = vadd.f32 %v10384, %v10496
    %10498 = vmatprep.mubr.bf16.mxu0 %v8113
    %10499 = vmatmul.mubr.bf16.gmra.mxu0 %v8112
    %v10500 = vpop.f32.mrf.mxu0
    %v10501 = vadd.f32 %v10388, %v10500
    %v10502 = vpop.f32.mrf.mxu0
    %v10503 = vadd.f32 %v10390, %v10502
    %v10504 = vpop.f32.mrf.mxu0
    %v10505 = vadd.f32 %v10392, %v10504
    %v10506 = vpop.f32.mrf.mxu0
    %v10507 = vadd.f32 %v10394, %v10506
    %10508 = vmatprep.mubr.bf16.mxu0 %v8131
    %10509 = vmatmul.mubr.bf16.gmra.mxu0 %v8130
    %v10510 = vpop.f32.mrf.mxu0
    %v10511 = vadd.f32 %v10398, %v10510
    %v10512 = vpop.f32.mrf.mxu0
    %v10513 = vadd.f32 %v10400, %v10512
    %v10514 = vpop.f32.mrf.mxu0
    %v10515 = vadd.f32 %v10402, %v10514
    %v10516 = vpop.f32.mrf.mxu0
    %v10517 = vadd.f32 %v10404, %v10516
    %10518 = vmatprep.mubr.bf16.mxu0 %v8149
    %10519 = vmatmul.mubr.bf16.gmra.mxu0 %v8148
    %v10520 = vpop.f32.mrf.mxu0
    %v10521 = vadd.f32 %v10408, %v10520
    %v10522 = vpop.f32.mrf.mxu0
    %v10523 = vadd.f32 %v10410, %v10522
    %v10524 = vpop.f32.mrf.mxu0
    %v10525 = vadd.f32 %v10412, %v10524
    %v10526 = vpop.f32.mrf.mxu0
    %v10527 = vadd.f32 %v10414, %v10526
    %10528 = vdwg.mxu0
    %10529 = vmatprep.subr.bf16.mxu0 %v9401
    %10530 = vmatpush1.bf16.msra.mxu0 %v9400
    %10531 = vmatprep.subr.bf16.mxu0 %v9399
    %10532 = vmatpush1.bf16.msra.mxu0 %v9398
    %10533 = vmatprep.subr.bf16.mxu0 %v9397
    %10534 = vmatpush1.bf16.msra.mxu0 %v9396
    %10535 = vmatprep.subr.bf16.mxu0 %v9395
    %10536 = vmatpush1.bf16.msra.mxu0 %v9394
    %10537 = vmatprep.subr.bf16.mxu0 %v9393
    %10538 = vmatpush1.bf16.msra.mxu0 %v9392
    %10539 = vmatprep.subr.bf16.mxu0 %v9391
    %10540 = vmatpush1.bf16.msra.mxu0 %v9390
    %10541 = vmatprep.subr.bf16.mxu0 %v9389
    %10542 = vmatpush1.bf16.msra.mxu0 %v9388
    %10543 = vmatprep.subr.bf16.mxu0 %v9387
    %10544 = vmatpush1.bf16.msra.mxu0 %v9386
    %10545 = vmatprep.subr.bf16.mxu0 %v9417
    %10546 = vmatpush2.bf16.msra.mxu0 %v9416
    %10547 = vmatprep.subr.bf16.mxu0 %v9415
    %10548 = vmatpush2.bf16.msra.mxu0 %v9414
    %10549 = vmatprep.subr.bf16.mxu0 %v9413
    %10550 = vmatpush2.bf16.msra.mxu0 %v9412
    %10551 = vmatprep.subr.bf16.mxu0 %v9411
    %10552 = vmatpush2.bf16.msra.mxu0 %v9410
    %10553 = vmatprep.subr.bf16.mxu0 %v9409
    %10554 = vmatpush2.bf16.msra.mxu0 %v9408
    %10555 = vmatprep.subr.bf16.mxu0 %v9407
    %10556 = vmatpush2.bf16.msra.mxu0 %v9406
    %10557 = vmatprep.subr.bf16.mxu0 %v9405
    %10558 = vmatpush2.bf16.msra.mxu0 %v9404
    %10559 = vmatprep.subr.bf16.mxu0 %v9403
    %10560 = vmatpush2.bf16.msra.mxu0 %v9402
    %10561 = vmatprep.mubr.bf16.mxu0 %v8025
    %10562 = vmatmul.mubr.bf16.gmra.mxu0 %v8024
    %v10563 = vpop.f32.mrf.mxu0
    %v10564 = vadd.f32 %v10451, %v10563
    %v10565 = vpop.f32.mrf.mxu0
    %v10566 = vadd.f32 %v10453, %v10565
    %v10567 = vpop.f32.mrf.mxu0
    %v10568 = vadd.f32 %v10455, %v10567
    %v10569 = vpop.f32.mrf.mxu0
    %v10570 = vadd.f32 %v10457, %v10569
    %10571 = vmatprep.mubr.bf16.mxu0 %v8043
    %10572 = vmatmul.mubr.bf16.gmra.mxu0 %v8042
    %v10573 = vpop.f32.mrf.mxu0
    %v10574 = vadd.f32 %v10461, %v10573
    %v10575 = vpop.f32.mrf.mxu0
    %v10576 = vadd.f32 %v10463, %v10575
    %v10577 = vpop.f32.mrf.mxu0
    %v10578 = vadd.f32 %v10465, %v10577
    %v10579 = vpop.f32.mrf.mxu0
    %v10580 = vadd.f32 %v10467, %v10579
    %10581 = vmatprep.mubr.bf16.mxu0 %v8061
    %10582 = vmatmul.mubr.bf16.gmra.mxu0 %v8060
    %v10583 = vpop.f32.mrf.mxu0
    %v10584 = vadd.f32 %v10471, %v10583
    %v10585 = vpop.f32.mrf.mxu0
    %v10586 = vadd.f32 %v10473, %v10585
    %v10587 = vpop.f32.mrf.mxu0
    %v10588 = vadd.f32 %v10475, %v10587
    %v10589 = vpop.f32.mrf.mxu0
    %v10590 = vadd.f32 %v10477, %v10589
    %10591 = vmatprep.mubr.bf16.mxu0 %v8079
    %10592 = vmatmul.mubr.bf16.gmra.mxu0 %v8078
    %v10593 = vpop.f32.mrf.mxu0
    %v10594 = vadd.f32 %v10481, %v10593
    %v10595 = vpop.f32.mrf.mxu0
    %v10596 = vadd.f32 %v10483, %v10595
    %v10597 = vpop.f32.mrf.mxu0
    %v10598 = vadd.f32 %v10485, %v10597
    %v10599 = vpop.f32.mrf.mxu0
    %v10600 = vadd.f32 %v10487, %v10599
    %10601 = vmatprep.mubr.bf16.mxu0 %v8097
    %10602 = vmatmul.mubr.bf16.gmra.mxu0 %v8096
    %v10603 = vpop.f32.mrf.mxu0
    %v10604 = vadd.f32 %v10491, %v10603
    %v10605 = vpop.f32.mrf.mxu0
    %v10606 = vadd.f32 %v10493, %v10605
    %v10607 = vpop.f32.mrf.mxu0
    %v10608 = vadd.f32 %v10495, %v10607
    %v10609 = vpop.f32.mrf.mxu0
    %v10610 = vadd.f32 %v10497, %v10609
    %10611 = vmatprep.mubr.bf16.mxu0 %v8115
    %10612 = vmatmul.mubr.bf16.gmra.mxu0 %v8114
    %v10613 = vpop.f32.mrf.mxu0
    %v10614 = vadd.f32 %v10501, %v10613
    %v10615 = vpop.f32.mrf.mxu0
    %v10616 = vadd.f32 %v10503, %v10615
    %v10617 = vpop.f32.mrf.mxu0
    %v10618 = vadd.f32 %v10505, %v10617
    %v10619 = vpop.f32.mrf.mxu0
    %v10620 = vadd.f32 %v10507, %v10619
    %10621 = vmatprep.mubr.bf16.mxu0 %v8133
    %10622 = vmatmul.mubr.bf16.gmra.mxu0 %v8132
    %v10623 = vpop.f32.mrf.mxu0
    %v10624 = vadd.f32 %v10511, %v10623
    %v10625 = vpop.f32.mrf.mxu0
    %v10626 = vadd.f32 %v10513, %v10625
    %v10627 = vpop.f32.mrf.mxu0
    %v10628 = vadd.f32 %v10515, %v10627
    %v10629 = vpop.f32.mrf.mxu0
    %v10630 = vadd.f32 %v10517, %v10629
    %10631 = vmatprep.mubr.bf16.mxu0 %v8151
    %10632 = vmatmul.mubr.bf16.gmra.mxu0 %v8150
    %v10633 = vpop.f32.mrf.mxu0
    %v10634 = vadd.f32 %v10521, %v10633
    %v10635 = vpop.f32.mrf.mxu0
    %v10636 = vadd.f32 %v10523, %v10635
    %v10637 = vpop.f32.mrf.mxu0
    %v10638 = vadd.f32 %v10525, %v10637
    %v10639 = vpop.f32.mrf.mxu0
    %v10640 = vadd.f32 %v10527, %v10639
    %10641 = vdwg.mxu0
    %10642 = vmatprep.subr.bf16.mxu0 %v9433
    %10643 = vmatpush1.bf16.msra.mxu0 %v9432
    %10644 = vmatprep.subr.bf16.mxu0 %v9431
    %10645 = vmatpush1.bf16.msra.mxu0 %v9430
    %10646 = vmatprep.subr.bf16.mxu0 %v9429
    %10647 = vmatpush1.bf16.msra.mxu0 %v9428
    %10648 = vmatprep.subr.bf16.mxu0 %v9427
    %10649 = vmatpush1.bf16.msra.mxu0 %v9426
    %10650 = vmatprep.subr.bf16.mxu0 %v9425
    %10651 = vmatpush1.bf16.msra.mxu0 %v9424
    %10652 = vmatprep.subr.bf16.mxu0 %v9423
    %10653 = vmatpush1.bf16.msra.mxu0 %v9422
    %10654 = vmatprep.subr.bf16.mxu0 %v9421
    %10655 = vmatpush1.bf16.msra.mxu0 %v9420
    %10656 = vmatprep.subr.bf16.mxu0 %v9419
    %10657 = vmatpush1.bf16.msra.mxu0 %v9418
    %10658 = vmatprep.subr.bf16.mxu0 %v9449
    %10659 = vmatpush2.bf16.msra.mxu0 %v9448
    %10660 = vmatprep.subr.bf16.mxu0 %v9447
    %10661 = vmatpush2.bf16.msra.mxu0 %v9446
    %10662 = vmatprep.subr.bf16.mxu0 %v9445
    %10663 = vmatpush2.bf16.msra.mxu0 %v9444
    %10664 = vmatprep.subr.bf16.mxu0 %v9443
    %10665 = vmatpush2.bf16.msra.mxu0 %v9442
    %10666 = vmatprep.subr.bf16.mxu0 %v9441
    %10667 = vmatpush2.bf16.msra.mxu0 %v9440
    %10668 = vmatprep.subr.bf16.mxu0 %v9439
    %10669 = vmatpush2.bf16.msra.mxu0 %v9438
    %10670 = vmatprep.subr.bf16.mxu0 %v9437
    %10671 = vmatpush2.bf16.msra.mxu0 %v9436
    %10672 = vmatprep.subr.bf16.mxu0 %v9435
    %10673 = vmatpush2.bf16.msra.mxu0 %v9434
    %10674 = vmatprep.mubr.bf16.mxu0 %v8027
    %10675 = vmatmul.mubr.bf16.gmra.mxu0 %v8026
    %v10676 = vpop.f32.mrf.mxu0
    %v10677 = vadd.f32 %v10564, %v10676
    %v10678 = vpop.f32.mrf.mxu0
    %v10679 = vadd.f32 %v10566, %v10678
    %v10680 = vpop.f32.mrf.mxu0
    %v10681 = vadd.f32 %v10568, %v10680
    %v10682 = vpop.f32.mrf.mxu0
    %v10683 = vadd.f32 %v10570, %v10682
    %10684 = vmatprep.mubr.bf16.mxu0 %v8045
    %10685 = vmatmul.mubr.bf16.gmra.mxu0 %v8044
    %v10686 = vpop.f32.mrf.mxu0
    %v10687 = vadd.f32 %v10574, %v10686
    %v10688 = vpop.f32.mrf.mxu0
    %v10689 = vadd.f32 %v10576, %v10688
    %v10690 = vpop.f32.mrf.mxu0
    %v10691 = vadd.f32 %v10578, %v10690
    %v10692 = vpop.f32.mrf.mxu0
    %v10693 = vadd.f32 %v10580, %v10692
    %10694 = vmatprep.mubr.bf16.mxu0 %v8063
    %10695 = vmatmul.mubr.bf16.gmra.mxu0 %v8062
    %v10696 = vpop.f32.mrf.mxu0
    %v10697 = vadd.f32 %v10584, %v10696
    %v10698 = vpop.f32.mrf.mxu0
    %v10699 = vadd.f32 %v10586, %v10698
    %v10700 = vpop.f32.mrf.mxu0
    %v10701 = vadd.f32 %v10588, %v10700
    %v10702 = vpop.f32.mrf.mxu0
    %v10703 = vadd.f32 %v10590, %v10702
    %10704 = vmatprep.mubr.bf16.mxu0 %v8081
    %10705 = vmatmul.mubr.bf16.gmra.mxu0 %v8080
    %v10706 = vpop.f32.mrf.mxu0
    %v10707 = vadd.f32 %v10594, %v10706
    %v10708 = vpop.f32.mrf.mxu0
    %v10709 = vadd.f32 %v10596, %v10708
    %v10710 = vpop.f32.mrf.mxu0
    %v10711 = vadd.f32 %v10598, %v10710
    %v10712 = vpop.f32.mrf.mxu0
    %v10713 = vadd.f32 %v10600, %v10712
    %10714 = vmatprep.mubr.bf16.mxu0 %v8099
    %10715 = vmatmul.mubr.bf16.gmra.mxu0 %v8098
    %v10716 = vpop.f32.mrf.mxu0
    %v10717 = vadd.f32 %v10604, %v10716
    %v10718 = vpop.f32.mrf.mxu0
    %v10719 = vadd.f32 %v10606, %v10718
    %v10720 = vpop.f32.mrf.mxu0
    %v10721 = vadd.f32 %v10608, %v10720
    %v10722 = vpop.f32.mrf.mxu0
    %v10723 = vadd.f32 %v10610, %v10722
    %10724 = vmatprep.mubr.bf16.mxu0 %v8117
    %10725 = vmatmul.mubr.bf16.gmra.mxu0 %v8116
    %v10726 = vpop.f32.mrf.mxu0
    %v10727 = vadd.f32 %v10614, %v10726
    %v10728 = vpop.f32.mrf.mxu0
    %v10729 = vadd.f32 %v10616, %v10728
    %v10730 = vpop.f32.mrf.mxu0
    %v10731 = vadd.f32 %v10618, %v10730
    %v10732 = vpop.f32.mrf.mxu0
    %v10733 = vadd.f32 %v10620, %v10732
    %10734 = vmatprep.mubr.bf16.mxu0 %v8135
    %10735 = vmatmul.mubr.bf16.gmra.mxu0 %v8134
    %v10736 = vpop.f32.mrf.mxu0
    %v10737 = vadd.f32 %v10624, %v10736
    %v10738 = vpop.f32.mrf.mxu0
    %v10739 = vadd.f32 %v10626, %v10738
    %v10740 = vpop.f32.mrf.mxu0
    %v10741 = vadd.f32 %v10628, %v10740
    %v10742 = vpop.f32.mrf.mxu0
    %v10743 = vadd.f32 %v10630, %v10742
    %10744 = vmatprep.mubr.bf16.mxu0 %v8153
    %10745 = vmatmul.mubr.bf16.gmra.mxu0 %v8152
    %v10746 = vpop.f32.mrf.mxu0
    %v10747 = vadd.f32 %v10634, %v10746
    %v10748 = vpop.f32.mrf.mxu0
    %v10749 = vadd.f32 %v10636, %v10748
    %v10750 = vpop.f32.mrf.mxu0
    %v10751 = vadd.f32 %v10638, %v10750
    %v10752 = vpop.f32.mrf.mxu0
    %v10753 = vadd.f32 %v10640, %v10752
    %10754 = vdwg.mxu0
    %v10755 = vadd.f32 %v10677, %v10681
    %v10756 = vadd.f32 %v10755, %v10687
    %v10757 = vadd.f32 %v10756, %v10691
    %v10758 = vadd.f32 %v10757, %v10697
    %v10759 = vadd.f32 %v10758, %v10701
    %v10760 = vadd.f32 %v10759, %v10707
    %v10761 = vadd.f32 %v10760, %v10711
    %v10762 = vrot.slane %v10761, 4
    %v10763 = vadd.f32 %v10761, %v10762
    %v10764 = vrot.slane %v10763, 2
    %v10765 = vadd.f32 %v10763, %v10764
    %v10766 = vrot.slane %v10765, 1
    %v10767 = vadd.f32 %v10765, %v10766
    %v10768 = vadd.f32 %v10679, %v10683
    %v10769 = vadd.f32 %v10768, %v10689
    %v10770 = vadd.f32 %v10769, %v10693
    %v10771 = vadd.f32 %v10770, %v10699
    %v10772 = vadd.f32 %v10771, %v10703
    %v10773 = vadd.f32 %v10772, %v10709
    %v10774 = vadd.f32 %v10773, %v10713
    %v10775 = vrot.slane %v10774, 4
    %v10776 = vadd.f32 %v10774, %v10775
    %v10777 = vrot.slane %v10776, 2
    %v10778 = vadd.f32 %v10776, %v10777
    %v10779 = vrot.slane %v10778, 1
    %v10780 = vadd.f32 %v10778, %v10779
    %v10781 = vadd.f32 %v10717, %v10721
    %v10782 = vadd.f32 %v10781, %v10727
    %v10783 = vadd.f32 %v10782, %v10731
    %v10784 = vadd.f32 %v10783, %v10737
    %v10785 = vadd.f32 %v10784, %v10741
    %v10786 = vadd.f32 %v10785, %v10747
    %v10787 = vadd.f32 %v10786, %v10751
    %v10788 = vrot.slane %v10787, 4
    %v10789 = vadd.f32 %v10787, %v10788
    %v10790 = vrot.slane %v10789, 2
    %v10791 = vadd.f32 %v10789, %v10790
    %v10792 = vrot.slane %v10791, 1
    %v10793 = vadd.f32 %v10791, %v10792
    %v10794 = vadd.f32 %v10719, %v10723
    %v10795 = vadd.f32 %v10794, %v10729
    %v10796 = vadd.f32 %v10795, %v10733
    %v10797 = vadd.f32 %v10796, %v10739
    %v10798 = vadd.f32 %v10797, %v10743
    %v10799 = vadd.f32 %v10798, %v10749
    %v10800 = vadd.f32 %v10799, %v10753
    %v10801 = vrot.slane %v10800, 4
    %v10802 = vadd.f32 %v10800, %v10801
    %v10803 = vrot.slane %v10802, 2
    %v10804 = vadd.f32 %v10802, %v10803
    %v10805 = vrot.slane %v10804, 1
    %v10806 = vadd.f32 %v10804, %v10805
    %v10807 = vmul.f32 %v10767, %v5418
    %v10808 = vmul.f32 %v10780, %v5418
    %v10809 = vmul.f32 %v10793, %v5418
    %v10810 = vmul.f32 %v10806, %v5418
    %v10811 = vmul.f32 %v10677, %v10677
    %v10812 = vmul.f32 %v10679, %v10679
    %v10813 = vmul.f32 %v10681, %v10681
    %v10814 = vmul.f32 %v10683, %v10683
    %v10815 = vmul.f32 %v10687, %v10687
    %v10816 = vmul.f32 %v10689, %v10689
    %v10817 = vmul.f32 %v10691, %v10691
    %v10818 = vmul.f32 %v10693, %v10693
    %v10819 = vmul.f32 %v10697, %v10697
    %v10820 = vmul.f32 %v10699, %v10699
    %v10821 = vmul.f32 %v10701, %v10701
    %v10822 = vmul.f32 %v10703, %v10703
    %v10823 = vmul.f32 %v10707, %v10707
    %v10824 = vmul.f32 %v10709, %v10709
    %v10825 = vmul.f32 %v10711, %v10711
    %v10826 = vmul.f32 %v10713, %v10713
    %v10827 = vmul.f32 %v10717, %v10717
    %v10828 = vmul.f32 %v10719, %v10719
    %v10829 = vmul.f32 %v10721, %v10721
    %v10830 = vmul.f32 %v10723, %v10723
    %v10831 = vmul.f32 %v10727, %v10727
    %v10832 = vmul.f32 %v10729, %v10729
    %v10833 = vmul.f32 %v10731, %v10731
    %v10834 = vmul.f32 %v10733, %v10733
    %v10835 = vmul.f32 %v10737, %v10737
    %v10836 = vmul.f32 %v10739, %v10739
    %v10837 = vmul.f32 %v10741, %v10741
    %v10838 = vmul.f32 %v10743, %v10743
    %v10839 = vmul.f32 %v10747, %v10747
    %v10840 = vmul.f32 %v10749, %v10749
    %v10841 = vmul.f32 %v10751, %v10751
    %v10842 = vmul.f32 %v10753, %v10753
    %v10843 = vadd.f32 %v10811, %v10813
    %v10844 = vadd.f32 %v10843, %v10815
    %v10845 = vadd.f32 %v10844, %v10817
    %v10846 = vadd.f32 %v10845, %v10819
    %v10847 = vadd.f32 %v10846, %v10821
    %v10848 = vadd.f32 %v10847, %v10823
    %v10849 = vadd.f32 %v10848, %v10825
    %v10850 = vrot.slane %v10849, 4
    %v10851 = vadd.f32 %v10849, %v10850
    %v10852 = vrot.slane %v10851, 2
    %v10853 = vadd.f32 %v10851, %v10852
    %v10854 = vrot.slane %v10853, 1
    %v10855 = vadd.f32 %v10853, %v10854
    %v10856 = vadd.f32 %v10812, %v10814
    %v10857 = vadd.f32 %v10856, %v10816
    %v10858 = vadd.f32 %v10857, %v10818
    %v10859 = vadd.f32 %v10858, %v10820
    %v10860 = vadd.f32 %v10859, %v10822
    %v10861 = vadd.f32 %v10860, %v10824
    %v10862 = vadd.f32 %v10861, %v10826
    %v10863 = vrot.slane %v10862, 4
    %v10864 = vadd.f32 %v10862, %v10863
    %v10865 = vrot.slane %v10864, 2
    %v10866 = vadd.f32 %v10864, %v10865
    %v10867 = vrot.slane %v10866, 1
    %v10868 = vadd.f32 %v10866, %v10867
    %v10869 = vadd.f32 %v10827, %v10829
    %v10870 = vadd.f32 %v10869, %v10831
    %v10871 = vadd.f32 %v10870, %v10833
    %v10872 = vadd.f32 %v10871, %v10835
    %v10873 = vadd.f32 %v10872, %v10837
    %v10874 = vadd.f32 %v10873, %v10839
    %v10875 = vadd.f32 %v10874, %v10841
    %v10876 = vrot.slane %v10875, 4
    %v10877 = vadd.f32 %v10875, %v10876
    %v10878 = vrot.slane %v10877, 2
    %v10879 = vadd.f32 %v10877, %v10878
    %v10880 = vrot.slane %v10879, 1
    %v10881 = vadd.f32 %v10879, %v10880
    %v10882 = vadd.f32 %v10828, %v10830
    %v10883 = vadd.f32 %v10882, %v10832
    %v10884 = vadd.f32 %v10883, %v10834
    %v10885 = vadd.f32 %v10884, %v10836
    %v10886 = vadd.f32 %v10885, %v10838
    %v10887 = vadd.f32 %v10886, %v10840
    %v10888 = vadd.f32 %v10887, %v10842
    %v10889 = vrot.slane %v10888, 4
    %v10890 = vadd.f32 %v10888, %v10889
    %v10891 = vrot.slane %v10890, 2
    %v10892 = vadd.f32 %v10890, %v10891
    %v10893 = vrot.slane %v10892, 1
    %v10894 = vadd.f32 %v10892, %v10893
    %v10895 = vmul.f32 %v10855, %v5418
    %v10896 = vmul.f32 %v10868, %v5418
    %v10897 = vmul.f32 %v10881, %v5418
    %v10898 = vmul.f32 %v10894, %v5418
    %v10899 = vmul.f32 %v10807, %v10807
    %v10900 = vmul.f32 %v10808, %v10808
    %v10901 = vmul.f32 %v10809, %v10809
    %v10902 = vmul.f32 %v10810, %v10810
    %v10903 = vsub.f32 %v10895, %v10899
    %v10904 = vsub.f32 %v10896, %v10900
    %v10905 = vsub.f32 %v10897, %v10901
    %v10906 = vsub.f32 %v10898, %v10902
    %v10907 = vadd.f32 %v10903, 1e-05
    %v10908 = vadd.f32 %v10904, 1e-05
    %v10909 = vadd.f32 %v10905, 1e-05
    %v10910 = vadd.f32 %v10906, 1e-05
    %v10911 = vrsqrt.pop %v10907
    %v10912 = vrsqrt.pop %v10908
    %v10913 = vrsqrt.pop %v10909
    %v10914 = vrsqrt.pop %v10910
    %v10915 = vmul.f32 %v10677, %v10911
    %v10916 = vmul.f32 %v10679, %v10912
    %v10917 = vmul.f32 %v10681, %v10911
    %v10918 = vmul.f32 %v10683, %v10912
    %v10919 = vmul.f32 %v10687, %v10911
    %v10920 = vmul.f32 %v10689, %v10912
    %v10921 = vmul.f32 %v10691, %v10911
    %v10922 = vmul.f32 %v10693, %v10912
    %v10923 = vmul.f32 %v10697, %v10911
    %v10924 = vmul.f32 %v10699, %v10912
    %v10925 = vmul.f32 %v10701, %v10911
    %v10926 = vmul.f32 %v10703, %v10912
    %v10927 = vmul.f32 %v10707, %v10911
    %v10928 = vmul.f32 %v10709, %v10912
    %v10929 = vmul.f32 %v10711, %v10911
    %v10930 = vmul.f32 %v10713, %v10912
    %v10931 = vmul.f32 %v10717, %v10913
    %v10932 = vmul.f32 %v10719, %v10914
    %v10933 = vmul.f32 %v10721, %v10913
    %v10934 = vmul.f32 %v10723, %v10914
    %v10935 = vmul.f32 %v10727, %v10913
    %v10936 = vmul.f32 %v10729, %v10914
    %v10937 = vmul.f32 %v10731, %v10913
    %v10938 = vmul.f32 %v10733, %v10914
    %v10939 = vmul.f32 %v10737, %v10913
    %v10940 = vmul.f32 %v10739, %v10914
    %v10941 = vmul.f32 %v10741, %v10913
    %v10942 = vmul.f32 %v10743, %v10914
    %v10943 = vmul.f32 %v10747, %v10913
    %v10944 = vmul.f32 %v10749, %v10914
    %v10945 = vmul.f32 %v10751, %v10913
    %v10946 = vmul.f32 %v10753, %v10914
    %v10947 = vmul.f32 %v10807, %v10911
    %v10948 = vmul.f32 %v10808, %v10912
    %v10949 = vmul.f32 %v10809, %v10913
    %v10950 = vmul.f32 %v10810, %v10914
    %v10951 = vsub.f32 %v10915, %v10947
    %v10952 = vsub.f32 %v10916, %v10948
    %v10953 = vsub.f32 %v10917, %v10947
    %v10954 = vsub.f32 %v10918, %v10948
    %v10955 = vsub.f32 %v10919, %v10947
    %v10956 = vsub.f32 %v10920, %v10948
    %v10957 = vsub.f32 %v10921, %v10947
    %v10958 = vsub.f32 %v10922, %v10948
    %v10959 = vsub.f32 %v10923, %v10947
    %v10960 = vsub.f32 %v10924, %v10948
    %v10961 = vsub.f32 %v10925, %v10947
    %v10962 = vsub.f32 %v10926, %v10948
    %v10963 = vsub.f32 %v10927, %v10947
    %v10964 = vsub.f32 %v10928, %v10948
    %v10965 = vsub.f32 %v10929, %v10947
    %v10966 = vsub.f32 %v10930, %v10948
    %v10967 = vsub.f32 %v10931, %v10949
    %v10968 = vsub.f32 %v10932, %v10950
    %v10969 = vsub.f32 %v10933, %v10949
    %v10970 = vsub.f32 %v10934, %v10950
    %v10971 = vsub.f32 %v10935, %v10949
    %v10972 = vsub.f32 %v10936, %v10950
    %v10973 = vsub.f32 %v10937, %v10949
    %v10974 = vsub.f32 %v10938, %v10950
    %v10975 = vsub.f32 %v10939, %v10949
    %v10976 = vsub.f32 %v10940, %v10950
    %v10977 = vsub.f32 %v10941, %v10949
    %v10978 = vsub.f32 %v10942, %v10950
    %v10979 = vsub.f32 %v10943, %v10949
    %v10980 = vsub.f32 %v10944, %v10950
    %v10981 = vsub.f32 %v10945, %v10949
    %v10982 = vsub.f32 %v10946, %v10950
    %v10983 = vld [vmem:[#allocation3] sm:$0xff]
    %v10984 = vld [vmem:[#allocation3 + $0x8] sm:$0xff]
    %v10985 = vld [vmem:[#allocation3 + $0x10] sm:$0xff]
    %v10986 = vld [vmem:[#allocation3 + $0x18] sm:$0xff]
    %v10987 = vld [vmem:[#allocation3 + $0x20] sm:$0xff]
    %v10988 = vld [vmem:[#allocation3 + $0x28] sm:$0xff]
    %v10989 = vld [vmem:[#allocation3 + $0x30] sm:$0xff]
    %v10990 = vld [vmem:[#allocation3 + $0x38] sm:$0xff]
    %v10991 = vld [vmem:[#allocation3 + $0x40] sm:$0xff]
    %v10992 = vld [vmem:[#allocation3 + $0x48] sm:$0xff]
    %v10993 = vld [vmem:[#allocation3 + $0x50] sm:$0xff]
    %v10994 = vld [vmem:[#allocation3 + $0x58] sm:$0xff]
    %v10995 = vld [vmem:[#allocation3 + $0x60] sm:$0xff]
    %v10996 = vld [vmem:[#allocation3 + $0x68] sm:$0xff]
    %v10997 = vld [vmem:[#allocation3 + $0x70] sm:$0xff]
    %v10998 = vld [vmem:[#allocation3 + $0x78] sm:$0xff]
    %v10999 = vld [vmem:[#allocation3 + $0x80] sm:$0xff]
    %v11000 = vld [vmem:[#allocation3 + $0x88] sm:$0xff]
    %v11001 = vld [vmem:[#allocation3 + $0x90] sm:$0xff]
    %v11002 = vld [vmem:[#allocation3 + $0x98] sm:$0xff]
    %v11003 = vld [vmem:[#allocation3 + $0xa0] sm:$0xff]
    %v11004 = vld [vmem:[#allocation3 + $0xa8] sm:$0xff]
    %v11005 = vld [vmem:[#allocation3 + $0xb0] sm:$0xff]
    %v11006 = vld [vmem:[#allocation3 + $0xb8] sm:$0xff]
    %v11007 = vld [vmem:[#allocation3 + $0xc0] sm:$0xff]
    %v11008 = vld [vmem:[#allocation3 + $0xc8] sm:$0xff]
    %v11009 = vld [vmem:[#allocation3 + $0xd0] sm:$0xff]
    %v11010 = vld [vmem:[#allocation3 + $0xd8] sm:$0xff]
    %v11011 = vld [vmem:[#allocation3 + $0xe0] sm:$0xff]
    %v11012 = vld [vmem:[#allocation3 + $0xe8] sm:$0xff]
    %v11013 = vld [vmem:[#allocation3 + $0xf0] sm:$0xff]
    %v11014 = vld [vmem:[#allocation3 + $0xf8] sm:$0xff]
    %v11015 = vadd.f32 %v10951, %v10983
    %v11016 = vadd.f32 %v10952, %v10984
    %v11017 = vadd.f32 %v10953, %v10985
    %v11018 = vadd.f32 %v10954, %v10986
    %v11019 = vadd.f32 %v10955, %v10987
    %v11020 = vadd.f32 %v10956, %v10988
    %v11021 = vadd.f32 %v10957, %v10989
    %v11022 = vadd.f32 %v10958, %v10990
    %v11023 = vadd.f32 %v10959, %v10991
    %v11024 = vadd.f32 %v10960, %v10992
    %v11025 = vadd.f32 %v10961, %v10993
    %v11026 = vadd.f32 %v10962, %v10994
    %v11027 = vadd.f32 %v10963, %v10995
    %v11028 = vadd.f32 %v10964, %v10996
    %v11029 = vadd.f32 %v10965, %v10997
    %v11030 = vadd.f32 %v10966, %v10998
    %v11031 = vadd.f32 %v10967, %v10999
    %v11032 = vadd.f32 %v10968, %v11000
    %v11033 = vadd.f32 %v10969, %v11001
    %v11034 = vadd.f32 %v10970, %v11002
    %v11035 = vadd.f32 %v10971, %v11003
    %v11036 = vadd.f32 %v10972, %v11004
    %v11037 = vadd.f32 %v10973, %v11005
    %v11038 = vadd.f32 %v10974, %v11006
    %v11039 = vadd.f32 %v10975, %v11007
    %v11040 = vadd.f32 %v10976, %v11008
    %v11041 = vadd.f32 %v10977, %v11009
    %v11042 = vadd.f32 %v10978, %v11010
    %v11043 = vadd.f32 %v10979, %v11011
    %v11044 = vadd.f32 %v10980, %v11012
    %v11045 = vadd.f32 %v10981, %v11013
    %v11046 = vadd.f32 %v10982, %v11014
    %11047 = vst [vmem:[#allocation9] sm:$0xff] %v11015
    %11048 = vst [vmem:[#allocation9 + $0x8] sm:$0xff] %v11016
    %11049 = vst [vmem:[#allocation9 + $0x10] sm:$0xff] %v11017
    %11050 = vst [vmem:[#allocation9 + $0x18] sm:$0xff] %v11018
    %11051 = vst [vmem:[#allocation9 + $0x20] sm:$0xff] %v11019
    %11052 = vst [vmem:[#allocation9 + $0x28] sm:$0xff] %v11020
    %11053 = vst [vmem:[#allocation9 + $0x30] sm:$0xff] %v11021
    %11054 = vst [vmem:[#allocation9 + $0x38] sm:$0xff] %v11022
    %11055 = vst [vmem:[#allocation9 + $0x40] sm:$0xff] %v11023
    %11056 = vst [vmem:[#allocation9 + $0x48] sm:$0xff] %v11024
    %11057 = vst [vmem:[#allocation9 + $0x50] sm:$0xff] %v11025
    %11058 = vst [vmem:[#allocation9 + $0x58] sm:$0xff] %v11026
    %11059 = vst [vmem:[#allocation9 + $0x60] sm:$0xff] %v11027
    %11060 = vst [vmem:[#allocation9 + $0x68] sm:$0xff] %v11028
    %11061 = vst [vmem:[#allocation9 + $0x70] sm:$0xff] %v11029
    %11062 = vst [vmem:[#allocation9 + $0x78] sm:$0xff] %v11030
    %11063 = vst [vmem:[#allocation9 + $0x80] sm:$0xff] %v11031
    %11064 = vst [vmem:[#allocation9 + $0x88] sm:$0xff] %v11032
    %11065 = vst [vmem:[#allocation9 + $0x90] sm:$0xff] %v11033
    %11066 = vst [vmem:[#allocation9 + $0x98] sm:$0xff] %v11034
    %11067 = vst [vmem:[#allocation9 + $0xa0] sm:$0xff] %v11035
    %11068 = vst [vmem:[#allocation9 + $0xa8] sm:$0xff] %v11036
    %11069 = vst [vmem:[#allocation9 + $0xb0] sm:$0xff] %v11037
    %11070 = vst [vmem:[#allocation9 + $0xb8] sm:$0xff] %v11038
    %11071 = vst [vmem:[#allocation9 + $0xc0] sm:$0xff] %v11039
    %11072 = vst [vmem:[#allocation9 + $0xc8] sm:$0xff] %v11040
    %11073 = vst [vmem:[#allocation9 + $0xd0] sm:$0xff] %v11041
    %11074 = vst [vmem:[#allocation9 + $0xd8] sm:$0xff] %v11042
    %11075 = vst [vmem:[#allocation9 + $0xe0] sm:$0xff] %v11043
    %11076 = vst [vmem:[#allocation9 + $0xe8] sm:$0xff] %v11044
    %11077 = vst [vmem:[#allocation9 + $0xf0] sm:$0xff] %v11045
    %11078 = vst [vmem:[#allocation9 + $0xf8] sm:$0xff] %v11046
    // Predicated region
    $region26: #{tpu_custom_call.1} parent=1 // pred_check
      _
    $region27: #{tpu_custom_call.1} parent=1 // pred_check_branch
      %11080 = sbr.rel (0) target = $region29
    $region28: #{tpu_custom_call.1} parent=1 // pred_region
      %s11082 = ssub.s32 4096, 4096
      %11083 = vsyncadd [#allocation5], %s11082
      %s11084 = sshll.u32 [#allocation9], 4
      %s11085 = int_to_ptr.vmem [resolvable:$true] %s11084
      %11090 = dma.vmem_to_hbm [thread:$0]  %s11085, 4096, %s3, [#allocation5], 256, 256, 16
    $region29: #{tpu_custom_call.1} parent=1 // pred_fallthru
      _
    // Predicated region
    $region30: #{tpu_custom_call.1} parent=1 // pred_check
      _
    $region31: #{tpu_custom_call.1} parent=1 // pred_check_branch
      %11092 = sbr.rel (0) target = $region33
    $region32: #{tpu_custom_call.1} parent=1 // pred_region
      %11093 = dma.done [#allocation5], 4096
    $region33: #{tpu_custom_call.1} parent=1 // pred_fallthru
      _
    %11094 = vsyncpa [#allocation4], 1
    %11095 = vsyncpa [#allocation7], 1
    %11096 = vsyncpa [#allocation5], 1

</llo_original>
